<compile_context>
chip_gen: v7x
topology: tpu7x:2x2x1
jax: 0.10.0
libtpu: 0.0.40
codegen_flags: <defaults>
</compile_context>

<pallas_src>
import numpy as np
import jax
import jax.numpy as jnp
from jax import lax
from jax.experimental import pallas as pl
from jax.experimental.pallas import tpu as pltpu

EPS = 1e-5
LANES = 128


def _round_up(x, m):
    return ((x + m - 1) // m) * m


# ----------------------------- Pallas kernel ------------------------------ #
def _fused_up2_kernel(x_ref, w1_ref, b1_ref, w2_ref, b2_ref, o_ref, x2pad, acc_ref):
    """Fused conv3x3(+folded BN+ReLU) -> conv3x3(+bias) for one (sample, row-tile).

    x_ref : (1, H+4, W+2, Cin_p) zero-padded unpooled activation (full image,
                                 resident per sample; halo & lane pads are already 0)
    w1_ref: (9, Cin_p, Cmid_p)   conv1 weights, BN folded, one 128x128 block per tap
    b1_ref: (1, Cmid_p)
    w2_ref: (9, Cmid_p, Cout_p)
    b2_ref: (1, Cout_p)
    o_ref : (1, TH, W, Cout_p)   lane-dense output tile
    x2pad : VMEM (TH+2, W+2, Cmid_p)  conv1 activation + halo (never touches HBM)
    acc_ref: VMEM ((TH+2)*W, max(Cmid_p, Cout_p))  f32 matmul accumulator
    """
    th, ww, cout_p = o_ref.shape[1], o_ref.shape[2], o_ref.shape[3]
    cin_p = x_ref.shape[3]
    cmid_p = w1_ref.shape[2]

    r = pl.program_id(1)
    row0 = r * th                      # first output row of this tile (image coords)

    m1 = (th + 2) * ww                 # conv1 computed for rows [row0-1, row0+th+1)
    m2 = th * ww                       # conv2 computed for rows [row0,   row0+th)

    def conv_taps(get_lhs, wt_ref, m, cw):
        # 3x3 conv as 9 shifted (m, K)x(K, cw) MXU matmuls accumulated in VMEM
        # (no im2col patch buffer, no strided-reshape compaction stores).
        for t in range(9):
            dy, dx = divmod(t, 3)
            part = jnp.dot(get_lhs(dy, dx), wt_ref[t],
                           preferred_element_type=jnp.float32)
            if t == 0:
                acc_ref[0:m, 0:cw] = part
            else:
                acc_ref[0:m, 0:cw] += part
        return acc_ref[0:m, 0:cw]

    # ---- conv1 (+ folded BN + ReLU) ----------------------------------------
    def lhs1(dy, dx):
        # Halo rows/cols and lane padding are zero straight from the padded input,
        # so no in-kernel zero-fill is needed on the input side.
        return x_ref[0, pl.ds(row0 + dy, th + 2), dx:dx + ww, :].reshape(m1, cin_p)

    y1 = jnp.maximum(conv_taps(lhs1, w1_ref, m1, cmid_p) + b1_ref[0, :], 0.0)

    # ---- stage conv1 output in VMEM (never written to HBM) ------------------
    x2pad[:, 1:ww + 1, :] = y1.reshape(th + 2, ww, cmid_p)
    zcol = jnp.zeros((th + 2, 1, cmid_p), jnp.float32)
    x2pad[:, 0:1, :] = zcol                      # conv2's zero padding, left
    x2pad[:, ww + 1:ww + 2, :] = zcol            # conv2's zero padding, right

    @pl.when(r == 0)                             # conv1 output row -1 does not exist
    def _():
        x2pad[0:1, :, :] = jnp.zeros((1, ww + 2, cmid_p), jnp.float32)

    @pl.when(r == pl.num_programs(1) - 1)        # conv1 output row H does not exist
    def _():
        x2pad[th + 1:th + 2, :, :] = jnp.zeros((1, ww + 2, cmid_p), jnp.float32)

    # ---- conv2 (+ bias) ------------------------------------------------------
    def lhs2(dy, dx):
        return x2pad[dy:dy + th, dx:dx + ww, :].reshape(m2, cmid_p)

    y2 = conv_taps(lhs2, w2_ref, m2, cout_p) + b2_ref[0, :]
    # Lane-dense (128-wide) unmasked store; wrapper slices to the real Cout.
    o_ref[0] = y2.reshape(th, ww, cout_p).astype(o_ref.dtype)


def _pick_tile_rows(H, W, cp, budget_bytes=24 << 20):
    """Largest divisor of H whose per-tile VMEM footprint fits the budget (sized so
    the kernel also fits v7x's 64 MiB physical VMEM at production shapes)."""
    best = 1
    for th in range(1, H + 1):
        if H % th:
            continue
        per = 4 * ((th + 2) * (W + 2) * cp      # x2pad scratch
                   + (th + 2) * W * cp          # accumulator scratch
                   + 2 * th * W * cp            # double-buffered output block
                   + 2 * (th + 2) * W * cp)     # matmul operand headroom
        if per <= budget_bytes:
            best = th
    return best


def _vmem_limit_bytes(Hp4, Wp2, cin_p, th, W, cmid_p, cout_p):
    cacc = max(cmid_p, cout_p)
    est = 4 * (
        2 * Hp4 * Wp2 * cin_p                       # resident input block (x2 buffers)
        + 2 * (9 * cin_p * cmid_p + cmid_p)         # conv1 weights + bias
        + 2 * (9 * cmid_p * cout_p + cout_p)        # conv2 weights + bias
        + 2 * th * W * cout_p                       # output block (x2 buffers)
        + (th + 2) * Wp2 * cmid_p                   # x2pad scratch
        + (th + 2) * W * cacc                       # accumulator scratch
        + 3 * (th + 2) * W * max(cin_p, cmid_p)     # matmul operand / value headroom
    )
    return int(min(100 * (1 << 20), max(32 * (1 << 20), 2 * est)))


def fused_up2(x_pad, w1, b1, w2, b2, tile_rows=None):
    """x_pad: (N, H+4, W+2, Cin_p) zero-padded unpooled activation (NHWC)."""
    N, Hp4, Wp2, cin_p = x_pad.shape
    H, W = Hp4 - 4, Wp2 - 2
    cmid_p, cout_p = w1.shape[2], w2.shape[2]
    cacc = max(cmid_p, cout_p)

    th = tile_rows if tile_rows is not None else _pick_tile_rows(H, W, cacc)
    assert H % th == 0, (H, th)
    rt = H // th

    return pl.pallas_call(
        _fused_up2_kernel,
        out_shape=jax.ShapeDtypeStruct((N, H, W, cout_p), jnp.float32),
        grid_spec=pltpu.PrefetchScalarGridSpec(
            num_scalar_prefetch=0,
            grid=(N, rt),
            in_specs=[
                # Full padded image stays resident while the row-tile axis runs.
                pl.BlockSpec((1, Hp4, Wp2, cin_p), lambda n, r: (n, 0, 0, 0)),
                # Index-invariant weight/bias blocks (resident across the grid).
                pl.BlockSpec((9, cin_p, cmid_p), lambda n, r: (0, 0, 0)),
                pl.BlockSpec((1, cmid_p), lambda n, r: (0, 0)),
                pl.BlockSpec((9, cmid_p, cout_p), lambda n, r: (0, 0, 0)),
                pl.BlockSpec((1, cout_p), lambda n, r: (0, 0)),
            ],
            out_specs=pl.BlockSpec((1, th, W, cout_p), lambda n, r: (n, r, 0, 0)),
            scratch_shapes=[
                pltpu.VMEM((th + 2, W + 2, cmid_p), jnp.float32),
                pltpu.VMEM(((th + 2) * W, cacc), jnp.float32),
            ],
        ),
        compiler_params=pltpu.CompilerParams(
            dimension_semantics=("parallel", "parallel"),
            vmem_limit_bytes=_vmem_limit_bytes(Hp4, Wp2, cin_p, th, W, cmid_p, cout_p),
        ),
    )(x_pad, w1, b1, w2, b2)


# ------------------------------ JAX glue ---------------------------------- #
def fold_bn(w, b, gamma, beta, mean, var, eps=EPS):
    """Fold eval-mode BatchNorm into conv weights/bias.  w: (3,3,Cin,Cout) HWIO."""
    s = gamma / jnp.sqrt(var + eps)
    return w * s[None, None, None, :], b * s + (beta - mean * s)


def prepare_params(params):
    """One-time prep (outside the hot path): BN fold, 128-lane channel padding,
    per-tap (9, Cin_p, Cout_p) weight packing."""
    p1, p2 = params["conv1"], params["conv2"]
    cin, cmid = p1["w"].shape[2], p1["w"].shape[3]
    cout = p2["w"].shape[3]
    cin_p, cmid_p, cout_p = (_round_up(c, LANES) for c in (cin, cmid, cout))

    w1, b1 = fold_bn(p1["w"], p1["b"], p1["gamma"], p1["beta"], p1["mean"], p1["var"])
    w2, b2 = p2["w"], p2["b"]

    def pack(w, b, ci, co, ci_p, co_p):
        wp = jnp.zeros((3, 3, ci_p, co_p), jnp.float32).at[:, :, :ci, :co].set(w)
        bp = jnp.zeros((co_p,), jnp.float32).at[:co].set(b)
        return wp.reshape(9, ci_p, co_p), bp.reshape(1, co_p)

    w1m, b1v = pack(w1, b1, cin, cmid, cin_p, cmid_p)
    w2m, b2v = pack(w2, b2, cmid, cout, cmid_p, cout_p)
    return dict(w1=w1m, b1=b1v, w2=w2m, b2=b2v,
                cin=cin, cin_p=cin_p, cout=cout, cout_p=cout_p)


def max_unpool_2x2_pad_nhwc(vals, idx, out_hw, cin_p):
    """PyTorch MaxUnpool2d(2,2) in NHWC, producing the (+2 rows, +1 cols) halo and
    128-lane channel padding in the same fused elementwise producer."""
    # TODO(synk): fuse this data-dependent scatter into the Pallas kernel.
    N, Hp, Wp, C = vals.shape
    H, W = out_hw
    up_v = jnp.repeat(jnp.repeat(vals, 2, axis=1), 2, axis=2)
    up_i = jnp.repeat(jnp.repeat(idx, 2, axis=1), 2, axis=2)
    tgt = (jnp.arange(H, dtype=idx.dtype)[:, None] * W
           + jnp.arange(W, dtype=idx.dtype)[None, :])
    x = jnp.where(up_i == tgt[None, :, :, None], up_v, jnp.zeros((), vals.dtype))
    return jnp.pad(x, ((0, 0), (2, 2), (1, 1), (0, cin_p - C)))


def segnet_up2_instance_forward(prep, inputs_nchw, indices_nchw, output_shape,
                                tile_rows=None):
    """Equivalent of segnetUp2Instance.forward(inputs, indices, output_shape), NCHW."""
    N, C, H, W = output_shape
    v = jnp.transpose(inputs_nchw, (0, 2, 3, 1))
    i = jnp.transpose(indices_nchw, (0, 2, 3, 1))
    x_pad = max_unpool_2x2_pad_nhwc(v, i, (H, W), prep["cin_p"])
    y = fused_up2(x_pad, prep["w1"], prep["b1"], prep["w2"], prep["b2"], tile_rows)
    return jnp.transpose(y[..., :prep["cout"]], (0, 3, 1, 2))


# --------------------------- pure-JAX reference ---------------------------- #
def reference_forward(params, inputs, indices, output_shape):
    N, C, H2, W2 = output_shape
    vals = inputs.reshape(N, C, -1)
    idx = indices.reshape(N, C, -1)
    onehot = (idx[..., None] == jnp.arange(H2 * W2)[None, None, None, :]).astype(inputs.dtype)
    x = jnp.einsum("ncp,ncpq->ncq", vals, onehot).reshape(N, C, H2, W2)

    p = params["conv1"]
    w_oihw = jnp.transpose(p["w"], (3, 2, 0, 1))
    y = lax.conv_general_dilated(x, w_oihw, (1, 1), ((1, 1), (1, 1)),
                                 dimension_numbers=("NCHW", "OIHW", "NCHW"))
    y = y + p["b"][None, :, None, None]
    s = p["gamma"] / jnp.sqrt(p["var"] + EPS)
    y = (y - p["mean"][None, :, None, None]) * s[None, :, None, None] \
        + p["beta"][None, :, None, None]
    x = jnp.maximum(y, 0.0)

    p = params["conv2"]
    w_oihw = jnp.transpose(p["w"], (3, 2, 0, 1))
    y = lax.conv_general_dilated(x, w_oihw, (1, 1), ((1, 1), (1, 1)),
                                 dimension_numbers=("NCHW", "OIHW", "NCHW"))
    return y + p["b"][None, :, None, None]


def init_params(key, in_size, out_size):
    k = jax.random.split(key, 9)
    conv1 = dict(
        w=jax.random.normal(k[0], (3, 3, in_size, in_size), jnp.float32) * 0.1,
        b=jax.random.normal(k[1], (in_size,), jnp.float32) * 0.1,
        gamma=jax.random.uniform(k[2], (in_size,), jnp.float32, 0.5, 1.5),
        beta=jax.random.normal(k[3], (in_size,), jnp.float32) * 0.1,
        mean=jax.random.normal(k[4], (in_size,), jnp.float32) * 0.1,
        var=jax.random.uniform(k[5], (in_size,), jnp.float32, 0.5, 1.5),
    )
    conv2 = dict(
        w=jax.random.normal(k[6], (3, 3, in_size, out_size), jnp.float32) * 0.1,
        b=jax.random.normal(k[7], (out_size,), jnp.float32) * 0.1,
    )
    return dict(conv1=conv1, conv2=conv2)


if __name__ == "__main__":
    key = jax.random.PRNGKey(0)
    N, in_size, out_size = 2, 4, 6
    H2 = W2 = 16                       # unpooled (output) spatial size
    Hp, Wp = H2 // 2, W2 // 2          # pooled (input) spatial size

    key, kx = jax.random.split(key)
    params = init_params(key, in_size, out_size)
    prep = prepare_params(params)                  # BN fold + packing done once

    # Build realistic MaxPool2d(2,2,return_indices=True) inputs/indices (NCHW).
    x_pre = jax.random.normal(kx, (N, in_size, H2, W2), jnp.float32)
    xw = x_pre.reshape(N, in_size, Hp, 2, Wp, 2).transpose(0, 1, 2, 4, 3, 5)
    xw = xw.reshape(N, in_size, Hp, Wp, 4)
    inputs = jnp.max(xw, axis=-1)                                   # (N, C, 8, 8)
    arg = jnp.argmax(xw, axis=-1)
    a, b = arg // 2, arg % 2
    ii = jnp.arange(Hp)[None, None, :, None]
    jj = jnp.arange(Wp)[None, None, None, :]
    indices = ((2 * ii + a) * W2 + (2 * jj + b)).astype(jnp.int32)  # (N, C, 8, 8)

    output_shape = (N, in_size, H2, W2)

    ref = jax.block_until_ready(reference_forward(params, inputs, indices, output_shape))

    # Default (auto-picked) row tile: whole image per step at this size.
    out = segnet_up2_instance_forward(prep, inputs, indices, output_shape)
    out = jax.block_until_ready(out)
    assert out.shape == (N, out_size, H2, W2), out.shape
    np.testing.assert_allclose(np.asarray(out), np.asarray(ref), rtol=1e-4, atol=1e-4)

    # Exercise the spatial row-tiling path (grid=(N, H//4), halo + boundary logic).
    out_t = jax.block_until_ready(
        segnet_up2_instance_forward(prep, inputs, indices, output_shape, tile_rows=4))
    np.testing.assert_allclose(np.asarray(out_t), np.asarray(ref), rtol=1e-4, atol=1e-4)

    print("KERNEL_OK")
</pallas_src>

<mosaic_0001>
module attributes {stable_mosaic.version = 11 : i64} {
  func.func @_fused_up2_kernel(%arg0: i32, %arg1: i32, %arg2: memref<1x20x18x128xf32, #tpu.memory_space<vmem>>, %arg3: memref<9x128x128xf32, #tpu.memory_space<vmem>>, %arg4: memref<1x128xf32, #tpu.memory_space<vmem>>, %arg5: memref<9x128x128xf32, #tpu.memory_space<vmem>>, %arg6: memref<1x128xf32, #tpu.memory_space<vmem>>, %arg7: memref<1x16x16x128xf32, #tpu.memory_space<vmem>>, %arg8: memref<18x18x128xf32, #tpu.memory_space<vmem>>, %arg9: memref<288x128xf32, #tpu.memory_space<vmem>>) attributes {dimension_semantics = [#tpu.dimension_semantics<parallel>, #tpu.dimension_semantics<parallel>], iteration_bounds = array<i64: 2, 1>, scalar_prefetch = 0 : i64, scratch_operands = 2 : i64, tpu.core_type = #tpu.core_type<tc>, window_params = [{transform_indices = @transform_0, window_bounds = array<i64: 1, 20, 18, 128>}, {pipeline_mode = #tpu.pipeline_mode<synchronous>, transform_indices = @transform_1, window_bounds = array<i64: 9, 128, 128>}, {pipeline_mode = #tpu.pipeline_mode<synchronous>, transform_indices = @transform_2, window_bounds = array<i64: 1, 128>}, {pipeline_mode = #tpu.pipeline_mode<synchronous>, transform_indices = @transform_3, window_bounds = array<i64: 9, 128, 128>}, {pipeline_mode = #tpu.pipeline_mode<synchronous>, transform_indices = @transform_4, window_bounds = array<i64: 1, 128>}, {transform_indices = @transform_5, window_bounds = array<i64: 1, 16, 16, 128>}]} {
    %c16_i32 = arith.constant 16 : i32
    %0 = arith.muli %arg1, %c16_i32 : i32
    %c0_i32 = arith.constant 0 : i32
    %1 = arith.addi %0, %c0_i32 : i32
    %c0 = arith.constant 0 : index
    %2 = arith.index_cast %1 : i32 to index
    %c0_0 = arith.constant 0 : index
    %c0_1 = arith.constant 0 : index
    %3 = vector.load %arg2[%c0, %2, %c0_0, %c0_1] : memref<1x20x18x128xf32, #tpu.memory_space<vmem>>, vector<1x18x16x128xf32>
    %4 = vector.shape_cast %3 : vector<1x18x16x128xf32> to vector<18x16x128xf32>
    %5 = vector.shape_cast %4 : vector<18x16x128xf32> to vector<288x128xf32>
    %c0_2 = arith.constant 0 : index
    %c0_3 = arith.constant 0 : index
    %c0_4 = arith.constant 0 : index
    %6 = vector.load %arg3[%c0_2, %c0_3, %c0_4] : memref<9x128x128xf32, #tpu.memory_space<vmem>>, vector<1x128x128xf32>
    %7 = vector.shape_cast %6 : vector<1x128x128xf32> to vector<128x128xf32>
    %cst = arith.constant dense<0.000000e+00> : vector<288x128xf32>
    %8 = tpu.matmul %5, %7, %cst {dimension_numbers = #tpu.dot_dimension_numbers<[1], [0], [0], [1], [0, 0, 1, 1], [], []>} : vector<288x128xf32>, vector<128x128xf32>, vector<288x128xf32> -> vector<288x128xf32>
    %c0_5 = arith.constant 0 : index
    %c0_6 = arith.constant 0 : index
    %9 = vector.load %arg9[%c0_5, %c0_6] : memref<288x128xf32, #tpu.memory_space<vmem>>, vector<288x128xf32>
    tpu.vector_store %arg9[%c0_5, %c0_6], %8 {strides = array<i32>} : memref<288x128xf32, #tpu.memory_space<vmem>>, vector<288x128xf32>,
    %c0_i32_7 = arith.constant 0 : i32
    %10 = arith.addi %0, %c0_i32_7 : i32
    %c0_8 = arith.constant 0 : index
    %11 = arith.index_cast %10 : i32 to index
    %c1 = arith.constant 1 : index
    %c0_9 = arith.constant 0 : index
    %12 = vector.load %arg2[%c0_8, %11, %c1, %c0_9] : memref<1x20x18x128xf32, #tpu.memory_space<vmem>>, vector<1x18x16x128xf32>
    %13 = vector.shape_cast %12 : vector<1x18x16x128xf32> to vector<18x16x128xf32>
    %14 = vector.shape_cast %13 : vector<18x16x128xf32> to vector<288x128xf32>
    %c1_10 = arith.constant 1 : index
    %c0_11 = arith.constant 0 : index
    %c0_12 = arith.constant 0 : index
    %15 = vector.load %arg3[%c1_10, %c0_11, %c0_12] : memref<9x128x128xf32, #tpu.memory_space<vmem>>, vector<1x128x128xf32>
    %16 = vector.shape_cast %15 : vector<1x128x128xf32> to vector<128x128xf32>
    %cst_13 = arith.constant dense<0.000000e+00> : vector<288x128xf32>
    %17 = tpu.matmul %14, %16, %cst_13 {dimension_numbers = #tpu.dot_dimension_numbers<[1], [0], [0], [1], [0, 0, 1, 1], [], []>} : vector<288x128xf32>, vector<128x128xf32>, vector<288x128xf32> -> vector<288x128xf32>
    %c0_14 = arith.constant 0 : index
    %c0_15 = arith.constant 0 : index
    %18 = vector.load %arg9[%c0_14, %c0_15] : memref<288x128xf32, #tpu.memory_space<vmem>>, vector<288x128xf32>
    %19 = arith.addf %18, %17 : vector<288x128xf32>
    %c0_16 = arith.constant 0 : index
    %c0_17 = arith.constant 0 : index
    %20 = vector.load %arg9[%c0_16, %c0_17] : memref<288x128xf32, #tpu.memory_space<vmem>>, vector<288x128xf32>
    tpu.vector_store %arg9[%c0_16, %c0_17], %19 {strides = array<i32>} : memref<288x128xf32, #tpu.memory_space<vmem>>, vector<288x128xf32>,
    %c0_i32_18 = arith.constant 0 : i32
    %21 = arith.addi %0, %c0_i32_18 : i32
    %c0_19 = arith.constant 0 : index
    %22 = arith.index_cast %21 : i32 to index
    %c2 = arith.constant 2 : index
    %c0_20 = arith.constant 0 : index
    %23 = vector.load %arg2[%c0_19, %22, %c2, %c0_20] : memref<1x20x18x128xf32, #tpu.memory_space<vmem>>, vector<1x18x16x128xf32>
    %24 = vector.shape_cast %23 : vector<1x18x16x128xf32> to vector<18x16x128xf32>
    %25 = vector.shape_cast %24 : vector<18x16x128xf32> to vector<288x128xf32>
    %c2_21 = arith.constant 2 : index
    %c0_22 = arith.constant 0 : index
    %c0_23 = arith.constant 0 : index
    %26 = vector.load %arg3[%c2_21, %c0_22, %c0_23] : memref<9x128x128xf32, #tpu.memory_space<vmem>>, vector<1x128x128xf32>
    %27 = vector.shape_cast %26 : vector<1x128x128xf32> to vector<128x128xf32>
    %cst_24 = arith.constant dense<0.000000e+00> : vector<288x128xf32>
    %28 = tpu.matmul %25, %27, %cst_24 {dimension_numbers = #tpu.dot_dimension_numbers<[1], [0], [0], [1], [0, 0, 1, 1], [], []>} : vector<288x128xf32>, vector<128x128xf32>, vector<288x128xf32> -> vector<288x128xf32>
    %c0_25 = arith.constant 0 : index
    %c0_26 = arith.constant 0 : index
    %29 = vector.load %arg9[%c0_25, %c0_26] : memref<288x128xf32, #tpu.memory_space<vmem>>, vector<288x128xf32>
    %30 = arith.addf %29, %28 : vector<288x128xf32>
    %c0_27 = arith.constant 0 : index
    %c0_28 = arith.constant 0 : index
    %31 = vector.load %arg9[%c0_27, %c0_28] : memref<288x128xf32, #tpu.memory_space<vmem>>, vector<288x128xf32>
    tpu.vector_store %arg9[%c0_27, %c0_28], %30 {strides = array<i32>} : memref<288x128xf32, #tpu.memory_space<vmem>>, vector<288x128xf32>,
    %c1_i32 = arith.constant 1 : i32
    %32 = arith.addi %0, %c1_i32 : i32
    %c0_29 = arith.constant 0 : index
    %33 = arith.index_cast %32 : i32 to index
    %c0_30 = arith.constant 0 : index
    %c0_31 = arith.constant 0 : index
    %34 = vector.load %arg2[%c0_29, %33, %c0_30, %c0_31] : memref<1x20x18x128xf32, #tpu.memory_space<vmem>>, vector<1x18x16x128xf32>
    %35 = vector.shape_cast %34 : vector<1x18x16x128xf32> to vector<18x16x128xf32>
    %36 = vector.shape_cast %35 : vector<18x16x128xf32> to vector<288x128xf32>
    %c3 = arith.constant 3 : index
    %c0_32 = arith.constant 0 : index
    %c0_33 = arith.constant 0 : index
    %37 = vector.load %arg3[%c3, %c0_32, %c0_33] : memref<9x128x128xf32, #tpu.memory_space<vmem>>, vector<1x128x128xf32>
    %38 = vector.shape_cast %37 : vector<1x128x128xf32> to vector<128x128xf32>
    %cst_34 = arith.constant dense<0.000000e+00> : vector<288x128xf32>
    %39 = tpu.matmul %36, %38, %cst_34 {dimension_numbers = #tpu.dot_dimension_numbers<[1], [0], [0], [1], [0, 0, 1, 1], [], []>} : vector<288x128xf32>, vector<128x128xf32>, vector<288x128xf32> -> vector<288x128xf32>
    %c0_35 = arith.constant 0 : index
    %c0_36 = arith.constant 0 : index
    %40 = vector.load %arg9[%c0_35, %c0_36] : memref<288x128xf32, #tpu.memory_space<vmem>>, vector<288x128xf32>
    %41 = arith.addf %40, %39 : vector<288x128xf32>
    %c0_37 = arith.constant 0 : index
    %c0_38 = arith.constant 0 : index
    %42 = vector.load %arg9[%c0_37, %c0_38] : memref<288x128xf32, #tpu.memory_space<vmem>>, vector<288x128xf32>
    tpu.vector_store %arg9[%c0_37, %c0_38], %41 {strides = array<i32>} : memref<288x128xf32, #tpu.memory_space<vmem>>, vector<288x128xf32>,
    %c1_i32_39 = arith.constant 1 : i32
    %43 = arith.addi %0, %c1_i32_39 : i32
    %c0_40 = arith.constant 0 : index
    %44 = arith.index_cast %43 : i32 to index
    %c1_41 = arith.constant 1 : index
    %c0_42 = arith.constant 0 : index
    %45 = vector.load %arg2[%c0_40, %44, %c1_41, %c0_42] : memref<1x20x18x128xf32, #tpu.memory_space<vmem>>, vector<1x18x16x128xf32>
    %46 = vector.shape_cast %45 : vector<1x18x16x128xf32> to vector<18x16x128xf32>
    %47 = vector.shape_cast %46 : vector<18x16x128xf32> to vector<288x128xf32>
    %c4 = arith.constant 4 : index
    %c0_43 = arith.constant 0 : index
    %c0_44 = arith.constant 0 : index
    %48 = vector.load %arg3[%c4, %c0_43, %c0_44] : memref<9x128x128xf32, #tpu.memory_space<vmem>>, vector<1x128x128xf32>
    %49 = vector.shape_cast %48 : vector<1x128x128xf32> to vector<128x128xf32>
    %cst_45 = arith.constant dense<0.000000e+00> : vector<288x128xf32>
    %50 = tpu.matmul %47, %49, %cst_45 {dimension_numbers = #tpu.dot_dimension_numbers<[1], [0], [0], [1], [0, 0, 1, 1], [], []>} : vector<288x128xf32>, vector<128x128xf32>, vector<288x128xf32> -> vector<288x128xf32>
    %c0_46 = arith.constant 0 : index
    %c0_47 = arith.constant 0 : index
    %51 = vector.load %arg9[%c0_46, %c0_47] : memref<288x128xf32, #tpu.memory_space<vmem>>, vector<288x128xf32>
    %52 = arith.addf %51, %50 : vector<288x128xf32>
    %c0_48 = arith.constant 0 : index
    %c0_49 = arith.constant 0 : index
    %53 = vector.load %arg9[%c0_48, %c0_49] : memref<288x128xf32, #tpu.memory_space<vmem>>, vector<288x128xf32>
    tpu.vector_store %arg9[%c0_48, %c0_49], %52 {strides = array<i32>} : memref<288x128xf32, #tpu.memory_space<vmem>>, vector<288x128xf32>,
    %c1_i32_50 = arith.constant 1 : i32
    %54 = arith.addi %0, %c1_i32_50 : i32
    %c0_51 = arith.constant 0 : index
    %55 = arith.index_cast %54 : i32 to index
    %c2_52 = arith.constant 2 : index
    %c0_53 = arith.constant 0 : index
    %56 = vector.load %arg2[%c0_51, %55, %c2_52, %c0_53] : memref<1x20x18x128xf32, #tpu.memory_space<vmem>>, vector<1x18x16x128xf32>
    %57 = vector.shape_cast %56 : vector<1x18x16x128xf32> to vector<18x16x128xf32>
    %58 = vector.shape_cast %57 : vector<18x16x128xf32> to vector<288x128xf32>
    %c5 = arith.constant 5 : index
    %c0_54 = arith.constant 0 : index
    %c0_55 = arith.constant 0 : index
    %59 = vector.load %arg3[%c5, %c0_54, %c0_55] : memref<9x128x128xf32, #tpu.memory_space<vmem>>, vector<1x128x128xf32>
    %60 = vector.shape_cast %59 : vector<1x128x128xf32> to vector<128x128xf32>
    %cst_56 = arith.constant dense<0.000000e+00> : vector<288x128xf32>
    %61 = tpu.matmul %58, %60, %cst_56 {dimension_numbers = #tpu.dot_dimension_numbers<[1], [0], [0], [1], [0, 0, 1, 1], [], []>} : vector<288x128xf32>, vector<128x128xf32>, vector<288x128xf32> -> vector<288x128xf32>
    %c0_57 = arith.constant 0 : index
    %c0_58 = arith.constant 0 : index
    %62 = vector.load %arg9[%c0_57, %c0_58] : memref<288x128xf32, #tpu.memory_space<vmem>>, vector<288x128xf32>
    %63 = arith.addf %62, %61 : vector<288x128xf32>
    %c0_59 = arith.constant 0 : index
    %c0_60 = arith.constant 0 : index
    %64 = vector.load %arg9[%c0_59, %c0_60] : memref<288x128xf32, #tpu.memory_space<vmem>>, vector<288x128xf32>
    tpu.vector_store %arg9[%c0_59, %c0_60], %63 {strides = array<i32>} : memref<288x128xf32, #tpu.memory_space<vmem>>, vector<288x128xf32>,
    %c2_i32 = arith.constant 2 : i32
    %65 = arith.addi %0, %c2_i32 : i32
    %c0_61 = arith.constant 0 : index
    %66 = arith.index_cast %65 : i32 to index
    %c0_62 = arith.constant 0 : index
    %c0_63 = arith.constant 0 : index
    %67 = vector.load %arg2[%c0_61, %66, %c0_62, %c0_63] : memref<1x20x18x128xf32, #tpu.memory_space<vmem>>, vector<1x18x16x128xf32>
    %68 = vector.shape_cast %67 : vector<1x18x16x128xf32> to vector<18x16x128xf32>
    %69 = vector.shape_cast %68 : vector<18x16x128xf32> to vector<288x128xf32>
    %c6 = arith.constant 6 : index
    %c0_64 = arith.constant 0 : index
    %c0_65 = arith.constant 0 : index
    %70 = vector.load %arg3[%c6, %c0_64, %c0_65] : memref<9x128x128xf32, #tpu.memory_space<vmem>>, vector<1x128x128xf32>
    %71 = vector.shape_cast %70 : vector<1x128x128xf32> to vector<128x128xf32>
    %cst_66 = arith.constant dense<0.000000e+00> : vector<288x128xf32>
    %72 = tpu.matmul %69, %71, %cst_66 {dimension_numbers = #tpu.dot_dimension_numbers<[1], [0], [0], [1], [0, 0, 1, 1], [], []>} : vector<288x128xf32>, vector<128x128xf32>, vector<288x128xf32> -> vector<288x128xf32>
    %c0_67 = arith.constant 0 : index
    %c0_68 = arith.constant 0 : index
    %73 = vector.load %arg9[%c0_67, %c0_68] : memref<288x128xf32, #tpu.memory_space<vmem>>, vector<288x128xf32>
    %74 = arith.addf %73, %72 : vector<288x128xf32>
    %c0_69 = arith.constant 0 : index
    %c0_70 = arith.constant 0 : index
    %75 = vector.load %arg9[%c0_69, %c0_70] : memref<288x128xf32, #tpu.memory_space<vmem>>, vector<288x128xf32>
    tpu.vector_store %arg9[%c0_69, %c0_70], %74 {strides = array<i32>} : memref<288x128xf32, #tpu.memory_space<vmem>>, vector<288x128xf32>,
    %c2_i32_71 = arith.constant 2 : i32
    %76 = arith.addi %0, %c2_i32_71 : i32
    %c0_72 = arith.constant 0 : index
    %77 = arith.index_cast %76 : i32 to index
    %c1_73 = arith.constant 1 : index
    %c0_74 = arith.constant 0 : index
    %78 = vector.load %arg2[%c0_72, %77, %c1_73, %c0_74] : memref<1x20x18x128xf32, #tpu.memory_space<vmem>>, vector<1x18x16x128xf32>
    %79 = vector.shape_cast %78 : vector<1x18x16x128xf32> to vector<18x16x128xf32>
    %80 = vector.shape_cast %79 : vector<18x16x128xf32> to vector<288x128xf32>
    %c7 = arith.constant 7 : index
    %c0_75 = arith.constant 0 : index
    %c0_76 = arith.constant 0 : index
    %81 = vector.load %arg3[%c7, %c0_75, %c0_76] : memref<9x128x128xf32, #tpu.memory_space<vmem>>, vector<1x128x128xf32>
    %82 = vector.shape_cast %81 : vector<1x128x128xf32> to vector<128x128xf32>
    %cst_77 = arith.constant dense<0.000000e+00> : vector<288x128xf32>
    %83 = tpu.matmul %80, %82, %cst_77 {dimension_numbers = #tpu.dot_dimension_numbers<[1], [0], [0], [1], [0, 0, 1, 1], [], []>} : vector<288x128xf32>, vector<128x128xf32>, vector<288x128xf32> -> vector<288x128xf32>
    %c0_78 = arith.constant 0 : index
    %c0_79 = arith.constant 0 : index
    %84 = vector.load %arg9[%c0_78, %c0_79] : memref<288x128xf32, #tpu.memory_space<vmem>>, vector<288x128xf32>
    %85 = arith.addf %84, %83 : vector<288x128xf32>
    %c0_80 = arith.constant 0 : index
    %c0_81 = arith.constant 0 : index
    %86 = vector.load %arg9[%c0_80, %c0_81] : memref<288x128xf32, #tpu.memory_space<vmem>>, vector<288x128xf32>
    tpu.vector_store %arg9[%c0_80, %c0_81], %85 {strides = array<i32>} : memref<288x128xf32, #tpu.memory_space<vmem>>, vector<288x128xf32>,
    %c2_i32_82 = arith.constant 2 : i32
    %87 = arith.addi %0, %c2_i32_82 : i32
    %c0_83 = arith.constant 0 : index
    %88 = arith.index_cast %87 : i32 to index
    %c2_84 = arith.constant 2 : index
    %c0_85 = arith.constant 0 : index
    %89 = vector.load %arg2[%c0_83, %88, %c2_84, %c0_85] : memref<1x20x18x128xf32, #tpu.memory_space<vmem>>, vector<1x18x16x128xf32>
    %90 = vector.shape_cast %89 : vector<1x18x16x128xf32> to vector<18x16x128xf32>
    %91 = vector.shape_cast %90 : vector<18x16x128xf32> to vector<288x128xf32>
    %c8 = arith.constant 8 : index
    %c0_86 = arith.constant 0 : index
    %c0_87 = arith.constant 0 : index
    %92 = vector.load %arg3[%c8, %c0_86, %c0_87] : memref<9x128x128xf32, #tpu.memory_space<vmem>>, vector<1x128x128xf32>
    %93 = vector.shape_cast %92 : vector<1x128x128xf32> to vector<128x128xf32>
    %cst_88 = arith.constant dense<0.000000e+00> : vector<288x128xf32>
    %94 = tpu.matmul %91, %93, %cst_88 {dimension_numbers = #tpu.dot_dimension_numbers<[1], [0], [0], [1], [0, 0, 1, 1], [], []>} : vector<288x128xf32>, vector<128x128xf32>, vector<288x128xf32> -> vector<288x128xf32>
    %c0_89 = arith.constant 0 : index
    %c0_90 = arith.constant 0 : index
    %95 = vector.load %arg9[%c0_89, %c0_90] : memref<288x128xf32, #tpu.memory_space<vmem>>, vector<288x128xf32>
    %96 = arith.addf %95, %94 : vector<288x128xf32>
    %c0_91 = arith.constant 0 : index
    %c0_92 = arith.constant 0 : index
    %97 = vector.load %arg9[%c0_91, %c0_92] : memref<288x128xf32, #tpu.memory_space<vmem>>, vector<288x128xf32>
    tpu.vector_store %arg9[%c0_91, %c0_92], %96 {strides = array<i32>} : memref<288x128xf32, #tpu.memory_space<vmem>>, vector<288x128xf32>,
    %c0_93 = arith.constant 0 : index
    %c0_94 = arith.constant 0 : index
    %98 = vector.load %arg9[%c0_93, %c0_94] : memref<288x128xf32, #tpu.memory_space<vmem>>, vector<288x128xf32>
    %c0_95 = arith.constant 0 : index
    %c0_96 = arith.constant 0 : index
    %99 = vector.load %arg4[%c0_95, %c0_96] : memref<1x128xf32, #tpu.memory_space<vmem>>, vector<1x128xf32>
    %100 = vector.shape_cast %99 : vector<1x128xf32> to vector<128xf32>
    %101 = vector.shape_cast %100 : vector<128xf32> to vector<1x128xf32>
    %102 = vector.broadcast %101 : vector<1x128xf32> to vector<288x128xf32>
    %103 = arith.addf %98, %102 : vector<288x128xf32>
    %cst_97 = arith.constant 0.000000e+00 : f32
    %104 = vector.broadcast %cst_97 : f32 to vector<288x128xf32>
    %105 = arith.maximumf %103, %104 : vector<288x128xf32>
    %106 = vector.shape_cast %105 : vector<288x128xf32> to vector<18x16x128xf32>
    %c0_98 = arith.constant 0 : index
    %c1_99 = arith.constant 1 : index
    %c0_100 = arith.constant 0 : index
    %107 = vector.load %arg8[%c0_98, %c1_99, %c0_100] : memref<18x18x128xf32, #tpu.memory_space<vmem>>, vector<18x16x128xf32>
    tpu.vector_store %arg8[%c0_98, %c1_99, %c0_100], %106 {strides = array<i32>} : memref<18x18x128xf32, #tpu.memory_space<vmem>>, vector<18x16x128xf32>,
    %cst_101 = arith.constant 0.000000e+00 : f32
    %108 = vector.broadcast %cst_101 : f32 to vector<18x1x128xf32>
    %c0_102 = arith.constant 0 : index
    %c0_103 = arith.constant 0 : index
    %c0_104 = arith.constant 0 : index
    %109 = vector.load %arg8[%c0_102, %c0_103, %c0_104] : memref<18x18x128xf32, #tpu.memory_space<vmem>>, vector<18x1x128xf32>
    tpu.vector_store %arg8[%c0_102, %c0_103, %c0_104], %108 {strides = array<i32>} : memref<18x18x128xf32, #tpu.memory_space<vmem>>, vector<18x1x128xf32>,
    %c0_105 = arith.constant 0 : index
    %c17 = arith.constant 17 : index
    %c0_106 = arith.constant 0 : index
    %110 = vector.load %arg8[%c0_105, %c17, %c0_106] : memref<18x18x128xf32, #tpu.memory_space<vmem>>, vector<18x1x128xf32>
    tpu.vector_store %arg8[%c0_105, %c17, %c0_106], %108 {strides = array<i32>} : memref<18x18x128xf32, #tpu.memory_space<vmem>>, vector<18x1x128xf32>,
    %c0_i32_107 = arith.constant 0 : i32
    %111 = arith.cmpi eq, %arg1, %c0_i32_107 : i32
    %112 = arith.extui %111 : i1 to i32
    %c0_i32_108 = arith.constant 0 : i32
    %113 = arith.cmpi ne, %112, %c0_i32_108 : i32
    scf.if %113 {
      %cst_216 = arith.constant 0.000000e+00 : f32
      %197 = vector.broadcast %cst_216 : f32 to vector<1x18x128xf32>
      %c0_217 = arith.constant 0 : index
      %c0_218 = arith.constant 0 : index
      %c0_219 = arith.constant 0 : index
      %198 = vector.load %arg8[%c0_217, %c0_218, %c0_219] : memref<18x18x128xf32, #tpu.memory_space<vmem>>, vector<1x18x128xf32>
      tpu.vector_store %arg8[%c0_217, %c0_218, %c0_219], %197 {strides = array<i32>} : memref<18x18x128xf32, #tpu.memory_space<vmem>>, vector<1x18x128xf32>,
    } else {
    }
    %c0_i32_109 = arith.constant 0 : i32
    %114 = arith.cmpi eq, %arg1, %c0_i32_109 : i32
    %115 = arith.extui %114 : i1 to i32
    %c0_i32_110 = arith.constant 0 : i32
    %116 = arith.cmpi ne, %115, %c0_i32_110 : i32
    scf.if %116 {
      %cst_216 = arith.constant 0.000000e+00 : f32
      %197 = vector.broadcast %cst_216 : f32 to vector<1x18x128xf32>
      %c17_217 = arith.constant 17 : index
      %c0_218 = arith.constant 0 : index
      %c0_219 = arith.constant 0 : index
      %198 = vector.load %arg8[%c17_217, %c0_218, %c0_219] : memref<18x18x128xf32, #tpu.memory_space<vmem>>, vector<1x18x128xf32>
      tpu.vector_store %arg8[%c17_217, %c0_218, %c0_219], %197 {strides = array<i32>} : memref<18x18x128xf32, #tpu.memory_space<vmem>>, vector<1x18x128xf32>,
    } else {
    }
    %c0_111 = arith.constant 0 : index
    %c0_112 = arith.constant 0 : index
    %c0_113 = arith.constant 0 : index
    %117 = vector.load %arg8[%c0_111, %c0_112, %c0_113] : memref<18x18x128xf32, #tpu.memory_space<vmem>>, vector<16x16x128xf32>
    %118 = vector.shape_cast %117 : vector<16x16x128xf32> to vector<256x128xf32>
    %c0_114 = arith.constant 0 : index
    %c0_115 = arith.constant 0 : index
    %c0_116 = arith.constant 0 : index
    %119 = vector.load %arg5[%c0_114, %c0_115, %c0_116] : memref<9x128x128xf32, #tpu.memory_space<vmem>>, vector<1x128x128xf32>
    %120 = vector.shape_cast %119 : vector<1x128x128xf32> to vector<128x128xf32>
    %cst_117 = arith.constant dense<0.000000e+00> : vector<256x128xf32>
    %121 = tpu.matmul %118, %120, %cst_117 {dimension_numbers = #tpu.dot_dimension_numbers<[1], [0], [0], [1], [0, 0, 1, 1], [], []>} : vector<256x128xf32>, vector<128x128xf32>, vector<256x128xf32> -> vector<256x128xf32>
    %c0_118 = arith.constant 0 : index
    %c0_119 = arith.constant 0 : index
    %122 = vector.load %arg9[%c0_118, %c0_119] : memref<288x128xf32, #tpu.memory_space<vmem>>, vector<256x128xf32>
    tpu.vector_store %arg9[%c0_118, %c0_119], %121 {strides = array<i32>} : memref<288x128xf32, #tpu.memory_space<vmem>>, vector<256x128xf32>,
    %c0_120 = arith.constant 0 : index
    %c1_121 = arith.constant 1 : index
    %c0_122 = arith.constant 0 : index
    %123 = vector.load %arg8[%c0_120, %c1_121, %c0_122] : memref<18x18x128xf32, #tpu.memory_space<vmem>>, vector<16x16x128xf32>
    %124 = vector.shape_cast %123 : vector<16x16x128xf32> to vector<256x128xf32>
    %c1_123 = arith.constant 1 : index
    %c0_124 = arith.constant 0 : index
    %c0_125 = arith.constant 0 : index
    %125 = vector.load %arg5[%c1_123, %c0_124, %c0_125] : memref<9x128x128xf32, #tpu.memory_space<vmem>>, vector<1x128x128xf32>
    %126 = vector.shape_cast %125 : vector<1x128x128xf32> to vector<128x128xf32>
    %cst_126 = arith.constant dense<0.000000e+00> : vector<256x128xf32>
    %127 = tpu.matmul %124, %126, %cst_126 {dimension_numbers = #tpu.dot_dimension_numbers<[1], [0], [0], [1], [0, 0, 1, 1], [], []>} : vector<256x128xf32>, vector<128x128xf32>, vector<256x128xf32> -> vector<256x128xf32>
    %c0_127 = arith.constant 0 : index
    %c0_128 = arith.constant 0 : index
    %128 = vector.load %arg9[%c0_127, %c0_128] : memref<288x128xf32, #tpu.memory_space<vmem>>, vector<256x128xf32>
    %129 = arith.addf %128, %127 : vector<256x128xf32>
    %c0_129 = arith.constant 0 : index
    %c0_130 = arith.constant 0 : index
    %130 = vector.load %arg9[%c0_129, %c0_130] : memref<288x128xf32, #tpu.memory_space<vmem>>, vector<256x128xf32>
    tpu.vector_store %arg9[%c0_129, %c0_130], %129 {strides = array<i32>} : memref<288x128xf32, #tpu.memory_space<vmem>>, vector<256x128xf32>,
    %c0_131 = arith.constant 0 : index
    %c2_132 = arith.constant 2 : index
    %c0_133 = arith.constant 0 : index
    %131 = vector.load %arg8[%c0_131, %c2_132, %c0_133] : memref<18x18x128xf32, #tpu.memory_space<vmem>>, vector<16x16x128xf32>
    %132 = vector.shape_cast %131 : vector<16x16x128xf32> to vector<256x128xf32>
    %c2_134 = arith.constant 2 : index
    %c0_135 = arith.constant 0 : index
    %c0_136 = arith.constant 0 : index
    %133 = vector.load %arg5[%c2_134, %c0_135, %c0_136] : memref<9x128x128xf32, #tpu.memory_space<vmem>>, vector<1x128x128xf32>
    %134 = vector.shape_cast %133 : vector<1x128x128xf32> to vector<128x128xf32>
    %cst_137 = arith.constant dense<0.000000e+00> : vector<256x128xf32>
    %135 = tpu.matmul %132, %134, %cst_137 {dimension_numbers = #tpu.dot_dimension_numbers<[1], [0], [0], [1], [0, 0, 1, 1], [], []>} : vector<256x128xf32>, vector<128x128xf32>, vector<256x128xf32> -> vector<256x128xf32>
    %c0_138 = arith.constant 0 : index
    %c0_139 = arith.constant 0 : index
    %136 = vector.load %arg9[%c0_138, %c0_139] : memref<288x128xf32, #tpu.memory_space<vmem>>, vector<256x128xf32>
    %137 = arith.addf %136, %135 : vector<256x128xf32>
    %c0_140 = arith.constant 0 : index
    %c0_141 = arith.constant 0 : index
    %138 = vector.load %arg9[%c0_140, %c0_141] : memref<288x128xf32, #tpu.memory_space<vmem>>, vector<256x128xf32>
    tpu.vector_store %arg9[%c0_140, %c0_141], %137 {strides = array<i32>} : memref<288x128xf32, #tpu.memory_space<vmem>>, vector<256x128xf32>,
    %c1_142 = arith.constant 1 : index
    %c0_143 = arith.constant 0 : index
    %c0_144 = arith.constant 0 : index
    %139 = vector.load %arg8[%c1_142, %c0_143, %c0_144] : memref<18x18x128xf32, #tpu.memory_space<vmem>>, vector<16x16x128xf32>
    %140 = vector.shape_cast %139 : vector<16x16x128xf32> to vector<256x128xf32>
    %c3_145 = arith.constant 3 : index
    %c0_146 = arith.constant 0 : index
    %c0_147 = arith.constant 0 : index
    %141 = vector.load %arg5[%c3_145, %c0_146, %c0_147] : memref<9x128x128xf32, #tpu.memory_space<vmem>>, vector<1x128x128xf32>
    %142 = vector.shape_cast %141 : vector<1x128x128xf32> to vector<128x128xf32>
    %cst_148 = arith.constant dense<0.000000e+00> : vector<256x128xf32>
    %143 = tpu.matmul %140, %142, %cst_148 {dimension_numbers = #tpu.dot_dimension_numbers<[1], [0], [0], [1], [0, 0, 1, 1], [], []>} : vector<256x128xf32>, vector<128x128xf32>, vector<256x128xf32> -> vector<256x128xf32>
    %c0_149 = arith.constant 0 : index
    %c0_150 = arith.constant 0 : index
    %144 = vector.load %arg9[%c0_149, %c0_150] : memref<288x128xf32, #tpu.memory_space<vmem>>, vector<256x128xf32>
    %145 = arith.addf %144, %143 : vector<256x128xf32>
    %c0_151 = arith.constant 0 : index
    %c0_152 = arith.constant 0 : index
    %146 = vector.load %arg9[%c0_151, %c0_152] : memref<288x128xf32, #tpu.memory_space<vmem>>, vector<256x128xf32>
    tpu.vector_store %arg9[%c0_151, %c0_152], %145 {strides = array<i32>} : memref<288x128xf32, #tpu.memory_space<vmem>>, vector<256x128xf32>,
    %c1_153 = arith.constant 1 : index
    %c1_154 = arith.constant 1 : index
    %c0_155 = arith.constant 0 : index
    %147 = vector.load %arg8[%c1_153, %c1_154, %c0_155] : memref<18x18x128xf32, #tpu.memory_space<vmem>>, vector<16x16x128xf32>
    %148 = vector.shape_cast %147 : vector<16x16x128xf32> to vector<256x128xf32>
    %c4_156 = arith.constant 4 : index
    %c0_157 = arith.constant 0 : index
    %c0_158 = arith.constant 0 : index
    %149 = vector.load %arg5[%c4_156, %c0_157, %c0_158] : memref<9x128x128xf32, #tpu.memory_space<vmem>>, vector<1x128x128xf32>
    %150 = vector.shape_cast %149 : vector<1x128x128xf32> to vector<128x128xf32>
    %cst_159 = arith.constant dense<0.000000e+00> : vector<256x128xf32>
    %151 = tpu.matmul %148, %150, %cst_159 {dimension_numbers = #tpu.dot_dimension_numbers<[1], [0], [0], [1], [0, 0, 1, 1], [], []>} : vector<256x128xf32>, vector<128x128xf32>, vector<256x128xf32> -> vector<256x128xf32>
    %c0_160 = arith.constant 0 : index
    %c0_161 = arith.constant 0 : index
    %152 = vector.load %arg9[%c0_160, %c0_161] : memref<288x128xf32, #tpu.memory_space<vmem>>, vector<256x128xf32>
    %153 = arith.addf %152, %151 : vector<256x128xf32>
    %c0_162 = arith.constant 0 : index
    %c0_163 = arith.constant 0 : index
    %154 = vector.load %arg9[%c0_162, %c0_163] : memref<288x128xf32, #tpu.memory_space<vmem>>, vector<256x128xf32>
    tpu.vector_store %arg9[%c0_162, %c0_163], %153 {strides = array<i32>} : memref<288x128xf32, #tpu.memory_space<vmem>>, vector<256x128xf32>,
    %c1_164 = arith.constant 1 : index
    %c2_165 = arith.constant 2 : index
    %c0_166 = arith.constant 0 : index
    %155 = vector.load %arg8[%c1_164, %c2_165, %c0_166] : memref<18x18x128xf32, #tpu.memory_space<vmem>>, vector<16x16x128xf32>
    %156 = vector.shape_cast %155 : vector<16x16x128xf32> to vector<256x128xf32>
    %c5_167 = arith.constant 5 : index
    %c0_168 = arith.constant 0 : index
    %c0_169 = arith.constant 0 : index
    %157 = vector.load %arg5[%c5_167, %c0_168, %c0_169] : memref<9x128x128xf32, #tpu.memory_space<vmem>>, vector<1x128x128xf32>
    %158 = vector.shape_cast %157 : vector<1x128x128xf32> to vector<128x128xf32>
    %cst_170 = arith.constant dense<0.000000e+00> : vector<256x128xf32>
    %159 = tpu.matmul %156, %158, %cst_170 {dimension_numbers = #tpu.dot_dimension_numbers<[1], [0], [0], [1], [0, 0, 1, 1], [], []>} : vector<256x128xf32>, vector<128x128xf32>, vector<256x128xf32> -> vector<256x128xf32>
    %c0_171 = arith.constant 0 : index
    %c0_172 = arith.constant 0 : index
    %160 = vector.load %arg9[%c0_171, %c0_172] : memref<288x128xf32, #tpu.memory_space<vmem>>, vector<256x128xf32>
    %161 = arith.addf %160, %159 : vector<256x128xf32>
    %c0_173 = arith.constant 0 : index
    %c0_174 = arith.constant 0 : index
    %162 = vector.load %arg9[%c0_173, %c0_174] : memref<288x128xf32, #tpu.memory_space<vmem>>, vector<256x128xf32>
    tpu.vector_store %arg9[%c0_173, %c0_174], %161 {strides = array<i32>} : memref<288x128xf32, #tpu.memory_space<vmem>>, vector<256x128xf32>,
    %c2_175 = arith.constant 2 : index
    %c0_176 = arith.constant 0 : index
    %c0_177 = arith.constant 0 : index
    %163 = vector.load %arg8[%c2_175, %c0_176, %c0_177] : memref<18x18x128xf32, #tpu.memory_space<vmem>>, vector<16x16x128xf32>
    %164 = vector.shape_cast %163 : vector<16x16x128xf32> to vector<256x128xf32>
    %c6_178 = arith.constant 6 : index
    %c0_179 = arith.constant 0 : index
    %c0_180 = arith.constant 0 : index
    %165 = vector.load %arg5[%c6_178, %c0_179, %c0_180] : memref<9x128x128xf32, #tpu.memory_space<vmem>>, vector<1x128x128xf32>
    %166 = vector.shape_cast %165 : vector<1x128x128xf32> to vector<128x128xf32>
    %cst_181 = arith.constant dense<0.000000e+00> : vector<256x128xf32>
    %167 = tpu.matmul %164, %166, %cst_181 {dimension_numbers = #tpu.dot_dimension_numbers<[1], [0], [0], [1], [0, 0, 1, 1], [], []>} : vector<256x128xf32>, vector<128x128xf32>, vector<256x128xf32> -> vector<256x128xf32>
    %c0_182 = arith.constant 0 : index
    %c0_183 = arith.constant 0 : index
    %168 = vector.load %arg9[%c0_182, %c0_183] : memref<288x128xf32, #tpu.memory_space<vmem>>, vector<256x128xf32>
    %169 = arith.addf %168, %167 : vector<256x128xf32>
    %c0_184 = arith.constant 0 : index
    %c0_185 = arith.constant 0 : index
    %170 = vector.load %arg9[%c0_184, %c0_185] : memref<288x128xf32, #tpu.memory_space<vmem>>, vector<256x128xf32>
    tpu.vector_store %arg9[%c0_184, %c0_185], %169 {strides = array<i32>} : memref<288x128xf32, #tpu.memory_space<vmem>>, vector<256x128xf32>,
    %c2_186 = arith.constant 2 : index
    %c1_187 = arith.constant 1 : index
    %c0_188 = arith.constant 0 : index
    %171 = vector.load %arg8[%c2_186, %c1_187, %c0_188] : memref<18x18x128xf32, #tpu.memory_space<vmem>>, vector<16x16x128xf32>
    %172 = vector.shape_cast %171 : vector<16x16x128xf32> to vector<256x128xf32>
    %c7_189 = arith.constant 7 : index
    %c0_190 = arith.constant 0 : index
    %c0_191 = arith.constant 0 : index
    %173 = vector.load %arg5[%c7_189, %c0_190, %c0_191] : memref<9x128x128xf32, #tpu.memory_space<vmem>>, vector<1x128x128xf32>
    %174 = vector.shape_cast %173 : vector<1x128x128xf32> to vector<128x128xf32>
    %cst_192 = arith.constant dense<0.000000e+00> : vector<256x128xf32>
    %175 = tpu.matmul %172, %174, %cst_192 {dimension_numbers = #tpu.dot_dimension_numbers<[1], [0], [0], [1], [0, 0, 1, 1], [], []>} : vector<256x128xf32>, vector<128x128xf32>, vector<256x128xf32> -> vector<256x128xf32>
    %c0_193 = arith.constant 0 : index
    %c0_194 = arith.constant 0 : index
    %176 = vector.load %arg9[%c0_193, %c0_194] : memref<288x128xf32, #tpu.memory_space<vmem>>, vector<256x128xf32>
    %177 = arith.addf %176, %175 : vector<256x128xf32>
    %c0_195 = arith.constant 0 : index
    %c0_196 = arith.constant 0 : index
    %178 = vector.load %arg9[%c0_195, %c0_196] : memref<288x128xf32, #tpu.memory_space<vmem>>, vector<256x128xf32>
    tpu.vector_store %arg9[%c0_195, %c0_196], %177 {strides = array<i32>} : memref<288x128xf32, #tpu.memory_space<vmem>>, vector<256x128xf32>,
    %c2_197 = arith.constant 2 : index
    %c2_198 = arith.constant 2 : index
    %c0_199 = arith.constant 0 : index
    %179 = vector.load %arg8[%c2_197, %c2_198, %c0_199] : memref<18x18x128xf32, #tpu.memory_space<vmem>>, vector<16x16x128xf32>
    %180 = vector.shape_cast %179 : vector<16x16x128xf32> to vector<256x128xf32>
    %c8_200 = arith.constant 8 : index
    %c0_201 = arith.constant 0 : index
    %c0_202 = arith.constant 0 : index
    %181 = vector.load %arg5[%c8_200, %c0_201, %c0_202] : memref<9x128x128xf32, #tpu.memory_space<vmem>>, vector<1x128x128xf32>
    %182 = vector.shape_cast %181 : vector<1x128x128xf32> to vector<128x128xf32>
    %cst_203 = arith.constant dense<0.000000e+00> : vector<256x128xf32>
    %183 = tpu.matmul %180, %182, %cst_203 {dimension_numbers = #tpu.dot_dimension_numbers<[1], [0], [0], [1], [0, 0, 1, 1], [], []>} : vector<256x128xf32>, vector<128x128xf32>, vector<256x128xf32> -> vector<256x128xf32>
    %c0_204 = arith.constant 0 : index
    %c0_205 = arith.constant 0 : index
    %184 = vector.load %arg9[%c0_204, %c0_205] : memref<288x128xf32, #tpu.memory_space<vmem>>, vector<256x128xf32>
    %185 = arith.addf %184, %183 : vector<256x128xf32>
    %c0_206 = arith.constant 0 : index
    %c0_207 = arith.constant 0 : index
    %186 = vector.load %arg9[%c0_206, %c0_207] : memref<288x128xf32, #tpu.memory_space<vmem>>, vector<256x128xf32>
    tpu.vector_store %arg9[%c0_206, %c0_207], %185 {strides = array<i32>} : memref<288x128xf32, #tpu.memory_space<vmem>>, vector<256x128xf32>,
    %c0_208 = arith.constant 0 : index
    %c0_209 = arith.constant 0 : index
    %187 = vector.load %arg9[%c0_208, %c0_209] : memref<288x128xf32, #tpu.memory_space<vmem>>, vector<256x128xf32>
    %c0_210 = arith.constant 0 : index
    %c0_211 = arith.constant 0 : index
    %188 = vector.load %arg6[%c0_210, %c0_211] : memref<1x128xf32, #tpu.memory_space<vmem>>, vector<1x128xf32>
    %189 = vector.shape_cast %188 : vector<1x128xf32> to vector<128xf32>
    %190 = vector.shape_cast %189 : vector<128xf32> to vector<1x128xf32>
    %191 = vector.broadcast %190 : vector<1x128xf32> to vector<256x128xf32>
    %192 = arith.addf %187, %191 : vector<256x128xf32>
    %193 = vector.shape_cast %192 : vector<256x128xf32> to vector<16x16x128xf32>
    %c0_212 = arith.constant 0 : index
    %c0_213 = arith.constant 0 : index
    %c0_214 = arith.constant 0 : index
    %c0_215 = arith.constant 0 : index
    %194 = vector.load %arg7[%c0_212, %c0_213, %c0_214, %c0_215] : memref<1x16x16x128xf32, #tpu.memory_space<vmem>>, vector<1x16x16x128xf32>
    %195 = vector.shape_cast %194 : vector<1x16x16x128xf32> to vector<16x16x128xf32>
    %196 = vector.shape_cast %193 : vector<16x16x128xf32> to vector<1x16x16x128xf32>
    tpu.vector_store %arg7[%c0_212, %c0_213, %c0_214, %c0_215], %196 {strides = array<i32>} : memref<1x16x16x128xf32, #tpu.memory_space<vmem>>, vector<1x16x16x128xf32>,
    return
  }
  func.func @transform_0(%arg0: i32, %arg1: i32) -> (i32, i32, i32, i32) {
    %c0_i32 = arith.constant 0 : i32
    %c0_i32_0 = arith.constant 0 : i32
    %c0_i32_1 = arith.constant 0 : i32
    %c0_i32_2 = arith.constant 0 : i32
    return %arg0, %c0_i32, %c0_i32_0, %c0_i32_1 : i32, i32, i32, i32
  }
  func.func @transform_1(%arg0: i32, %arg1: i32) -> (i32, i32, i32) {
    %c0_i32 = arith.constant 0 : i32
    %c0_i32_0 = arith.constant 0 : i32
    %c0_i32_1 = arith.constant 0 : i32
    %c0_i32_2 = arith.constant 0 : i32
    return %c0_i32, %c0_i32_0, %c0_i32_1 : i32, i32, i32
  }
  func.func @transform_2(%arg0: i32, %arg1: i32) -> (i32, i32) {
    %c0_i32 = arith.constant 0 : i32
    %c0_i32_0 = arith.constant 0 : i32
    %c0_i32_1 = arith.constant 0 : i32
    return %c0_i32, %c0_i32_0 : i32, i32
  }
  func.func @transform_3(%arg0: i32, %arg1: i32) -> (i32, i32, i32) {
    %c0_i32 = arith.constant 0 : i32
    %c0_i32_0 = arith.constant 0 : i32
    %c0_i32_1 = arith.constant 0 : i32
    %c0_i32_2 = arith.constant 0 : i32
    return %c0_i32, %c0_i32_0, %c0_i32_1 : i32, i32, i32
  }
  func.func @transform_4(%arg0: i32, %arg1: i32) -> (i32, i32) {
    %c0_i32 = arith.constant 0 : i32
    %c0_i32_0 = arith.constant 0 : i32
    %c0_i32_1 = arith.constant 0 : i32
    return %c0_i32, %c0_i32_0 : i32, i32
  }
  func.func @transform_5(%arg0: i32, %arg1: i32) -> (i32, i32, i32, i32) {
    %c0_i32 = arith.constant 0 : i32
    %c0_i32_0 = arith.constant 0 : i32
    %c0_i32_1 = arith.constant 0 : i32
    return %arg0, %arg1, %c0_i32, %c0_i32_0 : i32, i32, i32, i32
  }
}

</mosaic_0001>

<llo_original>
// kernel: tpu_custom_call.1
$region0: #{tpu_custom_call.1}
  #allocation0 [shape = 'u32[]', space=smem, size = 0x4, offset = 0x4, fixed_abs, tag = 'smem constant byte address 0x4 - core index']
  #allocation1 [shape = 'u32[144,128]{1,0:T(1,128)}', space=vmem, size = 0x12000, scoped, tag = 'internal scratch']
  #allocation2 [shape = 'f32[18,18,128]{2,1,0:T(8,128)}', space=vmem, size = 0x36000, scoped, tag = 'scratch operand']
  #allocation3 [shape = 'f32[288,128]{1,0:T(8,128)}', space=vmem, size = 0x24000, scoped, tag = 'scratch operand']
  %s0 = inlined_call_operand.vmem [shape: f32[2,20,18,128], index: 0, kind: input, shape index: {}]
  %s1 = inlined_call_operand.vmem [shape: f32[9,128,128], index: 1, kind: input, shape index: {}]
  %s2 = inlined_call_operand.vmem [shape: f32[1,128], index: 2, kind: input, shape index: {}]
  %s3 = inlined_call_operand.hbm [shape: f32[9,128,128], index: 3, kind: input, shape index: {}]
  %s4 = inlined_call_operand.vmem [shape: f32[1,128], index: 4, kind: input, shape index: {}]
  %s5 = inlined_call_operand.hbm [shape: f32[2,16,16,128], index: 5, kind: output, shape index: {}]
  %s6 = sld [smem:[#allocation0]]
  $region61: #{tpu_custom_call.1} parent=0
    _
  %s8 = ssub.s32 1, %s6
  %s9 = scalar_select 0, %s8, %s6
  $region1: #{tpu_custom_call.1} parent=0
    #allocation4 [shape = 'u8[589824]{0}', space=vmem, size = 0x90000, scoped, tag = 'input window, operand 3, single buffered']
    #allocation5 [shape = 's32[2]{0}', space=sflag, size = 0x8, scoped, tag = 'scoped memory for tpu_custom_call.1']
    #allocation6 [shape = 's32[2]{0}', space=sflag, size = 0x8, scoped, tag = 'scoped memory for tpu_custom_call.1']
    #allocation7 [shape = 'u8[262144]{0}', space=vmem, size = 0x40000, scoped, tag = 'output window, operand 0']
    %10 = vsyncpa [#allocation5], 0
    %11 = vsyncpa [#allocation6], 0
    %s12 = scalar_lea.sflag [#allocation6], 1
    %13 = vsyncpa %s12, 0
    loop: start=0, step=1, limit=4
    $region2: #{tpu_custom_call.1} parent=1 // loop_pre_header
      _
    $region3: #{tpu_custom_call.1} parent=1 // loop_header
      %s15 = sphi 0, %s19
      %p16 = scmp.ge.s32.totalorder %s15, 4
      %s22 = sphi 0, %s34
      %s23 = sphi 0, %s30
      %s24 = sphi 0, %s22
      %s25 = sphi 0, %s23
      %s26 = sphi 0, %s24
      %s27 = sphi 0, %s25
      %s37 = sphi 0, %s39
      %s40 = sphi 0, %s37
      %s41 = sphi 0, %s40
      %s57 = sphi 0, %s41
      %s61 = sphi 0, %s61
      %s63 = sphi 0, %s61
      %s64 = sphi 0, %s63
      %s78 = sphi 0, %s64
      %s82 = sphi 0, %s82
      %s84 = sphi 0, %s82
      %s85 = sphi 0, %s84
      %s99 = sphi 0, %s85
      %s103 = sphi 0, %s103
      %s105 = sphi 0, %s103
      %s106 = sphi 0, %s105
      %s120 = sphi 0, %s106
      %s124 = sphi 0, %s124
      %s126 = sphi 0, %s124
      %s127 = sphi 0, %s126
      %s141 = sphi 0, %s127
      %s149 = sphi 0, %s151
      %s152 = sphi 0, %s149
      %s153 = sphi 0, %s152
      %s169 = sphi 0, %s153
    $region4: #{tpu_custom_call.1} parent=1 // loop_header_branch
      %18 = sbr.rel (%p16) target = $region8
    $region5: #{tpu_custom_call.1} parent=1 // loop_body
      %s20 = ssub.s32 %s15, 1
      %s21 = ssub.s32 %s15, 2
      %s28 = sadd.s32 1, %s23
      %p29 = scmp.ge.s32.totalorder %s28, 1
      %s30 = scalar_select %p29, 0, %s28
      %s31 = sadd.s32 1, %s22
      %s32 = scalar_select %p29, %s31, %s22
      %p33 = scmp.ge.s32.totalorder %s32, 2
      %s34 = scalar_select %p33, 0, %s32
      %s35 = ssub.s32 %s22, %s34
      %p36 = scmp.eq.s32.totalorder %s35, 0
      %s38 = sadd.s32 %s37, 1
      %s39 = scalar_select %p36, %s37, %s38
      %p42 = pneg %p36
      %p43 = scmp.eq.s32.totalorder %s15, 1
      %p44 = por %p42, %p43
      %p45 = scmp.ne.s32.totalorder %s37, %s40
      %p46 = scmp.eq.s32.totalorder %s15, 0
      %p47 = por %p45, %p46
      %p48 = scmp.ne.s32.totalorder %s37, %s40
      %p49 = scmp.eq.s32.totalorder %s20, 1
      %p50 = por %p48, %p49
      %p51 = scmp.ne.s32.totalorder %s40, %s41
      %p52 = scmp.eq.s32.totalorder %s20, 0
      %p53 = por %p51, %p52
      %p54 = scmp.ne.s32.totalorder %s40, %s41
      %p55 = scmp.eq.s32.totalorder %s21, 1
      %p56 = por %p54, %p55
      %p58 = scmp.ne.s32.totalorder %s41, %s57
      %p59 = scmp.eq.s32.totalorder %s21, 0
      %p60 = por %p58, %p59
      %s62 = sadd.s32 %s61, 1
      %p65 = scmp.eq.s32.totalorder %s15, 1
      %p66 = scmp.ne.s32.totalorder %s61, %s63
      %p67 = scmp.eq.s32.totalorder %s15, 0
      %p68 = por %p66, %p67
      %p69 = scmp.ne.s32.totalorder %s61, %s63
      %p70 = scmp.eq.s32.totalorder %s20, 1
      %p71 = por %p69, %p70
      %p72 = scmp.ne.s32.totalorder %s63, %s64
      %p73 = scmp.eq.s32.totalorder %s20, 0
      %p74 = por %p72, %p73
      %p75 = scmp.ne.s32.totalorder %s63, %s64
      %p76 = scmp.eq.s32.totalorder %s21, 1
      %p77 = por %p75, %p76
      %p79 = scmp.ne.s32.totalorder %s64, %s78
      %p80 = scmp.eq.s32.totalorder %s21, 0
      %p81 = por %p79, %p80
      %s83 = sadd.s32 %s82, 1
      %p86 = scmp.eq.s32.totalorder %s15, 1
      %p87 = scmp.ne.s32.totalorder %s82, %s84
      %p88 = scmp.eq.s32.totalorder %s15, 0
      %p89 = por %p87, %p88
      %p90 = scmp.ne.s32.totalorder %s82, %s84
      %p91 = scmp.eq.s32.totalorder %s20, 1
      %p92 = por %p90, %p91
      %p93 = scmp.ne.s32.totalorder %s84, %s85
      %p94 = scmp.eq.s32.totalorder %s20, 0
      %p95 = por %p93, %p94
      %p96 = scmp.ne.s32.totalorder %s84, %s85
      %p97 = scmp.eq.s32.totalorder %s21, 1
      %p98 = por %p96, %p97
      %p100 = scmp.ne.s32.totalorder %s85, %s99
      %p101 = scmp.eq.s32.totalorder %s21, 0
      %p102 = por %p100, %p101
      %s104 = sadd.s32 %s103, 1
      %p107 = scmp.eq.s32.totalorder %s15, 1
      %p108 = scmp.ne.s32.totalorder %s103, %s105
      %p109 = scmp.eq.s32.totalorder %s15, 0
      %p110 = por %p108, %p109
      %p111 = scmp.ne.s32.totalorder %s103, %s105
      %p112 = scmp.eq.s32.totalorder %s20, 1
      %p113 = por %p111, %p112
      %p114 = scmp.ne.s32.totalorder %s105, %s106
      %p115 = scmp.eq.s32.totalorder %s20, 0
      %p116 = por %p114, %p115
      %p117 = scmp.ne.s32.totalorder %s105, %s106
      %p118 = scmp.eq.s32.totalorder %s21, 1
      %p119 = por %p117, %p118
      %p121 = scmp.ne.s32.totalorder %s106, %s120
      %p122 = scmp.eq.s32.totalorder %s21, 0
      %p123 = por %p121, %p122
      %s125 = sadd.s32 %s124, 1
      %p128 = scmp.eq.s32.totalorder %s15, 1
      %p129 = scmp.ne.s32.totalorder %s124, %s126
      %p130 = scmp.eq.s32.totalorder %s15, 0
      %p131 = por %p129, %p130
      %p132 = scmp.ne.s32.totalorder %s124, %s126
      %p133 = scmp.eq.s32.totalorder %s20, 1
      %p134 = por %p132, %p133
      %p135 = scmp.ne.s32.totalorder %s126, %s127
      %p136 = scmp.eq.s32.totalorder %s20, 0
      %p137 = por %p135, %p136
      %p138 = scmp.ne.s32.totalorder %s126, %s127
      %p139 = scmp.eq.s32.totalorder %s21, 1
      %p140 = por %p138, %p139
      %p142 = scmp.ne.s32.totalorder %s127, %s141
      %p143 = scmp.eq.s32.totalorder %s21, 0
      %p144 = por %p142, %p143
      %s145 = ssub.s32 %s22, %s34
      %s146 = ssub.s32 %s23, %s30
      %s147 = sor.u32 %s145, %s146
      %p148 = scmp.eq.s32.totalorder %s147, 0
      %s150 = sadd.s32 %s149, 1
      %s151 = scalar_select %p148, %s149, %s150
      %p154 = pneg %p148
      %p155 = scmp.eq.s32.totalorder %s15, 1
      %p156 = por %p154, %p155
      %p157 = scmp.ne.s32.totalorder %s149, %s152
      %p158 = scmp.eq.s32.totalorder %s15, 0
      %p159 = por %p157, %p158
      %p160 = scmp.ne.s32.totalorder %s149, %s152
      %p161 = scmp.eq.s32.totalorder %s20, 1
      %p162 = por %p160, %p161
      %p163 = scmp.ne.s32.totalorder %s152, %s153
      %p164 = scmp.eq.s32.totalorder %s20, 0
      %p165 = por %p163, %p164
      %p166 = scmp.ne.s32.totalorder %s152, %s153
      %p167 = scmp.eq.s32.totalorder %s21, 1
      %p168 = por %p166, %p167
      %p170 = scmp.ne.s32.totalorder %s153, %s169
      %p171 = scmp.eq.s32.totalorder %s21, 0
      %p172 = por %p170, %p171
      %p173 = scmp.le.s32.totalorder 1, %s15
      %p174 = scmp.lt.s32.totalorder %s15, 3
      %p175 = pnand %p173, %p174
      %p176 = pneg %p175
      // Predicated region
      $region9: #{tpu_custom_call.1} parent=5 // pred_check
        _
      $region10: #{tpu_custom_call.1} parent=5 // pred_check_branch
        %178 = sbr.rel (%p175) target = $region12
      $region11: #{tpu_custom_call.1} parent=5 // pred_region
        %s179 = ssub.s32 %s15, 1
        // Predicated region
        $region13: #{tpu_custom_call.1} parent=11 // pred_check
          %p180 = pneg %p74
        $region14: #{tpu_custom_call.1} parent=11 // pred_check_branch
          %182 = sbr.rel (%p180) target = $region16
        $region15: #{tpu_custom_call.1} parent=11 // pred_region
          _
        $region16: #{tpu_custom_call.1} parent=11 // pred_fallthru
          _
        // Predicated region
        $region17: #{tpu_custom_call.1} parent=11 // pred_check
          %p183 = pneg %p95
        $region18: #{tpu_custom_call.1} parent=11 // pred_check_branch
          %185 = sbr.rel (%p183) target = $region20
        $region19: #{tpu_custom_call.1} parent=11 // pred_region
          _
        $region20: #{tpu_custom_call.1} parent=11 // pred_fallthru
          _
        // Predicated region
        $region21: #{tpu_custom_call.1} parent=11 // pred_check
          %p186 = pneg %p116
        $region22: #{tpu_custom_call.1} parent=11 // pred_check_branch
          %188 = sbr.rel (%p186) target = $region24
        $region23: #{tpu_custom_call.1} parent=11 // pred_region
          %s190 = ssub.s32 18432, 18432
          %191 = vsyncadd [#allocation5], %s190
          %s192 = sshll.u32 [#allocation4], 4
          %s193 = int_to_ptr.vmem [resolvable:$true] %s192
          %198 = dma.hbm_to_vmem [thread:$0]  %s3, 18432, %s193, [#allocation5], 128, 128, 8
        $region24: #{tpu_custom_call.1} parent=11 // pred_fallthru
          _
        // Predicated region
        $region25: #{tpu_custom_call.1} parent=11 // pred_check
          %p199 = pneg %p137
        $region26: #{tpu_custom_call.1} parent=11 // pred_check_branch
          %201 = sbr.rel (%p199) target = $region28
        $region27: #{tpu_custom_call.1} parent=11 // pred_region
          _
        $region28: #{tpu_custom_call.1} parent=11 // pred_fallthru
          _
      $region12: #{tpu_custom_call.1} parent=5 // pred_fallthru
        _
      %p202 = scmp.lt.s32.totalorder %s15, 2
      // Predicated region
      $region29: #{tpu_custom_call.1} parent=5 // pred_check
        %p203 = pneg %p202
      $region30: #{tpu_custom_call.1} parent=5 // pred_check_branch
        %205 = sbr.rel (%p203) target = $region32
      $region31: #{tpu_custom_call.1} parent=5 // pred_region
        // Predicated region
        $region33: #{tpu_custom_call.1} parent=31 // pred_check
          %p206 = pneg %p47
        $region34: #{tpu_custom_call.1} parent=31 // pred_check_branch
          %208 = sbr.rel (%p206) target = $region36
        $region35: #{tpu_custom_call.1} parent=31 // pred_region
          %p209 = scmp.lt.s32.totalorder %s22, 1
          %s210 = scalar_select %p209, %s22, 1
          %s211 = smul.addr %s210, 60
          %s212 = smul.addr %s211, 8
          %s213 = scalar_lea.vmem %s0, %s212
        $region36: #{tpu_custom_call.1} parent=31 // pred_fallthru
          _
      $region32: #{tpu_custom_call.1} parent=5 // pred_fallthru
        _
      %p214 = scmp.le.s32.totalorder 1, %s15
      %p215 = scmp.lt.s32.totalorder %s15, 3
      %p216 = pnand %p214, %p215
      %p217 = pneg %p216
      // Predicated region
      $region37: #{tpu_custom_call.1} parent=5 // pred_check
        _
      $region38: #{tpu_custom_call.1} parent=5 // pred_check_branch
        %219 = sbr.rel (%p216) target = $region40
      $region39: #{tpu_custom_call.1} parent=5 // pred_region
        %s220 = ssub.s32 %s15, 1
        // Predicated region
        $region41: #{tpu_custom_call.1} parent=39 // pred_check
          %p221 = pneg %p116
        $region42: #{tpu_custom_call.1} parent=39 // pred_check_branch
          %223 = sbr.rel (%p221) target = $region44
        $region43: #{tpu_custom_call.1} parent=39 // pred_region
          %224 = dma.done [#allocation5], 18432
        $region44: #{tpu_custom_call.1} parent=39 // pred_fallthru
          _
        %p225 = scmp.lt.s32.totalorder %s24, 1
        %s226 = scalar_select %p225, %s24, 1
        %s227 = smul.addr %s226, 60
        %s228 = smul.addr %s227, 8
        %s229 = scalar_lea.vmem %s0, %s228
        %p230 = pneg %p53
        %p231 = pneg %p50
        %p232 = pneg %p74
        %p233 = pneg %p71
        %p234 = pneg %p95
        %p235 = pneg %p92
        %p236 = pneg %p116
        %p237 = pneg %p113
        %p238 = pneg %p137
        %p239 = pneg %p134
        %p240 = pneg %p165
        %p241 = pneg %p162
        %s242 = sand.u32 %s152, 1
        %s243 = scalar_lea.sflag [#allocation6], %s242
        %s244 = sand.u32 %s152, 1
        %s245 = smul.addr %s244, 256
        %s246 = scalar_lea.vmem [#allocation7], %s245
        %p247 = scmp.lt.s32.totalorder %s24, 1
        %s248 = scalar_select %p247, %s24, 1
        %s249 = smul.addr %s248, 60
        %s250 = smul.addr %s249, 8
        %s251 = scalar_lea.vmem %s0, %s250
        %s252 = smul.u32 16, %s25
        %s253 = smul.u32 %s25, 16
        %s254 = smul.u32 %s253, 24
        %s255 = scalar_lea.vmem %s251, %s254
        %v256 = vld [vmem:[%s255] sm:$0xff]
        %v257 = vld [vmem:[%s255 + $0x8] sm:$0xff]
        %v258 = vld [vmem:[%s255 + $0x18] sm:$0xff]
        %v259 = vld [vmem:[%s255 + $0x20] sm:$0xff]
        %v260 = vld [vmem:[%s255 + $0x30] sm:$0xff]
        %v261 = vld [vmem:[%s255 + $0x38] sm:$0xff]
        %v262 = vld [vmem:[%s255 + $0x48] sm:$0xff]
        %v263 = vld [vmem:[%s255 + $0x50] sm:$0xff]
        %v264 = vld [vmem:[%s255 + $0x60] sm:$0xff]
        %v265 = vld [vmem:[%s255 + $0x68] sm:$0xff]
        %v266 = vld [vmem:[%s255 + $0x78] sm:$0xff]
        %v267 = vld [vmem:[%s255 + $0x80] sm:$0xff]
        %v268 = vld [vmem:[%s255 + $0x90] sm:$0xff]
        %v269 = vld [vmem:[%s255 + $0x98] sm:$0xff]
        %v270 = vld [vmem:[%s255 + $0xa8] sm:$0xff]
        %v271 = vld [vmem:[%s255 + $0xb0] sm:$0xff]
        %v272 = vld [vmem:[%s255 + $0xc0] sm:$0xff]
        %v273 = vld [vmem:[%s255 + $0xc8] sm:$0xff]
        %v274 = vld [vmem:[%s255 + $0xd8] sm:$0xff]
        %v275 = vld [vmem:[%s255 + $0xe0] sm:$0xff]
        %v276 = vld [vmem:[%s255 + $0xf0] sm:$0xff]
        %v277 = vld [vmem:[%s255 + $0xf8] sm:$0xff]
        %v278 = vld [vmem:[%s255 + $0x108] sm:$0xff]
        %v279 = vld [vmem:[%s255 + $0x110] sm:$0xff]
        %v280 = vld [vmem:[%s255 + $0x120] sm:$0xff]
        %v281 = vld [vmem:[%s255 + $0x128] sm:$0xff]
        %v282 = vld [vmem:[%s255 + $0x138] sm:$0xff]
        %v283 = vld [vmem:[%s255 + $0x140] sm:$0xff]
        %v284 = vld [vmem:[%s255 + $0x150] sm:$0xff]
        %v285 = vld [vmem:[%s255 + $0x158] sm:$0xff]
        %v286 = vld [vmem:[%s255 + $0x168] sm:$0xff]
        %v287 = vld [vmem:[%s255 + $0x170] sm:$0xff]
        %v288 = vld [vmem:[%s255 + $0x180] sm:$0xff]
        %v289 = vld [vmem:[%s255 + $0x188] sm:$0xff]
        %v290 = vld [vmem:[%s255 + $0x198] sm:$0xff]
        %v291 = vld [vmem:[%s255 + $0x1a0] sm:$0xff]
        %v292 = vld [vmem:[%s1] sm:$0xff]
        %v293 = vld [vmem:[%s1 + $0x8] sm:$0xff]
        %v294 = vld [vmem:[%s1 + $0x10] sm:$0xff]
        %v295 = vld [vmem:[%s1 + $0x18] sm:$0xff]
        %v296 = vld [vmem:[%s1 + $0x20] sm:$0xff]
        %v297 = vld [vmem:[%s1 + $0x28] sm:$0xff]
        %v298 = vld [vmem:[%s1 + $0x30] sm:$0xff]
        %v299 = vld [vmem:[%s1 + $0x38] sm:$0xff]
        %v300 = vld [vmem:[%s1 + $0x40] sm:$0xff]
        %v301 = vld [vmem:[%s1 + $0x48] sm:$0xff]
        %v302 = vld [vmem:[%s1 + $0x50] sm:$0xff]
        %v303 = vld [vmem:[%s1 + $0x58] sm:$0xff]
        %v304 = vld [vmem:[%s1 + $0x60] sm:$0xff]
        %v305 = vld [vmem:[%s1 + $0x68] sm:$0xff]
        %v306 = vld [vmem:[%s1 + $0x70] sm:$0xff]
        %v307 = vld [vmem:[%s1 + $0x78] sm:$0xff]
        %308 = vmatprep.subr.mxu0 0.0
        %309 = vmatpush1.msra.mxu0 %v292
        %310 = vmatprep.subr.mxu0 0.0
        %311 = vmatpush1.msra.mxu0 %v293
        %312 = vmatprep.subr.mxu0 0.0
        %313 = vmatpush1.msra.mxu0 %v294
        %314 = vmatprep.subr.mxu0 0.0
        %315 = vmatpush1.msra.mxu0 %v295
        %316 = vmatprep.subr.mxu0 0.0
        %317 = vmatpush1.msra.mxu0 %v296
        %318 = vmatprep.subr.mxu0 0.0
        %319 = vmatpush1.msra.mxu0 %v297
        %320 = vmatprep.subr.mxu0 0.0
        %321 = vmatpush1.msra.mxu0 %v298
        %322 = vmatprep.subr.mxu0 0.0
        %323 = vmatpush1.msra.mxu0 %v299
        %324 = vmatprep.subr.mxu0 0.0
        %325 = vmatpush1.msra.mxu0 %v300
        %326 = vmatprep.subr.mxu0 0.0
        %327 = vmatpush1.msra.mxu0 %v301
        %328 = vmatprep.subr.mxu0 0.0
        %329 = vmatpush1.msra.mxu0 %v302
        %330 = vmatprep.subr.mxu0 0.0
        %331 = vmatpush1.msra.mxu0 %v303
        %332 = vmatprep.subr.mxu0 0.0
        %333 = vmatpush1.msra.mxu0 %v304
        %334 = vmatprep.subr.mxu0 0.0
        %335 = vmatpush1.msra.mxu0 %v305
        %336 = vmatprep.subr.mxu0 0.0
        %337 = vmatpush1.msra.mxu0 %v306
        %338 = vmatprep.subr.mxu0 0.0
        %339 = vmatpush1.msra.mxu0 %v307
        %340 = vmatprep.subr.mxu0 0.0
        %341 = vmatpush1.msra.mxu0 0.0
        %342 = vmatprep.subr.mxu0 0.0
        %343 = vmatpush1.msra.mxu0 0.0
        %344 = vmatprep.subr.mxu0 0.0
        %345 = vmatpush1.msra.mxu0 0.0
        %346 = vmatprep.subr.mxu0 0.0
        %347 = vmatpush1.msra.mxu0 0.0
        %348 = vmatprep.subr.mxu0 0.0
        %349 = vmatpush1.msra.mxu0 0.0
        %350 = vmatprep.subr.mxu0 0.0
        %351 = vmatpush1.msra.mxu0 0.0
        %352 = vmatprep.subr.mxu0 0.0
        %353 = vmatpush1.msra.mxu0 0.0
        %354 = vmatprep.subr.mxu0 0.0
        %355 = vmatpush1.msra.mxu0 0.0
        %356 = vmatprep.subr.mxu0 0.0
        %357 = vmatpush1.msra.mxu0 0.0
        %358 = vmatprep.subr.mxu0 0.0
        %359 = vmatpush1.msra.mxu0 0.0
        %360 = vmatprep.subr.mxu0 0.0
        %361 = vmatpush1.msra.mxu0 0.0
        %362 = vmatprep.subr.mxu0 0.0
        %363 = vmatpush1.msra.mxu0 0.0
        %364 = vmatprep.subr.mxu0 0.0
        %365 = vmatpush1.msra.mxu0 0.0
        %366 = vmatprep.subr.mxu0 0.0
        %367 = vmatpush1.msra.mxu0 0.0
        %368 = vmatprep.subr.mxu0 0.0
        %369 = vmatpush1.msra.mxu0 0.0
        %370 = vmatprep.subr.mxu0 0.0
        %371 = vmatpush1.msra.mxu0 0.0
        %372 = vmatprep.mubr.f32.mxu0 0.0
        %373 = vmatmul.mubr.f32.gmra.mrb[0].mxu0 %v256
        %v374 = vpop.f32.mrb[0].mxu0
        %v375 = vadd.f32 0.0, %v374
        %v376 = vpop.f32.mrb[0].mxu0
        %377 = vmatprep.mubr.f32.mxu0 0.0
        %378 = vmatmul.mubr.f32.gmra.mrb[0].mxu0 %v257
        %v379 = vpop.f32.mrb[0].mxu0
        %v380 = vadd.f32 0.0, %v379
        %v381 = vpop.f32.mrb[0].mxu0
        %382 = vmatprep.mubr.f32.mxu0 0.0
        %383 = vmatmul.mubr.f32.gmra.mrb[0].mxu0 %v258
        %v384 = vpop.f32.mrb[0].mxu0
        %v385 = vadd.f32 0.0, %v384
        %v386 = vpop.f32.mrb[0].mxu0
        %387 = vmatprep.mubr.f32.mxu0 0.0
        %388 = vmatmul.mubr.f32.gmra.mrb[0].mxu0 %v259
        %v389 = vpop.f32.mrb[0].mxu0
        %v390 = vadd.f32 0.0, %v389
        %v391 = vpop.f32.mrb[0].mxu0
        %392 = vmatprep.mubr.f32.mxu0 0.0
        %393 = vmatmul.mubr.f32.gmra.mrb[0].mxu0 %v260
        %v394 = vpop.f32.mrb[0].mxu0
        %v395 = vadd.f32 0.0, %v394
        %v396 = vpop.f32.mrb[0].mxu0
        %397 = vmatprep.mubr.f32.mxu0 0.0
        %398 = vmatmul.mubr.f32.gmra.mrb[0].mxu0 %v261
        %v399 = vpop.f32.mrb[0].mxu0
        %v400 = vadd.f32 0.0, %v399
        %v401 = vpop.f32.mrb[0].mxu0
        %402 = vmatprep.mubr.f32.mxu0 0.0
        %403 = vmatmul.mubr.f32.gmra.mrb[0].mxu0 %v262
        %v404 = vpop.f32.mrb[0].mxu0
        %v405 = vadd.f32 0.0, %v404
        %v406 = vpop.f32.mrb[0].mxu0
        %407 = vmatprep.mubr.f32.mxu0 0.0
        %408 = vmatmul.mubr.f32.gmra.mrb[0].mxu0 %v263
        %v409 = vpop.f32.mrb[0].mxu0
        %v410 = vadd.f32 0.0, %v409
        %v411 = vpop.f32.mrb[0].mxu0
        %412 = vmatprep.mubr.f32.mxu0 0.0
        %413 = vmatmul.mubr.f32.gmra.mrb[0].mxu0 %v264
        %v414 = vpop.f32.mrb[0].mxu0
        %v415 = vadd.f32 0.0, %v414
        %v416 = vpop.f32.mrb[0].mxu0
        %417 = vmatprep.mubr.f32.mxu0 0.0
        %418 = vmatmul.mubr.f32.gmra.mrb[0].mxu0 %v265
        %v419 = vpop.f32.mrb[0].mxu0
        %v420 = vadd.f32 0.0, %v419
        %v421 = vpop.f32.mrb[0].mxu0
        %422 = vmatprep.mubr.f32.mxu0 0.0
        %423 = vmatmul.mubr.f32.gmra.mrb[0].mxu0 %v266
        %v424 = vpop.f32.mrb[0].mxu0
        %v425 = vadd.f32 0.0, %v424
        %v426 = vpop.f32.mrb[0].mxu0
        %427 = vmatprep.mubr.f32.mxu0 0.0
        %428 = vmatmul.mubr.f32.gmra.mrb[0].mxu0 %v267
        %v429 = vpop.f32.mrb[0].mxu0
        %v430 = vadd.f32 0.0, %v429
        %v431 = vpop.f32.mrb[0].mxu0
        %432 = vmatprep.mubr.f32.mxu0 0.0
        %433 = vmatmul.mubr.f32.gmra.mrb[0].mxu0 %v268
        %v434 = vpop.f32.mrb[0].mxu0
        %v435 = vadd.f32 0.0, %v434
        %v436 = vpop.f32.mrb[0].mxu0
        %437 = vmatprep.mubr.f32.mxu0 0.0
        %438 = vmatmul.mubr.f32.gmra.mrb[0].mxu0 %v269
        %v439 = vpop.f32.mrb[0].mxu0
        %v440 = vadd.f32 0.0, %v439
        %v441 = vpop.f32.mrb[0].mxu0
        %442 = vmatprep.mubr.f32.mxu0 0.0
        %443 = vmatmul.mubr.f32.gmra.mrb[0].mxu0 %v270
        %v444 = vpop.f32.mrb[0].mxu0
        %v445 = vadd.f32 0.0, %v444
        %v446 = vpop.f32.mrb[0].mxu0
        %447 = vmatprep.mubr.f32.mxu0 0.0
        %448 = vmatmul.mubr.f32.gmra.mrb[0].mxu0 %v271
        %v449 = vpop.f32.mrb[0].mxu0
        %v450 = vadd.f32 0.0, %v449
        %v451 = vpop.f32.mrb[0].mxu0
        %452 = vmatprep.mubr.f32.mxu0 0.0
        %453 = vmatmul.mubr.f32.gmra.mrb[0].mxu0 %v272
        %v454 = vpop.f32.mrb[0].mxu0
        %v455 = vadd.f32 0.0, %v454
        %v456 = vpop.f32.mrb[0].mxu0
        %457 = vmatprep.mubr.f32.mxu0 0.0
        %458 = vmatmul.mubr.f32.gmra.mrb[0].mxu0 %v273
        %v459 = vpop.f32.mrb[0].mxu0
        %v460 = vadd.f32 0.0, %v459
        %v461 = vpop.f32.mrb[0].mxu0
        %462 = vmatprep.mubr.f32.mxu0 0.0
        %463 = vmatmul.mubr.f32.gmra.mrb[0].mxu0 %v274
        %v464 = vpop.f32.mrb[0].mxu0
        %v465 = vadd.f32 0.0, %v464
        %v466 = vpop.f32.mrb[0].mxu0
        %467 = vmatprep.mubr.f32.mxu0 0.0
        %468 = vmatmul.mubr.f32.gmra.mrb[0].mxu0 %v275
        %v469 = vpop.f32.mrb[0].mxu0
        %v470 = vadd.f32 0.0, %v469
        %v471 = vpop.f32.mrb[0].mxu0
        %472 = vmatprep.mubr.f32.mxu0 0.0
        %473 = vmatmul.mubr.f32.gmra.mrb[0].mxu0 %v276
        %v474 = vpop.f32.mrb[0].mxu0
        %v475 = vadd.f32 0.0, %v474
        %v476 = vpop.f32.mrb[0].mxu0
        %477 = vmatprep.mubr.f32.mxu0 0.0
        %478 = vmatmul.mubr.f32.gmra.mrb[0].mxu0 %v277
        %v479 = vpop.f32.mrb[0].mxu0
        %v480 = vadd.f32 0.0, %v479
        %v481 = vpop.f32.mrb[0].mxu0
        %482 = vmatprep.mubr.f32.mxu0 0.0
        %483 = vmatmul.mubr.f32.gmra.mrb[0].mxu0 %v278
        %v484 = vpop.f32.mrb[0].mxu0
        %v485 = vadd.f32 0.0, %v484
        %v486 = vpop.f32.mrb[0].mxu0
        %487 = vmatprep.mubr.f32.mxu0 0.0
        %488 = vmatmul.mubr.f32.gmra.mrb[0].mxu0 %v279
        %v489 = vpop.f32.mrb[0].mxu0
        %v490 = vadd.f32 0.0, %v489
        %v491 = vpop.f32.mrb[0].mxu0
        %492 = vmatprep.mubr.f32.mxu0 0.0
        %493 = vmatmul.mubr.f32.gmra.mrb[0].mxu0 %v280
        %v494 = vpop.f32.mrb[0].mxu0
        %v495 = vadd.f32 0.0, %v494
        %v496 = vpop.f32.mrb[0].mxu0
        %497 = vmatprep.mubr.f32.mxu0 0.0
        %498 = vmatmul.mubr.f32.gmra.mrb[0].mxu0 %v281
        %v499 = vpop.f32.mrb[0].mxu0
        %v500 = vadd.f32 0.0, %v499
        %v501 = vpop.f32.mrb[0].mxu0
        %502 = vmatprep.mubr.f32.mxu0 0.0
        %503 = vmatmul.mubr.f32.gmra.mrb[0].mxu0 %v282
        %v504 = vpop.f32.mrb[0].mxu0
        %v505 = vadd.f32 0.0, %v504
        %v506 = vpop.f32.mrb[0].mxu0
        %507 = vmatprep.mubr.f32.mxu0 0.0
        %508 = vmatmul.mubr.f32.gmra.mrb[0].mxu0 %v283
        %v509 = vpop.f32.mrb[0].mxu0
        %v510 = vadd.f32 0.0, %v509
        %v511 = vpop.f32.mrb[0].mxu0
        %512 = vmatprep.mubr.f32.mxu0 0.0
        %513 = vmatmul.mubr.f32.gmra.mrb[0].mxu0 %v284
        %v514 = vpop.f32.mrb[0].mxu0
        %v515 = vadd.f32 0.0, %v514
        %v516 = vpop.f32.mrb[0].mxu0
        %517 = vmatprep.mubr.f32.mxu0 0.0
        %518 = vmatmul.mubr.f32.gmra.mrb[0].mxu0 %v285
        %v519 = vpop.f32.mrb[0].mxu0
        %v520 = vadd.f32 0.0, %v519
        %v521 = vpop.f32.mrb[0].mxu0
        %522 = vmatprep.mubr.f32.mxu0 0.0
        %523 = vmatmul.mubr.f32.gmra.mrb[0].mxu0 %v286
        %v524 = vpop.f32.mrb[0].mxu0
        %v525 = vadd.f32 0.0, %v524
        %v526 = vpop.f32.mrb[0].mxu0
        %527 = vmatprep.mubr.f32.mxu0 0.0
        %528 = vmatmul.mubr.f32.gmra.mrb[0].mxu0 %v287
        %v529 = vpop.f32.mrb[0].mxu0
        %v530 = vadd.f32 0.0, %v529
        %v531 = vpop.f32.mrb[0].mxu0
        %532 = vmatprep.mubr.f32.mxu0 0.0
        %533 = vmatmul.mubr.f32.gmra.mrb[0].mxu0 %v288
        %v534 = vpop.f32.mrb[0].mxu0
        %v535 = vadd.f32 0.0, %v534
        %v536 = vpop.f32.mrb[0].mxu0
        %537 = vmatprep.mubr.f32.mxu0 0.0
        %538 = vmatmul.mubr.f32.gmra.mrb[0].mxu0 %v289
        %v539 = vpop.f32.mrb[0].mxu0
        %v540 = vadd.f32 0.0, %v539
        %v541 = vpop.f32.mrb[0].mxu0
        %542 = vmatprep.mubr.f32.mxu0 0.0
        %543 = vmatmul.mubr.f32.gmra.mrb[0].mxu0 %v290
        %v544 = vpop.f32.mrb[0].mxu0
        %v545 = vadd.f32 0.0, %v544
        %v546 = vpop.f32.mrb[0].mxu0
        %547 = vmatprep.mubr.f32.mxu0 0.0
        %548 = vmatmul.mubr.f32.gmra.mrb[0].mxu0 %v291
        %v549 = vpop.f32.mrb[0].mxu0
        %v550 = vadd.f32 0.0, %v549
        %v551 = vpop.f32.mrb[0].mxu0
        %552 = vdwg.mxu0
        %553 = vst [vmem:[#allocation3] sm:$0xff] %v375
        %554 = vst [vmem:[#allocation3 + $0x8] sm:$0xff] %v380
        %555 = vst [vmem:[#allocation3 + $0x10] sm:$0xff] %v385
        %556 = vst [vmem:[#allocation3 + $0x18] sm:$0xff] %v390
        %557 = vst [vmem:[#allocation3 + $0x20] sm:$0xff] %v395
        %558 = vst [vmem:[#allocation3 + $0x28] sm:$0xff] %v400
        %559 = vst [vmem:[#allocation3 + $0x30] sm:$0xff] %v405
        %560 = vst [vmem:[#allocation3 + $0x38] sm:$0xff] %v410
        %561 = vst [vmem:[#allocation3 + $0x40] sm:$0xff] %v415
        %562 = vst [vmem:[#allocation3 + $0x48] sm:$0xff] %v420
        %563 = vst [vmem:[#allocation3 + $0x50] sm:$0xff] %v425
        %564 = vst [vmem:[#allocation3 + $0x58] sm:$0xff] %v430
        %565 = vst [vmem:[#allocation3 + $0x60] sm:$0xff] %v435
        %566 = vst [vmem:[#allocation3 + $0x68] sm:$0xff] %v440
        %567 = vst [vmem:[#allocation3 + $0x70] sm:$0xff] %v445
        %568 = vst [vmem:[#allocation3 + $0x78] sm:$0xff] %v450
        %569 = vst [vmem:[#allocation3 + $0x80] sm:$0xff] %v455
        %570 = vst [vmem:[#allocation3 + $0x88] sm:$0xff] %v460
        %571 = vst [vmem:[#allocation3 + $0x90] sm:$0xff] %v465
        %572 = vst [vmem:[#allocation3 + $0x98] sm:$0xff] %v470
        %573 = vst [vmem:[#allocation3 + $0xa0] sm:$0xff] %v475
        %574 = vst [vmem:[#allocation3 + $0xa8] sm:$0xff] %v480
        %575 = vst [vmem:[#allocation3 + $0xb0] sm:$0xff] %v485
        %576 = vst [vmem:[#allocation3 + $0xb8] sm:$0xff] %v490
        %577 = vst [vmem:[#allocation3 + $0xc0] sm:$0xff] %v495
        %578 = vst [vmem:[#allocation3 + $0xc8] sm:$0xff] %v500
        %579 = vst [vmem:[#allocation3 + $0xd0] sm:$0xff] %v505
        %580 = vst [vmem:[#allocation3 + $0xd8] sm:$0xff] %v510
        %581 = vst [vmem:[#allocation3 + $0xe0] sm:$0xff] %v515
        %582 = vst [vmem:[#allocation3 + $0xe8] sm:$0xff] %v520
        %583 = vst [vmem:[#allocation3 + $0xf0] sm:$0xff] %v525
        %584 = vst [vmem:[#allocation3 + $0xf8] sm:$0xff] %v530
        %585 = vst [vmem:[#allocation3 + $0x100] sm:$0xff] %v535
        %586 = vst [vmem:[#allocation3 + $0x108] sm:$0xff] %v540
        %587 = vst [vmem:[#allocation3 + $0x110] sm:$0xff] %v545
        %588 = vst [vmem:[#allocation3 + $0x118] sm:$0xff] %v550
        %v589 = vld [vmem:[%s255 + $0x1] sm:$0xff]
        %v590 = vld [vmem:[%s255 + $0x9] sm:$0xff]
        %v591 = vld [vmem:[%s255 + $0x19] sm:$0xff]
        %v592 = vld [vmem:[%s255 + $0x21] sm:$0xff]
        %v593 = vld [vmem:[%s255 + $0x31] sm:$0xff]
        %v594 = vld [vmem:[%s255 + $0x39] sm:$0xff]
        %v595 = vld [vmem:[%s255 + $0x49] sm:$0xff]
        %v596 = vld [vmem:[%s255 + $0x51] sm:$0xff]
        %v597 = vld [vmem:[%s255 + $0x61] sm:$0xff]
        %v598 = vld [vmem:[%s255 + $0x69] sm:$0xff]
        %v599 = vld [vmem:[%s255 + $0x79] sm:$0xff]
        %v600 = vld [vmem:[%s255 + $0x81] sm:$0xff]
        %v601 = vld [vmem:[%s255 + $0x91] sm:$0xff]
        %v602 = vld [vmem:[%s255 + $0x99] sm:$0xff]
        %v603 = vld [vmem:[%s255 + $0xa9] sm:$0xff]
        %v604 = vld [vmem:[%s255 + $0xb1] sm:$0xff]
        %v605 = vld [vmem:[%s255 + $0xc1] sm:$0xff]
        %v606 = vld [vmem:[%s255 + $0xc9] sm:$0xff]
        %v607 = vld [vmem:[%s255 + $0xd9] sm:$0xff]
        %v608 = vld [vmem:[%s255 + $0xe1] sm:$0xff]
        %v609 = vld [vmem:[%s255 + $0xf1] sm:$0xff]
        %v610 = vld [vmem:[%s255 + $0xf9] sm:$0xff]
        %v611 = vld [vmem:[%s255 + $0x109] sm:$0xff]
        %v612 = vld [vmem:[%s255 + $0x111] sm:$0xff]
        %v613 = vld [vmem:[%s255 + $0x121] sm:$0xff]
        %v614 = vld [vmem:[%s255 + $0x129] sm:$0xff]
        %v615 = vld [vmem:[%s255 + $0x139] sm:$0xff]
        %v616 = vld [vmem:[%s255 + $0x141] sm:$0xff]
        %v617 = vld [vmem:[%s255 + $0x151] sm:$0xff]
        %v618 = vld [vmem:[%s255 + $0x159] sm:$0xff]
        %v619 = vld [vmem:[%s255 + $0x169] sm:$0xff]
        %v620 = vld [vmem:[%s255 + $0x171] sm:$0xff]
        %v621 = vld [vmem:[%s255 + $0x181] sm:$0xff]
        %v622 = vld [vmem:[%s255 + $0x189] sm:$0xff]
        %v623 = vld [vmem:[%s255 + $0x199] sm:$0xff]
        %v624 = vld [vmem:[%s255 + $0x1a1] sm:$0xff]
        %s625 = scalar_lea.vmem %s1, 128
        %v626 = vld [vmem:[%s625] sm:$0xff]
        %v627 = vld [vmem:[%s625 + $0x8] sm:$0xff]
        %v628 = vld [vmem:[%s625 + $0x10] sm:$0xff]
        %v629 = vld [vmem:[%s625 + $0x18] sm:$0xff]
        %v630 = vld [vmem:[%s625 + $0x20] sm:$0xff]
        %v631 = vld [vmem:[%s625 + $0x28] sm:$0xff]
        %v632 = vld [vmem:[%s625 + $0x30] sm:$0xff]
        %v633 = vld [vmem:[%s625 + $0x38] sm:$0xff]
        %v634 = vld [vmem:[%s625 + $0x40] sm:$0xff]
        %v635 = vld [vmem:[%s625 + $0x48] sm:$0xff]
        %v636 = vld [vmem:[%s625 + $0x50] sm:$0xff]
        %v637 = vld [vmem:[%s625 + $0x58] sm:$0xff]
        %v638 = vld [vmem:[%s625 + $0x60] sm:$0xff]
        %v639 = vld [vmem:[%s625 + $0x68] sm:$0xff]
        %v640 = vld [vmem:[%s625 + $0x70] sm:$0xff]
        %v641 = vld [vmem:[%s625 + $0x78] sm:$0xff]
        %642 = vmatprep.subr.mxu0 0.0
        %643 = vmatpush1.msra.mxu0 %v626
        %644 = vmatprep.subr.mxu0 0.0
        %645 = vmatpush1.msra.mxu0 %v627
        %646 = vmatprep.subr.mxu0 0.0
        %647 = vmatpush1.msra.mxu0 %v628
        %648 = vmatprep.subr.mxu0 0.0
        %649 = vmatpush1.msra.mxu0 %v629
        %650 = vmatprep.subr.mxu0 0.0
        %651 = vmatpush1.msra.mxu0 %v630
        %652 = vmatprep.subr.mxu0 0.0
        %653 = vmatpush1.msra.mxu0 %v631
        %654 = vmatprep.subr.mxu0 0.0
        %655 = vmatpush1.msra.mxu0 %v632
        %656 = vmatprep.subr.mxu0 0.0
        %657 = vmatpush1.msra.mxu0 %v633
        %658 = vmatprep.subr.mxu0 0.0
        %659 = vmatpush1.msra.mxu0 %v634
        %660 = vmatprep.subr.mxu0 0.0
        %661 = vmatpush1.msra.mxu0 %v635
        %662 = vmatprep.subr.mxu0 0.0
        %663 = vmatpush1.msra.mxu0 %v636
        %664 = vmatprep.subr.mxu0 0.0
        %665 = vmatpush1.msra.mxu0 %v637
        %666 = vmatprep.subr.mxu0 0.0
        %667 = vmatpush1.msra.mxu0 %v638
        %668 = vmatprep.subr.mxu0 0.0
        %669 = vmatpush1.msra.mxu0 %v639
        %670 = vmatprep.subr.mxu0 0.0
        %671 = vmatpush1.msra.mxu0 %v640
        %672 = vmatprep.subr.mxu0 0.0
        %673 = vmatpush1.msra.mxu0 %v641
        %674 = vmatprep.subr.mxu0 0.0
        %675 = vmatpush1.msra.mxu0 0.0
        %676 = vmatprep.subr.mxu0 0.0
        %677 = vmatpush1.msra.mxu0 0.0
        %678 = vmatprep.subr.mxu0 0.0
        %679 = vmatpush1.msra.mxu0 0.0
        %680 = vmatprep.subr.mxu0 0.0
        %681 = vmatpush1.msra.mxu0 0.0
        %682 = vmatprep.subr.mxu0 0.0
        %683 = vmatpush1.msra.mxu0 0.0
        %684 = vmatprep.subr.mxu0 0.0
        %685 = vmatpush1.msra.mxu0 0.0
        %686 = vmatprep.subr.mxu0 0.0
        %687 = vmatpush1.msra.mxu0 0.0
        %688 = vmatprep.subr.mxu0 0.0
        %689 = vmatpush1.msra.mxu0 0.0
        %690 = vmatprep.subr.mxu0 0.0
        %691 = vmatpush1.msra.mxu0 0.0
        %692 = vmatprep.subr.mxu0 0.0
        %693 = vmatpush1.msra.mxu0 0.0
        %694 = vmatprep.subr.mxu0 0.0
        %695 = vmatpush1.msra.mxu0 0.0
        %696 = vmatprep.subr.mxu0 0.0
        %697 = vmatpush1.msra.mxu0 0.0
        %698 = vmatprep.subr.mxu0 0.0
        %699 = vmatpush1.msra.mxu0 0.0
        %700 = vmatprep.subr.mxu0 0.0
        %701 = vmatpush1.msra.mxu0 0.0
        %702 = vmatprep.subr.mxu0 0.0
        %703 = vmatpush1.msra.mxu0 0.0
        %704 = vmatprep.subr.mxu0 0.0
        %705 = vmatpush1.msra.mxu0 0.0
        %706 = vmatprep.mubr.f32.mxu0 0.0
        %707 = vmatmul.mubr.f32.gmra.mrb[0].mxu0 %v589
        %v708 = vpop.f32.mrb[0].mxu0
        %v709 = vadd.f32 0.0, %v708
        %v710 = vpop.f32.mrb[0].mxu0
        %711 = vmatprep.mubr.f32.mxu0 0.0
        %712 = vmatmul.mubr.f32.gmra.mrb[0].mxu0 %v590
        %v713 = vpop.f32.mrb[0].mxu0
        %v714 = vadd.f32 0.0, %v713
        %v715 = vpop.f32.mrb[0].mxu0
        %716 = vmatprep.mubr.f32.mxu0 0.0
        %717 = vmatmul.mubr.f32.gmra.mrb[0].mxu0 %v591
        %v718 = vpop.f32.mrb[0].mxu0
        %v719 = vadd.f32 0.0, %v718
        %v720 = vpop.f32.mrb[0].mxu0
        %721 = vmatprep.mubr.f32.mxu0 0.0
        %722 = vmatmul.mubr.f32.gmra.mrb[0].mxu0 %v592
        %v723 = vpop.f32.mrb[0].mxu0
        %v724 = vadd.f32 0.0, %v723
        %v725 = vpop.f32.mrb[0].mxu0
        %726 = vmatprep.mubr.f32.mxu0 0.0
        %727 = vmatmul.mubr.f32.gmra.mrb[0].mxu0 %v593
        %v728 = vpop.f32.mrb[0].mxu0
        %v729 = vadd.f32 0.0, %v728
        %v730 = vpop.f32.mrb[0].mxu0
        %731 = vmatprep.mubr.f32.mxu0 0.0
        %732 = vmatmul.mubr.f32.gmra.mrb[0].mxu0 %v594
        %v733 = vpop.f32.mrb[0].mxu0
        %v734 = vadd.f32 0.0, %v733
        %v735 = vpop.f32.mrb[0].mxu0
        %736 = vmatprep.mubr.f32.mxu0 0.0
        %737 = vmatmul.mubr.f32.gmra.mrb[0].mxu0 %v595
        %v738 = vpop.f32.mrb[0].mxu0
        %v739 = vadd.f32 0.0, %v738
        %v740 = vpop.f32.mrb[0].mxu0
        %741 = vmatprep.mubr.f32.mxu0 0.0
        %742 = vmatmul.mubr.f32.gmra.mrb[0].mxu0 %v596
        %v743 = vpop.f32.mrb[0].mxu0
        %v744 = vadd.f32 0.0, %v743
        %v745 = vpop.f32.mrb[0].mxu0
        %746 = vmatprep.mubr.f32.mxu0 0.0
        %747 = vmatmul.mubr.f32.gmra.mrb[0].mxu0 %v597
        %v748 = vpop.f32.mrb[0].mxu0
        %v749 = vadd.f32 0.0, %v748
        %v750 = vpop.f32.mrb[0].mxu0
        %751 = vmatprep.mubr.f32.mxu0 0.0
        %752 = vmatmul.mubr.f32.gmra.mrb[0].mxu0 %v598
        %v753 = vpop.f32.mrb[0].mxu0
        %v754 = vadd.f32 0.0, %v753
        %v755 = vpop.f32.mrb[0].mxu0
        %756 = vmatprep.mubr.f32.mxu0 0.0
        %757 = vmatmul.mubr.f32.gmra.mrb[0].mxu0 %v599
        %v758 = vpop.f32.mrb[0].mxu0
        %v759 = vadd.f32 0.0, %v758
        %v760 = vpop.f32.mrb[0].mxu0
        %761 = vmatprep.mubr.f32.mxu0 0.0
        %762 = vmatmul.mubr.f32.gmra.mrb[0].mxu0 %v600
        %v763 = vpop.f32.mrb[0].mxu0
        %v764 = vadd.f32 0.0, %v763
        %v765 = vpop.f32.mrb[0].mxu0
        %766 = vmatprep.mubr.f32.mxu0 0.0
        %767 = vmatmul.mubr.f32.gmra.mrb[0].mxu0 %v601
        %v768 = vpop.f32.mrb[0].mxu0
        %v769 = vadd.f32 0.0, %v768
        %v770 = vpop.f32.mrb[0].mxu0
        %771 = vmatprep.mubr.f32.mxu0 0.0
        %772 = vmatmul.mubr.f32.gmra.mrb[0].mxu0 %v602
        %v773 = vpop.f32.mrb[0].mxu0
        %v774 = vadd.f32 0.0, %v773
        %v775 = vpop.f32.mrb[0].mxu0
        %776 = vmatprep.mubr.f32.mxu0 0.0
        %777 = vmatmul.mubr.f32.gmra.mrb[0].mxu0 %v603
        %v778 = vpop.f32.mrb[0].mxu0
        %v779 = vadd.f32 0.0, %v778
        %v780 = vpop.f32.mrb[0].mxu0
        %781 = vmatprep.mubr.f32.mxu0 0.0
        %782 = vmatmul.mubr.f32.gmra.mrb[0].mxu0 %v604
        %v783 = vpop.f32.mrb[0].mxu0
        %v784 = vadd.f32 0.0, %v783
        %v785 = vpop.f32.mrb[0].mxu0
        %786 = vmatprep.mubr.f32.mxu0 0.0
        %787 = vmatmul.mubr.f32.gmra.mrb[0].mxu0 %v605
        %v788 = vpop.f32.mrb[0].mxu0
        %v789 = vadd.f32 0.0, %v788
        %v790 = vpop.f32.mrb[0].mxu0
        %791 = vmatprep.mubr.f32.mxu0 0.0
        %792 = vmatmul.mubr.f32.gmra.mrb[0].mxu0 %v606
        %v793 = vpop.f32.mrb[0].mxu0
        %v794 = vadd.f32 0.0, %v793
        %v795 = vpop.f32.mrb[0].mxu0
        %796 = vmatprep.mubr.f32.mxu0 0.0
        %797 = vmatmul.mubr.f32.gmra.mrb[0].mxu0 %v607
        %v798 = vpop.f32.mrb[0].mxu0
        %v799 = vadd.f32 0.0, %v798
        %v800 = vpop.f32.mrb[0].mxu0
        %801 = vmatprep.mubr.f32.mxu0 0.0
        %802 = vmatmul.mubr.f32.gmra.mrb[0].mxu0 %v608
        %v803 = vpop.f32.mrb[0].mxu0
        %v804 = vadd.f32 0.0, %v803
        %v805 = vpop.f32.mrb[0].mxu0
        %806 = vmatprep.mubr.f32.mxu0 0.0
        %807 = vmatmul.mubr.f32.gmra.mrb[0].mxu0 %v609
        %v808 = vpop.f32.mrb[0].mxu0
        %v809 = vadd.f32 0.0, %v808
        %v810 = vpop.f32.mrb[0].mxu0
        %811 = vmatprep.mubr.f32.mxu0 0.0
        %812 = vmatmul.mubr.f32.gmra.mrb[0].mxu0 %v610
        %v813 = vpop.f32.mrb[0].mxu0
        %v814 = vadd.f32 0.0, %v813
        %v815 = vpop.f32.mrb[0].mxu0
        %816 = vmatprep.mubr.f32.mxu0 0.0
        %817 = vmatmul.mubr.f32.gmra.mrb[0].mxu0 %v611
        %v818 = vpop.f32.mrb[0].mxu0
        %v819 = vadd.f32 0.0, %v818
        %v820 = vpop.f32.mrb[0].mxu0
        %821 = vmatprep.mubr.f32.mxu0 0.0
        %822 = vmatmul.mubr.f32.gmra.mrb[0].mxu0 %v612
        %v823 = vpop.f32.mrb[0].mxu0
        %v824 = vadd.f32 0.0, %v823
        %v825 = vpop.f32.mrb[0].mxu0
        %826 = vmatprep.mubr.f32.mxu0 0.0
        %827 = vmatmul.mubr.f32.gmra.mrb[0].mxu0 %v613
        %v828 = vpop.f32.mrb[0].mxu0
        %v829 = vadd.f32 0.0, %v828
        %v830 = vpop.f32.mrb[0].mxu0
        %831 = vmatprep.mubr.f32.mxu0 0.0
        %832 = vmatmul.mubr.f32.gmra.mrb[0].mxu0 %v614
        %v833 = vpop.f32.mrb[0].mxu0
        %v834 = vadd.f32 0.0, %v833
        %v835 = vpop.f32.mrb[0].mxu0
        %836 = vmatprep.mubr.f32.mxu0 0.0
        %837 = vmatmul.mubr.f32.gmra.mrb[0].mxu0 %v615
        %v838 = vpop.f32.mrb[0].mxu0
        %v839 = vadd.f32 0.0, %v838
        %v840 = vpop.f32.mrb[0].mxu0
        %841 = vmatprep.mubr.f32.mxu0 0.0
        %842 = vmatmul.mubr.f32.gmra.mrb[0].mxu0 %v616
        %v843 = vpop.f32.mrb[0].mxu0
        %v844 = vadd.f32 0.0, %v843
        %v845 = vpop.f32.mrb[0].mxu0
        %846 = vmatprep.mubr.f32.mxu0 0.0
        %847 = vmatmul.mubr.f32.gmra.mrb[0].mxu0 %v617
        %v848 = vpop.f32.mrb[0].mxu0
        %v849 = vadd.f32 0.0, %v848
        %v850 = vpop.f32.mrb[0].mxu0
        %851 = vmatprep.mubr.f32.mxu0 0.0
        %852 = vmatmul.mubr.f32.gmra.mrb[0].mxu0 %v618
        %v853 = vpop.f32.mrb[0].mxu0
        %v854 = vadd.f32 0.0, %v853
        %v855 = vpop.f32.mrb[0].mxu0
        %856 = vmatprep.mubr.f32.mxu0 0.0
        %857 = vmatmul.mubr.f32.gmra.mrb[0].mxu0 %v619
        %v858 = vpop.f32.mrb[0].mxu0
        %v859 = vadd.f32 0.0, %v858
        %v860 = vpop.f32.mrb[0].mxu0
        %861 = vmatprep.mubr.f32.mxu0 0.0
        %862 = vmatmul.mubr.f32.gmra.mrb[0].mxu0 %v620
        %v863 = vpop.f32.mrb[0].mxu0
        %v864 = vadd.f32 0.0, %v863
        %v865 = vpop.f32.mrb[0].mxu0
        %866 = vmatprep.mubr.f32.mxu0 0.0
        %867 = vmatmul.mubr.f32.gmra.mrb[0].mxu0 %v621
        %v868 = vpop.f32.mrb[0].mxu0
        %v869 = vadd.f32 0.0, %v868
        %v870 = vpop.f32.mrb[0].mxu0
        %871 = vmatprep.mubr.f32.mxu0 0.0
        %872 = vmatmul.mubr.f32.gmra.mrb[0].mxu0 %v622
        %v873 = vpop.f32.mrb[0].mxu0
        %v874 = vadd.f32 0.0, %v873
        %v875 = vpop.f32.mrb[0].mxu0
        %876 = vmatprep.mubr.f32.mxu0 0.0
        %877 = vmatmul.mubr.f32.gmra.mrb[0].mxu0 %v623
        %v878 = vpop.f32.mrb[0].mxu0
        %v879 = vadd.f32 0.0, %v878
        %v880 = vpop.f32.mrb[0].mxu0
        %881 = vmatprep.mubr.f32.mxu0 0.0
        %882 = vmatmul.mubr.f32.gmra.mrb[0].mxu0 %v624
        %v883 = vpop.f32.mrb[0].mxu0
        %v884 = vadd.f32 0.0, %v883
        %v885 = vpop.f32.mrb[0].mxu0
        %886 = vdwg.mxu0
        %v887 = vld [vmem:[#allocation3] sm:$0xff]
        %v888 = vld [vmem:[#allocation3 + $0x8] sm:$0xff]
        %v889 = vld [vmem:[#allocation3 + $0x10] sm:$0xff]
        %v890 = vld [vmem:[#allocation3 + $0x18] sm:$0xff]
        %v891 = vld [vmem:[#allocation3 + $0x20] sm:$0xff]
        %v892 = vld [vmem:[#allocation3 + $0x28] sm:$0xff]
        %v893 = vld [vmem:[#allocation3 + $0x30] sm:$0xff]
        %v894 = vld [vmem:[#allocation3 + $0x38] sm:$0xff]
        %v895 = vld [vmem:[#allocation3 + $0x40] sm:$0xff]
        %v896 = vld [vmem:[#allocation3 + $0x48] sm:$0xff]
        %v897 = vld [vmem:[#allocation3 + $0x50] sm:$0xff]
        %v898 = vld [vmem:[#allocation3 + $0x58] sm:$0xff]
        %v899 = vld [vmem:[#allocation3 + $0x60] sm:$0xff]
        %v900 = vld [vmem:[#allocation3 + $0x68] sm:$0xff]
        %v901 = vld [vmem:[#allocation3 + $0x70] sm:$0xff]
        %v902 = vld [vmem:[#allocation3 + $0x78] sm:$0xff]
        %v903 = vld [vmem:[#allocation3 + $0x80] sm:$0xff]
        %v904 = vld [vmem:[#allocation3 + $0x88] sm:$0xff]
        %v905 = vld [vmem:[#allocation3 + $0x90] sm:$0xff]
        %v906 = vld [vmem:[#allocation3 + $0x98] sm:$0xff]
        %v907 = vld [vmem:[#allocation3 + $0xa0] sm:$0xff]
        %v908 = vld [vmem:[#allocation3 + $0xa8] sm:$0xff]
        %v909 = vld [vmem:[#allocation3 + $0xb0] sm:$0xff]
        %v910 = vld [vmem:[#allocation3 + $0xb8] sm:$0xff]
        %v911 = vld [vmem:[#allocation3 + $0xc0] sm:$0xff]
        %v912 = vld [vmem:[#allocation3 + $0xc8] sm:$0xff]
        %v913 = vld [vmem:[#allocation3 + $0xd0] sm:$0xff]
        %v914 = vld [vmem:[#allocation3 + $0xd8] sm:$0xff]
        %v915 = vld [vmem:[#allocation3 + $0xe0] sm:$0xff]
        %v916 = vld [vmem:[#allocation3 + $0xe8] sm:$0xff]
        %v917 = vld [vmem:[#allocation3 + $0xf0] sm:$0xff]
        %v918 = vld [vmem:[#allocation3 + $0xf8] sm:$0xff]
        %v919 = vld [vmem:[#allocation3 + $0x100] sm:$0xff]
        %v920 = vld [vmem:[#allocation3 + $0x108] sm:$0xff]
        %v921 = vld [vmem:[#allocation3 + $0x110] sm:$0xff]
        %v922 = vld [vmem:[#allocation3 + $0x118] sm:$0xff]
        %v923 = vadd.f32 %v887, %v709
        %v924 = vadd.f32 %v888, %v714
        %v925 = vadd.f32 %v889, %v719
        %v926 = vadd.f32 %v890, %v724
        %v927 = vadd.f32 %v891, %v729
        %v928 = vadd.f32 %v892, %v734
        %v929 = vadd.f32 %v893, %v739
        %v930 = vadd.f32 %v894, %v744
        %v931 = vadd.f32 %v895, %v749
        %v932 = vadd.f32 %v896, %v754
        %v933 = vadd.f32 %v897, %v759
        %v934 = vadd.f32 %v898, %v764
        %v935 = vadd.f32 %v899, %v769
        %v936 = vadd.f32 %v900, %v774
        %v937 = vadd.f32 %v901, %v779
        %v938 = vadd.f32 %v902, %v784
        %v939 = vadd.f32 %v903, %v789
        %v940 = vadd.f32 %v904, %v794
        %v941 = vadd.f32 %v905, %v799
        %v942 = vadd.f32 %v906, %v804
        %v943 = vadd.f32 %v907, %v809
        %v944 = vadd.f32 %v908, %v814
        %v945 = vadd.f32 %v909, %v819
        %v946 = vadd.f32 %v910, %v824
        %v947 = vadd.f32 %v911, %v829
        %v948 = vadd.f32 %v912, %v834
        %v949 = vadd.f32 %v913, %v839
        %v950 = vadd.f32 %v914, %v844
        %v951 = vadd.f32 %v915, %v849
        %v952 = vadd.f32 %v916, %v854
        %v953 = vadd.f32 %v917, %v859
        %v954 = vadd.f32 %v918, %v864
        %v955 = vadd.f32 %v919, %v869
        %v956 = vadd.f32 %v920, %v874
        %v957 = vadd.f32 %v921, %v879
        %v958 = vadd.f32 %v922, %v884
        %959 = vst [vmem:[#allocation3] sm:$0xff] %v923
        %960 = vst [vmem:[#allocation3 + $0x8] sm:$0xff] %v924
        %961 = vst [vmem:[#allocation3 + $0x10] sm:$0xff] %v925
        %962 = vst [vmem:[#allocation3 + $0x18] sm:$0xff] %v926
        %963 = vst [vmem:[#allocation3 + $0x20] sm:$0xff] %v927
        %964 = vst [vmem:[#allocation3 + $0x28] sm:$0xff] %v928
        %965 = vst [vmem:[#allocation3 + $0x30] sm:$0xff] %v929
        %966 = vst [vmem:[#allocation3 + $0x38] sm:$0xff] %v930
        %967 = vst [vmem:[#allocation3 + $0x40] sm:$0xff] %v931
        %968 = vst [vmem:[#allocation3 + $0x48] sm:$0xff] %v932
        %969 = vst [vmem:[#allocation3 + $0x50] sm:$0xff] %v933
        %970 = vst [vmem:[#allocation3 + $0x58] sm:$0xff] %v934
        %971 = vst [vmem:[#allocation3 + $0x60] sm:$0xff] %v935
        %972 = vst [vmem:[#allocation3 + $0x68] sm:$0xff] %v936
        %973 = vst [vmem:[#allocation3 + $0x70] sm:$0xff] %v937
        %974 = vst [vmem:[#allocation3 + $0x78] sm:$0xff] %v938
        %975 = vst [vmem:[#allocation3 + $0x80] sm:$0xff] %v939
        %976 = vst [vmem:[#allocation3 + $0x88] sm:$0xff] %v940
        %977 = vst [vmem:[#allocation3 + $0x90] sm:$0xff] %v941
        %978 = vst [vmem:[#allocation3 + $0x98] sm:$0xff] %v942
        %979 = vst [vmem:[#allocation3 + $0xa0] sm:$0xff] %v943
        %980 = vst [vmem:[#allocation3 + $0xa8] sm:$0xff] %v944
        %981 = vst [vmem:[#allocation3 + $0xb0] sm:$0xff] %v945
        %982 = vst [vmem:[#allocation3 + $0xb8] sm:$0xff] %v946
        %983 = vst [vmem:[#allocation3 + $0xc0] sm:$0xff] %v947
        %984 = vst [vmem:[#allocation3 + $0xc8] sm:$0xff] %v948
        %985 = vst [vmem:[#allocation3 + $0xd0] sm:$0xff] %v949
        %986 = vst [vmem:[#allocation3 + $0xd8] sm:$0xff] %v950
        %987 = vst [vmem:[#allocation3 + $0xe0] sm:$0xff] %v951
        %988 = vst [vmem:[#allocation3 + $0xe8] sm:$0xff] %v952
        %989 = vst [vmem:[#allocation3 + $0xf0] sm:$0xff] %v953
        %990 = vst [vmem:[#allocation3 + $0xf8] sm:$0xff] %v954
        %991 = vst [vmem:[#allocation3 + $0x100] sm:$0xff] %v955
        %992 = vst [vmem:[#allocation3 + $0x108] sm:$0xff] %v956
        %993 = vst [vmem:[#allocation3 + $0x110] sm:$0xff] %v957
        %994 = vst [vmem:[#allocation3 + $0x118] sm:$0xff] %v958
        %v995 = vld [vmem:[%s255 + $0x2] sm:$0xff]
        %v996 = vld [vmem:[%s255 + $0xa] sm:$0xff]
        %v997 = vld [vmem:[%s255 + $0x1a] sm:$0xff]
        %v998 = vld [vmem:[%s255 + $0x22] sm:$0xff]
        %v999 = vld [vmem:[%s255 + $0x32] sm:$0xff]
        %v1000 = vld [vmem:[%s255 + $0x3a] sm:$0xff]
        %v1001 = vld [vmem:[%s255 + $0x4a] sm:$0xff]
        %v1002 = vld [vmem:[%s255 + $0x52] sm:$0xff]
        %v1003 = vld [vmem:[%s255 + $0x62] sm:$0xff]
        %v1004 = vld [vmem:[%s255 + $0x6a] sm:$0xff]
        %v1005 = vld [vmem:[%s255 + $0x7a] sm:$0xff]
        %v1006 = vld [vmem:[%s255 + $0x82] sm:$0xff]
        %v1007 = vld [vmem:[%s255 + $0x92] sm:$0xff]
        %v1008 = vld [vmem:[%s255 + $0x9a] sm:$0xff]
        %v1009 = vld [vmem:[%s255 + $0xaa] sm:$0xff]
        %v1010 = vld [vmem:[%s255 + $0xb2] sm:$0xff]
        %v1011 = vld [vmem:[%s255 + $0xc2] sm:$0xff]
        %v1012 = vld [vmem:[%s255 + $0xca] sm:$0xff]
        %v1013 = vld [vmem:[%s255 + $0xda] sm:$0xff]
        %v1014 = vld [vmem:[%s255 + $0xe2] sm:$0xff]
        %v1015 = vld [vmem:[%s255 + $0xf2] sm:$0xff]
        %v1016 = vld [vmem:[%s255 + $0xfa] sm:$0xff]
        %v1017 = vld [vmem:[%s255 + $0x10a] sm:$0xff]
        %v1018 = vld [vmem:[%s255 + $0x112] sm:$0xff]
        %v1019 = vld [vmem:[%s255 + $0x122] sm:$0xff]
        %v1020 = vld [vmem:[%s255 + $0x12a] sm:$0xff]
        %v1021 = vld [vmem:[%s255 + $0x13a] sm:$0xff]
        %v1022 = vld [vmem:[%s255 + $0x142] sm:$0xff]
        %v1023 = vld [vmem:[%s255 + $0x152] sm:$0xff]
        %v1024 = vld [vmem:[%s255 + $0x15a] sm:$0xff]
        %v1025 = vld [vmem:[%s255 + $0x16a] sm:$0xff]
        %v1026 = vld [vmem:[%s255 + $0x172] sm:$0xff]
        %v1027 = vld [vmem:[%s255 + $0x182] sm:$0xff]
        %v1028 = vld [vmem:[%s255 + $0x18a] sm:$0xff]
        %v1029 = vld [vmem:[%s255 + $0x19a] sm:$0xff]
        %v1030 = vld [vmem:[%s255 + $0x1a2] sm:$0xff]
        %s1031 = scalar_lea.vmem %s1, 256
        %v1032 = vld [vmem:[%s1031] sm:$0xff]
        %v1033 = vld [vmem:[%s1031 + $0x8] sm:$0xff]
        %v1034 = vld [vmem:[%s1031 + $0x10] sm:$0xff]
        %v1035 = vld [vmem:[%s1031 + $0x18] sm:$0xff]
        %v1036 = vld [vmem:[%s1031 + $0x20] sm:$0xff]
        %v1037 = vld [vmem:[%s1031 + $0x28] sm:$0xff]
        %v1038 = vld [vmem:[%s1031 + $0x30] sm:$0xff]
        %v1039 = vld [vmem:[%s1031 + $0x38] sm:$0xff]
        %v1040 = vld [vmem:[%s1031 + $0x40] sm:$0xff]
        %v1041 = vld [vmem:[%s1031 + $0x48] sm:$0xff]
        %v1042 = vld [vmem:[%s1031 + $0x50] sm:$0xff]
        %v1043 = vld [vmem:[%s1031 + $0x58] sm:$0xff]
        %v1044 = vld [vmem:[%s1031 + $0x60] sm:$0xff]
        %v1045 = vld [vmem:[%s1031 + $0x68] sm:$0xff]
        %v1046 = vld [vmem:[%s1031 + $0x70] sm:$0xff]
        %v1047 = vld [vmem:[%s1031 + $0x78] sm:$0xff]
        %1048 = vmatprep.subr.mxu0 0.0
        %1049 = vmatpush1.msra.mxu0 %v1032
        %1050 = vmatprep.subr.mxu0 0.0
        %1051 = vmatpush1.msra.mxu0 %v1033
        %1052 = vmatprep.subr.mxu0 0.0
        %1053 = vmatpush1.msra.mxu0 %v1034
        %1054 = vmatprep.subr.mxu0 0.0
        %1055 = vmatpush1.msra.mxu0 %v1035
        %1056 = vmatprep.subr.mxu0 0.0
        %1057 = vmatpush1.msra.mxu0 %v1036
        %1058 = vmatprep.subr.mxu0 0.0
        %1059 = vmatpush1.msra.mxu0 %v1037
        %1060 = vmatprep.subr.mxu0 0.0
        %1061 = vmatpush1.msra.mxu0 %v1038
        %1062 = vmatprep.subr.mxu0 0.0
        %1063 = vmatpush1.msra.mxu0 %v1039
        %1064 = vmatprep.subr.mxu0 0.0
        %1065 = vmatpush1.msra.mxu0 %v1040
        %1066 = vmatprep.subr.mxu0 0.0
        %1067 = vmatpush1.msra.mxu0 %v1041
        %1068 = vmatprep.subr.mxu0 0.0
        %1069 = vmatpush1.msra.mxu0 %v1042
        %1070 = vmatprep.subr.mxu0 0.0
        %1071 = vmatpush1.msra.mxu0 %v1043
        %1072 = vmatprep.subr.mxu0 0.0
        %1073 = vmatpush1.msra.mxu0 %v1044
        %1074 = vmatprep.subr.mxu0 0.0
        %1075 = vmatpush1.msra.mxu0 %v1045
        %1076 = vmatprep.subr.mxu0 0.0
        %1077 = vmatpush1.msra.mxu0 %v1046
        %1078 = vmatprep.subr.mxu0 0.0
        %1079 = vmatpush1.msra.mxu0 %v1047
        %1080 = vmatprep.subr.mxu0 0.0
        %1081 = vmatpush1.msra.mxu0 0.0
        %1082 = vmatprep.subr.mxu0 0.0
        %1083 = vmatpush1.msra.mxu0 0.0
        %1084 = vmatprep.subr.mxu0 0.0
        %1085 = vmatpush1.msra.mxu0 0.0
        %1086 = vmatprep.subr.mxu0 0.0
        %1087 = vmatpush1.msra.mxu0 0.0
        %1088 = vmatprep.subr.mxu0 0.0
        %1089 = vmatpush1.msra.mxu0 0.0
        %1090 = vmatprep.subr.mxu0 0.0
        %1091 = vmatpush1.msra.mxu0 0.0
        %1092 = vmatprep.subr.mxu0 0.0
        %1093 = vmatpush1.msra.mxu0 0.0
        %1094 = vmatprep.subr.mxu0 0.0
        %1095 = vmatpush1.msra.mxu0 0.0
        %1096 = vmatprep.subr.mxu0 0.0
        %1097 = vmatpush1.msra.mxu0 0.0
        %1098 = vmatprep.subr.mxu0 0.0
        %1099 = vmatpush1.msra.mxu0 0.0
        %1100 = vmatprep.subr.mxu0 0.0
        %1101 = vmatpush1.msra.mxu0 0.0
        %1102 = vmatprep.subr.mxu0 0.0
        %1103 = vmatpush1.msra.mxu0 0.0
        %1104 = vmatprep.subr.mxu0 0.0
        %1105 = vmatpush1.msra.mxu0 0.0
        %1106 = vmatprep.subr.mxu0 0.0
        %1107 = vmatpush1.msra.mxu0 0.0
        %1108 = vmatprep.subr.mxu0 0.0
        %1109 = vmatpush1.msra.mxu0 0.0
        %1110 = vmatprep.subr.mxu0 0.0
        %1111 = vmatpush1.msra.mxu0 0.0
        %1112 = vmatprep.mubr.f32.mxu0 0.0
        %1113 = vmatmul.mubr.f32.gmra.mrb[0].mxu0 %v995
        %v1114 = vpop.f32.mrb[0].mxu0
        %v1115 = vadd.f32 0.0, %v1114
        %v1116 = vpop.f32.mrb[0].mxu0
        %1117 = vmatprep.mubr.f32.mxu0 0.0
        %1118 = vmatmul.mubr.f32.gmra.mrb[0].mxu0 %v996
        %v1119 = vpop.f32.mrb[0].mxu0
        %v1120 = vadd.f32 0.0, %v1119
        %v1121 = vpop.f32.mrb[0].mxu0
        %1122 = vmatprep.mubr.f32.mxu0 0.0
        %1123 = vmatmul.mubr.f32.gmra.mrb[0].mxu0 %v997
        %v1124 = vpop.f32.mrb[0].mxu0
        %v1125 = vadd.f32 0.0, %v1124
        %v1126 = vpop.f32.mrb[0].mxu0
        %1127 = vmatprep.mubr.f32.mxu0 0.0
        %1128 = vmatmul.mubr.f32.gmra.mrb[0].mxu0 %v998
        %v1129 = vpop.f32.mrb[0].mxu0
        %v1130 = vadd.f32 0.0, %v1129
        %v1131 = vpop.f32.mrb[0].mxu0
        %1132 = vmatprep.mubr.f32.mxu0 0.0
        %1133 = vmatmul.mubr.f32.gmra.mrb[0].mxu0 %v999
        %v1134 = vpop.f32.mrb[0].mxu0
        %v1135 = vadd.f32 0.0, %v1134
        %v1136 = vpop.f32.mrb[0].mxu0
        %1137 = vmatprep.mubr.f32.mxu0 0.0
        %1138 = vmatmul.mubr.f32.gmra.mrb[0].mxu0 %v1000
        %v1139 = vpop.f32.mrb[0].mxu0
        %v1140 = vadd.f32 0.0, %v1139
        %v1141 = vpop.f32.mrb[0].mxu0
        %1142 = vmatprep.mubr.f32.mxu0 0.0
        %1143 = vmatmul.mubr.f32.gmra.mrb[0].mxu0 %v1001
        %v1144 = vpop.f32.mrb[0].mxu0
        %v1145 = vadd.f32 0.0, %v1144
        %v1146 = vpop.f32.mrb[0].mxu0
        %1147 = vmatprep.mubr.f32.mxu0 0.0
        %1148 = vmatmul.mubr.f32.gmra.mrb[0].mxu0 %v1002
        %v1149 = vpop.f32.mrb[0].mxu0
        %v1150 = vadd.f32 0.0, %v1149
        %v1151 = vpop.f32.mrb[0].mxu0
        %1152 = vmatprep.mubr.f32.mxu0 0.0
        %1153 = vmatmul.mubr.f32.gmra.mrb[0].mxu0 %v1003
        %v1154 = vpop.f32.mrb[0].mxu0
        %v1155 = vadd.f32 0.0, %v1154
        %v1156 = vpop.f32.mrb[0].mxu0
        %1157 = vmatprep.mubr.f32.mxu0 0.0
        %1158 = vmatmul.mubr.f32.gmra.mrb[0].mxu0 %v1004
        %v1159 = vpop.f32.mrb[0].mxu0
        %v1160 = vadd.f32 0.0, %v1159
        %v1161 = vpop.f32.mrb[0].mxu0
        %1162 = vmatprep.mubr.f32.mxu0 0.0
        %1163 = vmatmul.mubr.f32.gmra.mrb[0].mxu0 %v1005
        %v1164 = vpop.f32.mrb[0].mxu0
        %v1165 = vadd.f32 0.0, %v1164
        %v1166 = vpop.f32.mrb[0].mxu0
        %1167 = vmatprep.mubr.f32.mxu0 0.0
        %1168 = vmatmul.mubr.f32.gmra.mrb[0].mxu0 %v1006
        %v1169 = vpop.f32.mrb[0].mxu0
        %v1170 = vadd.f32 0.0, %v1169
        %v1171 = vpop.f32.mrb[0].mxu0
        %1172 = vmatprep.mubr.f32.mxu0 0.0
        %1173 = vmatmul.mubr.f32.gmra.mrb[0].mxu0 %v1007
        %v1174 = vpop.f32.mrb[0].mxu0
        %v1175 = vadd.f32 0.0, %v1174
        %v1176 = vpop.f32.mrb[0].mxu0
        %1177 = vmatprep.mubr.f32.mxu0 0.0
        %1178 = vmatmul.mubr.f32.gmra.mrb[0].mxu0 %v1008
        %v1179 = vpop.f32.mrb[0].mxu0
        %v1180 = vadd.f32 0.0, %v1179
        %v1181 = vpop.f32.mrb[0].mxu0
        %1182 = vmatprep.mubr.f32.mxu0 0.0
        %1183 = vmatmul.mubr.f32.gmra.mrb[0].mxu0 %v1009
        %v1184 = vpop.f32.mrb[0].mxu0
        %v1185 = vadd.f32 0.0, %v1184
        %v1186 = vpop.f32.mrb[0].mxu0
        %1187 = vmatprep.mubr.f32.mxu0 0.0
        %1188 = vmatmul.mubr.f32.gmra.mrb[0].mxu0 %v1010
        %v1189 = vpop.f32.mrb[0].mxu0
        %v1190 = vadd.f32 0.0, %v1189
        %v1191 = vpop.f32.mrb[0].mxu0
        %1192 = vmatprep.mubr.f32.mxu0 0.0
        %1193 = vmatmul.mubr.f32.gmra.mrb[0].mxu0 %v1011
        %v1194 = vpop.f32.mrb[0].mxu0
        %v1195 = vadd.f32 0.0, %v1194
        %v1196 = vpop.f32.mrb[0].mxu0
        %1197 = vmatprep.mubr.f32.mxu0 0.0
        %1198 = vmatmul.mubr.f32.gmra.mrb[0].mxu0 %v1012
        %v1199 = vpop.f32.mrb[0].mxu0
        %v1200 = vadd.f32 0.0, %v1199
        %v1201 = vpop.f32.mrb[0].mxu0
        %1202 = vmatprep.mubr.f32.mxu0 0.0
        %1203 = vmatmul.mubr.f32.gmra.mrb[0].mxu0 %v1013
        %v1204 = vpop.f32.mrb[0].mxu0
        %v1205 = vadd.f32 0.0, %v1204
        %v1206 = vpop.f32.mrb[0].mxu0
        %1207 = vmatprep.mubr.f32.mxu0 0.0
        %1208 = vmatmul.mubr.f32.gmra.mrb[0].mxu0 %v1014
        %v1209 = vpop.f32.mrb[0].mxu0
        %v1210 = vadd.f32 0.0, %v1209
        %v1211 = vpop.f32.mrb[0].mxu0
        %1212 = vmatprep.mubr.f32.mxu0 0.0
        %1213 = vmatmul.mubr.f32.gmra.mrb[0].mxu0 %v1015
        %v1214 = vpop.f32.mrb[0].mxu0
        %v1215 = vadd.f32 0.0, %v1214
        %v1216 = vpop.f32.mrb[0].mxu0
        %1217 = vmatprep.mubr.f32.mxu0 0.0
        %1218 = vmatmul.mubr.f32.gmra.mrb[0].mxu0 %v1016
        %v1219 = vpop.f32.mrb[0].mxu0
        %v1220 = vadd.f32 0.0, %v1219
        %v1221 = vpop.f32.mrb[0].mxu0
        %1222 = vmatprep.mubr.f32.mxu0 0.0
        %1223 = vmatmul.mubr.f32.gmra.mrb[0].mxu0 %v1017
        %v1224 = vpop.f32.mrb[0].mxu0
        %v1225 = vadd.f32 0.0, %v1224
        %v1226 = vpop.f32.mrb[0].mxu0
        %1227 = vmatprep.mubr.f32.mxu0 0.0
        %1228 = vmatmul.mubr.f32.gmra.mrb[0].mxu0 %v1018
        %v1229 = vpop.f32.mrb[0].mxu0
        %v1230 = vadd.f32 0.0, %v1229
        %v1231 = vpop.f32.mrb[0].mxu0
        %1232 = vmatprep.mubr.f32.mxu0 0.0
        %1233 = vmatmul.mubr.f32.gmra.mrb[0].mxu0 %v1019
        %v1234 = vpop.f32.mrb[0].mxu0
        %v1235 = vadd.f32 0.0, %v1234
        %v1236 = vpop.f32.mrb[0].mxu0
        %1237 = vmatprep.mubr.f32.mxu0 0.0
        %1238 = vmatmul.mubr.f32.gmra.mrb[0].mxu0 %v1020
        %v1239 = vpop.f32.mrb[0].mxu0
        %v1240 = vadd.f32 0.0, %v1239
        %v1241 = vpop.f32.mrb[0].mxu0
        %1242 = vmatprep.mubr.f32.mxu0 0.0
        %1243 = vmatmul.mubr.f32.gmra.mrb[0].mxu0 %v1021
        %v1244 = vpop.f32.mrb[0].mxu0
        %v1245 = vadd.f32 0.0, %v1244
        %v1246 = vpop.f32.mrb[0].mxu0
        %1247 = vmatprep.mubr.f32.mxu0 0.0
        %1248 = vmatmul.mubr.f32.gmra.mrb[0].mxu0 %v1022
        %v1249 = vpop.f32.mrb[0].mxu0
        %v1250 = vadd.f32 0.0, %v1249
        %v1251 = vpop.f32.mrb[0].mxu0
        %1252 = vmatprep.mubr.f32.mxu0 0.0
        %1253 = vmatmul.mubr.f32.gmra.mrb[0].mxu0 %v1023
        %v1254 = vpop.f32.mrb[0].mxu0
        %v1255 = vadd.f32 0.0, %v1254
        %v1256 = vpop.f32.mrb[0].mxu0
        %1257 = vmatprep.mubr.f32.mxu0 0.0
        %1258 = vmatmul.mubr.f32.gmra.mrb[0].mxu0 %v1024
        %v1259 = vpop.f32.mrb[0].mxu0
        %v1260 = vadd.f32 0.0, %v1259
        %v1261 = vpop.f32.mrb[0].mxu0
        %1262 = vmatprep.mubr.f32.mxu0 0.0
        %1263 = vmatmul.mubr.f32.gmra.mrb[0].mxu0 %v1025
        %v1264 = vpop.f32.mrb[0].mxu0
        %v1265 = vadd.f32 0.0, %v1264
        %v1266 = vpop.f32.mrb[0].mxu0
        %1267 = vmatprep.mubr.f32.mxu0 0.0
        %1268 = vmatmul.mubr.f32.gmra.mrb[0].mxu0 %v1026
        %v1269 = vpop.f32.mrb[0].mxu0
        %v1270 = vadd.f32 0.0, %v1269
        %v1271 = vpop.f32.mrb[0].mxu0
        %1272 = vmatprep.mubr.f32.mxu0 0.0
        %1273 = vmatmul.mubr.f32.gmra.mrb[0].mxu0 %v1027
        %v1274 = vpop.f32.mrb[0].mxu0
        %v1275 = vadd.f32 0.0, %v1274
        %v1276 = vpop.f32.mrb[0].mxu0
        %1277 = vmatprep.mubr.f32.mxu0 0.0
        %1278 = vmatmul.mubr.f32.gmra.mrb[0].mxu0 %v1028
        %v1279 = vpop.f32.mrb[0].mxu0
        %v1280 = vadd.f32 0.0, %v1279
        %v1281 = vpop.f32.mrb[0].mxu0
        %1282 = vmatprep.mubr.f32.mxu0 0.0
        %1283 = vmatmul.mubr.f32.gmra.mrb[0].mxu0 %v1029
        %v1284 = vpop.f32.mrb[0].mxu0
        %v1285 = vadd.f32 0.0, %v1284
        %v1286 = vpop.f32.mrb[0].mxu0
        %1287 = vmatprep.mubr.f32.mxu0 0.0
        %1288 = vmatmul.mubr.f32.gmra.mrb[0].mxu0 %v1030
        %v1289 = vpop.f32.mrb[0].mxu0
        %v1290 = vadd.f32 0.0, %v1289
        %v1291 = vpop.f32.mrb[0].mxu0
        %1292 = vdwg.mxu0
        %v1293 = vld [vmem:[#allocation3] sm:$0xff]
        %v1294 = vld [vmem:[#allocation3 + $0x8] sm:$0xff]
        %v1295 = vld [vmem:[#allocation3 + $0x10] sm:$0xff]
        %v1296 = vld [vmem:[#allocation3 + $0x18] sm:$0xff]
        %v1297 = vld [vmem:[#allocation3 + $0x20] sm:$0xff]
        %v1298 = vld [vmem:[#allocation3 + $0x28] sm:$0xff]
        %v1299 = vld [vmem:[#allocation3 + $0x30] sm:$0xff]
        %v1300 = vld [vmem:[#allocation3 + $0x38] sm:$0xff]
        %v1301 = vld [vmem:[#allocation3 + $0x40] sm:$0xff]
        %v1302 = vld [vmem:[#allocation3 + $0x48] sm:$0xff]
        %v1303 = vld [vmem:[#allocation3 + $0x50] sm:$0xff]
        %v1304 = vld [vmem:[#allocation3 + $0x58] sm:$0xff]
        %v1305 = vld [vmem:[#allocation3 + $0x60] sm:$0xff]
        %v1306 = vld [vmem:[#allocation3 + $0x68] sm:$0xff]
        %v1307 = vld [vmem:[#allocation3 + $0x70] sm:$0xff]
        %v1308 = vld [vmem:[#allocation3 + $0x78] sm:$0xff]
        %v1309 = vld [vmem:[#allocation3 + $0x80] sm:$0xff]
        %v1310 = vld [vmem:[#allocation3 + $0x88] sm:$0xff]
        %v1311 = vld [vmem:[#allocation3 + $0x90] sm:$0xff]
        %v1312 = vld [vmem:[#allocation3 + $0x98] sm:$0xff]
        %v1313 = vld [vmem:[#allocation3 + $0xa0] sm:$0xff]
        %v1314 = vld [vmem:[#allocation3 + $0xa8] sm:$0xff]
        %v1315 = vld [vmem:[#allocation3 + $0xb0] sm:$0xff]
        %v1316 = vld [vmem:[#allocation3 + $0xb8] sm:$0xff]
        %v1317 = vld [vmem:[#allocation3 + $0xc0] sm:$0xff]
        %v1318 = vld [vmem:[#allocation3 + $0xc8] sm:$0xff]
        %v1319 = vld [vmem:[#allocation3 + $0xd0] sm:$0xff]
        %v1320 = vld [vmem:[#allocation3 + $0xd8] sm:$0xff]
        %v1321 = vld [vmem:[#allocation3 + $0xe0] sm:$0xff]
        %v1322 = vld [vmem:[#allocation3 + $0xe8] sm:$0xff]
        %v1323 = vld [vmem:[#allocation3 + $0xf0] sm:$0xff]
        %v1324 = vld [vmem:[#allocation3 + $0xf8] sm:$0xff]
        %v1325 = vld [vmem:[#allocation3 + $0x100] sm:$0xff]
        %v1326 = vld [vmem:[#allocation3 + $0x108] sm:$0xff]
        %v1327 = vld [vmem:[#allocation3 + $0x110] sm:$0xff]
        %v1328 = vld [vmem:[#allocation3 + $0x118] sm:$0xff]
        %v1329 = vadd.f32 %v1293, %v1115
        %v1330 = vadd.f32 %v1294, %v1120
        %v1331 = vadd.f32 %v1295, %v1125
        %v1332 = vadd.f32 %v1296, %v1130
        %v1333 = vadd.f32 %v1297, %v1135
        %v1334 = vadd.f32 %v1298, %v1140
        %v1335 = vadd.f32 %v1299, %v1145
        %v1336 = vadd.f32 %v1300, %v1150
        %v1337 = vadd.f32 %v1301, %v1155
        %v1338 = vadd.f32 %v1302, %v1160
        %v1339 = vadd.f32 %v1303, %v1165
        %v1340 = vadd.f32 %v1304, %v1170
        %v1341 = vadd.f32 %v1305, %v1175
        %v1342 = vadd.f32 %v1306, %v1180
        %v1343 = vadd.f32 %v1307, %v1185
        %v1344 = vadd.f32 %v1308, %v1190
        %v1345 = vadd.f32 %v1309, %v1195
        %v1346 = vadd.f32 %v1310, %v1200
        %v1347 = vadd.f32 %v1311, %v1205
        %v1348 = vadd.f32 %v1312, %v1210
        %v1349 = vadd.f32 %v1313, %v1215
        %v1350 = vadd.f32 %v1314, %v1220
        %v1351 = vadd.f32 %v1315, %v1225
        %v1352 = vadd.f32 %v1316, %v1230
        %v1353 = vadd.f32 %v1317, %v1235
        %v1354 = vadd.f32 %v1318, %v1240
        %v1355 = vadd.f32 %v1319, %v1245
        %v1356 = vadd.f32 %v1320, %v1250
        %v1357 = vadd.f32 %v1321, %v1255
        %v1358 = vadd.f32 %v1322, %v1260
        %v1359 = vadd.f32 %v1323, %v1265
        %v1360 = vadd.f32 %v1324, %v1270
        %v1361 = vadd.f32 %v1325, %v1275
        %v1362 = vadd.f32 %v1326, %v1280
        %v1363 = vadd.f32 %v1327, %v1285
        %v1364 = vadd.f32 %v1328, %v1290
        %1365 = vst [vmem:[#allocation3] sm:$0xff] %v1329
        %1366 = vst [vmem:[#allocation3 + $0x8] sm:$0xff] %v1330
        %1367 = vst [vmem:[#allocation3 + $0x10] sm:$0xff] %v1331
        %1368 = vst [vmem:[#allocation3 + $0x18] sm:$0xff] %v1332
        %1369 = vst [vmem:[#allocation3 + $0x20] sm:$0xff] %v1333
        %1370 = vst [vmem:[#allocation3 + $0x28] sm:$0xff] %v1334
        %1371 = vst [vmem:[#allocation3 + $0x30] sm:$0xff] %v1335
        %1372 = vst [vmem:[#allocation3 + $0x38] sm:$0xff] %v1336
        %1373 = vst [vmem:[#allocation3 + $0x40] sm:$0xff] %v1337
        %1374 = vst [vmem:[#allocation3 + $0x48] sm:$0xff] %v1338
        %1375 = vst [vmem:[#allocation3 + $0x50] sm:$0xff] %v1339
        %1376 = vst [vmem:[#allocation3 + $0x58] sm:$0xff] %v1340
        %1377 = vst [vmem:[#allocation3 + $0x60] sm:$0xff] %v1341
        %1378 = vst [vmem:[#allocation3 + $0x68] sm:$0xff] %v1342
        %1379 = vst [vmem:[#allocation3 + $0x70] sm:$0xff] %v1343
        %1380 = vst [vmem:[#allocation3 + $0x78] sm:$0xff] %v1344
        %1381 = vst [vmem:[#allocation3 + $0x80] sm:$0xff] %v1345
        %1382 = vst [vmem:[#allocation3 + $0x88] sm:$0xff] %v1346
        %1383 = vst [vmem:[#allocation3 + $0x90] sm:$0xff] %v1347
        %1384 = vst [vmem:[#allocation3 + $0x98] sm:$0xff] %v1348
        %1385 = vst [vmem:[#allocation3 + $0xa0] sm:$0xff] %v1349
        %1386 = vst [vmem:[#allocation3 + $0xa8] sm:$0xff] %v1350
        %1387 = vst [vmem:[#allocation3 + $0xb0] sm:$0xff] %v1351
        %1388 = vst [vmem:[#allocation3 + $0xb8] sm:$0xff] %v1352
        %1389 = vst [vmem:[#allocation3 + $0xc0] sm:$0xff] %v1353
        %1390 = vst [vmem:[#allocation3 + $0xc8] sm:$0xff] %v1354
        %1391 = vst [vmem:[#allocation3 + $0xd0] sm:$0xff] %v1355
        %1392 = vst [vmem:[#allocation3 + $0xd8] sm:$0xff] %v1356
        %1393 = vst [vmem:[#allocation3 + $0xe0] sm:$0xff] %v1357
        %1394 = vst [vmem:[#allocation3 + $0xe8] sm:$0xff] %v1358
        %1395 = vst [vmem:[#allocation3 + $0xf0] sm:$0xff] %v1359
        %1396 = vst [vmem:[#allocation3 + $0xf8] sm:$0xff] %v1360
        %1397 = vst [vmem:[#allocation3 + $0x100] sm:$0xff] %v1361
        %1398 = vst [vmem:[#allocation3 + $0x108] sm:$0xff] %v1362
        %1399 = vst [vmem:[#allocation3 + $0x110] sm:$0xff] %v1363
        %1400 = vst [vmem:[#allocation3 + $0x118] sm:$0xff] %v1364
        %s1401 = sadd.s32 %s253, 1
        %s1402 = smul.u32 %s1401, 24
        %s1403 = scalar_lea.vmem %s251, %s1402
        %v1404 = vld [vmem:[%s1403] sm:$0xff]
        %v1405 = vld [vmem:[%s1403 + $0x8] sm:$0xff]
        %v1406 = vld [vmem:[%s1403 + $0x18] sm:$0xff]
        %v1407 = vld [vmem:[%s1403 + $0x20] sm:$0xff]
        %v1408 = vld [vmem:[%s1403 + $0x30] sm:$0xff]
        %v1409 = vld [vmem:[%s1403 + $0x38] sm:$0xff]
        %v1410 = vld [vmem:[%s1403 + $0x48] sm:$0xff]
        %v1411 = vld [vmem:[%s1403 + $0x50] sm:$0xff]
        %v1412 = vld [vmem:[%s1403 + $0x60] sm:$0xff]
        %v1413 = vld [vmem:[%s1403 + $0x68] sm:$0xff]
        %v1414 = vld [vmem:[%s1403 + $0x78] sm:$0xff]
        %v1415 = vld [vmem:[%s1403 + $0x80] sm:$0xff]
        %v1416 = vld [vmem:[%s1403 + $0x90] sm:$0xff]
        %v1417 = vld [vmem:[%s1403 + $0x98] sm:$0xff]
        %v1418 = vld [vmem:[%s1403 + $0xa8] sm:$0xff]
        %v1419 = vld [vmem:[%s1403 + $0xb0] sm:$0xff]
        %v1420 = vld [vmem:[%s1403 + $0xc0] sm:$0xff]
        %v1421 = vld [vmem:[%s1403 + $0xc8] sm:$0xff]
        %v1422 = vld [vmem:[%s1403 + $0xd8] sm:$0xff]
        %v1423 = vld [vmem:[%s1403 + $0xe0] sm:$0xff]
        %v1424 = vld [vmem:[%s1403 + $0xf0] sm:$0xff]
        %v1425 = vld [vmem:[%s1403 + $0xf8] sm:$0xff]
        %v1426 = vld [vmem:[%s1403 + $0x108] sm:$0xff]
        %v1427 = vld [vmem:[%s1403 + $0x110] sm:$0xff]
        %v1428 = vld [vmem:[%s1403 + $0x120] sm:$0xff]
        %v1429 = vld [vmem:[%s1403 + $0x128] sm:$0xff]
        %v1430 = vld [vmem:[%s1403 + $0x138] sm:$0xff]
        %v1431 = vld [vmem:[%s1403 + $0x140] sm:$0xff]
        %v1432 = vld [vmem:[%s1403 + $0x150] sm:$0xff]
        %v1433 = vld [vmem:[%s1403 + $0x158] sm:$0xff]
        %v1434 = vld [vmem:[%s1403 + $0x168] sm:$0xff]
        %v1435 = vld [vmem:[%s1403 + $0x170] sm:$0xff]
        %v1436 = vld [vmem:[%s1403 + $0x180] sm:$0xff]
        %v1437 = vld [vmem:[%s1403 + $0x188] sm:$0xff]
        %v1438 = vld [vmem:[%s1403 + $0x198] sm:$0xff]
        %v1439 = vld [vmem:[%s1403 + $0x1a0] sm:$0xff]
        %s1440 = scalar_lea.vmem %s1, 384
        %v1441 = vld [vmem:[%s1440] sm:$0xff]
        %v1442 = vld [vmem:[%s1440 + $0x8] sm:$0xff]
        %v1443 = vld [vmem:[%s1440 + $0x10] sm:$0xff]
        %v1444 = vld [vmem:[%s1440 + $0x18] sm:$0xff]
        %v1445 = vld [vmem:[%s1440 + $0x20] sm:$0xff]
        %v1446 = vld [vmem:[%s1440 + $0x28] sm:$0xff]
        %v1447 = vld [vmem:[%s1440 + $0x30] sm:$0xff]
        %v1448 = vld [vmem:[%s1440 + $0x38] sm:$0xff]
        %v1449 = vld [vmem:[%s1440 + $0x40] sm:$0xff]
        %v1450 = vld [vmem:[%s1440 + $0x48] sm:$0xff]
        %v1451 = vld [vmem:[%s1440 + $0x50] sm:$0xff]
        %v1452 = vld [vmem:[%s1440 + $0x58] sm:$0xff]
        %v1453 = vld [vmem:[%s1440 + $0x60] sm:$0xff]
        %v1454 = vld [vmem:[%s1440 + $0x68] sm:$0xff]
        %v1455 = vld [vmem:[%s1440 + $0x70] sm:$0xff]
        %v1456 = vld [vmem:[%s1440 + $0x78] sm:$0xff]
        %1457 = vmatprep.subr.mxu0 0.0
        %1458 = vmatpush1.msra.mxu0 %v1441
        %1459 = vmatprep.subr.mxu0 0.0
        %1460 = vmatpush1.msra.mxu0 %v1442
        %1461 = vmatprep.subr.mxu0 0.0
        %1462 = vmatpush1.msra.mxu0 %v1443
        %1463 = vmatprep.subr.mxu0 0.0
        %1464 = vmatpush1.msra.mxu0 %v1444
        %1465 = vmatprep.subr.mxu0 0.0
        %1466 = vmatpush1.msra.mxu0 %v1445
        %1467 = vmatprep.subr.mxu0 0.0
        %1468 = vmatpush1.msra.mxu0 %v1446
        %1469 = vmatprep.subr.mxu0 0.0
        %1470 = vmatpush1.msra.mxu0 %v1447
        %1471 = vmatprep.subr.mxu0 0.0
        %1472 = vmatpush1.msra.mxu0 %v1448
        %1473 = vmatprep.subr.mxu0 0.0
        %1474 = vmatpush1.msra.mxu0 %v1449
        %1475 = vmatprep.subr.mxu0 0.0
        %1476 = vmatpush1.msra.mxu0 %v1450
        %1477 = vmatprep.subr.mxu0 0.0
        %1478 = vmatpush1.msra.mxu0 %v1451
        %1479 = vmatprep.subr.mxu0 0.0
        %1480 = vmatpush1.msra.mxu0 %v1452
        %1481 = vmatprep.subr.mxu0 0.0
        %1482 = vmatpush1.msra.mxu0 %v1453
        %1483 = vmatprep.subr.mxu0 0.0
        %1484 = vmatpush1.msra.mxu0 %v1454
        %1485 = vmatprep.subr.mxu0 0.0
        %1486 = vmatpush1.msra.mxu0 %v1455
        %1487 = vmatprep.subr.mxu0 0.0
        %1488 = vmatpush1.msra.mxu0 %v1456
        %1489 = vmatprep.subr.mxu0 0.0
        %1490 = vmatpush1.msra.mxu0 0.0
        %1491 = vmatprep.subr.mxu0 0.0
        %1492 = vmatpush1.msra.mxu0 0.0
        %1493 = vmatprep.subr.mxu0 0.0
        %1494 = vmatpush1.msra.mxu0 0.0
        %1495 = vmatprep.subr.mxu0 0.0
        %1496 = vmatpush1.msra.mxu0 0.0
        %1497 = vmatprep.subr.mxu0 0.0
        %1498 = vmatpush1.msra.mxu0 0.0
        %1499 = vmatprep.subr.mxu0 0.0
        %1500 = vmatpush1.msra.mxu0 0.0
        %1501 = vmatprep.subr.mxu0 0.0
        %1502 = vmatpush1.msra.mxu0 0.0
        %1503 = vmatprep.subr.mxu0 0.0
        %1504 = vmatpush1.msra.mxu0 0.0
        %1505 = vmatprep.subr.mxu0 0.0
        %1506 = vmatpush1.msra.mxu0 0.0
        %1507 = vmatprep.subr.mxu0 0.0
        %1508 = vmatpush1.msra.mxu0 0.0
        %1509 = vmatprep.subr.mxu0 0.0
        %1510 = vmatpush1.msra.mxu0 0.0
        %1511 = vmatprep.subr.mxu0 0.0
        %1512 = vmatpush1.msra.mxu0 0.0
        %1513 = vmatprep.subr.mxu0 0.0
        %1514 = vmatpush1.msra.mxu0 0.0
        %1515 = vmatprep.subr.mxu0 0.0
        %1516 = vmatpush1.msra.mxu0 0.0
        %1517 = vmatprep.subr.mxu0 0.0
        %1518 = vmatpush1.msra.mxu0 0.0
        %1519 = vmatprep.subr.mxu0 0.0
        %1520 = vmatpush1.msra.mxu0 0.0
        %1521 = vmatprep.mubr.f32.mxu0 0.0
        %1522 = vmatmul.mubr.f32.gmra.mrb[0].mxu0 %v1404
        %v1523 = vpop.f32.mrb[0].mxu0
        %v1524 = vadd.f32 0.0, %v1523
        %v1525 = vpop.f32.mrb[0].mxu0
        %1526 = vmatprep.mubr.f32.mxu0 0.0
        %1527 = vmatmul.mubr.f32.gmra.mrb[0].mxu0 %v1405
        %v1528 = vpop.f32.mrb[0].mxu0
        %v1529 = vadd.f32 0.0, %v1528
        %v1530 = vpop.f32.mrb[0].mxu0
        %1531 = vmatprep.mubr.f32.mxu0 0.0
        %1532 = vmatmul.mubr.f32.gmra.mrb[0].mxu0 %v1406
        %v1533 = vpop.f32.mrb[0].mxu0
        %v1534 = vadd.f32 0.0, %v1533
        %v1535 = vpop.f32.mrb[0].mxu0
        %1536 = vmatprep.mubr.f32.mxu0 0.0
        %1537 = vmatmul.mubr.f32.gmra.mrb[0].mxu0 %v1407
        %v1538 = vpop.f32.mrb[0].mxu0
        %v1539 = vadd.f32 0.0, %v1538
        %v1540 = vpop.f32.mrb[0].mxu0
        %1541 = vmatprep.mubr.f32.mxu0 0.0
        %1542 = vmatmul.mubr.f32.gmra.mrb[0].mxu0 %v1408
        %v1543 = vpop.f32.mrb[0].mxu0
        %v1544 = vadd.f32 0.0, %v1543
        %v1545 = vpop.f32.mrb[0].mxu0
        %1546 = vmatprep.mubr.f32.mxu0 0.0
        %1547 = vmatmul.mubr.f32.gmra.mrb[0].mxu0 %v1409
        %v1548 = vpop.f32.mrb[0].mxu0
        %v1549 = vadd.f32 0.0, %v1548
        %v1550 = vpop.f32.mrb[0].mxu0
        %1551 = vmatprep.mubr.f32.mxu0 0.0
        %1552 = vmatmul.mubr.f32.gmra.mrb[0].mxu0 %v1410
        %v1553 = vpop.f32.mrb[0].mxu0
        %v1554 = vadd.f32 0.0, %v1553
        %v1555 = vpop.f32.mrb[0].mxu0
        %1556 = vmatprep.mubr.f32.mxu0 0.0
        %1557 = vmatmul.mubr.f32.gmra.mrb[0].mxu0 %v1411
        %v1558 = vpop.f32.mrb[0].mxu0
        %v1559 = vadd.f32 0.0, %v1558
        %v1560 = vpop.f32.mrb[0].mxu0
        %1561 = vmatprep.mubr.f32.mxu0 0.0
        %1562 = vmatmul.mubr.f32.gmra.mrb[0].mxu0 %v1412
        %v1563 = vpop.f32.mrb[0].mxu0
        %v1564 = vadd.f32 0.0, %v1563
        %v1565 = vpop.f32.mrb[0].mxu0
        %1566 = vmatprep.mubr.f32.mxu0 0.0
        %1567 = vmatmul.mubr.f32.gmra.mrb[0].mxu0 %v1413
        %v1568 = vpop.f32.mrb[0].mxu0
        %v1569 = vadd.f32 0.0, %v1568
        %v1570 = vpop.f32.mrb[0].mxu0
        %1571 = vmatprep.mubr.f32.mxu0 0.0
        %1572 = vmatmul.mubr.f32.gmra.mrb[0].mxu0 %v1414
        %v1573 = vpop.f32.mrb[0].mxu0
        %v1574 = vadd.f32 0.0, %v1573
        %v1575 = vpop.f32.mrb[0].mxu0
        %1576 = vmatprep.mubr.f32.mxu0 0.0
        %1577 = vmatmul.mubr.f32.gmra.mrb[0].mxu0 %v1415
        %v1578 = vpop.f32.mrb[0].mxu0
        %v1579 = vadd.f32 0.0, %v1578
        %v1580 = vpop.f32.mrb[0].mxu0
        %1581 = vmatprep.mubr.f32.mxu0 0.0
        %1582 = vmatmul.mubr.f32.gmra.mrb[0].mxu0 %v1416
        %v1583 = vpop.f32.mrb[0].mxu0
        %v1584 = vadd.f32 0.0, %v1583
        %v1585 = vpop.f32.mrb[0].mxu0
        %1586 = vmatprep.mubr.f32.mxu0 0.0
        %1587 = vmatmul.mubr.f32.gmra.mrb[0].mxu0 %v1417
        %v1588 = vpop.f32.mrb[0].mxu0
        %v1589 = vadd.f32 0.0, %v1588
        %v1590 = vpop.f32.mrb[0].mxu0
        %1591 = vmatprep.mubr.f32.mxu0 0.0
        %1592 = vmatmul.mubr.f32.gmra.mrb[0].mxu0 %v1418
        %v1593 = vpop.f32.mrb[0].mxu0
        %v1594 = vadd.f32 0.0, %v1593
        %v1595 = vpop.f32.mrb[0].mxu0
        %1596 = vmatprep.mubr.f32.mxu0 0.0
        %1597 = vmatmul.mubr.f32.gmra.mrb[0].mxu0 %v1419
        %v1598 = vpop.f32.mrb[0].mxu0
        %v1599 = vadd.f32 0.0, %v1598
        %v1600 = vpop.f32.mrb[0].mxu0
        %1601 = vmatprep.mubr.f32.mxu0 0.0
        %1602 = vmatmul.mubr.f32.gmra.mrb[0].mxu0 %v1420
        %v1603 = vpop.f32.mrb[0].mxu0
        %v1604 = vadd.f32 0.0, %v1603
        %v1605 = vpop.f32.mrb[0].mxu0
        %1606 = vmatprep.mubr.f32.mxu0 0.0
        %1607 = vmatmul.mubr.f32.gmra.mrb[0].mxu0 %v1421
        %v1608 = vpop.f32.mrb[0].mxu0
        %v1609 = vadd.f32 0.0, %v1608
        %v1610 = vpop.f32.mrb[0].mxu0
        %1611 = vmatprep.mubr.f32.mxu0 0.0
        %1612 = vmatmul.mubr.f32.gmra.mrb[0].mxu0 %v1422
        %v1613 = vpop.f32.mrb[0].mxu0
        %v1614 = vadd.f32 0.0, %v1613
        %v1615 = vpop.f32.mrb[0].mxu0
        %1616 = vmatprep.mubr.f32.mxu0 0.0
        %1617 = vmatmul.mubr.f32.gmra.mrb[0].mxu0 %v1423
        %v1618 = vpop.f32.mrb[0].mxu0
        %v1619 = vadd.f32 0.0, %v1618
        %v1620 = vpop.f32.mrb[0].mxu0
        %1621 = vmatprep.mubr.f32.mxu0 0.0
        %1622 = vmatmul.mubr.f32.gmra.mrb[0].mxu0 %v1424
        %v1623 = vpop.f32.mrb[0].mxu0
        %v1624 = vadd.f32 0.0, %v1623
        %v1625 = vpop.f32.mrb[0].mxu0
        %1626 = vmatprep.mubr.f32.mxu0 0.0
        %1627 = vmatmul.mubr.f32.gmra.mrb[0].mxu0 %v1425
        %v1628 = vpop.f32.mrb[0].mxu0
        %v1629 = vadd.f32 0.0, %v1628
        %v1630 = vpop.f32.mrb[0].mxu0
        %1631 = vmatprep.mubr.f32.mxu0 0.0
        %1632 = vmatmul.mubr.f32.gmra.mrb[0].mxu0 %v1426
        %v1633 = vpop.f32.mrb[0].mxu0
        %v1634 = vadd.f32 0.0, %v1633
        %v1635 = vpop.f32.mrb[0].mxu0
        %1636 = vmatprep.mubr.f32.mxu0 0.0
        %1637 = vmatmul.mubr.f32.gmra.mrb[0].mxu0 %v1427
        %v1638 = vpop.f32.mrb[0].mxu0
        %v1639 = vadd.f32 0.0, %v1638
        %v1640 = vpop.f32.mrb[0].mxu0
        %1641 = vmatprep.mubr.f32.mxu0 0.0
        %1642 = vmatmul.mubr.f32.gmra.mrb[0].mxu0 %v1428
        %v1643 = vpop.f32.mrb[0].mxu0
        %v1644 = vadd.f32 0.0, %v1643
        %v1645 = vpop.f32.mrb[0].mxu0
        %1646 = vmatprep.mubr.f32.mxu0 0.0
        %1647 = vmatmul.mubr.f32.gmra.mrb[0].mxu0 %v1429
        %v1648 = vpop.f32.mrb[0].mxu0
        %v1649 = vadd.f32 0.0, %v1648
        %v1650 = vpop.f32.mrb[0].mxu0
        %1651 = vmatprep.mubr.f32.mxu0 0.0
        %1652 = vmatmul.mubr.f32.gmra.mrb[0].mxu0 %v1430
        %v1653 = vpop.f32.mrb[0].mxu0
        %v1654 = vadd.f32 0.0, %v1653
        %v1655 = vpop.f32.mrb[0].mxu0
        %1656 = vmatprep.mubr.f32.mxu0 0.0
        %1657 = vmatmul.mubr.f32.gmra.mrb[0].mxu0 %v1431
        %v1658 = vpop.f32.mrb[0].mxu0
        %v1659 = vadd.f32 0.0, %v1658
        %v1660 = vpop.f32.mrb[0].mxu0
        %1661 = vmatprep.mubr.f32.mxu0 0.0
        %1662 = vmatmul.mubr.f32.gmra.mrb[0].mxu0 %v1432
        %v1663 = vpop.f32.mrb[0].mxu0
        %v1664 = vadd.f32 0.0, %v1663
        %v1665 = vpop.f32.mrb[0].mxu0
        %1666 = vmatprep.mubr.f32.mxu0 0.0
        %1667 = vmatmul.mubr.f32.gmra.mrb[0].mxu0 %v1433
        %v1668 = vpop.f32.mrb[0].mxu0
        %v1669 = vadd.f32 0.0, %v1668
        %v1670 = vpop.f32.mrb[0].mxu0
        %1671 = vmatprep.mubr.f32.mxu0 0.0
        %1672 = vmatmul.mubr.f32.gmra.mrb[0].mxu0 %v1434
        %v1673 = vpop.f32.mrb[0].mxu0
        %v1674 = vadd.f32 0.0, %v1673
        %v1675 = vpop.f32.mrb[0].mxu0
        %1676 = vmatprep.mubr.f32.mxu0 0.0
        %1677 = vmatmul.mubr.f32.gmra.mrb[0].mxu0 %v1435
        %v1678 = vpop.f32.mrb[0].mxu0
        %v1679 = vadd.f32 0.0, %v1678
        %v1680 = vpop.f32.mrb[0].mxu0
        %1681 = vmatprep.mubr.f32.mxu0 0.0
        %1682 = vmatmul.mubr.f32.gmra.mrb[0].mxu0 %v1436
        %v1683 = vpop.f32.mrb[0].mxu0
        %v1684 = vadd.f32 0.0, %v1683
        %v1685 = vpop.f32.mrb[0].mxu0
        %1686 = vmatprep.mubr.f32.mxu0 0.0
        %1687 = vmatmul.mubr.f32.gmra.mrb[0].mxu0 %v1437
        %v1688 = vpop.f32.mrb[0].mxu0
        %v1689 = vadd.f32 0.0, %v1688
        %v1690 = vpop.f32.mrb[0].mxu0
        %1691 = vmatprep.mubr.f32.mxu0 0.0
        %1692 = vmatmul.mubr.f32.gmra.mrb[0].mxu0 %v1438
        %v1693 = vpop.f32.mrb[0].mxu0
        %v1694 = vadd.f32 0.0, %v1693
        %v1695 = vpop.f32.mrb[0].mxu0
        %1696 = vmatprep.mubr.f32.mxu0 0.0
        %1697 = vmatmul.mubr.f32.gmra.mrb[0].mxu0 %v1439
        %v1698 = vpop.f32.mrb[0].mxu0
        %v1699 = vadd.f32 0.0, %v1698
        %v1700 = vpop.f32.mrb[0].mxu0
        %1701 = vdwg.mxu0
        %v1702 = vld [vmem:[#allocation3] sm:$0xff]
        %v1703 = vld [vmem:[#allocation3 + $0x8] sm:$0xff]
        %v1704 = vld [vmem:[#allocation3 + $0x10] sm:$0xff]
        %v1705 = vld [vmem:[#allocation3 + $0x18] sm:$0xff]
        %v1706 = vld [vmem:[#allocation3 + $0x20] sm:$0xff]
        %v1707 = vld [vmem:[#allocation3 + $0x28] sm:$0xff]
        %v1708 = vld [vmem:[#allocation3 + $0x30] sm:$0xff]
        %v1709 = vld [vmem:[#allocation3 + $0x38] sm:$0xff]
        %v1710 = vld [vmem:[#allocation3 + $0x40] sm:$0xff]
        %v1711 = vld [vmem:[#allocation3 + $0x48] sm:$0xff]
        %v1712 = vld [vmem:[#allocation3 + $0x50] sm:$0xff]
        %v1713 = vld [vmem:[#allocation3 + $0x58] sm:$0xff]
        %v1714 = vld [vmem:[#allocation3 + $0x60] sm:$0xff]
        %v1715 = vld [vmem:[#allocation3 + $0x68] sm:$0xff]
        %v1716 = vld [vmem:[#allocation3 + $0x70] sm:$0xff]
        %v1717 = vld [vmem:[#allocation3 + $0x78] sm:$0xff]
        %v1718 = vld [vmem:[#allocation3 + $0x80] sm:$0xff]
        %v1719 = vld [vmem:[#allocation3 + $0x88] sm:$0xff]
        %v1720 = vld [vmem:[#allocation3 + $0x90] sm:$0xff]
        %v1721 = vld [vmem:[#allocation3 + $0x98] sm:$0xff]
        %v1722 = vld [vmem:[#allocation3 + $0xa0] sm:$0xff]
        %v1723 = vld [vmem:[#allocation3 + $0xa8] sm:$0xff]
        %v1724 = vld [vmem:[#allocation3 + $0xb0] sm:$0xff]
        %v1725 = vld [vmem:[#allocation3 + $0xb8] sm:$0xff]
        %v1726 = vld [vmem:[#allocation3 + $0xc0] sm:$0xff]
        %v1727 = vld [vmem:[#allocation3 + $0xc8] sm:$0xff]
        %v1728 = vld [vmem:[#allocation3 + $0xd0] sm:$0xff]
        %v1729 = vld [vmem:[#allocation3 + $0xd8] sm:$0xff]
        %v1730 = vld [vmem:[#allocation3 + $0xe0] sm:$0xff]
        %v1731 = vld [vmem:[#allocation3 + $0xe8] sm:$0xff]
        %v1732 = vld [vmem:[#allocation3 + $0xf0] sm:$0xff]
        %v1733 = vld [vmem:[#allocation3 + $0xf8] sm:$0xff]
        %v1734 = vld [vmem:[#allocation3 + $0x100] sm:$0xff]
        %v1735 = vld [vmem:[#allocation3 + $0x108] sm:$0xff]
        %v1736 = vld [vmem:[#allocation3 + $0x110] sm:$0xff]
        %v1737 = vld [vmem:[#allocation3 + $0x118] sm:$0xff]
        %v1738 = vadd.f32 %v1702, %v1524
        %v1739 = vadd.f32 %v1703, %v1529
        %v1740 = vadd.f32 %v1704, %v1534
        %v1741 = vadd.f32 %v1705, %v1539
        %v1742 = vadd.f32 %v1706, %v1544
        %v1743 = vadd.f32 %v1707, %v1549
        %v1744 = vadd.f32 %v1708, %v1554
        %v1745 = vadd.f32 %v1709, %v1559
        %v1746 = vadd.f32 %v1710, %v1564
        %v1747 = vadd.f32 %v1711, %v1569
        %v1748 = vadd.f32 %v1712, %v1574
        %v1749 = vadd.f32 %v1713, %v1579
        %v1750 = vadd.f32 %v1714, %v1584
        %v1751 = vadd.f32 %v1715, %v1589
        %v1752 = vadd.f32 %v1716, %v1594
        %v1753 = vadd.f32 %v1717, %v1599
        %v1754 = vadd.f32 %v1718, %v1604
        %v1755 = vadd.f32 %v1719, %v1609
        %v1756 = vadd.f32 %v1720, %v1614
        %v1757 = vadd.f32 %v1721, %v1619
        %v1758 = vadd.f32 %v1722, %v1624
        %v1759 = vadd.f32 %v1723, %v1629
        %v1760 = vadd.f32 %v1724, %v1634
        %v1761 = vadd.f32 %v1725, %v1639
        %v1762 = vadd.f32 %v1726, %v1644
        %v1763 = vadd.f32 %v1727, %v1649
        %v1764 = vadd.f32 %v1728, %v1654
        %v1765 = vadd.f32 %v1729, %v1659
        %v1766 = vadd.f32 %v1730, %v1664
        %v1767 = vadd.f32 %v1731, %v1669
        %v1768 = vadd.f32 %v1732, %v1674
        %v1769 = vadd.f32 %v1733, %v1679
        %v1770 = vadd.f32 %v1734, %v1684
        %v1771 = vadd.f32 %v1735, %v1689
        %v1772 = vadd.f32 %v1736, %v1694
        %v1773 = vadd.f32 %v1737, %v1699
        %1774 = vst [vmem:[#allocation3] sm:$0xff] %v1738
        %1775 = vst [vmem:[#allocation3 + $0x8] sm:$0xff] %v1739
        %1776 = vst [vmem:[#allocation3 + $0x10] sm:$0xff] %v1740
        %1777 = vst [vmem:[#allocation3 + $0x18] sm:$0xff] %v1741
        %1778 = vst [vmem:[#allocation3 + $0x20] sm:$0xff] %v1742
        %1779 = vst [vmem:[#allocation3 + $0x28] sm:$0xff] %v1743
        %1780 = vst [vmem:[#allocation3 + $0x30] sm:$0xff] %v1744
        %1781 = vst [vmem:[#allocation3 + $0x38] sm:$0xff] %v1745
        %1782 = vst [vmem:[#allocation3 + $0x40] sm:$0xff] %v1746
        %1783 = vst [vmem:[#allocation3 + $0x48] sm:$0xff] %v1747
        %1784 = vst [vmem:[#allocation3 + $0x50] sm:$0xff] %v1748
        %1785 = vst [vmem:[#allocation3 + $0x58] sm:$0xff] %v1749
        %1786 = vst [vmem:[#allocation3 + $0x60] sm:$0xff] %v1750
        %1787 = vst [vmem:[#allocation3 + $0x68] sm:$0xff] %v1751
        %1788 = vst [vmem:[#allocation3 + $0x70] sm:$0xff] %v1752
        %1789 = vst [vmem:[#allocation3 + $0x78] sm:$0xff] %v1753
        %1790 = vst [vmem:[#allocation3 + $0x80] sm:$0xff] %v1754
        %1791 = vst [vmem:[#allocation3 + $0x88] sm:$0xff] %v1755
        %1792 = vst [vmem:[#allocation3 + $0x90] sm:$0xff] %v1756
        %1793 = vst [vmem:[#allocation3 + $0x98] sm:$0xff] %v1757
        %1794 = vst [vmem:[#allocation3 + $0xa0] sm:$0xff] %v1758
        %1795 = vst [vmem:[#allocation3 + $0xa8] sm:$0xff] %v1759
        %1796 = vst [vmem:[#allocation3 + $0xb0] sm:$0xff] %v1760
        %1797 = vst [vmem:[#allocation3 + $0xb8] sm:$0xff] %v1761
        %1798 = vst [vmem:[#allocation3 + $0xc0] sm:$0xff] %v1762
        %1799 = vst [vmem:[#allocation3 + $0xc8] sm:$0xff] %v1763
        %1800 = vst [vmem:[#allocation3 + $0xd0] sm:$0xff] %v1764
        %1801 = vst [vmem:[#allocation3 + $0xd8] sm:$0xff] %v1765
        %1802 = vst [vmem:[#allocation3 + $0xe0] sm:$0xff] %v1766
        %1803 = vst [vmem:[#allocation3 + $0xe8] sm:$0xff] %v1767
        %1804 = vst [vmem:[#allocation3 + $0xf0] sm:$0xff] %v1768
        %1805 = vst [vmem:[#allocation3 + $0xf8] sm:$0xff] %v1769
        %1806 = vst [vmem:[#allocation3 + $0x100] sm:$0xff] %v1770
        %1807 = vst [vmem:[#allocation3 + $0x108] sm:$0xff] %v1771
        %1808 = vst [vmem:[#allocation3 + $0x110] sm:$0xff] %v1772
        %1809 = vst [vmem:[#allocation3 + $0x118] sm:$0xff] %v1773
        %v1810 = vld [vmem:[%s1403 + $0x1] sm:$0xff]
        %v1811 = vld [vmem:[%s1403 + $0x9] sm:$0xff]
        %v1812 = vld [vmem:[%s1403 + $0x19] sm:$0xff]
        %v1813 = vld [vmem:[%s1403 + $0x21] sm:$0xff]
        %v1814 = vld [vmem:[%s1403 + $0x31] sm:$0xff]
        %v1815 = vld [vmem:[%s1403 + $0x39] sm:$0xff]
        %v1816 = vld [vmem:[%s1403 + $0x49] sm:$0xff]
        %v1817 = vld [vmem:[%s1403 + $0x51] sm:$0xff]
        %v1818 = vld [vmem:[%s1403 + $0x61] sm:$0xff]
        %v1819 = vld [vmem:[%s1403 + $0x69] sm:$0xff]
        %v1820 = vld [vmem:[%s1403 + $0x79] sm:$0xff]
        %v1821 = vld [vmem:[%s1403 + $0x81] sm:$0xff]
        %v1822 = vld [vmem:[%s1403 + $0x91] sm:$0xff]
        %v1823 = vld [vmem:[%s1403 + $0x99] sm:$0xff]
        %v1824 = vld [vmem:[%s1403 + $0xa9] sm:$0xff]
        %v1825 = vld [vmem:[%s1403 + $0xb1] sm:$0xff]
        %v1826 = vld [vmem:[%s1403 + $0xc1] sm:$0xff]
        %v1827 = vld [vmem:[%s1403 + $0xc9] sm:$0xff]
        %v1828 = vld [vmem:[%s1403 + $0xd9] sm:$0xff]
        %v1829 = vld [vmem:[%s1403 + $0xe1] sm:$0xff]
        %v1830 = vld [vmem:[%s1403 + $0xf1] sm:$0xff]
        %v1831 = vld [vmem:[%s1403 + $0xf9] sm:$0xff]
        %v1832 = vld [vmem:[%s1403 + $0x109] sm:$0xff]
        %v1833 = vld [vmem:[%s1403 + $0x111] sm:$0xff]
        %v1834 = vld [vmem:[%s1403 + $0x121] sm:$0xff]
        %v1835 = vld [vmem:[%s1403 + $0x129] sm:$0xff]
        %v1836 = vld [vmem:[%s1403 + $0x139] sm:$0xff]
        %v1837 = vld [vmem:[%s1403 + $0x141] sm:$0xff]
        %v1838 = vld [vmem:[%s1403 + $0x151] sm:$0xff]
        %v1839 = vld [vmem:[%s1403 + $0x159] sm:$0xff]
        %v1840 = vld [vmem:[%s1403 + $0x169] sm:$0xff]
        %v1841 = vld [vmem:[%s1403 + $0x171] sm:$0xff]
        %v1842 = vld [vmem:[%s1403 + $0x181] sm:$0xff]
        %v1843 = vld [vmem:[%s1403 + $0x189] sm:$0xff]
        %v1844 = vld [vmem:[%s1403 + $0x199] sm:$0xff]
        %v1845 = vld [vmem:[%s1403 + $0x1a1] sm:$0xff]
        %s1846 = scalar_lea.vmem %s1, 512
        %v1847 = vld [vmem:[%s1846] sm:$0xff]
        %v1848 = vld [vmem:[%s1846 + $0x8] sm:$0xff]
        %v1849 = vld [vmem:[%s1846 + $0x10] sm:$0xff]
        %v1850 = vld [vmem:[%s1846 + $0x18] sm:$0xff]
        %v1851 = vld [vmem:[%s1846 + $0x20] sm:$0xff]
        %v1852 = vld [vmem:[%s1846 + $0x28] sm:$0xff]
        %v1853 = vld [vmem:[%s1846 + $0x30] sm:$0xff]
        %v1854 = vld [vmem:[%s1846 + $0x38] sm:$0xff]
        %v1855 = vld [vmem:[%s1846 + $0x40] sm:$0xff]
        %v1856 = vld [vmem:[%s1846 + $0x48] sm:$0xff]
        %v1857 = vld [vmem:[%s1846 + $0x50] sm:$0xff]
        %v1858 = vld [vmem:[%s1846 + $0x58] sm:$0xff]
        %v1859 = vld [vmem:[%s1846 + $0x60] sm:$0xff]
        %v1860 = vld [vmem:[%s1846 + $0x68] sm:$0xff]
        %v1861 = vld [vmem:[%s1846 + $0x70] sm:$0xff]
        %v1862 = vld [vmem:[%s1846 + $0x78] sm:$0xff]
        %1863 = vmatprep.subr.mxu0 0.0
        %1864 = vmatpush1.msra.mxu0 %v1847
        %1865 = vmatprep.subr.mxu0 0.0
        %1866 = vmatpush1.msra.mxu0 %v1848
        %1867 = vmatprep.subr.mxu0 0.0
        %1868 = vmatpush1.msra.mxu0 %v1849
        %1869 = vmatprep.subr.mxu0 0.0
        %1870 = vmatpush1.msra.mxu0 %v1850
        %1871 = vmatprep.subr.mxu0 0.0
        %1872 = vmatpush1.msra.mxu0 %v1851
        %1873 = vmatprep.subr.mxu0 0.0
        %1874 = vmatpush1.msra.mxu0 %v1852
        %1875 = vmatprep.subr.mxu0 0.0
        %1876 = vmatpush1.msra.mxu0 %v1853
        %1877 = vmatprep.subr.mxu0 0.0
        %1878 = vmatpush1.msra.mxu0 %v1854
        %1879 = vmatprep.subr.mxu0 0.0
        %1880 = vmatpush1.msra.mxu0 %v1855
        %1881 = vmatprep.subr.mxu0 0.0
        %1882 = vmatpush1.msra.mxu0 %v1856
        %1883 = vmatprep.subr.mxu0 0.0
        %1884 = vmatpush1.msra.mxu0 %v1857
        %1885 = vmatprep.subr.mxu0 0.0
        %1886 = vmatpush1.msra.mxu0 %v1858
        %1887 = vmatprep.subr.mxu0 0.0
        %1888 = vmatpush1.msra.mxu0 %v1859
        %1889 = vmatprep.subr.mxu0 0.0
        %1890 = vmatpush1.msra.mxu0 %v1860
        %1891 = vmatprep.subr.mxu0 0.0
        %1892 = vmatpush1.msra.mxu0 %v1861
        %1893 = vmatprep.subr.mxu0 0.0
        %1894 = vmatpush1.msra.mxu0 %v1862
        %1895 = vmatprep.subr.mxu0 0.0
        %1896 = vmatpush1.msra.mxu0 0.0
        %1897 = vmatprep.subr.mxu0 0.0
        %1898 = vmatpush1.msra.mxu0 0.0
        %1899 = vmatprep.subr.mxu0 0.0
        %1900 = vmatpush1.msra.mxu0 0.0
        %1901 = vmatprep.subr.mxu0 0.0
        %1902 = vmatpush1.msra.mxu0 0.0
        %1903 = vmatprep.subr.mxu0 0.0
        %1904 = vmatpush1.msra.mxu0 0.0
        %1905 = vmatprep.subr.mxu0 0.0
        %1906 = vmatpush1.msra.mxu0 0.0
        %1907 = vmatprep.subr.mxu0 0.0
        %1908 = vmatpush1.msra.mxu0 0.0
        %1909 = vmatprep.subr.mxu0 0.0
        %1910 = vmatpush1.msra.mxu0 0.0
        %1911 = vmatprep.subr.mxu0 0.0
        %1912 = vmatpush1.msra.mxu0 0.0
        %1913 = vmatprep.subr.mxu0 0.0
        %1914 = vmatpush1.msra.mxu0 0.0
        %1915 = vmatprep.subr.mxu0 0.0
        %1916 = vmatpush1.msra.mxu0 0.0
        %1917 = vmatprep.subr.mxu0 0.0
        %1918 = vmatpush1.msra.mxu0 0.0
        %1919 = vmatprep.subr.mxu0 0.0
        %1920 = vmatpush1.msra.mxu0 0.0
        %1921 = vmatprep.subr.mxu0 0.0
        %1922 = vmatpush1.msra.mxu0 0.0
        %1923 = vmatprep.subr.mxu0 0.0
        %1924 = vmatpush1.msra.mxu0 0.0
        %1925 = vmatprep.subr.mxu0 0.0
        %1926 = vmatpush1.msra.mxu0 0.0
        %1927 = vmatprep.mubr.f32.mxu0 0.0
        %1928 = vmatmul.mubr.f32.gmra.mrb[0].mxu0 %v1810
        %v1929 = vpop.f32.mrb[0].mxu0
        %v1930 = vadd.f32 0.0, %v1929
        %v1931 = vpop.f32.mrb[0].mxu0
        %1932 = vmatprep.mubr.f32.mxu0 0.0
        %1933 = vmatmul.mubr.f32.gmra.mrb[0].mxu0 %v1811
        %v1934 = vpop.f32.mrb[0].mxu0
        %v1935 = vadd.f32 0.0, %v1934
        %v1936 = vpop.f32.mrb[0].mxu0
        %1937 = vmatprep.mubr.f32.mxu0 0.0
        %1938 = vmatmul.mubr.f32.gmra.mrb[0].mxu0 %v1812
        %v1939 = vpop.f32.mrb[0].mxu0
        %v1940 = vadd.f32 0.0, %v1939
        %v1941 = vpop.f32.mrb[0].mxu0
        %1942 = vmatprep.mubr.f32.mxu0 0.0
        %1943 = vmatmul.mubr.f32.gmra.mrb[0].mxu0 %v1813
        %v1944 = vpop.f32.mrb[0].mxu0
        %v1945 = vadd.f32 0.0, %v1944
        %v1946 = vpop.f32.mrb[0].mxu0
        %1947 = vmatprep.mubr.f32.mxu0 0.0
        %1948 = vmatmul.mubr.f32.gmra.mrb[0].mxu0 %v1814
        %v1949 = vpop.f32.mrb[0].mxu0
        %v1950 = vadd.f32 0.0, %v1949
        %v1951 = vpop.f32.mrb[0].mxu0
        %1952 = vmatprep.mubr.f32.mxu0 0.0
        %1953 = vmatmul.mubr.f32.gmra.mrb[0].mxu0 %v1815
        %v1954 = vpop.f32.mrb[0].mxu0
        %v1955 = vadd.f32 0.0, %v1954
        %v1956 = vpop.f32.mrb[0].mxu0
        %1957 = vmatprep.mubr.f32.mxu0 0.0
        %1958 = vmatmul.mubr.f32.gmra.mrb[0].mxu0 %v1816
        %v1959 = vpop.f32.mrb[0].mxu0
        %v1960 = vadd.f32 0.0, %v1959
        %v1961 = vpop.f32.mrb[0].mxu0
        %1962 = vmatprep.mubr.f32.mxu0 0.0
        %1963 = vmatmul.mubr.f32.gmra.mrb[0].mxu0 %v1817
        %v1964 = vpop.f32.mrb[0].mxu0
        %v1965 = vadd.f32 0.0, %v1964
        %v1966 = vpop.f32.mrb[0].mxu0
        %1967 = vmatprep.mubr.f32.mxu0 0.0
        %1968 = vmatmul.mubr.f32.gmra.mrb[0].mxu0 %v1818
        %v1969 = vpop.f32.mrb[0].mxu0
        %v1970 = vadd.f32 0.0, %v1969
        %v1971 = vpop.f32.mrb[0].mxu0
        %1972 = vmatprep.mubr.f32.mxu0 0.0
        %1973 = vmatmul.mubr.f32.gmra.mrb[0].mxu0 %v1819
        %v1974 = vpop.f32.mrb[0].mxu0
        %v1975 = vadd.f32 0.0, %v1974
        %v1976 = vpop.f32.mrb[0].mxu0
        %1977 = vmatprep.mubr.f32.mxu0 0.0
        %1978 = vmatmul.mubr.f32.gmra.mrb[0].mxu0 %v1820
        %v1979 = vpop.f32.mrb[0].mxu0
        %v1980 = vadd.f32 0.0, %v1979
        %v1981 = vpop.f32.mrb[0].mxu0
        %1982 = vmatprep.mubr.f32.mxu0 0.0
        %1983 = vmatmul.mubr.f32.gmra.mrb[0].mxu0 %v1821
        %v1984 = vpop.f32.mrb[0].mxu0
        %v1985 = vadd.f32 0.0, %v1984
        %v1986 = vpop.f32.mrb[0].mxu0
        %1987 = vmatprep.mubr.f32.mxu0 0.0
        %1988 = vmatmul.mubr.f32.gmra.mrb[0].mxu0 %v1822
        %v1989 = vpop.f32.mrb[0].mxu0
        %v1990 = vadd.f32 0.0, %v1989
        %v1991 = vpop.f32.mrb[0].mxu0
        %1992 = vmatprep.mubr.f32.mxu0 0.0
        %1993 = vmatmul.mubr.f32.gmra.mrb[0].mxu0 %v1823
        %v1994 = vpop.f32.mrb[0].mxu0
        %v1995 = vadd.f32 0.0, %v1994
        %v1996 = vpop.f32.mrb[0].mxu0
        %1997 = vmatprep.mubr.f32.mxu0 0.0
        %1998 = vmatmul.mubr.f32.gmra.mrb[0].mxu0 %v1824
        %v1999 = vpop.f32.mrb[0].mxu0
        %v2000 = vadd.f32 0.0, %v1999
        %v2001 = vpop.f32.mrb[0].mxu0
        %2002 = vmatprep.mubr.f32.mxu0 0.0
        %2003 = vmatmul.mubr.f32.gmra.mrb[0].mxu0 %v1825
        %v2004 = vpop.f32.mrb[0].mxu0
        %v2005 = vadd.f32 0.0, %v2004
        %v2006 = vpop.f32.mrb[0].mxu0
        %2007 = vmatprep.mubr.f32.mxu0 0.0
        %2008 = vmatmul.mubr.f32.gmra.mrb[0].mxu0 %v1826
        %v2009 = vpop.f32.mrb[0].mxu0
        %v2010 = vadd.f32 0.0, %v2009
        %v2011 = vpop.f32.mrb[0].mxu0
        %2012 = vmatprep.mubr.f32.mxu0 0.0
        %2013 = vmatmul.mubr.f32.gmra.mrb[0].mxu0 %v1827
        %v2014 = vpop.f32.mrb[0].mxu0
        %v2015 = vadd.f32 0.0, %v2014
        %v2016 = vpop.f32.mrb[0].mxu0
        %2017 = vmatprep.mubr.f32.mxu0 0.0
        %2018 = vmatmul.mubr.f32.gmra.mrb[0].mxu0 %v1828
        %v2019 = vpop.f32.mrb[0].mxu0
        %v2020 = vadd.f32 0.0, %v2019
        %v2021 = vpop.f32.mrb[0].mxu0
        %2022 = vmatprep.mubr.f32.mxu0 0.0
        %2023 = vmatmul.mubr.f32.gmra.mrb[0].mxu0 %v1829
        %v2024 = vpop.f32.mrb[0].mxu0
        %v2025 = vadd.f32 0.0, %v2024
        %v2026 = vpop.f32.mrb[0].mxu0
        %2027 = vmatprep.mubr.f32.mxu0 0.0
        %2028 = vmatmul.mubr.f32.gmra.mrb[0].mxu0 %v1830
        %v2029 = vpop.f32.mrb[0].mxu0
        %v2030 = vadd.f32 0.0, %v2029
        %v2031 = vpop.f32.mrb[0].mxu0
        %2032 = vmatprep.mubr.f32.mxu0 0.0
        %2033 = vmatmul.mubr.f32.gmra.mrb[0].mxu0 %v1831
        %v2034 = vpop.f32.mrb[0].mxu0
        %v2035 = vadd.f32 0.0, %v2034
        %v2036 = vpop.f32.mrb[0].mxu0
        %2037 = vmatprep.mubr.f32.mxu0 0.0
        %2038 = vmatmul.mubr.f32.gmra.mrb[0].mxu0 %v1832
        %v2039 = vpop.f32.mrb[0].mxu0
        %v2040 = vadd.f32 0.0, %v2039
        %v2041 = vpop.f32.mrb[0].mxu0
        %2042 = vmatprep.mubr.f32.mxu0 0.0
        %2043 = vmatmul.mubr.f32.gmra.mrb[0].mxu0 %v1833
        %v2044 = vpop.f32.mrb[0].mxu0
        %v2045 = vadd.f32 0.0, %v2044
        %v2046 = vpop.f32.mrb[0].mxu0
        %2047 = vmatprep.mubr.f32.mxu0 0.0
        %2048 = vmatmul.mubr.f32.gmra.mrb[0].mxu0 %v1834
        %v2049 = vpop.f32.mrb[0].mxu0
        %v2050 = vadd.f32 0.0, %v2049
        %v2051 = vpop.f32.mrb[0].mxu0
        %2052 = vmatprep.mubr.f32.mxu0 0.0
        %2053 = vmatmul.mubr.f32.gmra.mrb[0].mxu0 %v1835
        %v2054 = vpop.f32.mrb[0].mxu0
        %v2055 = vadd.f32 0.0, %v2054
        %v2056 = vpop.f32.mrb[0].mxu0
        %2057 = vmatprep.mubr.f32.mxu0 0.0
        %2058 = vmatmul.mubr.f32.gmra.mrb[0].mxu0 %v1836
        %v2059 = vpop.f32.mrb[0].mxu0
        %v2060 = vadd.f32 0.0, %v2059
        %v2061 = vpop.f32.mrb[0].mxu0
        %2062 = vmatprep.mubr.f32.mxu0 0.0
        %2063 = vmatmul.mubr.f32.gmra.mrb[0].mxu0 %v1837
        %v2064 = vpop.f32.mrb[0].mxu0
        %v2065 = vadd.f32 0.0, %v2064
        %v2066 = vpop.f32.mrb[0].mxu0
        %2067 = vmatprep.mubr.f32.mxu0 0.0
        %2068 = vmatmul.mubr.f32.gmra.mrb[0].mxu0 %v1838
        %v2069 = vpop.f32.mrb[0].mxu0
        %v2070 = vadd.f32 0.0, %v2069
        %v2071 = vpop.f32.mrb[0].mxu0
        %2072 = vmatprep.mubr.f32.mxu0 0.0
        %2073 = vmatmul.mubr.f32.gmra.mrb[0].mxu0 %v1839
        %v2074 = vpop.f32.mrb[0].mxu0
        %v2075 = vadd.f32 0.0, %v2074
        %v2076 = vpop.f32.mrb[0].mxu0
        %2077 = vmatprep.mubr.f32.mxu0 0.0
        %2078 = vmatmul.mubr.f32.gmra.mrb[0].mxu0 %v1840
        %v2079 = vpop.f32.mrb[0].mxu0
        %v2080 = vadd.f32 0.0, %v2079
        %v2081 = vpop.f32.mrb[0].mxu0
        %2082 = vmatprep.mubr.f32.mxu0 0.0
        %2083 = vmatmul.mubr.f32.gmra.mrb[0].mxu0 %v1841
        %v2084 = vpop.f32.mrb[0].mxu0
        %v2085 = vadd.f32 0.0, %v2084
        %v2086 = vpop.f32.mrb[0].mxu0
        %2087 = vmatprep.mubr.f32.mxu0 0.0
        %2088 = vmatmul.mubr.f32.gmra.mrb[0].mxu0 %v1842
        %v2089 = vpop.f32.mrb[0].mxu0
        %v2090 = vadd.f32 0.0, %v2089
        %v2091 = vpop.f32.mrb[0].mxu0
        %2092 = vmatprep.mubr.f32.mxu0 0.0
        %2093 = vmatmul.mubr.f32.gmra.mrb[0].mxu0 %v1843
        %v2094 = vpop.f32.mrb[0].mxu0
        %v2095 = vadd.f32 0.0, %v2094
        %v2096 = vpop.f32.mrb[0].mxu0
        %2097 = vmatprep.mubr.f32.mxu0 0.0
        %2098 = vmatmul.mubr.f32.gmra.mrb[0].mxu0 %v1844
        %v2099 = vpop.f32.mrb[0].mxu0
        %v2100 = vadd.f32 0.0, %v2099
        %v2101 = vpop.f32.mrb[0].mxu0
        %2102 = vmatprep.mubr.f32.mxu0 0.0
        %2103 = vmatmul.mubr.f32.gmra.mrb[0].mxu0 %v1845
        %v2104 = vpop.f32.mrb[0].mxu0
        %v2105 = vadd.f32 0.0, %v2104
        %v2106 = vpop.f32.mrb[0].mxu0
        %2107 = vdwg.mxu0
        %v2108 = vld [vmem:[#allocation3] sm:$0xff]
        %v2109 = vld [vmem:[#allocation3 + $0x8] sm:$0xff]
        %v2110 = vld [vmem:[#allocation3 + $0x10] sm:$0xff]
        %v2111 = vld [vmem:[#allocation3 + $0x18] sm:$0xff]
        %v2112 = vld [vmem:[#allocation3 + $0x20] sm:$0xff]
        %v2113 = vld [vmem:[#allocation3 + $0x28] sm:$0xff]
        %v2114 = vld [vmem:[#allocation3 + $0x30] sm:$0xff]
        %v2115 = vld [vmem:[#allocation3 + $0x38] sm:$0xff]
        %v2116 = vld [vmem:[#allocation3 + $0x40] sm:$0xff]
        %v2117 = vld [vmem:[#allocation3 + $0x48] sm:$0xff]
        %v2118 = vld [vmem:[#allocation3 + $0x50] sm:$0xff]
        %v2119 = vld [vmem:[#allocation3 + $0x58] sm:$0xff]
        %v2120 = vld [vmem:[#allocation3 + $0x60] sm:$0xff]
        %v2121 = vld [vmem:[#allocation3 + $0x68] sm:$0xff]
        %v2122 = vld [vmem:[#allocation3 + $0x70] sm:$0xff]
        %v2123 = vld [vmem:[#allocation3 + $0x78] sm:$0xff]
        %v2124 = vld [vmem:[#allocation3 + $0x80] sm:$0xff]
        %v2125 = vld [vmem:[#allocation3 + $0x88] sm:$0xff]
        %v2126 = vld [vmem:[#allocation3 + $0x90] sm:$0xff]
        %v2127 = vld [vmem:[#allocation3 + $0x98] sm:$0xff]
        %v2128 = vld [vmem:[#allocation3 + $0xa0] sm:$0xff]
        %v2129 = vld [vmem:[#allocation3 + $0xa8] sm:$0xff]
        %v2130 = vld [vmem:[#allocation3 + $0xb0] sm:$0xff]
        %v2131 = vld [vmem:[#allocation3 + $0xb8] sm:$0xff]
        %v2132 = vld [vmem:[#allocation3 + $0xc0] sm:$0xff]
        %v2133 = vld [vmem:[#allocation3 + $0xc8] sm:$0xff]
        %v2134 = vld [vmem:[#allocation3 + $0xd0] sm:$0xff]
        %v2135 = vld [vmem:[#allocation3 + $0xd8] sm:$0xff]
        %v2136 = vld [vmem:[#allocation3 + $0xe0] sm:$0xff]
        %v2137 = vld [vmem:[#allocation3 + $0xe8] sm:$0xff]
        %v2138 = vld [vmem:[#allocation3 + $0xf0] sm:$0xff]
        %v2139 = vld [vmem:[#allocation3 + $0xf8] sm:$0xff]
        %v2140 = vld [vmem:[#allocation3 + $0x100] sm:$0xff]
        %v2141 = vld [vmem:[#allocation3 + $0x108] sm:$0xff]
        %v2142 = vld [vmem:[#allocation3 + $0x110] sm:$0xff]
        %v2143 = vld [vmem:[#allocation3 + $0x118] sm:$0xff]
        %v2144 = vadd.f32 %v2108, %v1930
        %v2145 = vadd.f32 %v2109, %v1935
        %v2146 = vadd.f32 %v2110, %v1940
        %v2147 = vadd.f32 %v2111, %v1945
        %v2148 = vadd.f32 %v2112, %v1950
        %v2149 = vadd.f32 %v2113, %v1955
        %v2150 = vadd.f32 %v2114, %v1960
        %v2151 = vadd.f32 %v2115, %v1965
        %v2152 = vadd.f32 %v2116, %v1970
        %v2153 = vadd.f32 %v2117, %v1975
        %v2154 = vadd.f32 %v2118, %v1980
        %v2155 = vadd.f32 %v2119, %v1985
        %v2156 = vadd.f32 %v2120, %v1990
        %v2157 = vadd.f32 %v2121, %v1995
        %v2158 = vadd.f32 %v2122, %v2000
        %v2159 = vadd.f32 %v2123, %v2005
        %v2160 = vadd.f32 %v2124, %v2010
        %v2161 = vadd.f32 %v2125, %v2015
        %v2162 = vadd.f32 %v2126, %v2020
        %v2163 = vadd.f32 %v2127, %v2025
        %v2164 = vadd.f32 %v2128, %v2030
        %v2165 = vadd.f32 %v2129, %v2035
        %v2166 = vadd.f32 %v2130, %v2040
        %v2167 = vadd.f32 %v2131, %v2045
        %v2168 = vadd.f32 %v2132, %v2050
        %v2169 = vadd.f32 %v2133, %v2055
        %v2170 = vadd.f32 %v2134, %v2060
        %v2171 = vadd.f32 %v2135, %v2065
        %v2172 = vadd.f32 %v2136, %v2070
        %v2173 = vadd.f32 %v2137, %v2075
        %v2174 = vadd.f32 %v2138, %v2080
        %v2175 = vadd.f32 %v2139, %v2085
        %v2176 = vadd.f32 %v2140, %v2090
        %v2177 = vadd.f32 %v2141, %v2095
        %v2178 = vadd.f32 %v2142, %v2100
        %v2179 = vadd.f32 %v2143, %v2105
        %2180 = vst [vmem:[#allocation3] sm:$0xff] %v2144
        %2181 = vst [vmem:[#allocation3 + $0x8] sm:$0xff] %v2145
        %2182 = vst [vmem:[#allocation3 + $0x10] sm:$0xff] %v2146
        %2183 = vst [vmem:[#allocation3 + $0x18] sm:$0xff] %v2147
        %2184 = vst [vmem:[#allocation3 + $0x20] sm:$0xff] %v2148
        %2185 = vst [vmem:[#allocation3 + $0x28] sm:$0xff] %v2149
        %2186 = vst [vmem:[#allocation3 + $0x30] sm:$0xff] %v2150
        %2187 = vst [vmem:[#allocation3 + $0x38] sm:$0xff] %v2151
        %2188 = vst [vmem:[#allocation3 + $0x40] sm:$0xff] %v2152
        %2189 = vst [vmem:[#allocation3 + $0x48] sm:$0xff] %v2153
        %2190 = vst [vmem:[#allocation3 + $0x50] sm:$0xff] %v2154
        %2191 = vst [vmem:[#allocation3 + $0x58] sm:$0xff] %v2155
        %2192 = vst [vmem:[#allocation3 + $0x60] sm:$0xff] %v2156
        %2193 = vst [vmem:[#allocation3 + $0x68] sm:$0xff] %v2157
        %2194 = vst [vmem:[#allocation3 + $0x70] sm:$0xff] %v2158
        %2195 = vst [vmem:[#allocation3 + $0x78] sm:$0xff] %v2159
        %2196 = vst [vmem:[#allocation3 + $0x80] sm:$0xff] %v2160
        %2197 = vst [vmem:[#allocation3 + $0x88] sm:$0xff] %v2161
        %2198 = vst [vmem:[#allocation3 + $0x90] sm:$0xff] %v2162
        %2199 = vst [vmem:[#allocation3 + $0x98] sm:$0xff] %v2163
        %2200 = vst [vmem:[#allocation3 + $0xa0] sm:$0xff] %v2164
        %2201 = vst [vmem:[#allocation3 + $0xa8] sm:$0xff] %v2165
        %2202 = vst [vmem:[#allocation3 + $0xb0] sm:$0xff] %v2166
        %2203 = vst [vmem:[#allocation3 + $0xb8] sm:$0xff] %v2167
        %2204 = vst [vmem:[#allocation3 + $0xc0] sm:$0xff] %v2168
        %2205 = vst [vmem:[#allocation3 + $0xc8] sm:$0xff] %v2169
        %2206 = vst [vmem:[#allocation3 + $0xd0] sm:$0xff] %v2170
        %2207 = vst [vmem:[#allocation3 + $0xd8] sm:$0xff] %v2171
        %2208 = vst [vmem:[#allocation3 + $0xe0] sm:$0xff] %v2172
        %2209 = vst [vmem:[#allocation3 + $0xe8] sm:$0xff] %v2173
        %2210 = vst [vmem:[#allocation3 + $0xf0] sm:$0xff] %v2174
        %2211 = vst [vmem:[#allocation3 + $0xf8] sm:$0xff] %v2175
        %2212 = vst [vmem:[#allocation3 + $0x100] sm:$0xff] %v2176
        %2213 = vst [vmem:[#allocation3 + $0x108] sm:$0xff] %v2177
        %2214 = vst [vmem:[#allocation3 + $0x110] sm:$0xff] %v2178
        %2215 = vst [vmem:[#allocation3 + $0x118] sm:$0xff] %v2179
        %v2216 = vld [vmem:[%s1403 + $0x2] sm:$0xff]
        %v2217 = vld [vmem:[%s1403 + $0xa] sm:$0xff]
        %v2218 = vld [vmem:[%s1403 + $0x1a] sm:$0xff]
        %v2219 = vld [vmem:[%s1403 + $0x22] sm:$0xff]
        %v2220 = vld [vmem:[%s1403 + $0x32] sm:$0xff]
        %v2221 = vld [vmem:[%s1403 + $0x3a] sm:$0xff]
        %v2222 = vld [vmem:[%s1403 + $0x4a] sm:$0xff]
        %v2223 = vld [vmem:[%s1403 + $0x52] sm:$0xff]
        %v2224 = vld [vmem:[%s1403 + $0x62] sm:$0xff]
        %v2225 = vld [vmem:[%s1403 + $0x6a] sm:$0xff]
        %v2226 = vld [vmem:[%s1403 + $0x7a] sm:$0xff]
        %v2227 = vld [vmem:[%s1403 + $0x82] sm:$0xff]
        %v2228 = vld [vmem:[%s1403 + $0x92] sm:$0xff]
        %v2229 = vld [vmem:[%s1403 + $0x9a] sm:$0xff]
        %v2230 = vld [vmem:[%s1403 + $0xaa] sm:$0xff]
        %v2231 = vld [vmem:[%s1403 + $0xb2] sm:$0xff]
        %v2232 = vld [vmem:[%s1403 + $0xc2] sm:$0xff]
        %v2233 = vld [vmem:[%s1403 + $0xca] sm:$0xff]
        %v2234 = vld [vmem:[%s1403 + $0xda] sm:$0xff]
        %v2235 = vld [vmem:[%s1403 + $0xe2] sm:$0xff]
        %v2236 = vld [vmem:[%s1403 + $0xf2] sm:$0xff]
        %v2237 = vld [vmem:[%s1403 + $0xfa] sm:$0xff]
        %v2238 = vld [vmem:[%s1403 + $0x10a] sm:$0xff]
        %v2239 = vld [vmem:[%s1403 + $0x112] sm:$0xff]
        %v2240 = vld [vmem:[%s1403 + $0x122] sm:$0xff]
        %v2241 = vld [vmem:[%s1403 + $0x12a] sm:$0xff]
        %v2242 = vld [vmem:[%s1403 + $0x13a] sm:$0xff]
        %v2243 = vld [vmem:[%s1403 + $0x142] sm:$0xff]
        %v2244 = vld [vmem:[%s1403 + $0x152] sm:$0xff]
        %v2245 = vld [vmem:[%s1403 + $0x15a] sm:$0xff]
        %v2246 = vld [vmem:[%s1403 + $0x16a] sm:$0xff]
        %v2247 = vld [vmem:[%s1403 + $0x172] sm:$0xff]
        %v2248 = vld [vmem:[%s1403 + $0x182] sm:$0xff]
        %v2249 = vld [vmem:[%s1403 + $0x18a] sm:$0xff]
        %v2250 = vld [vmem:[%s1403 + $0x19a] sm:$0xff]
        %v2251 = vld [vmem:[%s1403 + $0x1a2] sm:$0xff]
        %s2252 = scalar_lea.vmem %s1, 640
        %v2253 = vld [vmem:[%s2252] sm:$0xff]
        %v2254 = vld [vmem:[%s2252 + $0x8] sm:$0xff]
        %v2255 = vld [vmem:[%s2252 + $0x10] sm:$0xff]
        %v2256 = vld [vmem:[%s2252 + $0x18] sm:$0xff]
        %v2257 = vld [vmem:[%s2252 + $0x20] sm:$0xff]
        %v2258 = vld [vmem:[%s2252 + $0x28] sm:$0xff]
        %v2259 = vld [vmem:[%s2252 + $0x30] sm:$0xff]
        %v2260 = vld [vmem:[%s2252 + $0x38] sm:$0xff]
        %v2261 = vld [vmem:[%s2252 + $0x40] sm:$0xff]
        %v2262 = vld [vmem:[%s2252 + $0x48] sm:$0xff]
        %v2263 = vld [vmem:[%s2252 + $0x50] sm:$0xff]
        %v2264 = vld [vmem:[%s2252 + $0x58] sm:$0xff]
        %v2265 = vld [vmem:[%s2252 + $0x60] sm:$0xff]
        %v2266 = vld [vmem:[%s2252 + $0x68] sm:$0xff]
        %v2267 = vld [vmem:[%s2252 + $0x70] sm:$0xff]
        %v2268 = vld [vmem:[%s2252 + $0x78] sm:$0xff]
        %2269 = vmatprep.subr.mxu0 0.0
        %2270 = vmatpush1.msra.mxu0 %v2253
        %2271 = vmatprep.subr.mxu0 0.0
        %2272 = vmatpush1.msra.mxu0 %v2254
        %2273 = vmatprep.subr.mxu0 0.0
        %2274 = vmatpush1.msra.mxu0 %v2255
        %2275 = vmatprep.subr.mxu0 0.0
        %2276 = vmatpush1.msra.mxu0 %v2256
        %2277 = vmatprep.subr.mxu0 0.0
        %2278 = vmatpush1.msra.mxu0 %v2257
        %2279 = vmatprep.subr.mxu0 0.0
        %2280 = vmatpush1.msra.mxu0 %v2258
        %2281 = vmatprep.subr.mxu0 0.0
        %2282 = vmatpush1.msra.mxu0 %v2259
        %2283 = vmatprep.subr.mxu0 0.0
        %2284 = vmatpush1.msra.mxu0 %v2260
        %2285 = vmatprep.subr.mxu0 0.0
        %2286 = vmatpush1.msra.mxu0 %v2261
        %2287 = vmatprep.subr.mxu0 0.0
        %2288 = vmatpush1.msra.mxu0 %v2262
        %2289 = vmatprep.subr.mxu0 0.0
        %2290 = vmatpush1.msra.mxu0 %v2263
        %2291 = vmatprep.subr.mxu0 0.0
        %2292 = vmatpush1.msra.mxu0 %v2264
        %2293 = vmatprep.subr.mxu0 0.0
        %2294 = vmatpush1.msra.mxu0 %v2265
        %2295 = vmatprep.subr.mxu0 0.0
        %2296 = vmatpush1.msra.mxu0 %v2266
        %2297 = vmatprep.subr.mxu0 0.0
        %2298 = vmatpush1.msra.mxu0 %v2267
        %2299 = vmatprep.subr.mxu0 0.0
        %2300 = vmatpush1.msra.mxu0 %v2268
        %2301 = vmatprep.subr.mxu0 0.0
        %2302 = vmatpush1.msra.mxu0 0.0
        %2303 = vmatprep.subr.mxu0 0.0
        %2304 = vmatpush1.msra.mxu0 0.0
        %2305 = vmatprep.subr.mxu0 0.0
        %2306 = vmatpush1.msra.mxu0 0.0
        %2307 = vmatprep.subr.mxu0 0.0
        %2308 = vmatpush1.msra.mxu0 0.0
        %2309 = vmatprep.subr.mxu0 0.0
        %2310 = vmatpush1.msra.mxu0 0.0
        %2311 = vmatprep.subr.mxu0 0.0
        %2312 = vmatpush1.msra.mxu0 0.0
        %2313 = vmatprep.subr.mxu0 0.0
        %2314 = vmatpush1.msra.mxu0 0.0
        %2315 = vmatprep.subr.mxu0 0.0
        %2316 = vmatpush1.msra.mxu0 0.0
        %2317 = vmatprep.subr.mxu0 0.0
        %2318 = vmatpush1.msra.mxu0 0.0
        %2319 = vmatprep.subr.mxu0 0.0
        %2320 = vmatpush1.msra.mxu0 0.0
        %2321 = vmatprep.subr.mxu0 0.0
        %2322 = vmatpush1.msra.mxu0 0.0
        %2323 = vmatprep.subr.mxu0 0.0
        %2324 = vmatpush1.msra.mxu0 0.0
        %2325 = vmatprep.subr.mxu0 0.0
        %2326 = vmatpush1.msra.mxu0 0.0
        %2327 = vmatprep.subr.mxu0 0.0
        %2328 = vmatpush1.msra.mxu0 0.0
        %2329 = vmatprep.subr.mxu0 0.0
        %2330 = vmatpush1.msra.mxu0 0.0
        %2331 = vmatprep.subr.mxu0 0.0
        %2332 = vmatpush1.msra.mxu0 0.0
        %2333 = vmatprep.mubr.f32.mxu0 0.0
        %2334 = vmatmul.mubr.f32.gmra.mrb[0].mxu0 %v2216
        %v2335 = vpop.f32.mrb[0].mxu0
        %v2336 = vadd.f32 0.0, %v2335
        %v2337 = vpop.f32.mrb[0].mxu0
        %2338 = vmatprep.mubr.f32.mxu0 0.0
        %2339 = vmatmul.mubr.f32.gmra.mrb[0].mxu0 %v2217
        %v2340 = vpop.f32.mrb[0].mxu0
        %v2341 = vadd.f32 0.0, %v2340
        %v2342 = vpop.f32.mrb[0].mxu0
        %2343 = vmatprep.mubr.f32.mxu0 0.0
        %2344 = vmatmul.mubr.f32.gmra.mrb[0].mxu0 %v2218
        %v2345 = vpop.f32.mrb[0].mxu0
        %v2346 = vadd.f32 0.0, %v2345
        %v2347 = vpop.f32.mrb[0].mxu0
        %2348 = vmatprep.mubr.f32.mxu0 0.0
        %2349 = vmatmul.mubr.f32.gmra.mrb[0].mxu0 %v2219
        %v2350 = vpop.f32.mrb[0].mxu0
        %v2351 = vadd.f32 0.0, %v2350
        %v2352 = vpop.f32.mrb[0].mxu0
        %2353 = vmatprep.mubr.f32.mxu0 0.0
        %2354 = vmatmul.mubr.f32.gmra.mrb[0].mxu0 %v2220
        %v2355 = vpop.f32.mrb[0].mxu0
        %v2356 = vadd.f32 0.0, %v2355
        %v2357 = vpop.f32.mrb[0].mxu0
        %2358 = vmatprep.mubr.f32.mxu0 0.0
        %2359 = vmatmul.mubr.f32.gmra.mrb[0].mxu0 %v2221
        %v2360 = vpop.f32.mrb[0].mxu0
        %v2361 = vadd.f32 0.0, %v2360
        %v2362 = vpop.f32.mrb[0].mxu0
        %2363 = vmatprep.mubr.f32.mxu0 0.0
        %2364 = vmatmul.mubr.f32.gmra.mrb[0].mxu0 %v2222
        %v2365 = vpop.f32.mrb[0].mxu0
        %v2366 = vadd.f32 0.0, %v2365
        %v2367 = vpop.f32.mrb[0].mxu0
        %2368 = vmatprep.mubr.f32.mxu0 0.0
        %2369 = vmatmul.mubr.f32.gmra.mrb[0].mxu0 %v2223
        %v2370 = vpop.f32.mrb[0].mxu0
        %v2371 = vadd.f32 0.0, %v2370
        %v2372 = vpop.f32.mrb[0].mxu0
        %2373 = vmatprep.mubr.f32.mxu0 0.0
        %2374 = vmatmul.mubr.f32.gmra.mrb[0].mxu0 %v2224
        %v2375 = vpop.f32.mrb[0].mxu0
        %v2376 = vadd.f32 0.0, %v2375
        %v2377 = vpop.f32.mrb[0].mxu0
        %2378 = vmatprep.mubr.f32.mxu0 0.0
        %2379 = vmatmul.mubr.f32.gmra.mrb[0].mxu0 %v2225
        %v2380 = vpop.f32.mrb[0].mxu0
        %v2381 = vadd.f32 0.0, %v2380
        %v2382 = vpop.f32.mrb[0].mxu0
        %2383 = vmatprep.mubr.f32.mxu0 0.0
        %2384 = vmatmul.mubr.f32.gmra.mrb[0].mxu0 %v2226
        %v2385 = vpop.f32.mrb[0].mxu0
        %v2386 = vadd.f32 0.0, %v2385
        %v2387 = vpop.f32.mrb[0].mxu0
        %2388 = vmatprep.mubr.f32.mxu0 0.0
        %2389 = vmatmul.mubr.f32.gmra.mrb[0].mxu0 %v2227
        %v2390 = vpop.f32.mrb[0].mxu0
        %v2391 = vadd.f32 0.0, %v2390
        %v2392 = vpop.f32.mrb[0].mxu0
        %2393 = vmatprep.mubr.f32.mxu0 0.0
        %2394 = vmatmul.mubr.f32.gmra.mrb[0].mxu0 %v2228
        %v2395 = vpop.f32.mrb[0].mxu0
        %v2396 = vadd.f32 0.0, %v2395
        %v2397 = vpop.f32.mrb[0].mxu0
        %2398 = vmatprep.mubr.f32.mxu0 0.0
        %2399 = vmatmul.mubr.f32.gmra.mrb[0].mxu0 %v2229
        %v2400 = vpop.f32.mrb[0].mxu0
        %v2401 = vadd.f32 0.0, %v2400
        %v2402 = vpop.f32.mrb[0].mxu0
        %2403 = vmatprep.mubr.f32.mxu0 0.0
        %2404 = vmatmul.mubr.f32.gmra.mrb[0].mxu0 %v2230
        %v2405 = vpop.f32.mrb[0].mxu0
        %v2406 = vadd.f32 0.0, %v2405
        %v2407 = vpop.f32.mrb[0].mxu0
        %2408 = vmatprep.mubr.f32.mxu0 0.0
        %2409 = vmatmul.mubr.f32.gmra.mrb[0].mxu0 %v2231
        %v2410 = vpop.f32.mrb[0].mxu0
        %v2411 = vadd.f32 0.0, %v2410
        %v2412 = vpop.f32.mrb[0].mxu0
        %2413 = vmatprep.mubr.f32.mxu0 0.0
        %2414 = vmatmul.mubr.f32.gmra.mrb[0].mxu0 %v2232
        %v2415 = vpop.f32.mrb[0].mxu0
        %v2416 = vadd.f32 0.0, %v2415
        %v2417 = vpop.f32.mrb[0].mxu0
        %2418 = vmatprep.mubr.f32.mxu0 0.0
        %2419 = vmatmul.mubr.f32.gmra.mrb[0].mxu0 %v2233
        %v2420 = vpop.f32.mrb[0].mxu0
        %v2421 = vadd.f32 0.0, %v2420
        %v2422 = vpop.f32.mrb[0].mxu0
        %2423 = vmatprep.mubr.f32.mxu0 0.0
        %2424 = vmatmul.mubr.f32.gmra.mrb[0].mxu0 %v2234
        %v2425 = vpop.f32.mrb[0].mxu0
        %v2426 = vadd.f32 0.0, %v2425
        %v2427 = vpop.f32.mrb[0].mxu0
        %2428 = vmatprep.mubr.f32.mxu0 0.0
        %2429 = vmatmul.mubr.f32.gmra.mrb[0].mxu0 %v2235
        %v2430 = vpop.f32.mrb[0].mxu0
        %v2431 = vadd.f32 0.0, %v2430
        %v2432 = vpop.f32.mrb[0].mxu0
        %2433 = vmatprep.mubr.f32.mxu0 0.0
        %2434 = vmatmul.mubr.f32.gmra.mrb[0].mxu0 %v2236
        %v2435 = vpop.f32.mrb[0].mxu0
        %v2436 = vadd.f32 0.0, %v2435
        %v2437 = vpop.f32.mrb[0].mxu0
        %2438 = vmatprep.mubr.f32.mxu0 0.0
        %2439 = vmatmul.mubr.f32.gmra.mrb[0].mxu0 %v2237
        %v2440 = vpop.f32.mrb[0].mxu0
        %v2441 = vadd.f32 0.0, %v2440
        %v2442 = vpop.f32.mrb[0].mxu0
        %2443 = vmatprep.mubr.f32.mxu0 0.0
        %2444 = vmatmul.mubr.f32.gmra.mrb[0].mxu0 %v2238
        %v2445 = vpop.f32.mrb[0].mxu0
        %v2446 = vadd.f32 0.0, %v2445
        %v2447 = vpop.f32.mrb[0].mxu0
        %2448 = vmatprep.mubr.f32.mxu0 0.0
        %2449 = vmatmul.mubr.f32.gmra.mrb[0].mxu0 %v2239
        %v2450 = vpop.f32.mrb[0].mxu0
        %v2451 = vadd.f32 0.0, %v2450
        %v2452 = vpop.f32.mrb[0].mxu0
        %2453 = vmatprep.mubr.f32.mxu0 0.0
        %2454 = vmatmul.mubr.f32.gmra.mrb[0].mxu0 %v2240
        %v2455 = vpop.f32.mrb[0].mxu0
        %v2456 = vadd.f32 0.0, %v2455
        %v2457 = vpop.f32.mrb[0].mxu0
        %2458 = vmatprep.mubr.f32.mxu0 0.0
        %2459 = vmatmul.mubr.f32.gmra.mrb[0].mxu0 %v2241
        %v2460 = vpop.f32.mrb[0].mxu0
        %v2461 = vadd.f32 0.0, %v2460
        %v2462 = vpop.f32.mrb[0].mxu0
        %2463 = vmatprep.mubr.f32.mxu0 0.0
        %2464 = vmatmul.mubr.f32.gmra.mrb[0].mxu0 %v2242
        %v2465 = vpop.f32.mrb[0].mxu0
        %v2466 = vadd.f32 0.0, %v2465
        %v2467 = vpop.f32.mrb[0].mxu0
        %2468 = vmatprep.mubr.f32.mxu0 0.0
        %2469 = vmatmul.mubr.f32.gmra.mrb[0].mxu0 %v2243
        %v2470 = vpop.f32.mrb[0].mxu0
        %v2471 = vadd.f32 0.0, %v2470
        %v2472 = vpop.f32.mrb[0].mxu0
        %2473 = vmatprep.mubr.f32.mxu0 0.0
        %2474 = vmatmul.mubr.f32.gmra.mrb[0].mxu0 %v2244
        %v2475 = vpop.f32.mrb[0].mxu0
        %v2476 = vadd.f32 0.0, %v2475
        %v2477 = vpop.f32.mrb[0].mxu0
        %2478 = vmatprep.mubr.f32.mxu0 0.0
        %2479 = vmatmul.mubr.f32.gmra.mrb[0].mxu0 %v2245
        %v2480 = vpop.f32.mrb[0].mxu0
        %v2481 = vadd.f32 0.0, %v2480
        %v2482 = vpop.f32.mrb[0].mxu0
        %2483 = vmatprep.mubr.f32.mxu0 0.0
        %2484 = vmatmul.mubr.f32.gmra.mrb[0].mxu0 %v2246
        %v2485 = vpop.f32.mrb[0].mxu0
        %v2486 = vadd.f32 0.0, %v2485
        %v2487 = vpop.f32.mrb[0].mxu0
        %2488 = vmatprep.mubr.f32.mxu0 0.0
        %2489 = vmatmul.mubr.f32.gmra.mrb[0].mxu0 %v2247
        %v2490 = vpop.f32.mrb[0].mxu0
        %v2491 = vadd.f32 0.0, %v2490
        %v2492 = vpop.f32.mrb[0].mxu0
        %2493 = vmatprep.mubr.f32.mxu0 0.0
        %2494 = vmatmul.mubr.f32.gmra.mrb[0].mxu0 %v2248
        %v2495 = vpop.f32.mrb[0].mxu0
        %v2496 = vadd.f32 0.0, %v2495
        %v2497 = vpop.f32.mrb[0].mxu0
        %2498 = vmatprep.mubr.f32.mxu0 0.0
        %2499 = vmatmul.mubr.f32.gmra.mrb[0].mxu0 %v2249
        %v2500 = vpop.f32.mrb[0].mxu0
        %v2501 = vadd.f32 0.0, %v2500
        %v2502 = vpop.f32.mrb[0].mxu0
        %2503 = vmatprep.mubr.f32.mxu0 0.0
        %2504 = vmatmul.mubr.f32.gmra.mrb[0].mxu0 %v2250
        %v2505 = vpop.f32.mrb[0].mxu0
        %v2506 = vadd.f32 0.0, %v2505
        %v2507 = vpop.f32.mrb[0].mxu0
        %2508 = vmatprep.mubr.f32.mxu0 0.0
        %2509 = vmatmul.mubr.f32.gmra.mrb[0].mxu0 %v2251
        %v2510 = vpop.f32.mrb[0].mxu0
        %v2511 = vadd.f32 0.0, %v2510
        %v2512 = vpop.f32.mrb[0].mxu0
        %2513 = vdwg.mxu0
        %v2514 = vld [vmem:[#allocation3] sm:$0xff]
        %v2515 = vld [vmem:[#allocation3 + $0x8] sm:$0xff]
        %v2516 = vld [vmem:[#allocation3 + $0x10] sm:$0xff]
        %v2517 = vld [vmem:[#allocation3 + $0x18] sm:$0xff]
        %v2518 = vld [vmem:[#allocation3 + $0x20] sm:$0xff]
        %v2519 = vld [vmem:[#allocation3 + $0x28] sm:$0xff]
        %v2520 = vld [vmem:[#allocation3 + $0x30] sm:$0xff]
        %v2521 = vld [vmem:[#allocation3 + $0x38] sm:$0xff]
        %v2522 = vld [vmem:[#allocation3 + $0x40] sm:$0xff]
        %v2523 = vld [vmem:[#allocation3 + $0x48] sm:$0xff]
        %v2524 = vld [vmem:[#allocation3 + $0x50] sm:$0xff]
        %v2525 = vld [vmem:[#allocation3 + $0x58] sm:$0xff]
        %v2526 = vld [vmem:[#allocation3 + $0x60] sm:$0xff]
        %v2527 = vld [vmem:[#allocation3 + $0x68] sm:$0xff]
        %v2528 = vld [vmem:[#allocation3 + $0x70] sm:$0xff]
        %v2529 = vld [vmem:[#allocation3 + $0x78] sm:$0xff]
        %v2530 = vld [vmem:[#allocation3 + $0x80] sm:$0xff]
        %v2531 = vld [vmem:[#allocation3 + $0x88] sm:$0xff]
        %v2532 = vld [vmem:[#allocation3 + $0x90] sm:$0xff]
        %v2533 = vld [vmem:[#allocation3 + $0x98] sm:$0xff]
        %v2534 = vld [vmem:[#allocation3 + $0xa0] sm:$0xff]
        %v2535 = vld [vmem:[#allocation3 + $0xa8] sm:$0xff]
        %v2536 = vld [vmem:[#allocation3 + $0xb0] sm:$0xff]
        %v2537 = vld [vmem:[#allocation3 + $0xb8] sm:$0xff]
        %v2538 = vld [vmem:[#allocation3 + $0xc0] sm:$0xff]
        %v2539 = vld [vmem:[#allocation3 + $0xc8] sm:$0xff]
        %v2540 = vld [vmem:[#allocation3 + $0xd0] sm:$0xff]
        %v2541 = vld [vmem:[#allocation3 + $0xd8] sm:$0xff]
        %v2542 = vld [vmem:[#allocation3 + $0xe0] sm:$0xff]
        %v2543 = vld [vmem:[#allocation3 + $0xe8] sm:$0xff]
        %v2544 = vld [vmem:[#allocation3 + $0xf0] sm:$0xff]
        %v2545 = vld [vmem:[#allocation3 + $0xf8] sm:$0xff]
        %v2546 = vld [vmem:[#allocation3 + $0x100] sm:$0xff]
        %v2547 = vld [vmem:[#allocation3 + $0x108] sm:$0xff]
        %v2548 = vld [vmem:[#allocation3 + $0x110] sm:$0xff]
        %v2549 = vld [vmem:[#allocation3 + $0x118] sm:$0xff]
        %v2550 = vadd.f32 %v2514, %v2336
        %v2551 = vadd.f32 %v2515, %v2341
        %v2552 = vadd.f32 %v2516, %v2346
        %v2553 = vadd.f32 %v2517, %v2351
        %v2554 = vadd.f32 %v2518, %v2356
        %v2555 = vadd.f32 %v2519, %v2361
        %v2556 = vadd.f32 %v2520, %v2366
        %v2557 = vadd.f32 %v2521, %v2371
        %v2558 = vadd.f32 %v2522, %v2376
        %v2559 = vadd.f32 %v2523, %v2381
        %v2560 = vadd.f32 %v2524, %v2386
        %v2561 = vadd.f32 %v2525, %v2391
        %v2562 = vadd.f32 %v2526, %v2396
        %v2563 = vadd.f32 %v2527, %v2401
        %v2564 = vadd.f32 %v2528, %v2406
        %v2565 = vadd.f32 %v2529, %v2411
        %v2566 = vadd.f32 %v2530, %v2416
        %v2567 = vadd.f32 %v2531, %v2421
        %v2568 = vadd.f32 %v2532, %v2426
        %v2569 = vadd.f32 %v2533, %v2431
        %v2570 = vadd.f32 %v2534, %v2436
        %v2571 = vadd.f32 %v2535, %v2441
        %v2572 = vadd.f32 %v2536, %v2446
        %v2573 = vadd.f32 %v2537, %v2451
        %v2574 = vadd.f32 %v2538, %v2456
        %v2575 = vadd.f32 %v2539, %v2461
        %v2576 = vadd.f32 %v2540, %v2466
        %v2577 = vadd.f32 %v2541, %v2471
        %v2578 = vadd.f32 %v2542, %v2476
        %v2579 = vadd.f32 %v2543, %v2481
        %v2580 = vadd.f32 %v2544, %v2486
        %v2581 = vadd.f32 %v2545, %v2491
        %v2582 = vadd.f32 %v2546, %v2496
        %v2583 = vadd.f32 %v2547, %v2501
        %v2584 = vadd.f32 %v2548, %v2506
        %v2585 = vadd.f32 %v2549, %v2511
        %2586 = vst [vmem:[#allocation3] sm:$0xff] %v2550
        %2587 = vst [vmem:[#allocation3 + $0x8] sm:$0xff] %v2551
        %2588 = vst [vmem:[#allocation3 + $0x10] sm:$0xff] %v2552
        %2589 = vst [vmem:[#allocation3 + $0x18] sm:$0xff] %v2553
        %2590 = vst [vmem:[#allocation3 + $0x20] sm:$0xff] %v2554
        %2591 = vst [vmem:[#allocation3 + $0x28] sm:$0xff] %v2555
        %2592 = vst [vmem:[#allocation3 + $0x30] sm:$0xff] %v2556
        %2593 = vst [vmem:[#allocation3 + $0x38] sm:$0xff] %v2557
        %2594 = vst [vmem:[#allocation3 + $0x40] sm:$0xff] %v2558
        %2595 = vst [vmem:[#allocation3 + $0x48] sm:$0xff] %v2559
        %2596 = vst [vmem:[#allocation3 + $0x50] sm:$0xff] %v2560
        %2597 = vst [vmem:[#allocation3 + $0x58] sm:$0xff] %v2561
        %2598 = vst [vmem:[#allocation3 + $0x60] sm:$0xff] %v2562
        %2599 = vst [vmem:[#allocation3 + $0x68] sm:$0xff] %v2563
        %2600 = vst [vmem:[#allocation3 + $0x70] sm:$0xff] %v2564
        %2601 = vst [vmem:[#allocation3 + $0x78] sm:$0xff] %v2565
        %2602 = vst [vmem:[#allocation3 + $0x80] sm:$0xff] %v2566
        %2603 = vst [vmem:[#allocation3 + $0x88] sm:$0xff] %v2567
        %2604 = vst [vmem:[#allocation3 + $0x90] sm:$0xff] %v2568
        %2605 = vst [vmem:[#allocation3 + $0x98] sm:$0xff] %v2569
        %2606 = vst [vmem:[#allocation3 + $0xa0] sm:$0xff] %v2570
        %2607 = vst [vmem:[#allocation3 + $0xa8] sm:$0xff] %v2571
        %2608 = vst [vmem:[#allocation3 + $0xb0] sm:$0xff] %v2572
        %2609 = vst [vmem:[#allocation3 + $0xb8] sm:$0xff] %v2573
        %2610 = vst [vmem:[#allocation3 + $0xc0] sm:$0xff] %v2574
        %2611 = vst [vmem:[#allocation3 + $0xc8] sm:$0xff] %v2575
        %2612 = vst [vmem:[#allocation3 + $0xd0] sm:$0xff] %v2576
        %2613 = vst [vmem:[#allocation3 + $0xd8] sm:$0xff] %v2577
        %2614 = vst [vmem:[#allocation3 + $0xe0] sm:$0xff] %v2578
        %2615 = vst [vmem:[#allocation3 + $0xe8] sm:$0xff] %v2579
        %2616 = vst [vmem:[#allocation3 + $0xf0] sm:$0xff] %v2580
        %2617 = vst [vmem:[#allocation3 + $0xf8] sm:$0xff] %v2581
        %2618 = vst [vmem:[#allocation3 + $0x100] sm:$0xff] %v2582
        %2619 = vst [vmem:[#allocation3 + $0x108] sm:$0xff] %v2583
        %2620 = vst [vmem:[#allocation3 + $0x110] sm:$0xff] %v2584
        %2621 = vst [vmem:[#allocation3 + $0x118] sm:$0xff] %v2585
        %s2622 = sadd.s32 %s253, 2
        %s2623 = smul.u32 %s2622, 24
        %s2624 = scalar_lea.vmem %s251, %s2623
        %v2625 = vld [vmem:[%s2624] sm:$0xff]
        %v2626 = vld [vmem:[%s2624 + $0x8] sm:$0xff]
        %v2627 = vld [vmem:[%s2624 + $0x18] sm:$0xff]
        %v2628 = vld [vmem:[%s2624 + $0x20] sm:$0xff]
        %v2629 = vld [vmem:[%s2624 + $0x30] sm:$0xff]
        %v2630 = vld [vmem:[%s2624 + $0x38] sm:$0xff]
        %v2631 = vld [vmem:[%s2624 + $0x48] sm:$0xff]
        %v2632 = vld [vmem:[%s2624 + $0x50] sm:$0xff]
        %v2633 = vld [vmem:[%s2624 + $0x60] sm:$0xff]
        %v2634 = vld [vmem:[%s2624 + $0x68] sm:$0xff]
        %v2635 = vld [vmem:[%s2624 + $0x78] sm:$0xff]
        %v2636 = vld [vmem:[%s2624 + $0x80] sm:$0xff]
        %v2637 = vld [vmem:[%s2624 + $0x90] sm:$0xff]
        %v2638 = vld [vmem:[%s2624 + $0x98] sm:$0xff]
        %v2639 = vld [vmem:[%s2624 + $0xa8] sm:$0xff]
        %v2640 = vld [vmem:[%s2624 + $0xb0] sm:$0xff]
        %v2641 = vld [vmem:[%s2624 + $0xc0] sm:$0xff]
        %v2642 = vld [vmem:[%s2624 + $0xc8] sm:$0xff]
        %v2643 = vld [vmem:[%s2624 + $0xd8] sm:$0xff]
        %v2644 = vld [vmem:[%s2624 + $0xe0] sm:$0xff]
        %v2645 = vld [vmem:[%s2624 + $0xf0] sm:$0xff]
        %v2646 = vld [vmem:[%s2624 + $0xf8] sm:$0xff]
        %v2647 = vld [vmem:[%s2624 + $0x108] sm:$0xff]
        %v2648 = vld [vmem:[%s2624 + $0x110] sm:$0xff]
        %v2649 = vld [vmem:[%s2624 + $0x120] sm:$0xff]
        %v2650 = vld [vmem:[%s2624 + $0x128] sm:$0xff]
        %v2651 = vld [vmem:[%s2624 + $0x138] sm:$0xff]
        %v2652 = vld [vmem:[%s2624 + $0x140] sm:$0xff]
        %v2653 = vld [vmem:[%s2624 + $0x150] sm:$0xff]
        %v2654 = vld [vmem:[%s2624 + $0x158] sm:$0xff]
        %v2655 = vld [vmem:[%s2624 + $0x168] sm:$0xff]
        %v2656 = vld [vmem:[%s2624 + $0x170] sm:$0xff]
        %v2657 = vld [vmem:[%s2624 + $0x180] sm:$0xff]
        %v2658 = vld [vmem:[%s2624 + $0x188] sm:$0xff]
        %v2659 = vld [vmem:[%s2624 + $0x198] sm:$0xff]
        %v2660 = vld [vmem:[%s2624 + $0x1a0] sm:$0xff]
        %s2661 = scalar_lea.vmem %s1, 768
        %v2662 = vld [vmem:[%s2661] sm:$0xff]
        %v2663 = vld [vmem:[%s2661 + $0x8] sm:$0xff]
        %v2664 = vld [vmem:[%s2661 + $0x10] sm:$0xff]
        %v2665 = vld [vmem:[%s2661 + $0x18] sm:$0xff]
        %v2666 = vld [vmem:[%s2661 + $0x20] sm:$0xff]
        %v2667 = vld [vmem:[%s2661 + $0x28] sm:$0xff]
        %v2668 = vld [vmem:[%s2661 + $0x30] sm:$0xff]
        %v2669 = vld [vmem:[%s2661 + $0x38] sm:$0xff]
        %v2670 = vld [vmem:[%s2661 + $0x40] sm:$0xff]
        %v2671 = vld [vmem:[%s2661 + $0x48] sm:$0xff]
        %v2672 = vld [vmem:[%s2661 + $0x50] sm:$0xff]
        %v2673 = vld [vmem:[%s2661 + $0x58] sm:$0xff]
        %v2674 = vld [vmem:[%s2661 + $0x60] sm:$0xff]
        %v2675 = vld [vmem:[%s2661 + $0x68] sm:$0xff]
        %v2676 = vld [vmem:[%s2661 + $0x70] sm:$0xff]
        %v2677 = vld [vmem:[%s2661 + $0x78] sm:$0xff]
        %2678 = vmatprep.subr.mxu0 0.0
        %2679 = vmatpush1.msra.mxu0 %v2662
        %2680 = vmatprep.subr.mxu0 0.0
        %2681 = vmatpush1.msra.mxu0 %v2663
        %2682 = vmatprep.subr.mxu0 0.0
        %2683 = vmatpush1.msra.mxu0 %v2664
        %2684 = vmatprep.subr.mxu0 0.0
        %2685 = vmatpush1.msra.mxu0 %v2665
        %2686 = vmatprep.subr.mxu0 0.0
        %2687 = vmatpush1.msra.mxu0 %v2666
        %2688 = vmatprep.subr.mxu0 0.0
        %2689 = vmatpush1.msra.mxu0 %v2667
        %2690 = vmatprep.subr.mxu0 0.0
        %2691 = vmatpush1.msra.mxu0 %v2668
        %2692 = vmatprep.subr.mxu0 0.0
        %2693 = vmatpush1.msra.mxu0 %v2669
        %2694 = vmatprep.subr.mxu0 0.0
        %2695 = vmatpush1.msra.mxu0 %v2670
        %2696 = vmatprep.subr.mxu0 0.0
        %2697 = vmatpush1.msra.mxu0 %v2671
        %2698 = vmatprep.subr.mxu0 0.0
        %2699 = vmatpush1.msra.mxu0 %v2672
        %2700 = vmatprep.subr.mxu0 0.0
        %2701 = vmatpush1.msra.mxu0 %v2673
        %2702 = vmatprep.subr.mxu0 0.0
        %2703 = vmatpush1.msra.mxu0 %v2674
        %2704 = vmatprep.subr.mxu0 0.0
        %2705 = vmatpush1.msra.mxu0 %v2675
        %2706 = vmatprep.subr.mxu0 0.0
        %2707 = vmatpush1.msra.mxu0 %v2676
        %2708 = vmatprep.subr.mxu0 0.0
        %2709 = vmatpush1.msra.mxu0 %v2677
        %2710 = vmatprep.subr.mxu0 0.0
        %2711 = vmatpush1.msra.mxu0 0.0
        %2712 = vmatprep.subr.mxu0 0.0
        %2713 = vmatpush1.msra.mxu0 0.0
        %2714 = vmatprep.subr.mxu0 0.0
        %2715 = vmatpush1.msra.mxu0 0.0
        %2716 = vmatprep.subr.mxu0 0.0
        %2717 = vmatpush1.msra.mxu0 0.0
        %2718 = vmatprep.subr.mxu0 0.0
        %2719 = vmatpush1.msra.mxu0 0.0
        %2720 = vmatprep.subr.mxu0 0.0
        %2721 = vmatpush1.msra.mxu0 0.0
        %2722 = vmatprep.subr.mxu0 0.0
        %2723 = vmatpush1.msra.mxu0 0.0
        %2724 = vmatprep.subr.mxu0 0.0
        %2725 = vmatpush1.msra.mxu0 0.0
        %2726 = vmatprep.subr.mxu0 0.0
        %2727 = vmatpush1.msra.mxu0 0.0
        %2728 = vmatprep.subr.mxu0 0.0
        %2729 = vmatpush1.msra.mxu0 0.0
        %2730 = vmatprep.subr.mxu0 0.0
        %2731 = vmatpush1.msra.mxu0 0.0
        %2732 = vmatprep.subr.mxu0 0.0
        %2733 = vmatpush1.msra.mxu0 0.0
        %2734 = vmatprep.subr.mxu0 0.0
        %2735 = vmatpush1.msra.mxu0 0.0
        %2736 = vmatprep.subr.mxu0 0.0
        %2737 = vmatpush1.msra.mxu0 0.0
        %2738 = vmatprep.subr.mxu0 0.0
        %2739 = vmatpush1.msra.mxu0 0.0
        %2740 = vmatprep.subr.mxu0 0.0
        %2741 = vmatpush1.msra.mxu0 0.0
        %2742 = vmatprep.mubr.f32.mxu0 0.0
        %2743 = vmatmul.mubr.f32.gmra.mrb[0].mxu0 %v2625
        %v2744 = vpop.f32.mrb[0].mxu0
        %v2745 = vadd.f32 0.0, %v2744
        %v2746 = vpop.f32.mrb[0].mxu0
        %2747 = vmatprep.mubr.f32.mxu0 0.0
        %2748 = vmatmul.mubr.f32.gmra.mrb[0].mxu0 %v2626
        %v2749 = vpop.f32.mrb[0].mxu0
        %v2750 = vadd.f32 0.0, %v2749
        %v2751 = vpop.f32.mrb[0].mxu0
        %2752 = vmatprep.mubr.f32.mxu0 0.0
        %2753 = vmatmul.mubr.f32.gmra.mrb[0].mxu0 %v2627
        %v2754 = vpop.f32.mrb[0].mxu0
        %v2755 = vadd.f32 0.0, %v2754
        %v2756 = vpop.f32.mrb[0].mxu0
        %2757 = vmatprep.mubr.f32.mxu0 0.0
        %2758 = vmatmul.mubr.f32.gmra.mrb[0].mxu0 %v2628
        %v2759 = vpop.f32.mrb[0].mxu0
        %v2760 = vadd.f32 0.0, %v2759
        %v2761 = vpop.f32.mrb[0].mxu0
        %2762 = vmatprep.mubr.f32.mxu0 0.0
        %2763 = vmatmul.mubr.f32.gmra.mrb[0].mxu0 %v2629
        %v2764 = vpop.f32.mrb[0].mxu0
        %v2765 = vadd.f32 0.0, %v2764
        %v2766 = vpop.f32.mrb[0].mxu0
        %2767 = vmatprep.mubr.f32.mxu0 0.0
        %2768 = vmatmul.mubr.f32.gmra.mrb[0].mxu0 %v2630
        %v2769 = vpop.f32.mrb[0].mxu0
        %v2770 = vadd.f32 0.0, %v2769
        %v2771 = vpop.f32.mrb[0].mxu0
        %2772 = vmatprep.mubr.f32.mxu0 0.0
        %2773 = vmatmul.mubr.f32.gmra.mrb[0].mxu0 %v2631
        %v2774 = vpop.f32.mrb[0].mxu0
        %v2775 = vadd.f32 0.0, %v2774
        %v2776 = vpop.f32.mrb[0].mxu0
        %2777 = vmatprep.mubr.f32.mxu0 0.0
        %2778 = vmatmul.mubr.f32.gmra.mrb[0].mxu0 %v2632
        %v2779 = vpop.f32.mrb[0].mxu0
        %v2780 = vadd.f32 0.0, %v2779
        %v2781 = vpop.f32.mrb[0].mxu0
        %2782 = vmatprep.mubr.f32.mxu0 0.0
        %2783 = vmatmul.mubr.f32.gmra.mrb[0].mxu0 %v2633
        %v2784 = vpop.f32.mrb[0].mxu0
        %v2785 = vadd.f32 0.0, %v2784
        %v2786 = vpop.f32.mrb[0].mxu0
        %2787 = vmatprep.mubr.f32.mxu0 0.0
        %2788 = vmatmul.mubr.f32.gmra.mrb[0].mxu0 %v2634
        %v2789 = vpop.f32.mrb[0].mxu0
        %v2790 = vadd.f32 0.0, %v2789
        %v2791 = vpop.f32.mrb[0].mxu0
        %2792 = vmatprep.mubr.f32.mxu0 0.0
        %2793 = vmatmul.mubr.f32.gmra.mrb[0].mxu0 %v2635
        %v2794 = vpop.f32.mrb[0].mxu0
        %v2795 = vadd.f32 0.0, %v2794
        %v2796 = vpop.f32.mrb[0].mxu0
        %2797 = vmatprep.mubr.f32.mxu0 0.0
        %2798 = vmatmul.mubr.f32.gmra.mrb[0].mxu0 %v2636
        %v2799 = vpop.f32.mrb[0].mxu0
        %v2800 = vadd.f32 0.0, %v2799
        %v2801 = vpop.f32.mrb[0].mxu0
        %2802 = vmatprep.mubr.f32.mxu0 0.0
        %2803 = vmatmul.mubr.f32.gmra.mrb[0].mxu0 %v2637
        %v2804 = vpop.f32.mrb[0].mxu0
        %v2805 = vadd.f32 0.0, %v2804
        %v2806 = vpop.f32.mrb[0].mxu0
        %2807 = vmatprep.mubr.f32.mxu0 0.0
        %2808 = vmatmul.mubr.f32.gmra.mrb[0].mxu0 %v2638
        %v2809 = vpop.f32.mrb[0].mxu0
        %v2810 = vadd.f32 0.0, %v2809
        %v2811 = vpop.f32.mrb[0].mxu0
        %2812 = vmatprep.mubr.f32.mxu0 0.0
        %2813 = vmatmul.mubr.f32.gmra.mrb[0].mxu0 %v2639
        %v2814 = vpop.f32.mrb[0].mxu0
        %v2815 = vadd.f32 0.0, %v2814
        %v2816 = vpop.f32.mrb[0].mxu0
        %2817 = vmatprep.mubr.f32.mxu0 0.0
        %2818 = vmatmul.mubr.f32.gmra.mrb[0].mxu0 %v2640
        %v2819 = vpop.f32.mrb[0].mxu0
        %v2820 = vadd.f32 0.0, %v2819
        %v2821 = vpop.f32.mrb[0].mxu0
        %2822 = vmatprep.mubr.f32.mxu0 0.0
        %2823 = vmatmul.mubr.f32.gmra.mrb[0].mxu0 %v2641
        %v2824 = vpop.f32.mrb[0].mxu0
        %v2825 = vadd.f32 0.0, %v2824
        %v2826 = vpop.f32.mrb[0].mxu0
        %2827 = vmatprep.mubr.f32.mxu0 0.0
        %2828 = vmatmul.mubr.f32.gmra.mrb[0].mxu0 %v2642
        %v2829 = vpop.f32.mrb[0].mxu0
        %v2830 = vadd.f32 0.0, %v2829
        %v2831 = vpop.f32.mrb[0].mxu0
        %2832 = vmatprep.mubr.f32.mxu0 0.0
        %2833 = vmatmul.mubr.f32.gmra.mrb[0].mxu0 %v2643
        %v2834 = vpop.f32.mrb[0].mxu0
        %v2835 = vadd.f32 0.0, %v2834
        %v2836 = vpop.f32.mrb[0].mxu0
        %2837 = vmatprep.mubr.f32.mxu0 0.0
        %2838 = vmatmul.mubr.f32.gmra.mrb[0].mxu0 %v2644
        %v2839 = vpop.f32.mrb[0].mxu0
        %v2840 = vadd.f32 0.0, %v2839
        %v2841 = vpop.f32.mrb[0].mxu0
        %2842 = vmatprep.mubr.f32.mxu0 0.0
        %2843 = vmatmul.mubr.f32.gmra.mrb[0].mxu0 %v2645
        %v2844 = vpop.f32.mrb[0].mxu0
        %v2845 = vadd.f32 0.0, %v2844
        %v2846 = vpop.f32.mrb[0].mxu0
        %2847 = vmatprep.mubr.f32.mxu0 0.0
        %2848 = vmatmul.mubr.f32.gmra.mrb[0].mxu0 %v2646
        %v2849 = vpop.f32.mrb[0].mxu0
        %v2850 = vadd.f32 0.0, %v2849
        %v2851 = vpop.f32.mrb[0].mxu0
        %2852 = vmatprep.mubr.f32.mxu0 0.0
        %2853 = vmatmul.mubr.f32.gmra.mrb[0].mxu0 %v2647
        %v2854 = vpop.f32.mrb[0].mxu0
        %v2855 = vadd.f32 0.0, %v2854
        %v2856 = vpop.f32.mrb[0].mxu0
        %2857 = vmatprep.mubr.f32.mxu0 0.0
        %2858 = vmatmul.mubr.f32.gmra.mrb[0].mxu0 %v2648
        %v2859 = vpop.f32.mrb[0].mxu0
        %v2860 = vadd.f32 0.0, %v2859
        %v2861 = vpop.f32.mrb[0].mxu0
        %2862 = vmatprep.mubr.f32.mxu0 0.0
        %2863 = vmatmul.mubr.f32.gmra.mrb[0].mxu0 %v2649
        %v2864 = vpop.f32.mrb[0].mxu0
        %v2865 = vadd.f32 0.0, %v2864
        %v2866 = vpop.f32.mrb[0].mxu0
        %2867 = vmatprep.mubr.f32.mxu0 0.0
        %2868 = vmatmul.mubr.f32.gmra.mrb[0].mxu0 %v2650
        %v2869 = vpop.f32.mrb[0].mxu0
        %v2870 = vadd.f32 0.0, %v2869
        %v2871 = vpop.f32.mrb[0].mxu0
        %2872 = vmatprep.mubr.f32.mxu0 0.0
        %2873 = vmatmul.mubr.f32.gmra.mrb[0].mxu0 %v2651
        %v2874 = vpop.f32.mrb[0].mxu0
        %v2875 = vadd.f32 0.0, %v2874
        %v2876 = vpop.f32.mrb[0].mxu0
        %2877 = vmatprep.mubr.f32.mxu0 0.0
        %2878 = vmatmul.mubr.f32.gmra.mrb[0].mxu0 %v2652
        %v2879 = vpop.f32.mrb[0].mxu0
        %v2880 = vadd.f32 0.0, %v2879
        %v2881 = vpop.f32.mrb[0].mxu0
        %2882 = vmatprep.mubr.f32.mxu0 0.0
        %2883 = vmatmul.mubr.f32.gmra.mrb[0].mxu0 %v2653
        %v2884 = vpop.f32.mrb[0].mxu0
        %v2885 = vadd.f32 0.0, %v2884
        %v2886 = vpop.f32.mrb[0].mxu0
        %2887 = vmatprep.mubr.f32.mxu0 0.0
        %2888 = vmatmul.mubr.f32.gmra.mrb[0].mxu0 %v2654
        %v2889 = vpop.f32.mrb[0].mxu0
        %v2890 = vadd.f32 0.0, %v2889
        %v2891 = vpop.f32.mrb[0].mxu0
        %2892 = vmatprep.mubr.f32.mxu0 0.0
        %2893 = vmatmul.mubr.f32.gmra.mrb[0].mxu0 %v2655
        %v2894 = vpop.f32.mrb[0].mxu0
        %v2895 = vadd.f32 0.0, %v2894
        %v2896 = vpop.f32.mrb[0].mxu0
        %2897 = vmatprep.mubr.f32.mxu0 0.0
        %2898 = vmatmul.mubr.f32.gmra.mrb[0].mxu0 %v2656
        %v2899 = vpop.f32.mrb[0].mxu0
        %v2900 = vadd.f32 0.0, %v2899
        %v2901 = vpop.f32.mrb[0].mxu0
        %2902 = vmatprep.mubr.f32.mxu0 0.0
        %2903 = vmatmul.mubr.f32.gmra.mrb[0].mxu0 %v2657
        %v2904 = vpop.f32.mrb[0].mxu0
        %v2905 = vadd.f32 0.0, %v2904
        %v2906 = vpop.f32.mrb[0].mxu0
        %2907 = vmatprep.mubr.f32.mxu0 0.0
        %2908 = vmatmul.mubr.f32.gmra.mrb[0].mxu0 %v2658
        %v2909 = vpop.f32.mrb[0].mxu0
        %v2910 = vadd.f32 0.0, %v2909
        %v2911 = vpop.f32.mrb[0].mxu0
        %2912 = vmatprep.mubr.f32.mxu0 0.0
        %2913 = vmatmul.mubr.f32.gmra.mrb[0].mxu0 %v2659
        %v2914 = vpop.f32.mrb[0].mxu0
        %v2915 = vadd.f32 0.0, %v2914
        %v2916 = vpop.f32.mrb[0].mxu0
        %2917 = vmatprep.mubr.f32.mxu0 0.0
        %2918 = vmatmul.mubr.f32.gmra.mrb[0].mxu0 %v2660
        %v2919 = vpop.f32.mrb[0].mxu0
        %v2920 = vadd.f32 0.0, %v2919
        %v2921 = vpop.f32.mrb[0].mxu0
        %2922 = vdwg.mxu0
        %v2923 = vld [vmem:[#allocation3] sm:$0xff]
        %v2924 = vld [vmem:[#allocation3 + $0x8] sm:$0xff]
        %v2925 = vld [vmem:[#allocation3 + $0x10] sm:$0xff]
        %v2926 = vld [vmem:[#allocation3 + $0x18] sm:$0xff]
        %v2927 = vld [vmem:[#allocation3 + $0x20] sm:$0xff]
        %v2928 = vld [vmem:[#allocation3 + $0x28] sm:$0xff]
        %v2929 = vld [vmem:[#allocation3 + $0x30] sm:$0xff]
        %v2930 = vld [vmem:[#allocation3 + $0x38] sm:$0xff]
        %v2931 = vld [vmem:[#allocation3 + $0x40] sm:$0xff]
        %v2932 = vld [vmem:[#allocation3 + $0x48] sm:$0xff]
        %v2933 = vld [vmem:[#allocation3 + $0x50] sm:$0xff]
        %v2934 = vld [vmem:[#allocation3 + $0x58] sm:$0xff]
        %v2935 = vld [vmem:[#allocation3 + $0x60] sm:$0xff]
        %v2936 = vld [vmem:[#allocation3 + $0x68] sm:$0xff]
        %v2937 = vld [vmem:[#allocation3 + $0x70] sm:$0xff]
        %v2938 = vld [vmem:[#allocation3 + $0x78] sm:$0xff]
        %v2939 = vld [vmem:[#allocation3 + $0x80] sm:$0xff]
        %v2940 = vld [vmem:[#allocation3 + $0x88] sm:$0xff]
        %v2941 = vld [vmem:[#allocation3 + $0x90] sm:$0xff]
        %v2942 = vld [vmem:[#allocation3 + $0x98] sm:$0xff]
        %v2943 = vld [vmem:[#allocation3 + $0xa0] sm:$0xff]
        %v2944 = vld [vmem:[#allocation3 + $0xa8] sm:$0xff]
        %v2945 = vld [vmem:[#allocation3 + $0xb0] sm:$0xff]
        %v2946 = vld [vmem:[#allocation3 + $0xb8] sm:$0xff]
        %v2947 = vld [vmem:[#allocation3 + $0xc0] sm:$0xff]
        %v2948 = vld [vmem:[#allocation3 + $0xc8] sm:$0xff]
        %v2949 = vld [vmem:[#allocation3 + $0xd0] sm:$0xff]
        %v2950 = vld [vmem:[#allocation3 + $0xd8] sm:$0xff]
        %v2951 = vld [vmem:[#allocation3 + $0xe0] sm:$0xff]
        %v2952 = vld [vmem:[#allocation3 + $0xe8] sm:$0xff]
        %v2953 = vld [vmem:[#allocation3 + $0xf0] sm:$0xff]
        %v2954 = vld [vmem:[#allocation3 + $0xf8] sm:$0xff]
        %v2955 = vld [vmem:[#allocation3 + $0x100] sm:$0xff]
        %v2956 = vld [vmem:[#allocation3 + $0x108] sm:$0xff]
        %v2957 = vld [vmem:[#allocation3 + $0x110] sm:$0xff]
        %v2958 = vld [vmem:[#allocation3 + $0x118] sm:$0xff]
        %v2959 = vadd.f32 %v2923, %v2745
        %v2960 = vadd.f32 %v2924, %v2750
        %v2961 = vadd.f32 %v2925, %v2755
        %v2962 = vadd.f32 %v2926, %v2760
        %v2963 = vadd.f32 %v2927, %v2765
        %v2964 = vadd.f32 %v2928, %v2770
        %v2965 = vadd.f32 %v2929, %v2775
        %v2966 = vadd.f32 %v2930, %v2780
        %v2967 = vadd.f32 %v2931, %v2785
        %v2968 = vadd.f32 %v2932, %v2790
        %v2969 = vadd.f32 %v2933, %v2795
        %v2970 = vadd.f32 %v2934, %v2800
        %v2971 = vadd.f32 %v2935, %v2805
        %v2972 = vadd.f32 %v2936, %v2810
        %v2973 = vadd.f32 %v2937, %v2815
        %v2974 = vadd.f32 %v2938, %v2820
        %v2975 = vadd.f32 %v2939, %v2825
        %v2976 = vadd.f32 %v2940, %v2830
        %v2977 = vadd.f32 %v2941, %v2835
        %v2978 = vadd.f32 %v2942, %v2840
        %v2979 = vadd.f32 %v2943, %v2845
        %v2980 = vadd.f32 %v2944, %v2850
        %v2981 = vadd.f32 %v2945, %v2855
        %v2982 = vadd.f32 %v2946, %v2860
        %v2983 = vadd.f32 %v2947, %v2865
        %v2984 = vadd.f32 %v2948, %v2870
        %v2985 = vadd.f32 %v2949, %v2875
        %v2986 = vadd.f32 %v2950, %v2880
        %v2987 = vadd.f32 %v2951, %v2885
        %v2988 = vadd.f32 %v2952, %v2890
        %v2989 = vadd.f32 %v2953, %v2895
        %v2990 = vadd.f32 %v2954, %v2900
        %v2991 = vadd.f32 %v2955, %v2905
        %v2992 = vadd.f32 %v2956, %v2910
        %v2993 = vadd.f32 %v2957, %v2915
        %v2994 = vadd.f32 %v2958, %v2920
        %2995 = vst [vmem:[#allocation3] sm:$0xff] %v2959
        %2996 = vst [vmem:[#allocation3 + $0x8] sm:$0xff] %v2960
        %2997 = vst [vmem:[#allocation3 + $0x10] sm:$0xff] %v2961
        %2998 = vst [vmem:[#allocation3 + $0x18] sm:$0xff] %v2962
        %2999 = vst [vmem:[#allocation3 + $0x20] sm:$0xff] %v2963
        %3000 = vst [vmem:[#allocation3 + $0x28] sm:$0xff] %v2964
        %3001 = vst [vmem:[#allocation3 + $0x30] sm:$0xff] %v2965
        %3002 = vst [vmem:[#allocation3 + $0x38] sm:$0xff] %v2966
        %3003 = vst [vmem:[#allocation3 + $0x40] sm:$0xff] %v2967
        %3004 = vst [vmem:[#allocation3 + $0x48] sm:$0xff] %v2968
        %3005 = vst [vmem:[#allocation3 + $0x50] sm:$0xff] %v2969
        %3006 = vst [vmem:[#allocation3 + $0x58] sm:$0xff] %v2970
        %3007 = vst [vmem:[#allocation3 + $0x60] sm:$0xff] %v2971
        %3008 = vst [vmem:[#allocation3 + $0x68] sm:$0xff] %v2972
        %3009 = vst [vmem:[#allocation3 + $0x70] sm:$0xff] %v2973
        %3010 = vst [vmem:[#allocation3 + $0x78] sm:$0xff] %v2974
        %3011 = vst [vmem:[#allocation3 + $0x80] sm:$0xff] %v2975
        %3012 = vst [vmem:[#allocation3 + $0x88] sm:$0xff] %v2976
        %3013 = vst [vmem:[#allocation3 + $0x90] sm:$0xff] %v2977
        %3014 = vst [vmem:[#allocation3 + $0x98] sm:$0xff] %v2978
        %3015 = vst [vmem:[#allocation3 + $0xa0] sm:$0xff] %v2979
        %3016 = vst [vmem:[#allocation3 + $0xa8] sm:$0xff] %v2980
        %3017 = vst [vmem:[#allocation3 + $0xb0] sm:$0xff] %v2981
        %3018 = vst [vmem:[#allocation3 + $0xb8] sm:$0xff] %v2982
        %3019 = vst [vmem:[#allocation3 + $0xc0] sm:$0xff] %v2983
        %3020 = vst [vmem:[#allocation3 + $0xc8] sm:$0xff] %v2984
        %3021 = vst [vmem:[#allocation3 + $0xd0] sm:$0xff] %v2985
        %3022 = vst [vmem:[#allocation3 + $0xd8] sm:$0xff] %v2986
        %3023 = vst [vmem:[#allocation3 + $0xe0] sm:$0xff] %v2987
        %3024 = vst [vmem:[#allocation3 + $0xe8] sm:$0xff] %v2988
        %3025 = vst [vmem:[#allocation3 + $0xf0] sm:$0xff] %v2989
        %3026 = vst [vmem:[#allocation3 + $0xf8] sm:$0xff] %v2990
        %3027 = vst [vmem:[#allocation3 + $0x100] sm:$0xff] %v2991
        %3028 = vst [vmem:[#allocation3 + $0x108] sm:$0xff] %v2992
        %3029 = vst [vmem:[#allocation3 + $0x110] sm:$0xff] %v2993
        %3030 = vst [vmem:[#allocation3 + $0x118] sm:$0xff] %v2994
        %v3031 = vld [vmem:[%s2624 + $0x1] sm:$0xff]
        %v3032 = vld [vmem:[%s2624 + $0x9] sm:$0xff]
        %v3033 = vld [vmem:[%s2624 + $0x19] sm:$0xff]
        %v3034 = vld [vmem:[%s2624 + $0x21] sm:$0xff]
        %v3035 = vld [vmem:[%s2624 + $0x31] sm:$0xff]
        %v3036 = vld [vmem:[%s2624 + $0x39] sm:$0xff]
        %v3037 = vld [vmem:[%s2624 + $0x49] sm:$0xff]
        %v3038 = vld [vmem:[%s2624 + $0x51] sm:$0xff]
        %v3039 = vld [vmem:[%s2624 + $0x61] sm:$0xff]
        %v3040 = vld [vmem:[%s2624 + $0x69] sm:$0xff]
        %v3041 = vld [vmem:[%s2624 + $0x79] sm:$0xff]
        %v3042 = vld [vmem:[%s2624 + $0x81] sm:$0xff]
        %v3043 = vld [vmem:[%s2624 + $0x91] sm:$0xff]
        %v3044 = vld [vmem:[%s2624 + $0x99] sm:$0xff]
        %v3045 = vld [vmem:[%s2624 + $0xa9] sm:$0xff]
        %v3046 = vld [vmem:[%s2624 + $0xb1] sm:$0xff]
        %v3047 = vld [vmem:[%s2624 + $0xc1] sm:$0xff]
        %v3048 = vld [vmem:[%s2624 + $0xc9] sm:$0xff]
        %v3049 = vld [vmem:[%s2624 + $0xd9] sm:$0xff]
        %v3050 = vld [vmem:[%s2624 + $0xe1] sm:$0xff]
        %v3051 = vld [vmem:[%s2624 + $0xf1] sm:$0xff]
        %v3052 = vld [vmem:[%s2624 + $0xf9] sm:$0xff]
        %v3053 = vld [vmem:[%s2624 + $0x109] sm:$0xff]
        %v3054 = vld [vmem:[%s2624 + $0x111] sm:$0xff]
        %v3055 = vld [vmem:[%s2624 + $0x121] sm:$0xff]
        %v3056 = vld [vmem:[%s2624 + $0x129] sm:$0xff]
        %v3057 = vld [vmem:[%s2624 + $0x139] sm:$0xff]
        %v3058 = vld [vmem:[%s2624 + $0x141] sm:$0xff]
        %v3059 = vld [vmem:[%s2624 + $0x151] sm:$0xff]
        %v3060 = vld [vmem:[%s2624 + $0x159] sm:$0xff]
        %v3061 = vld [vmem:[%s2624 + $0x169] sm:$0xff]
        %v3062 = vld [vmem:[%s2624 + $0x171] sm:$0xff]
        %v3063 = vld [vmem:[%s2624 + $0x181] sm:$0xff]
        %v3064 = vld [vmem:[%s2624 + $0x189] sm:$0xff]
        %v3065 = vld [vmem:[%s2624 + $0x199] sm:$0xff]
        %v3066 = vld [vmem:[%s2624 + $0x1a1] sm:$0xff]
        %s3067 = scalar_lea.vmem %s1, 896
        %v3068 = vld [vmem:[%s3067] sm:$0xff]
        %v3069 = vld [vmem:[%s3067 + $0x8] sm:$0xff]
        %v3070 = vld [vmem:[%s3067 + $0x10] sm:$0xff]
        %v3071 = vld [vmem:[%s3067 + $0x18] sm:$0xff]
        %v3072 = vld [vmem:[%s3067 + $0x20] sm:$0xff]
        %v3073 = vld [vmem:[%s3067 + $0x28] sm:$0xff]
        %v3074 = vld [vmem:[%s3067 + $0x30] sm:$0xff]
        %v3075 = vld [vmem:[%s3067 + $0x38] sm:$0xff]
        %v3076 = vld [vmem:[%s3067 + $0x40] sm:$0xff]
        %v3077 = vld [vmem:[%s3067 + $0x48] sm:$0xff]
        %v3078 = vld [vmem:[%s3067 + $0x50] sm:$0xff]
        %v3079 = vld [vmem:[%s3067 + $0x58] sm:$0xff]
        %v3080 = vld [vmem:[%s3067 + $0x60] sm:$0xff]
        %v3081 = vld [vmem:[%s3067 + $0x68] sm:$0xff]
        %v3082 = vld [vmem:[%s3067 + $0x70] sm:$0xff]
        %v3083 = vld [vmem:[%s3067 + $0x78] sm:$0xff]
        %3084 = vmatprep.subr.mxu0 0.0
        %3085 = vmatpush1.msra.mxu0 %v3068
        %3086 = vmatprep.subr.mxu0 0.0
        %3087 = vmatpush1.msra.mxu0 %v3069
        %3088 = vmatprep.subr.mxu0 0.0
        %3089 = vmatpush1.msra.mxu0 %v3070
        %3090 = vmatprep.subr.mxu0 0.0
        %3091 = vmatpush1.msra.mxu0 %v3071
        %3092 = vmatprep.subr.mxu0 0.0
        %3093 = vmatpush1.msra.mxu0 %v3072
        %3094 = vmatprep.subr.mxu0 0.0
        %3095 = vmatpush1.msra.mxu0 %v3073
        %3096 = vmatprep.subr.mxu0 0.0
        %3097 = vmatpush1.msra.mxu0 %v3074
        %3098 = vmatprep.subr.mxu0 0.0
        %3099 = vmatpush1.msra.mxu0 %v3075
        %3100 = vmatprep.subr.mxu0 0.0
        %3101 = vmatpush1.msra.mxu0 %v3076
        %3102 = vmatprep.subr.mxu0 0.0
        %3103 = vmatpush1.msra.mxu0 %v3077
        %3104 = vmatprep.subr.mxu0 0.0
        %3105 = vmatpush1.msra.mxu0 %v3078
        %3106 = vmatprep.subr.mxu0 0.0
        %3107 = vmatpush1.msra.mxu0 %v3079
        %3108 = vmatprep.subr.mxu0 0.0
        %3109 = vmatpush1.msra.mxu0 %v3080
        %3110 = vmatprep.subr.mxu0 0.0
        %3111 = vmatpush1.msra.mxu0 %v3081
        %3112 = vmatprep.subr.mxu0 0.0
        %3113 = vmatpush1.msra.mxu0 %v3082
        %3114 = vmatprep.subr.mxu0 0.0
        %3115 = vmatpush1.msra.mxu0 %v3083
        %3116 = vmatprep.subr.mxu0 0.0
        %3117 = vmatpush1.msra.mxu0 0.0
        %3118 = vmatprep.subr.mxu0 0.0
        %3119 = vmatpush1.msra.mxu0 0.0
        %3120 = vmatprep.subr.mxu0 0.0
        %3121 = vmatpush1.msra.mxu0 0.0
        %3122 = vmatprep.subr.mxu0 0.0
        %3123 = vmatpush1.msra.mxu0 0.0
        %3124 = vmatprep.subr.mxu0 0.0
        %3125 = vmatpush1.msra.mxu0 0.0
        %3126 = vmatprep.subr.mxu0 0.0
        %3127 = vmatpush1.msra.mxu0 0.0
        %3128 = vmatprep.subr.mxu0 0.0
        %3129 = vmatpush1.msra.mxu0 0.0
        %3130 = vmatprep.subr.mxu0 0.0
        %3131 = vmatpush1.msra.mxu0 0.0
        %3132 = vmatprep.subr.mxu0 0.0
        %3133 = vmatpush1.msra.mxu0 0.0
        %3134 = vmatprep.subr.mxu0 0.0
        %3135 = vmatpush1.msra.mxu0 0.0
        %3136 = vmatprep.subr.mxu0 0.0
        %3137 = vmatpush1.msra.mxu0 0.0
        %3138 = vmatprep.subr.mxu0 0.0
        %3139 = vmatpush1.msra.mxu0 0.0
        %3140 = vmatprep.subr.mxu0 0.0
        %3141 = vmatpush1.msra.mxu0 0.0
        %3142 = vmatprep.subr.mxu0 0.0
        %3143 = vmatpush1.msra.mxu0 0.0
        %3144 = vmatprep.subr.mxu0 0.0
        %3145 = vmatpush1.msra.mxu0 0.0
        %3146 = vmatprep.subr.mxu0 0.0
        %3147 = vmatpush1.msra.mxu0 0.0
        %3148 = vmatprep.mubr.f32.mxu0 0.0
        %3149 = vmatmul.mubr.f32.gmra.mrb[0].mxu0 %v3031
        %v3150 = vpop.f32.mrb[0].mxu0
        %v3151 = vadd.f32 0.0, %v3150
        %v3152 = vpop.f32.mrb[0].mxu0
        %3153 = vmatprep.mubr.f32.mxu0 0.0
        %3154 = vmatmul.mubr.f32.gmra.mrb[0].mxu0 %v3032
        %v3155 = vpop.f32.mrb[0].mxu0
        %v3156 = vadd.f32 0.0, %v3155
        %v3157 = vpop.f32.mrb[0].mxu0
        %3158 = vmatprep.mubr.f32.mxu0 0.0
        %3159 = vmatmul.mubr.f32.gmra.mrb[0].mxu0 %v3033
        %v3160 = vpop.f32.mrb[0].mxu0
        %v3161 = vadd.f32 0.0, %v3160
        %v3162 = vpop.f32.mrb[0].mxu0
        %3163 = vmatprep.mubr.f32.mxu0 0.0
        %3164 = vmatmul.mubr.f32.gmra.mrb[0].mxu0 %v3034
        %v3165 = vpop.f32.mrb[0].mxu0
        %v3166 = vadd.f32 0.0, %v3165
        %v3167 = vpop.f32.mrb[0].mxu0
        %3168 = vmatprep.mubr.f32.mxu0 0.0
        %3169 = vmatmul.mubr.f32.gmra.mrb[0].mxu0 %v3035
        %v3170 = vpop.f32.mrb[0].mxu0
        %v3171 = vadd.f32 0.0, %v3170
        %v3172 = vpop.f32.mrb[0].mxu0
        %3173 = vmatprep.mubr.f32.mxu0 0.0
        %3174 = vmatmul.mubr.f32.gmra.mrb[0].mxu0 %v3036
        %v3175 = vpop.f32.mrb[0].mxu0
        %v3176 = vadd.f32 0.0, %v3175
        %v3177 = vpop.f32.mrb[0].mxu0
        %3178 = vmatprep.mubr.f32.mxu0 0.0
        %3179 = vmatmul.mubr.f32.gmra.mrb[0].mxu0 %v3037
        %v3180 = vpop.f32.mrb[0].mxu0
        %v3181 = vadd.f32 0.0, %v3180
        %v3182 = vpop.f32.mrb[0].mxu0
        %3183 = vmatprep.mubr.f32.mxu0 0.0
        %3184 = vmatmul.mubr.f32.gmra.mrb[0].mxu0 %v3038
        %v3185 = vpop.f32.mrb[0].mxu0
        %v3186 = vadd.f32 0.0, %v3185
        %v3187 = vpop.f32.mrb[0].mxu0
        %3188 = vmatprep.mubr.f32.mxu0 0.0
        %3189 = vmatmul.mubr.f32.gmra.mrb[0].mxu0 %v3039
        %v3190 = vpop.f32.mrb[0].mxu0
        %v3191 = vadd.f32 0.0, %v3190
        %v3192 = vpop.f32.mrb[0].mxu0
        %3193 = vmatprep.mubr.f32.mxu0 0.0
        %3194 = vmatmul.mubr.f32.gmra.mrb[0].mxu0 %v3040
        %v3195 = vpop.f32.mrb[0].mxu0
        %v3196 = vadd.f32 0.0, %v3195
        %v3197 = vpop.f32.mrb[0].mxu0
        %3198 = vmatprep.mubr.f32.mxu0 0.0
        %3199 = vmatmul.mubr.f32.gmra.mrb[0].mxu0 %v3041
        %v3200 = vpop.f32.mrb[0].mxu0
        %v3201 = vadd.f32 0.0, %v3200
        %v3202 = vpop.f32.mrb[0].mxu0
        %3203 = vmatprep.mubr.f32.mxu0 0.0
        %3204 = vmatmul.mubr.f32.gmra.mrb[0].mxu0 %v3042
        %v3205 = vpop.f32.mrb[0].mxu0
        %v3206 = vadd.f32 0.0, %v3205
        %v3207 = vpop.f32.mrb[0].mxu0
        %3208 = vmatprep.mubr.f32.mxu0 0.0
        %3209 = vmatmul.mubr.f32.gmra.mrb[0].mxu0 %v3043
        %v3210 = vpop.f32.mrb[0].mxu0
        %v3211 = vadd.f32 0.0, %v3210
        %v3212 = vpop.f32.mrb[0].mxu0
        %3213 = vmatprep.mubr.f32.mxu0 0.0
        %3214 = vmatmul.mubr.f32.gmra.mrb[0].mxu0 %v3044
        %v3215 = vpop.f32.mrb[0].mxu0
        %v3216 = vadd.f32 0.0, %v3215
        %v3217 = vpop.f32.mrb[0].mxu0
        %3218 = vmatprep.mubr.f32.mxu0 0.0
        %3219 = vmatmul.mubr.f32.gmra.mrb[0].mxu0 %v3045
        %v3220 = vpop.f32.mrb[0].mxu0
        %v3221 = vadd.f32 0.0, %v3220
        %v3222 = vpop.f32.mrb[0].mxu0
        %3223 = vmatprep.mubr.f32.mxu0 0.0
        %3224 = vmatmul.mubr.f32.gmra.mrb[0].mxu0 %v3046
        %v3225 = vpop.f32.mrb[0].mxu0
        %v3226 = vadd.f32 0.0, %v3225
        %v3227 = vpop.f32.mrb[0].mxu0
        %3228 = vmatprep.mubr.f32.mxu0 0.0
        %3229 = vmatmul.mubr.f32.gmra.mrb[0].mxu0 %v3047
        %v3230 = vpop.f32.mrb[0].mxu0
        %v3231 = vadd.f32 0.0, %v3230
        %v3232 = vpop.f32.mrb[0].mxu0
        %3233 = vmatprep.mubr.f32.mxu0 0.0
        %3234 = vmatmul.mubr.f32.gmra.mrb[0].mxu0 %v3048
        %v3235 = vpop.f32.mrb[0].mxu0
        %v3236 = vadd.f32 0.0, %v3235
        %v3237 = vpop.f32.mrb[0].mxu0
        %3238 = vmatprep.mubr.f32.mxu0 0.0
        %3239 = vmatmul.mubr.f32.gmra.mrb[0].mxu0 %v3049
        %v3240 = vpop.f32.mrb[0].mxu0
        %v3241 = vadd.f32 0.0, %v3240
        %v3242 = vpop.f32.mrb[0].mxu0
        %3243 = vmatprep.mubr.f32.mxu0 0.0
        %3244 = vmatmul.mubr.f32.gmra.mrb[0].mxu0 %v3050
        %v3245 = vpop.f32.mrb[0].mxu0
        %v3246 = vadd.f32 0.0, %v3245
        %v3247 = vpop.f32.mrb[0].mxu0
        %3248 = vmatprep.mubr.f32.mxu0 0.0
        %3249 = vmatmul.mubr.f32.gmra.mrb[0].mxu0 %v3051
        %v3250 = vpop.f32.mrb[0].mxu0
        %v3251 = vadd.f32 0.0, %v3250
        %v3252 = vpop.f32.mrb[0].mxu0
        %3253 = vmatprep.mubr.f32.mxu0 0.0
        %3254 = vmatmul.mubr.f32.gmra.mrb[0].mxu0 %v3052
        %v3255 = vpop.f32.mrb[0].mxu0
        %v3256 = vadd.f32 0.0, %v3255
        %v3257 = vpop.f32.mrb[0].mxu0
        %3258 = vmatprep.mubr.f32.mxu0 0.0
        %3259 = vmatmul.mubr.f32.gmra.mrb[0].mxu0 %v3053
        %v3260 = vpop.f32.mrb[0].mxu0
        %v3261 = vadd.f32 0.0, %v3260
        %v3262 = vpop.f32.mrb[0].mxu0
        %3263 = vmatprep.mubr.f32.mxu0 0.0
        %3264 = vmatmul.mubr.f32.gmra.mrb[0].mxu0 %v3054
        %v3265 = vpop.f32.mrb[0].mxu0
        %v3266 = vadd.f32 0.0, %v3265
        %v3267 = vpop.f32.mrb[0].mxu0
        %3268 = vmatprep.mubr.f32.mxu0 0.0
        %3269 = vmatmul.mubr.f32.gmra.mrb[0].mxu0 %v3055
        %v3270 = vpop.f32.mrb[0].mxu0
        %v3271 = vadd.f32 0.0, %v3270
        %v3272 = vpop.f32.mrb[0].mxu0
        %3273 = vmatprep.mubr.f32.mxu0 0.0
        %3274 = vmatmul.mubr.f32.gmra.mrb[0].mxu0 %v3056
        %v3275 = vpop.f32.mrb[0].mxu0
        %v3276 = vadd.f32 0.0, %v3275
        %v3277 = vpop.f32.mrb[0].mxu0
        %3278 = vmatprep.mubr.f32.mxu0 0.0
        %3279 = vmatmul.mubr.f32.gmra.mrb[0].mxu0 %v3057
        %v3280 = vpop.f32.mrb[0].mxu0
        %v3281 = vadd.f32 0.0, %v3280
        %v3282 = vpop.f32.mrb[0].mxu0
        %3283 = vmatprep.mubr.f32.mxu0 0.0
        %3284 = vmatmul.mubr.f32.gmra.mrb[0].mxu0 %v3058
        %v3285 = vpop.f32.mrb[0].mxu0
        %v3286 = vadd.f32 0.0, %v3285
        %v3287 = vpop.f32.mrb[0].mxu0
        %3288 = vmatprep.mubr.f32.mxu0 0.0
        %3289 = vmatmul.mubr.f32.gmra.mrb[0].mxu0 %v3059
        %v3290 = vpop.f32.mrb[0].mxu0
        %v3291 = vadd.f32 0.0, %v3290
        %v3292 = vpop.f32.mrb[0].mxu0
        %3293 = vmatprep.mubr.f32.mxu0 0.0
        %3294 = vmatmul.mubr.f32.gmra.mrb[0].mxu0 %v3060
        %v3295 = vpop.f32.mrb[0].mxu0
        %v3296 = vadd.f32 0.0, %v3295
        %v3297 = vpop.f32.mrb[0].mxu0
        %3298 = vmatprep.mubr.f32.mxu0 0.0
        %3299 = vmatmul.mubr.f32.gmra.mrb[0].mxu0 %v3061
        %v3300 = vpop.f32.mrb[0].mxu0
        %v3301 = vadd.f32 0.0, %v3300
        %v3302 = vpop.f32.mrb[0].mxu0
        %3303 = vmatprep.mubr.f32.mxu0 0.0
        %3304 = vmatmul.mubr.f32.gmra.mrb[0].mxu0 %v3062
        %v3305 = vpop.f32.mrb[0].mxu0
        %v3306 = vadd.f32 0.0, %v3305
        %v3307 = vpop.f32.mrb[0].mxu0
        %3308 = vmatprep.mubr.f32.mxu0 0.0
        %3309 = vmatmul.mubr.f32.gmra.mrb[0].mxu0 %v3063
        %v3310 = vpop.f32.mrb[0].mxu0
        %v3311 = vadd.f32 0.0, %v3310
        %v3312 = vpop.f32.mrb[0].mxu0
        %3313 = vmatprep.mubr.f32.mxu0 0.0
        %3314 = vmatmul.mubr.f32.gmra.mrb[0].mxu0 %v3064
        %v3315 = vpop.f32.mrb[0].mxu0
        %v3316 = vadd.f32 0.0, %v3315
        %v3317 = vpop.f32.mrb[0].mxu0
        %3318 = vmatprep.mubr.f32.mxu0 0.0
        %3319 = vmatmul.mubr.f32.gmra.mrb[0].mxu0 %v3065
        %v3320 = vpop.f32.mrb[0].mxu0
        %v3321 = vadd.f32 0.0, %v3320
        %v3322 = vpop.f32.mrb[0].mxu0
        %3323 = vmatprep.mubr.f32.mxu0 0.0
        %3324 = vmatmul.mubr.f32.gmra.mrb[0].mxu0 %v3066
        %v3325 = vpop.f32.mrb[0].mxu0
        %v3326 = vadd.f32 0.0, %v3325
        %v3327 = vpop.f32.mrb[0].mxu0
        %3328 = vdwg.mxu0
        %v3329 = vld [vmem:[#allocation3] sm:$0xff]
        %v3330 = vld [vmem:[#allocation3 + $0x8] sm:$0xff]
        %v3331 = vld [vmem:[#allocation3 + $0x10] sm:$0xff]
        %v3332 = vld [vmem:[#allocation3 + $0x18] sm:$0xff]
        %v3333 = vld [vmem:[#allocation3 + $0x20] sm:$0xff]
        %v3334 = vld [vmem:[#allocation3 + $0x28] sm:$0xff]
        %v3335 = vld [vmem:[#allocation3 + $0x30] sm:$0xff]
        %v3336 = vld [vmem:[#allocation3 + $0x38] sm:$0xff]
        %v3337 = vld [vmem:[#allocation3 + $0x40] sm:$0xff]
        %v3338 = vld [vmem:[#allocation3 + $0x48] sm:$0xff]
        %v3339 = vld [vmem:[#allocation3 + $0x50] sm:$0xff]
        %v3340 = vld [vmem:[#allocation3 + $0x58] sm:$0xff]
        %v3341 = vld [vmem:[#allocation3 + $0x60] sm:$0xff]
        %v3342 = vld [vmem:[#allocation3 + $0x68] sm:$0xff]
        %v3343 = vld [vmem:[#allocation3 + $0x70] sm:$0xff]
        %v3344 = vld [vmem:[#allocation3 + $0x78] sm:$0xff]
        %v3345 = vld [vmem:[#allocation3 + $0x80] sm:$0xff]
        %v3346 = vld [vmem:[#allocation3 + $0x88] sm:$0xff]
        %v3347 = vld [vmem:[#allocation3 + $0x90] sm:$0xff]
        %v3348 = vld [vmem:[#allocation3 + $0x98] sm:$0xff]
        %v3349 = vld [vmem:[#allocation3 + $0xa0] sm:$0xff]
        %v3350 = vld [vmem:[#allocation3 + $0xa8] sm:$0xff]
        %v3351 = vld [vmem:[#allocation3 + $0xb0] sm:$0xff]
        %v3352 = vld [vmem:[#allocation3 + $0xb8] sm:$0xff]
        %v3353 = vld [vmem:[#allocation3 + $0xc0] sm:$0xff]
        %v3354 = vld [vmem:[#allocation3 + $0xc8] sm:$0xff]
        %v3355 = vld [vmem:[#allocation3 + $0xd0] sm:$0xff]
        %v3356 = vld [vmem:[#allocation3 + $0xd8] sm:$0xff]
        %v3357 = vld [vmem:[#allocation3 + $0xe0] sm:$0xff]
        %v3358 = vld [vmem:[#allocation3 + $0xe8] sm:$0xff]
        %v3359 = vld [vmem:[#allocation3 + $0xf0] sm:$0xff]
        %v3360 = vld [vmem:[#allocation3 + $0xf8] sm:$0xff]
        %v3361 = vld [vmem:[#allocation3 + $0x100] sm:$0xff]
        %v3362 = vld [vmem:[#allocation3 + $0x108] sm:$0xff]
        %v3363 = vld [vmem:[#allocation3 + $0x110] sm:$0xff]
        %v3364 = vld [vmem:[#allocation3 + $0x118] sm:$0xff]
        %v3365 = vadd.f32 %v3329, %v3151
        %v3366 = vadd.f32 %v3330, %v3156
        %v3367 = vadd.f32 %v3331, %v3161
        %v3368 = vadd.f32 %v3332, %v3166
        %v3369 = vadd.f32 %v3333, %v3171
        %v3370 = vadd.f32 %v3334, %v3176
        %v3371 = vadd.f32 %v3335, %v3181
        %v3372 = vadd.f32 %v3336, %v3186
        %v3373 = vadd.f32 %v3337, %v3191
        %v3374 = vadd.f32 %v3338, %v3196
        %v3375 = vadd.f32 %v3339, %v3201
        %v3376 = vadd.f32 %v3340, %v3206
        %v3377 = vadd.f32 %v3341, %v3211
        %v3378 = vadd.f32 %v3342, %v3216
        %v3379 = vadd.f32 %v3343, %v3221
        %v3380 = vadd.f32 %v3344, %v3226
        %v3381 = vadd.f32 %v3345, %v3231
        %v3382 = vadd.f32 %v3346, %v3236
        %v3383 = vadd.f32 %v3347, %v3241
        %v3384 = vadd.f32 %v3348, %v3246
        %v3385 = vadd.f32 %v3349, %v3251
        %v3386 = vadd.f32 %v3350, %v3256
        %v3387 = vadd.f32 %v3351, %v3261
        %v3388 = vadd.f32 %v3352, %v3266
        %v3389 = vadd.f32 %v3353, %v3271
        %v3390 = vadd.f32 %v3354, %v3276
        %v3391 = vadd.f32 %v3355, %v3281
        %v3392 = vadd.f32 %v3356, %v3286
        %v3393 = vadd.f32 %v3357, %v3291
        %v3394 = vadd.f32 %v3358, %v3296
        %v3395 = vadd.f32 %v3359, %v3301
        %v3396 = vadd.f32 %v3360, %v3306
        %v3397 = vadd.f32 %v3361, %v3311
        %v3398 = vadd.f32 %v3362, %v3316
        %v3399 = vadd.f32 %v3363, %v3321
        %v3400 = vadd.f32 %v3364, %v3326
        %3401 = vst [vmem:[#allocation3] sm:$0xff] %v3365
        %3402 = vst [vmem:[#allocation3 + $0x8] sm:$0xff] %v3366
        %3403 = vst [vmem:[#allocation3 + $0x10] sm:$0xff] %v3367
        %3404 = vst [vmem:[#allocation3 + $0x18] sm:$0xff] %v3368
        %3405 = vst [vmem:[#allocation3 + $0x20] sm:$0xff] %v3369
        %3406 = vst [vmem:[#allocation3 + $0x28] sm:$0xff] %v3370
        %3407 = vst [vmem:[#allocation3 + $0x30] sm:$0xff] %v3371
        %3408 = vst [vmem:[#allocation3 + $0x38] sm:$0xff] %v3372
        %3409 = vst [vmem:[#allocation3 + $0x40] sm:$0xff] %v3373
        %3410 = vst [vmem:[#allocation3 + $0x48] sm:$0xff] %v3374
        %3411 = vst [vmem:[#allocation3 + $0x50] sm:$0xff] %v3375
        %3412 = vst [vmem:[#allocation3 + $0x58] sm:$0xff] %v3376
        %3413 = vst [vmem:[#allocation3 + $0x60] sm:$0xff] %v3377
        %3414 = vst [vmem:[#allocation3 + $0x68] sm:$0xff] %v3378
        %3415 = vst [vmem:[#allocation3 + $0x70] sm:$0xff] %v3379
        %3416 = vst [vmem:[#allocation3 + $0x78] sm:$0xff] %v3380
        %3417 = vst [vmem:[#allocation3 + $0x80] sm:$0xff] %v3381
        %3418 = vst [vmem:[#allocation3 + $0x88] sm:$0xff] %v3382
        %3419 = vst [vmem:[#allocation3 + $0x90] sm:$0xff] %v3383
        %3420 = vst [vmem:[#allocation3 + $0x98] sm:$0xff] %v3384
        %3421 = vst [vmem:[#allocation3 + $0xa0] sm:$0xff] %v3385
        %3422 = vst [vmem:[#allocation3 + $0xa8] sm:$0xff] %v3386
        %3423 = vst [vmem:[#allocation3 + $0xb0] sm:$0xff] %v3387
        %3424 = vst [vmem:[#allocation3 + $0xb8] sm:$0xff] %v3388
        %3425 = vst [vmem:[#allocation3 + $0xc0] sm:$0xff] %v3389
        %3426 = vst [vmem:[#allocation3 + $0xc8] sm:$0xff] %v3390
        %3427 = vst [vmem:[#allocation3 + $0xd0] sm:$0xff] %v3391
        %3428 = vst [vmem:[#allocation3 + $0xd8] sm:$0xff] %v3392
        %3429 = vst [vmem:[#allocation3 + $0xe0] sm:$0xff] %v3393
        %3430 = vst [vmem:[#allocation3 + $0xe8] sm:$0xff] %v3394
        %3431 = vst [vmem:[#allocation3 + $0xf0] sm:$0xff] %v3395
        %3432 = vst [vmem:[#allocation3 + $0xf8] sm:$0xff] %v3396
        %3433 = vst [vmem:[#allocation3 + $0x100] sm:$0xff] %v3397
        %3434 = vst [vmem:[#allocation3 + $0x108] sm:$0xff] %v3398
        %3435 = vst [vmem:[#allocation3 + $0x110] sm:$0xff] %v3399
        %3436 = vst [vmem:[#allocation3 + $0x118] sm:$0xff] %v3400
        %v3437 = vld [vmem:[%s2624 + $0x2] sm:$0xff]
        %v3438 = vld [vmem:[%s2624 + $0xa] sm:$0xff]
        %v3439 = vld [vmem:[%s2624 + $0x1a] sm:$0xff]
        %v3440 = vld [vmem:[%s2624 + $0x22] sm:$0xff]
        %v3441 = vld [vmem:[%s2624 + $0x32] sm:$0xff]
        %v3442 = vld [vmem:[%s2624 + $0x3a] sm:$0xff]
        %v3443 = vld [vmem:[%s2624 + $0x4a] sm:$0xff]
        %v3444 = vld [vmem:[%s2624 + $0x52] sm:$0xff]
        %v3445 = vld [vmem:[%s2624 + $0x62] sm:$0xff]
        %v3446 = vld [vmem:[%s2624 + $0x6a] sm:$0xff]
        %v3447 = vld [vmem:[%s2624 + $0x7a] sm:$0xff]
        %v3448 = vld [vmem:[%s2624 + $0x82] sm:$0xff]
        %v3449 = vld [vmem:[%s2624 + $0x92] sm:$0xff]
        %v3450 = vld [vmem:[%s2624 + $0x9a] sm:$0xff]
        %v3451 = vld [vmem:[%s2624 + $0xaa] sm:$0xff]
        %v3452 = vld [vmem:[%s2624 + $0xb2] sm:$0xff]
        %v3453 = vld [vmem:[%s2624 + $0xc2] sm:$0xff]
        %v3454 = vld [vmem:[%s2624 + $0xca] sm:$0xff]
        %v3455 = vld [vmem:[%s2624 + $0xda] sm:$0xff]
        %v3456 = vld [vmem:[%s2624 + $0xe2] sm:$0xff]
        %v3457 = vld [vmem:[%s2624 + $0xf2] sm:$0xff]
        %v3458 = vld [vmem:[%s2624 + $0xfa] sm:$0xff]
        %v3459 = vld [vmem:[%s2624 + $0x10a] sm:$0xff]
        %v3460 = vld [vmem:[%s2624 + $0x112] sm:$0xff]
        %v3461 = vld [vmem:[%s2624 + $0x122] sm:$0xff]
        %v3462 = vld [vmem:[%s2624 + $0x12a] sm:$0xff]
        %v3463 = vld [vmem:[%s2624 + $0x13a] sm:$0xff]
        %v3464 = vld [vmem:[%s2624 + $0x142] sm:$0xff]
        %v3465 = vld [vmem:[%s2624 + $0x152] sm:$0xff]
        %v3466 = vld [vmem:[%s2624 + $0x15a] sm:$0xff]
        %v3467 = vld [vmem:[%s2624 + $0x16a] sm:$0xff]
        %v3468 = vld [vmem:[%s2624 + $0x172] sm:$0xff]
        %v3469 = vld [vmem:[%s2624 + $0x182] sm:$0xff]
        %v3470 = vld [vmem:[%s2624 + $0x18a] sm:$0xff]
        %v3471 = vld [vmem:[%s2624 + $0x19a] sm:$0xff]
        %v3472 = vld [vmem:[%s2624 + $0x1a2] sm:$0xff]
        %s3473 = scalar_lea.vmem %s1, 1024
        %v3474 = vld [vmem:[%s3473] sm:$0xff]
        %v3475 = vld [vmem:[%s3473 + $0x8] sm:$0xff]
        %v3476 = vld [vmem:[%s3473 + $0x10] sm:$0xff]
        %v3477 = vld [vmem:[%s3473 + $0x18] sm:$0xff]
        %v3478 = vld [vmem:[%s3473 + $0x20] sm:$0xff]
        %v3479 = vld [vmem:[%s3473 + $0x28] sm:$0xff]
        %v3480 = vld [vmem:[%s3473 + $0x30] sm:$0xff]
        %v3481 = vld [vmem:[%s3473 + $0x38] sm:$0xff]
        %v3482 = vld [vmem:[%s3473 + $0x40] sm:$0xff]
        %v3483 = vld [vmem:[%s3473 + $0x48] sm:$0xff]
        %v3484 = vld [vmem:[%s3473 + $0x50] sm:$0xff]
        %v3485 = vld [vmem:[%s3473 + $0x58] sm:$0xff]
        %v3486 = vld [vmem:[%s3473 + $0x60] sm:$0xff]
        %v3487 = vld [vmem:[%s3473 + $0x68] sm:$0xff]
        %v3488 = vld [vmem:[%s3473 + $0x70] sm:$0xff]
        %v3489 = vld [vmem:[%s3473 + $0x78] sm:$0xff]
        %3490 = vmatprep.subr.mxu0 0.0
        %3491 = vmatpush1.msra.mxu0 %v3474
        %3492 = vmatprep.subr.mxu0 0.0
        %3493 = vmatpush1.msra.mxu0 %v3475
        %3494 = vmatprep.subr.mxu0 0.0
        %3495 = vmatpush1.msra.mxu0 %v3476
        %3496 = vmatprep.subr.mxu0 0.0
        %3497 = vmatpush1.msra.mxu0 %v3477
        %3498 = vmatprep.subr.mxu0 0.0
        %3499 = vmatpush1.msra.mxu0 %v3478
        %3500 = vmatprep.subr.mxu0 0.0
        %3501 = vmatpush1.msra.mxu0 %v3479
        %3502 = vmatprep.subr.mxu0 0.0
        %3503 = vmatpush1.msra.mxu0 %v3480
        %3504 = vmatprep.subr.mxu0 0.0
        %3505 = vmatpush1.msra.mxu0 %v3481
        %3506 = vmatprep.subr.mxu0 0.0
        %3507 = vmatpush1.msra.mxu0 %v3482
        %3508 = vmatprep.subr.mxu0 0.0
        %3509 = vmatpush1.msra.mxu0 %v3483
        %3510 = vmatprep.subr.mxu0 0.0
        %3511 = vmatpush1.msra.mxu0 %v3484
        %3512 = vmatprep.subr.mxu0 0.0
        %3513 = vmatpush1.msra.mxu0 %v3485
        %3514 = vmatprep.subr.mxu0 0.0
        %3515 = vmatpush1.msra.mxu0 %v3486
        %3516 = vmatprep.subr.mxu0 0.0
        %3517 = vmatpush1.msra.mxu0 %v3487
        %3518 = vmatprep.subr.mxu0 0.0
        %3519 = vmatpush1.msra.mxu0 %v3488
        %3520 = vmatprep.subr.mxu0 0.0
        %3521 = vmatpush1.msra.mxu0 %v3489
        %3522 = vmatprep.subr.mxu0 0.0
        %3523 = vmatpush1.msra.mxu0 0.0
        %3524 = vmatprep.subr.mxu0 0.0
        %3525 = vmatpush1.msra.mxu0 0.0
        %3526 = vmatprep.subr.mxu0 0.0
        %3527 = vmatpush1.msra.mxu0 0.0
        %3528 = vmatprep.subr.mxu0 0.0
        %3529 = vmatpush1.msra.mxu0 0.0
        %3530 = vmatprep.subr.mxu0 0.0
        %3531 = vmatpush1.msra.mxu0 0.0
        %3532 = vmatprep.subr.mxu0 0.0
        %3533 = vmatpush1.msra.mxu0 0.0
        %3534 = vmatprep.subr.mxu0 0.0
        %3535 = vmatpush1.msra.mxu0 0.0
        %3536 = vmatprep.subr.mxu0 0.0
        %3537 = vmatpush1.msra.mxu0 0.0
        %3538 = vmatprep.subr.mxu0 0.0
        %3539 = vmatpush1.msra.mxu0 0.0
        %3540 = vmatprep.subr.mxu0 0.0
        %3541 = vmatpush1.msra.mxu0 0.0
        %3542 = vmatprep.subr.mxu0 0.0
        %3543 = vmatpush1.msra.mxu0 0.0
        %3544 = vmatprep.subr.mxu0 0.0
        %3545 = vmatpush1.msra.mxu0 0.0
        %3546 = vmatprep.subr.mxu0 0.0
        %3547 = vmatpush1.msra.mxu0 0.0
        %3548 = vmatprep.subr.mxu0 0.0
        %3549 = vmatpush1.msra.mxu0 0.0
        %3550 = vmatprep.subr.mxu0 0.0
        %3551 = vmatpush1.msra.mxu0 0.0
        %3552 = vmatprep.subr.mxu0 0.0
        %3553 = vmatpush1.msra.mxu0 0.0
        %3554 = vmatprep.mubr.f32.mxu0 0.0
        %3555 = vmatmul.mubr.f32.gmra.mrb[0].mxu0 %v3437
        %v3556 = vpop.f32.mrb[0].mxu0
        %v3557 = vadd.f32 0.0, %v3556
        %v3558 = vpop.f32.mrb[0].mxu0
        %3559 = vmatprep.mubr.f32.mxu0 0.0
        %3560 = vmatmul.mubr.f32.gmra.mrb[0].mxu0 %v3438
        %v3561 = vpop.f32.mrb[0].mxu0
        %v3562 = vadd.f32 0.0, %v3561
        %v3563 = vpop.f32.mrb[0].mxu0
        %3564 = vmatprep.mubr.f32.mxu0 0.0
        %3565 = vmatmul.mubr.f32.gmra.mrb[0].mxu0 %v3439
        %v3566 = vpop.f32.mrb[0].mxu0
        %v3567 = vadd.f32 0.0, %v3566
        %v3568 = vpop.f32.mrb[0].mxu0
        %3569 = vmatprep.mubr.f32.mxu0 0.0
        %3570 = vmatmul.mubr.f32.gmra.mrb[0].mxu0 %v3440
        %v3571 = vpop.f32.mrb[0].mxu0
        %v3572 = vadd.f32 0.0, %v3571
        %v3573 = vpop.f32.mrb[0].mxu0
        %3574 = vmatprep.mubr.f32.mxu0 0.0
        %3575 = vmatmul.mubr.f32.gmra.mrb[0].mxu0 %v3441
        %v3576 = vpop.f32.mrb[0].mxu0
        %v3577 = vadd.f32 0.0, %v3576
        %v3578 = vpop.f32.mrb[0].mxu0
        %3579 = vmatprep.mubr.f32.mxu0 0.0
        %3580 = vmatmul.mubr.f32.gmra.mrb[0].mxu0 %v3442
        %v3581 = vpop.f32.mrb[0].mxu0
        %v3582 = vadd.f32 0.0, %v3581
        %v3583 = vpop.f32.mrb[0].mxu0
        %3584 = vmatprep.mubr.f32.mxu0 0.0
        %3585 = vmatmul.mubr.f32.gmra.mrb[0].mxu0 %v3443
        %v3586 = vpop.f32.mrb[0].mxu0
        %v3587 = vadd.f32 0.0, %v3586
        %v3588 = vpop.f32.mrb[0].mxu0
        %3589 = vmatprep.mubr.f32.mxu0 0.0
        %3590 = vmatmul.mubr.f32.gmra.mrb[0].mxu0 %v3444
        %v3591 = vpop.f32.mrb[0].mxu0
        %v3592 = vadd.f32 0.0, %v3591
        %v3593 = vpop.f32.mrb[0].mxu0
        %3594 = vmatprep.mubr.f32.mxu0 0.0
        %3595 = vmatmul.mubr.f32.gmra.mrb[0].mxu0 %v3445
        %v3596 = vpop.f32.mrb[0].mxu0
        %v3597 = vadd.f32 0.0, %v3596
        %v3598 = vpop.f32.mrb[0].mxu0
        %3599 = vmatprep.mubr.f32.mxu0 0.0
        %3600 = vmatmul.mubr.f32.gmra.mrb[0].mxu0 %v3446
        %v3601 = vpop.f32.mrb[0].mxu0
        %v3602 = vadd.f32 0.0, %v3601
        %v3603 = vpop.f32.mrb[0].mxu0
        %3604 = vmatprep.mubr.f32.mxu0 0.0
        %3605 = vmatmul.mubr.f32.gmra.mrb[0].mxu0 %v3447
        %v3606 = vpop.f32.mrb[0].mxu0
        %v3607 = vadd.f32 0.0, %v3606
        %v3608 = vpop.f32.mrb[0].mxu0
        %3609 = vmatprep.mubr.f32.mxu0 0.0
        %3610 = vmatmul.mubr.f32.gmra.mrb[0].mxu0 %v3448
        %v3611 = vpop.f32.mrb[0].mxu0
        %v3612 = vadd.f32 0.0, %v3611
        %v3613 = vpop.f32.mrb[0].mxu0
        %3614 = vmatprep.mubr.f32.mxu0 0.0
        %3615 = vmatmul.mubr.f32.gmra.mrb[0].mxu0 %v3449
        %v3616 = vpop.f32.mrb[0].mxu0
        %v3617 = vadd.f32 0.0, %v3616
        %v3618 = vpop.f32.mrb[0].mxu0
        %3619 = vmatprep.mubr.f32.mxu0 0.0
        %3620 = vmatmul.mubr.f32.gmra.mrb[0].mxu0 %v3450
        %v3621 = vpop.f32.mrb[0].mxu0
        %v3622 = vadd.f32 0.0, %v3621
        %v3623 = vpop.f32.mrb[0].mxu0
        %3624 = vmatprep.mubr.f32.mxu0 0.0
        %3625 = vmatmul.mubr.f32.gmra.mrb[0].mxu0 %v3451
        %v3626 = vpop.f32.mrb[0].mxu0
        %v3627 = vadd.f32 0.0, %v3626
        %v3628 = vpop.f32.mrb[0].mxu0
        %3629 = vmatprep.mubr.f32.mxu0 0.0
        %3630 = vmatmul.mubr.f32.gmra.mrb[0].mxu0 %v3452
        %v3631 = vpop.f32.mrb[0].mxu0
        %v3632 = vadd.f32 0.0, %v3631
        %v3633 = vpop.f32.mrb[0].mxu0
        %3634 = vmatprep.mubr.f32.mxu0 0.0
        %3635 = vmatmul.mubr.f32.gmra.mrb[0].mxu0 %v3453
        %v3636 = vpop.f32.mrb[0].mxu0
        %v3637 = vadd.f32 0.0, %v3636
        %v3638 = vpop.f32.mrb[0].mxu0
        %3639 = vmatprep.mubr.f32.mxu0 0.0
        %3640 = vmatmul.mubr.f32.gmra.mrb[0].mxu0 %v3454
        %v3641 = vpop.f32.mrb[0].mxu0
        %v3642 = vadd.f32 0.0, %v3641
        %v3643 = vpop.f32.mrb[0].mxu0
        %3644 = vmatprep.mubr.f32.mxu0 0.0
        %3645 = vmatmul.mubr.f32.gmra.mrb[0].mxu0 %v3455
        %v3646 = vpop.f32.mrb[0].mxu0
        %v3647 = vadd.f32 0.0, %v3646
        %v3648 = vpop.f32.mrb[0].mxu0
        %3649 = vmatprep.mubr.f32.mxu0 0.0
        %3650 = vmatmul.mubr.f32.gmra.mrb[0].mxu0 %v3456
        %v3651 = vpop.f32.mrb[0].mxu0
        %v3652 = vadd.f32 0.0, %v3651
        %v3653 = vpop.f32.mrb[0].mxu0
        %3654 = vmatprep.mubr.f32.mxu0 0.0
        %3655 = vmatmul.mubr.f32.gmra.mrb[0].mxu0 %v3457
        %v3656 = vpop.f32.mrb[0].mxu0
        %v3657 = vadd.f32 0.0, %v3656
        %v3658 = vpop.f32.mrb[0].mxu0
        %3659 = vmatprep.mubr.f32.mxu0 0.0
        %3660 = vmatmul.mubr.f32.gmra.mrb[0].mxu0 %v3458
        %v3661 = vpop.f32.mrb[0].mxu0
        %v3662 = vadd.f32 0.0, %v3661
        %v3663 = vpop.f32.mrb[0].mxu0
        %3664 = vmatprep.mubr.f32.mxu0 0.0
        %3665 = vmatmul.mubr.f32.gmra.mrb[0].mxu0 %v3459
        %v3666 = vpop.f32.mrb[0].mxu0
        %v3667 = vadd.f32 0.0, %v3666
        %v3668 = vpop.f32.mrb[0].mxu0
        %3669 = vmatprep.mubr.f32.mxu0 0.0
        %3670 = vmatmul.mubr.f32.gmra.mrb[0].mxu0 %v3460
        %v3671 = vpop.f32.mrb[0].mxu0
        %v3672 = vadd.f32 0.0, %v3671
        %v3673 = vpop.f32.mrb[0].mxu0
        %3674 = vmatprep.mubr.f32.mxu0 0.0
        %3675 = vmatmul.mubr.f32.gmra.mrb[0].mxu0 %v3461
        %v3676 = vpop.f32.mrb[0].mxu0
        %v3677 = vadd.f32 0.0, %v3676
        %v3678 = vpop.f32.mrb[0].mxu0
        %3679 = vmatprep.mubr.f32.mxu0 0.0
        %3680 = vmatmul.mubr.f32.gmra.mrb[0].mxu0 %v3462
        %v3681 = vpop.f32.mrb[0].mxu0
        %v3682 = vadd.f32 0.0, %v3681
        %v3683 = vpop.f32.mrb[0].mxu0
        %3684 = vmatprep.mubr.f32.mxu0 0.0
        %3685 = vmatmul.mubr.f32.gmra.mrb[0].mxu0 %v3463
        %v3686 = vpop.f32.mrb[0].mxu0
        %v3687 = vadd.f32 0.0, %v3686
        %v3688 = vpop.f32.mrb[0].mxu0
        %3689 = vmatprep.mubr.f32.mxu0 0.0
        %3690 = vmatmul.mubr.f32.gmra.mrb[0].mxu0 %v3464
        %v3691 = vpop.f32.mrb[0].mxu0
        %v3692 = vadd.f32 0.0, %v3691
        %v3693 = vpop.f32.mrb[0].mxu0
        %3694 = vmatprep.mubr.f32.mxu0 0.0
        %3695 = vmatmul.mubr.f32.gmra.mrb[0].mxu0 %v3465
        %v3696 = vpop.f32.mrb[0].mxu0
        %v3697 = vadd.f32 0.0, %v3696
        %v3698 = vpop.f32.mrb[0].mxu0
        %3699 = vmatprep.mubr.f32.mxu0 0.0
        %3700 = vmatmul.mubr.f32.gmra.mrb[0].mxu0 %v3466
        %v3701 = vpop.f32.mrb[0].mxu0
        %v3702 = vadd.f32 0.0, %v3701
        %v3703 = vpop.f32.mrb[0].mxu0
        %3704 = vmatprep.mubr.f32.mxu0 0.0
        %3705 = vmatmul.mubr.f32.gmra.mrb[0].mxu0 %v3467
        %v3706 = vpop.f32.mrb[0].mxu0
        %v3707 = vadd.f32 0.0, %v3706
        %v3708 = vpop.f32.mrb[0].mxu0
        %3709 = vmatprep.mubr.f32.mxu0 0.0
        %3710 = vmatmul.mubr.f32.gmra.mrb[0].mxu0 %v3468
        %v3711 = vpop.f32.mrb[0].mxu0
        %v3712 = vadd.f32 0.0, %v3711
        %v3713 = vpop.f32.mrb[0].mxu0
        %3714 = vmatprep.mubr.f32.mxu0 0.0
        %3715 = vmatmul.mubr.f32.gmra.mrb[0].mxu0 %v3469
        %v3716 = vpop.f32.mrb[0].mxu0
        %v3717 = vadd.f32 0.0, %v3716
        %v3718 = vpop.f32.mrb[0].mxu0
        %3719 = vmatprep.mubr.f32.mxu0 0.0
        %3720 = vmatmul.mubr.f32.gmra.mrb[0].mxu0 %v3470
        %v3721 = vpop.f32.mrb[0].mxu0
        %v3722 = vadd.f32 0.0, %v3721
        %v3723 = vpop.f32.mrb[0].mxu0
        %3724 = vmatprep.mubr.f32.mxu0 0.0
        %3725 = vmatmul.mubr.f32.gmra.mrb[0].mxu0 %v3471
        %v3726 = vpop.f32.mrb[0].mxu0
        %v3727 = vadd.f32 0.0, %v3726
        %v3728 = vpop.f32.mrb[0].mxu0
        %3729 = vmatprep.mubr.f32.mxu0 0.0
        %3730 = vmatmul.mubr.f32.gmra.mrb[0].mxu0 %v3472
        %v3731 = vpop.f32.mrb[0].mxu0
        %v3732 = vadd.f32 0.0, %v3731
        %v3733 = vpop.f32.mrb[0].mxu0
        %3734 = vdwg.mxu0
        %v3735 = vld [vmem:[#allocation3] sm:$0xff]
        %v3736 = vld [vmem:[#allocation3 + $0x8] sm:$0xff]
        %v3737 = vld [vmem:[#allocation3 + $0x10] sm:$0xff]
        %v3738 = vld [vmem:[#allocation3 + $0x18] sm:$0xff]
        %v3739 = vld [vmem:[#allocation3 + $0x20] sm:$0xff]
        %v3740 = vld [vmem:[#allocation3 + $0x28] sm:$0xff]
        %v3741 = vld [vmem:[#allocation3 + $0x30] sm:$0xff]
        %v3742 = vld [vmem:[#allocation3 + $0x38] sm:$0xff]
        %v3743 = vld [vmem:[#allocation3 + $0x40] sm:$0xff]
        %v3744 = vld [vmem:[#allocation3 + $0x48] sm:$0xff]
        %v3745 = vld [vmem:[#allocation3 + $0x50] sm:$0xff]
        %v3746 = vld [vmem:[#allocation3 + $0x58] sm:$0xff]
        %v3747 = vld [vmem:[#allocation3 + $0x60] sm:$0xff]
        %v3748 = vld [vmem:[#allocation3 + $0x68] sm:$0xff]
        %v3749 = vld [vmem:[#allocation3 + $0x70] sm:$0xff]
        %v3750 = vld [vmem:[#allocation3 + $0x78] sm:$0xff]
        %v3751 = vld [vmem:[#allocation3 + $0x80] sm:$0xff]
        %v3752 = vld [vmem:[#allocation3 + $0x88] sm:$0xff]
        %v3753 = vld [vmem:[#allocation3 + $0x90] sm:$0xff]
        %v3754 = vld [vmem:[#allocation3 + $0x98] sm:$0xff]
        %v3755 = vld [vmem:[#allocation3 + $0xa0] sm:$0xff]
        %v3756 = vld [vmem:[#allocation3 + $0xa8] sm:$0xff]
        %v3757 = vld [vmem:[#allocation3 + $0xb0] sm:$0xff]
        %v3758 = vld [vmem:[#allocation3 + $0xb8] sm:$0xff]
        %v3759 = vld [vmem:[#allocation3 + $0xc0] sm:$0xff]
        %v3760 = vld [vmem:[#allocation3 + $0xc8] sm:$0xff]
        %v3761 = vld [vmem:[#allocation3 + $0xd0] sm:$0xff]
        %v3762 = vld [vmem:[#allocation3 + $0xd8] sm:$0xff]
        %v3763 = vld [vmem:[#allocation3 + $0xe0] sm:$0xff]
        %v3764 = vld [vmem:[#allocation3 + $0xe8] sm:$0xff]
        %v3765 = vld [vmem:[#allocation3 + $0xf0] sm:$0xff]
        %v3766 = vld [vmem:[#allocation3 + $0xf8] sm:$0xff]
        %v3767 = vld [vmem:[#allocation3 + $0x100] sm:$0xff]
        %v3768 = vld [vmem:[#allocation3 + $0x108] sm:$0xff]
        %v3769 = vld [vmem:[#allocation3 + $0x110] sm:$0xff]
        %v3770 = vld [vmem:[#allocation3 + $0x118] sm:$0xff]
        %v3771 = vadd.f32 %v3735, %v3557
        %v3772 = vadd.f32 %v3736, %v3562
        %v3773 = vadd.f32 %v3737, %v3567
        %v3774 = vadd.f32 %v3738, %v3572
        %v3775 = vadd.f32 %v3739, %v3577
        %v3776 = vadd.f32 %v3740, %v3582
        %v3777 = vadd.f32 %v3741, %v3587
        %v3778 = vadd.f32 %v3742, %v3592
        %v3779 = vadd.f32 %v3743, %v3597
        %v3780 = vadd.f32 %v3744, %v3602
        %v3781 = vadd.f32 %v3745, %v3607
        %v3782 = vadd.f32 %v3746, %v3612
        %v3783 = vadd.f32 %v3747, %v3617
        %v3784 = vadd.f32 %v3748, %v3622
        %v3785 = vadd.f32 %v3749, %v3627
        %v3786 = vadd.f32 %v3750, %v3632
        %v3787 = vadd.f32 %v3751, %v3637
        %v3788 = vadd.f32 %v3752, %v3642
        %v3789 = vadd.f32 %v3753, %v3647
        %v3790 = vadd.f32 %v3754, %v3652
        %v3791 = vadd.f32 %v3755, %v3657
        %v3792 = vadd.f32 %v3756, %v3662
        %v3793 = vadd.f32 %v3757, %v3667
        %v3794 = vadd.f32 %v3758, %v3672
        %v3795 = vadd.f32 %v3759, %v3677
        %v3796 = vadd.f32 %v3760, %v3682
        %v3797 = vadd.f32 %v3761, %v3687
        %v3798 = vadd.f32 %v3762, %v3692
        %v3799 = vadd.f32 %v3763, %v3697
        %v3800 = vadd.f32 %v3764, %v3702
        %v3801 = vadd.f32 %v3765, %v3707
        %v3802 = vadd.f32 %v3766, %v3712
        %v3803 = vadd.f32 %v3767, %v3717
        %v3804 = vadd.f32 %v3768, %v3722
        %v3805 = vadd.f32 %v3769, %v3727
        %v3806 = vadd.f32 %v3770, %v3732
        %3807 = vst [vmem:[#allocation3] sm:$0xff] %v3771
        %3808 = vst [vmem:[#allocation3 + $0x8] sm:$0xff] %v3772
        %3809 = vst [vmem:[#allocation3 + $0x10] sm:$0xff] %v3773
        %3810 = vst [vmem:[#allocation3 + $0x18] sm:$0xff] %v3774
        %3811 = vst [vmem:[#allocation3 + $0x20] sm:$0xff] %v3775
        %3812 = vst [vmem:[#allocation3 + $0x28] sm:$0xff] %v3776
        %3813 = vst [vmem:[#allocation3 + $0x30] sm:$0xff] %v3777
        %3814 = vst [vmem:[#allocation3 + $0x38] sm:$0xff] %v3778
        %3815 = vst [vmem:[#allocation3 + $0x40] sm:$0xff] %v3779
        %3816 = vst [vmem:[#allocation3 + $0x48] sm:$0xff] %v3780
        %3817 = vst [vmem:[#allocation3 + $0x50] sm:$0xff] %v3781
        %3818 = vst [vmem:[#allocation3 + $0x58] sm:$0xff] %v3782
        %3819 = vst [vmem:[#allocation3 + $0x60] sm:$0xff] %v3783
        %3820 = vst [vmem:[#allocation3 + $0x68] sm:$0xff] %v3784
        %3821 = vst [vmem:[#allocation3 + $0x70] sm:$0xff] %v3785
        %3822 = vst [vmem:[#allocation3 + $0x78] sm:$0xff] %v3786
        %3823 = vst [vmem:[#allocation3 + $0x80] sm:$0xff] %v3787
        %3824 = vst [vmem:[#allocation3 + $0x88] sm:$0xff] %v3788
        %3825 = vst [vmem:[#allocation3 + $0x90] sm:$0xff] %v3789
        %3826 = vst [vmem:[#allocation3 + $0x98] sm:$0xff] %v3790
        %3827 = vst [vmem:[#allocation3 + $0xa0] sm:$0xff] %v3791
        %3828 = vst [vmem:[#allocation3 + $0xa8] sm:$0xff] %v3792
        %3829 = vst [vmem:[#allocation3 + $0xb0] sm:$0xff] %v3793
        %3830 = vst [vmem:[#allocation3 + $0xb8] sm:$0xff] %v3794
        %3831 = vst [vmem:[#allocation3 + $0xc0] sm:$0xff] %v3795
        %3832 = vst [vmem:[#allocation3 + $0xc8] sm:$0xff] %v3796
        %3833 = vst [vmem:[#allocation3 + $0xd0] sm:$0xff] %v3797
        %3834 = vst [vmem:[#allocation3 + $0xd8] sm:$0xff] %v3798
        %3835 = vst [vmem:[#allocation3 + $0xe0] sm:$0xff] %v3799
        %3836 = vst [vmem:[#allocation3 + $0xe8] sm:$0xff] %v3800
        %3837 = vst [vmem:[#allocation3 + $0xf0] sm:$0xff] %v3801
        %3838 = vst [vmem:[#allocation3 + $0xf8] sm:$0xff] %v3802
        %3839 = vst [vmem:[#allocation3 + $0x100] sm:$0xff] %v3803
        %3840 = vst [vmem:[#allocation3 + $0x108] sm:$0xff] %v3804
        %3841 = vst [vmem:[#allocation3 + $0x110] sm:$0xff] %v3805
        %3842 = vst [vmem:[#allocation3 + $0x118] sm:$0xff] %v3806
        %v3843 = vld [vmem:[#allocation3] sm:$0xff]
        %v3844 = vld [vmem:[#allocation3 + $0x8] sm:$0xff]
        %v3845 = vld [vmem:[#allocation3 + $0x10] sm:$0xff]
        %v3846 = vld [vmem:[#allocation3 + $0x18] sm:$0xff]
        %v3847 = vld [vmem:[#allocation3 + $0x20] sm:$0xff]
        %v3848 = vld [vmem:[#allocation3 + $0x28] sm:$0xff]
        %v3849 = vld [vmem:[#allocation3 + $0x30] sm:$0xff]
        %v3850 = vld [vmem:[#allocation3 + $0x38] sm:$0xff]
        %v3851 = vld [vmem:[#allocation3 + $0x40] sm:$0xff]
        %v3852 = vld [vmem:[#allocation3 + $0x48] sm:$0xff]
        %v3853 = vld [vmem:[#allocation3 + $0x50] sm:$0xff]
        %v3854 = vld [vmem:[#allocation3 + $0x58] sm:$0xff]
        %v3855 = vld [vmem:[#allocation3 + $0x60] sm:$0xff]
        %v3856 = vld [vmem:[#allocation3 + $0x68] sm:$0xff]
        %v3857 = vld [vmem:[#allocation3 + $0x70] sm:$0xff]
        %v3858 = vld [vmem:[#allocation3 + $0x78] sm:$0xff]
        %v3859 = vld [vmem:[#allocation3 + $0x80] sm:$0xff]
        %v3860 = vld [vmem:[#allocation3 + $0x88] sm:$0xff]
        %v3861 = vld [vmem:[#allocation3 + $0x90] sm:$0xff]
        %v3862 = vld [vmem:[#allocation3 + $0x98] sm:$0xff]
        %v3863 = vld [vmem:[#allocation3 + $0xa0] sm:$0xff]
        %v3864 = vld [vmem:[#allocation3 + $0xa8] sm:$0xff]
        %v3865 = vld [vmem:[#allocation3 + $0xb0] sm:$0xff]
        %v3866 = vld [vmem:[#allocation3 + $0xb8] sm:$0xff]
        %v3867 = vld [vmem:[#allocation3 + $0xc0] sm:$0xff]
        %v3868 = vld [vmem:[#allocation3 + $0xc8] sm:$0xff]
        %v3869 = vld [vmem:[#allocation3 + $0xd0] sm:$0xff]
        %v3870 = vld [vmem:[#allocation3 + $0xd8] sm:$0xff]
        %v3871 = vld [vmem:[#allocation3 + $0xe0] sm:$0xff]
        %v3872 = vld [vmem:[#allocation3 + $0xe8] sm:$0xff]
        %v3873 = vld [vmem:[#allocation3 + $0xf0] sm:$0xff]
        %v3874 = vld [vmem:[#allocation3 + $0xf8] sm:$0xff]
        %v3875 = vld [vmem:[#allocation3 + $0x100] sm:$0xff]
        %v3876 = vld [vmem:[#allocation3 + $0x108] sm:$0xff]
        %v3877 = vld [vmem:[#allocation3 + $0x110] sm:$0xff]
        %v3878 = vld [vmem:[#allocation3 + $0x118] sm:$0xff]
        %v3879 = vld [vmem:[%s2] sm:$0x1]
        %v3881 = vlaneseq
        %v3882 = vshrl.u32 %v3881, 7
        %v3883 = vsub.s32 0, %v3882
        %v3884 = vrot.slane %v3879, %v3883
        %v3886 = vadd.f32 %v3843, %v3884
        %v3887 = vadd.f32 %v3844, %v3884
        %v3888 = vadd.f32 %v3845, %v3884
        %v3889 = vadd.f32 %v3846, %v3884
        %v3890 = vadd.f32 %v3847, %v3884
        %v3891 = vadd.f32 %v3848, %v3884
        %v3892 = vadd.f32 %v3849, %v3884
        %v3893 = vadd.f32 %v3850, %v3884
        %v3894 = vadd.f32 %v3851, %v3884
        %v3895 = vadd.f32 %v3852, %v3884
        %v3896 = vadd.f32 %v3853, %v3884
        %v3897 = vadd.f32 %v3854, %v3884
        %v3898 = vadd.f32 %v3855, %v3884
        %v3899 = vadd.f32 %v3856, %v3884
        %v3900 = vadd.f32 %v3857, %v3884
        %v3901 = vadd.f32 %v3858, %v3884
        %v3902 = vadd.f32 %v3859, %v3884
        %v3903 = vadd.f32 %v3860, %v3884
        %v3904 = vadd.f32 %v3861, %v3884
        %v3905 = vadd.f32 %v3862, %v3884
        %v3906 = vadd.f32 %v3863, %v3884
        %v3907 = vadd.f32 %v3864, %v3884
        %v3908 = vadd.f32 %v3865, %v3884
        %v3909 = vadd.f32 %v3866, %v3884
        %v3910 = vadd.f32 %v3867, %v3884
        %v3911 = vadd.f32 %v3868, %v3884
        %v3912 = vadd.f32 %v3869, %v3884
        %v3913 = vadd.f32 %v3870, %v3884
        %v3914 = vadd.f32 %v3871, %v3884
        %v3915 = vadd.f32 %v3872, %v3884
        %v3916 = vadd.f32 %v3873, %v3884
        %v3917 = vadd.f32 %v3874, %v3884
        %v3918 = vadd.f32 %v3875, %v3884
        %v3919 = vadd.f32 %v3876, %v3884
        %v3920 = vadd.f32 %v3877, %v3884
        %v3921 = vadd.f32 %v3878, %v3884
        %v3922 = vmax.f32 %v3886, 0.0
        %v3923 = vmax.f32 %v3887, 0.0
        %v3924 = vmax.f32 %v3888, 0.0
        %v3925 = vmax.f32 %v3889, 0.0
        %v3926 = vmax.f32 %v3890, 0.0
        %v3927 = vmax.f32 %v3891, 0.0
        %v3928 = vmax.f32 %v3892, 0.0
        %v3929 = vmax.f32 %v3893, 0.0
        %v3930 = vmax.f32 %v3894, 0.0
        %v3931 = vmax.f32 %v3895, 0.0
        %v3932 = vmax.f32 %v3896, 0.0
        %v3933 = vmax.f32 %v3897, 0.0
        %v3934 = vmax.f32 %v3898, 0.0
        %v3935 = vmax.f32 %v3899, 0.0
        %v3936 = vmax.f32 %v3900, 0.0
        %v3937 = vmax.f32 %v3901, 0.0
        %v3938 = vmax.f32 %v3902, 0.0
        %v3939 = vmax.f32 %v3903, 0.0
        %v3940 = vmax.f32 %v3904, 0.0
        %v3941 = vmax.f32 %v3905, 0.0
        %v3942 = vmax.f32 %v3906, 0.0
        %v3943 = vmax.f32 %v3907, 0.0
        %v3944 = vmax.f32 %v3908, 0.0
        %v3945 = vmax.f32 %v3909, 0.0
        %v3946 = vmax.f32 %v3910, 0.0
        %v3947 = vmax.f32 %v3911, 0.0
        %v3948 = vmax.f32 %v3912, 0.0
        %v3949 = vmax.f32 %v3913, 0.0
        %v3950 = vmax.f32 %v3914, 0.0
        %v3951 = vmax.f32 %v3915, 0.0
        %v3952 = vmax.f32 %v3916, 0.0
        %v3953 = vmax.f32 %v3917, 0.0
        %v3954 = vmax.f32 %v3918, 0.0
        %v3955 = vmax.f32 %v3919, 0.0
        %v3956 = vmax.f32 %v3920, 0.0
        %v3957 = vmax.f32 %v3921, 0.0
        %3958 = vst [vmem:[#allocation2 + $0x1] sm:$0xff] %v3922
        %3959 = vst [vmem:[#allocation2 + $0x9] sm:$0xff] %v3923
        %3960 = vst [vmem:[#allocation2 + $0x19] sm:$0xff] %v3924
        %3961 = vst [vmem:[#allocation2 + $0x21] sm:$0xff] %v3925
        %3962 = vst [vmem:[#allocation2 + $0x31] sm:$0xff] %v3926
        %3963 = vst [vmem:[#allocation2 + $0x39] sm:$0xff] %v3927
        %3964 = vst [vmem:[#allocation2 + $0x49] sm:$0xff] %v3928
        %3965 = vst [vmem:[#allocation2 + $0x51] sm:$0xff] %v3929
        %3966 = vst [vmem:[#allocation2 + $0x61] sm:$0xff] %v3930
        %3967 = vst [vmem:[#allocation2 + $0x69] sm:$0xff] %v3931
        %3968 = vst [vmem:[#allocation2 + $0x79] sm:$0xff] %v3932
        %3969 = vst [vmem:[#allocation2 + $0x81] sm:$0xff] %v3933
        %3970 = vst [vmem:[#allocation2 + $0x91] sm:$0xff] %v3934
        %3971 = vst [vmem:[#allocation2 + $0x99] sm:$0xff] %v3935
        %3972 = vst [vmem:[#allocation2 + $0xa9] sm:$0xff] %v3936
        %3973 = vst [vmem:[#allocation2 + $0xb1] sm:$0xff] %v3937
        %3974 = vst [vmem:[#allocation2 + $0xc1] sm:$0xff] %v3938
        %3975 = vst [vmem:[#allocation2 + $0xc9] sm:$0xff] %v3939
        %3976 = vst [vmem:[#allocation2 + $0xd9] sm:$0xff] %v3940
        %3977 = vst [vmem:[#allocation2 + $0xe1] sm:$0xff] %v3941
        %3978 = vst [vmem:[#allocation2 + $0xf1] sm:$0xff] %v3942
        %3979 = vst [vmem:[#allocation2 + $0xf9] sm:$0xff] %v3943
        %3980 = vst [vmem:[#allocation2 + $0x109] sm:$0xff] %v3944
        %3981 = vst [vmem:[#allocation2 + $0x111] sm:$0xff] %v3945
        %3982 = vst [vmem:[#allocation2 + $0x121] sm:$0xff] %v3946
        %3983 = vst [vmem:[#allocation2 + $0x129] sm:$0xff] %v3947
        %3984 = vst [vmem:[#allocation2 + $0x139] sm:$0xff] %v3948
        %3985 = vst [vmem:[#allocation2 + $0x141] sm:$0xff] %v3949
        %3986 = vst [vmem:[#allocation2 + $0x151] sm:$0xff] %v3950
        %3987 = vst [vmem:[#allocation2 + $0x159] sm:$0xff] %v3951
        %3988 = vst [vmem:[#allocation2 + $0x169] sm:$0xff] %v3952
        %3989 = vst [vmem:[#allocation2 + $0x171] sm:$0xff] %v3953
        %3990 = vst [vmem:[#allocation2 + $0x181] sm:$0xff] %v3954
        %3991 = vst [vmem:[#allocation2 + $0x189] sm:$0xff] %v3955
        %3992 = vst [vmem:[#allocation2 + $0x199] sm:$0xff] %v3956
        %3993 = vst [vmem:[#allocation2 + $0x1a1] sm:$0xff] %v3957
        %3994 = vst [vmem:[#allocation2] sm:$0x1] 0.0
        %3995 = vst [vmem:[#allocation2 + $0x18] sm:$0x1] 0.0
        %3996 = vst [vmem:[#allocation2 + $0x30] sm:$0x1] 0.0
        %3997 = vst [vmem:[#allocation2 + $0x48] sm:$0x1] 0.0
        %3998 = vst [vmem:[#allocation2 + $0x60] sm:$0x1] 0.0
        %3999 = vst [vmem:[#allocation2 + $0x78] sm:$0x1] 0.0
        %4000 = vst [vmem:[#allocation2 + $0x90] sm:$0x1] 0.0
        %4001 = vst [vmem:[#allocation2 + $0xa8] sm:$0x1] 0.0
        %4002 = vst [vmem:[#allocation2 + $0xc0] sm:$0x1] 0.0
        %4003 = vst [vmem:[#allocation2 + $0xd8] sm:$0x1] 0.0
        %4004 = vst [vmem:[#allocation2 + $0xf0] sm:$0x1] 0.0
        %4005 = vst [vmem:[#allocation2 + $0x108] sm:$0x1] 0.0
        %4006 = vst [vmem:[#allocation2 + $0x120] sm:$0x1] 0.0
        %4007 = vst [vmem:[#allocation2 + $0x138] sm:$0x1] 0.0
        %4008 = vst [vmem:[#allocation2 + $0x150] sm:$0x1] 0.0
        %4009 = vst [vmem:[#allocation2 + $0x168] sm:$0x1] 0.0
        %4010 = vst [vmem:[#allocation2 + $0x180] sm:$0x1] 0.0
        %4011 = vst [vmem:[#allocation2 + $0x198] sm:$0x1] 0.0
        %4012 = vst [vmem:[#allocation2 + $0x11] sm:$0x1] 0.0
        %4013 = vst [vmem:[#allocation2 + $0x29] sm:$0x1] 0.0
        %4014 = vst [vmem:[#allocation2 + $0x41] sm:$0x1] 0.0
        %4015 = vst [vmem:[#allocation2 + $0x59] sm:$0x1] 0.0
        %4016 = vst [vmem:[#allocation2 + $0x71] sm:$0x1] 0.0
        %4017 = vst [vmem:[#allocation2 + $0x89] sm:$0x1] 0.0
        %4018 = vst [vmem:[#allocation2 + $0xa1] sm:$0x1] 0.0
        %4019 = vst [vmem:[#allocation2 + $0xb9] sm:$0x1] 0.0
        %4020 = vst [vmem:[#allocation2 + $0xd1] sm:$0x1] 0.0
        %4021 = vst [vmem:[#allocation2 + $0xe9] sm:$0x1] 0.0
        %4022 = vst [vmem:[#allocation2 + $0x101] sm:$0x1] 0.0
        %4023 = vst [vmem:[#allocation2 + $0x119] sm:$0x1] 0.0
        %4024 = vst [vmem:[#allocation2 + $0x131] sm:$0x1] 0.0
        %4025 = vst [vmem:[#allocation2 + $0x149] sm:$0x1] 0.0
        %4026 = vst [vmem:[#allocation2 + $0x161] sm:$0x1] 0.0
        %4027 = vst [vmem:[#allocation2 + $0x179] sm:$0x1] 0.0
        %4028 = vst [vmem:[#allocation2 + $0x191] sm:$0x1] 0.0
        %4029 = vst [vmem:[#allocation2 + $0x1a9] sm:$0x1] 0.0
        %p4030 = scmp.eq.s32.totalorder %s25, 0
        // Predicated region
        $region45: #{tpu_custom_call.1} parent=39 // pred_check
          %p4031 = pneg %p4030
        $region46: #{tpu_custom_call.1} parent=39 // pred_check_branch
          %4033 = sbr.rel (%p4031) target = $region48
        $region47: #{tpu_custom_call.1} parent=39 // pred_region
          %4034 = vst [vmem:[#allocation2] sm:$0xff] 0.0
          %4035 = vst [vmem:[#allocation2 + $0x8] sm:$0xff] 0.0
          %4036 = vst [vmem:[#allocation2 + $0x10] sm:$0x3] 0.0
          %s4037 = scalar_lea.vmem [#allocation2], 408
          %4038 = vst [vmem:[%s4037] sm:$0xff] 0.0
          %4039 = vst [vmem:[%s4037 + $0x8] sm:$0xff] 0.0
          %4040 = vst [vmem:[%s4037 + $0x10] sm:$0x3] 0.0
        $region48: #{tpu_custom_call.1} parent=39 // pred_fallthru
          _
        %v4041 = vld [vmem:[#allocation2] sm:$0xff]
        %v4042 = vld [vmem:[#allocation2 + $0x8] sm:$0xff]
        %v4043 = vld [vmem:[#allocation2 + $0x18] sm:$0xff]
        %v4044 = vld [vmem:[#allocation2 + $0x20] sm:$0xff]
        %v4045 = vld [vmem:[#allocation2 + $0x30] sm:$0xff]
        %v4046 = vld [vmem:[#allocation2 + $0x38] sm:$0xff]
        %v4047 = vld [vmem:[#allocation2 + $0x48] sm:$0xff]
        %v4048 = vld [vmem:[#allocation2 + $0x50] sm:$0xff]
        %v4049 = vld [vmem:[#allocation2 + $0x60] sm:$0xff]
        %v4050 = vld [vmem:[#allocation2 + $0x68] sm:$0xff]
        %v4051 = vld [vmem:[#allocation2 + $0x78] sm:$0xff]
        %v4052 = vld [vmem:[#allocation2 + $0x80] sm:$0xff]
        %v4053 = vld [vmem:[#allocation2 + $0x90] sm:$0xff]
        %v4054 = vld [vmem:[#allocation2 + $0x98] sm:$0xff]
        %v4055 = vld [vmem:[#allocation2 + $0xa8] sm:$0xff]
        %v4056 = vld [vmem:[#allocation2 + $0xb0] sm:$0xff]
        %v4057 = vld [vmem:[#allocation2 + $0xc0] sm:$0xff]
        %v4058 = vld [vmem:[#allocation2 + $0xc8] sm:$0xff]
        %v4059 = vld [vmem:[#allocation2 + $0xd8] sm:$0xff]
        %v4060 = vld [vmem:[#allocation2 + $0xe0] sm:$0xff]
        %v4061 = vld [vmem:[#allocation2 + $0xf0] sm:$0xff]
        %v4062 = vld [vmem:[#allocation2 + $0xf8] sm:$0xff]
        %v4063 = vld [vmem:[#allocation2 + $0x108] sm:$0xff]
        %v4064 = vld [vmem:[#allocation2 + $0x110] sm:$0xff]
        %v4065 = vld [vmem:[#allocation2 + $0x120] sm:$0xff]
        %v4066 = vld [vmem:[#allocation2 + $0x128] sm:$0xff]
        %v4067 = vld [vmem:[#allocation2 + $0x138] sm:$0xff]
        %v4068 = vld [vmem:[#allocation2 + $0x140] sm:$0xff]
        %v4069 = vld [vmem:[#allocation2 + $0x150] sm:$0xff]
        %v4070 = vld [vmem:[#allocation2 + $0x158] sm:$0xff]
        %v4071 = vld [vmem:[#allocation2 + $0x168] sm:$0xff]
        %v4072 = vld [vmem:[#allocation2 + $0x170] sm:$0xff]
        %v4073 = vld [vmem:[#allocation4] sm:$0xff]
        %v4074 = vld [vmem:[#allocation4 + $0x8] sm:$0xff]
        %v4075 = vld [vmem:[#allocation4 + $0x10] sm:$0xff]
        %v4076 = vld [vmem:[#allocation4 + $0x18] sm:$0xff]
        %v4077 = vld [vmem:[#allocation4 + $0x20] sm:$0xff]
        %v4078 = vld [vmem:[#allocation4 + $0x28] sm:$0xff]
        %v4079 = vld [vmem:[#allocation4 + $0x30] sm:$0xff]
        %v4080 = vld [vmem:[#allocation4 + $0x38] sm:$0xff]
        %v4081 = vld [vmem:[#allocation4 + $0x40] sm:$0xff]
        %v4082 = vld [vmem:[#allocation4 + $0x48] sm:$0xff]
        %v4083 = vld [vmem:[#allocation4 + $0x50] sm:$0xff]
        %v4084 = vld [vmem:[#allocation4 + $0x58] sm:$0xff]
        %v4085 = vld [vmem:[#allocation4 + $0x60] sm:$0xff]
        %v4086 = vld [vmem:[#allocation4 + $0x68] sm:$0xff]
        %v4087 = vld [vmem:[#allocation4 + $0x70] sm:$0xff]
        %v4088 = vld [vmem:[#allocation4 + $0x78] sm:$0xff]
        %4089 = vmatprep.subr.mxu0 0.0
        %4090 = vmatpush1.msra.mxu0 %v4073
        %4091 = vmatprep.subr.mxu0 0.0
        %4092 = vmatpush1.msra.mxu0 %v4074
        %4093 = vmatprep.subr.mxu0 0.0
        %4094 = vmatpush1.msra.mxu0 %v4075
        %4095 = vmatprep.subr.mxu0 0.0
        %4096 = vmatpush1.msra.mxu0 %v4076
        %4097 = vmatprep.subr.mxu0 0.0
        %4098 = vmatpush1.msra.mxu0 %v4077
        %4099 = vmatprep.subr.mxu0 0.0
        %4100 = vmatpush1.msra.mxu0 %v4078
        %4101 = vmatprep.subr.mxu0 0.0
        %4102 = vmatpush1.msra.mxu0 %v4079
        %4103 = vmatprep.subr.mxu0 0.0
        %4104 = vmatpush1.msra.mxu0 %v4080
        %4105 = vmatprep.subr.mxu0 0.0
        %4106 = vmatpush1.msra.mxu0 %v4081
        %4107 = vmatprep.subr.mxu0 0.0
        %4108 = vmatpush1.msra.mxu0 %v4082
        %4109 = vmatprep.subr.mxu0 0.0
        %4110 = vmatpush1.msra.mxu0 %v4083
        %4111 = vmatprep.subr.mxu0 0.0
        %4112 = vmatpush1.msra.mxu0 %v4084
        %4113 = vmatprep.subr.mxu0 0.0
        %4114 = vmatpush1.msra.mxu0 %v4085
        %4115 = vmatprep.subr.mxu0 0.0
        %4116 = vmatpush1.msra.mxu0 %v4086
        %4117 = vmatprep.subr.mxu0 0.0
        %4118 = vmatpush1.msra.mxu0 %v4087
        %4119 = vmatprep.subr.mxu0 0.0
        %4120 = vmatpush1.msra.mxu0 %v4088
        %4121 = vmatprep.subr.mxu0 0.0
        %4122 = vmatpush1.msra.mxu0 0.0
        %4123 = vmatprep.subr.mxu0 0.0
        %4124 = vmatpush1.msra.mxu0 0.0
        %4125 = vmatprep.subr.mxu0 0.0
        %4126 = vmatpush1.msra.mxu0 0.0
        %4127 = vmatprep.subr.mxu0 0.0
        %4128 = vmatpush1.msra.mxu0 0.0
        %4129 = vmatprep.subr.mxu0 0.0
        %4130 = vmatpush1.msra.mxu0 0.0
        %4131 = vmatprep.subr.mxu0 0.0
        %4132 = vmatpush1.msra.mxu0 0.0
        %4133 = vmatprep.subr.mxu0 0.0
        %4134 = vmatpush1.msra.mxu0 0.0
        %4135 = vmatprep.subr.mxu0 0.0
        %4136 = vmatpush1.msra.mxu0 0.0
        %4137 = vmatprep.subr.mxu0 0.0
        %4138 = vmatpush1.msra.mxu0 0.0
        %4139 = vmatprep.subr.mxu0 0.0
        %4140 = vmatpush1.msra.mxu0 0.0
        %4141 = vmatprep.subr.mxu0 0.0
        %4142 = vmatpush1.msra.mxu0 0.0
        %4143 = vmatprep.subr.mxu0 0.0
        %4144 = vmatpush1.msra.mxu0 0.0
        %4145 = vmatprep.subr.mxu0 0.0
        %4146 = vmatpush1.msra.mxu0 0.0
        %4147 = vmatprep.subr.mxu0 0.0
        %4148 = vmatpush1.msra.mxu0 0.0
        %4149 = vmatprep.subr.mxu0 0.0
        %4150 = vmatpush1.msra.mxu0 0.0
        %4151 = vmatprep.subr.mxu0 0.0
        %4152 = vmatpush1.msra.mxu0 0.0
        %4153 = vmatprep.mubr.f32.mxu0 0.0
        %4154 = vmatmul.mubr.f32.gmra.mrb[0].mxu0 %v4041
        %v4155 = vpop.f32.mrb[0].mxu0
        %v4156 = vadd.f32 0.0, %v4155
        %v4157 = vpop.f32.mrb[0].mxu0
        %4158 = vmatprep.mubr.f32.mxu0 0.0
        %4159 = vmatmul.mubr.f32.gmra.mrb[0].mxu0 %v4042
        %v4160 = vpop.f32.mrb[0].mxu0
        %v4161 = vadd.f32 0.0, %v4160
        %v4162 = vpop.f32.mrb[0].mxu0
        %4163 = vmatprep.mubr.f32.mxu0 0.0
        %4164 = vmatmul.mubr.f32.gmra.mrb[0].mxu0 %v4043
        %v4165 = vpop.f32.mrb[0].mxu0
        %v4166 = vadd.f32 0.0, %v4165
        %v4167 = vpop.f32.mrb[0].mxu0
        %4168 = vmatprep.mubr.f32.mxu0 0.0
        %4169 = vmatmul.mubr.f32.gmra.mrb[0].mxu0 %v4044
        %v4170 = vpop.f32.mrb[0].mxu0
        %v4171 = vadd.f32 0.0, %v4170
        %v4172 = vpop.f32.mrb[0].mxu0
        %4173 = vmatprep.mubr.f32.mxu0 0.0
        %4174 = vmatmul.mubr.f32.gmra.mrb[0].mxu0 %v4045
        %v4175 = vpop.f32.mrb[0].mxu0
        %v4176 = vadd.f32 0.0, %v4175
        %v4177 = vpop.f32.mrb[0].mxu0
        %4178 = vmatprep.mubr.f32.mxu0 0.0
        %4179 = vmatmul.mubr.f32.gmra.mrb[0].mxu0 %v4046
        %v4180 = vpop.f32.mrb[0].mxu0
        %v4181 = vadd.f32 0.0, %v4180
        %v4182 = vpop.f32.mrb[0].mxu0
        %4183 = vmatprep.mubr.f32.mxu0 0.0
        %4184 = vmatmul.mubr.f32.gmra.mrb[0].mxu0 %v4047
        %v4185 = vpop.f32.mrb[0].mxu0
        %v4186 = vadd.f32 0.0, %v4185
        %v4187 = vpop.f32.mrb[0].mxu0
        %4188 = vmatprep.mubr.f32.mxu0 0.0
        %4189 = vmatmul.mubr.f32.gmra.mrb[0].mxu0 %v4048
        %v4190 = vpop.f32.mrb[0].mxu0
        %v4191 = vadd.f32 0.0, %v4190
        %v4192 = vpop.f32.mrb[0].mxu0
        %4193 = vmatprep.mubr.f32.mxu0 0.0
        %4194 = vmatmul.mubr.f32.gmra.mrb[0].mxu0 %v4049
        %v4195 = vpop.f32.mrb[0].mxu0
        %v4196 = vadd.f32 0.0, %v4195
        %v4197 = vpop.f32.mrb[0].mxu0
        %4198 = vmatprep.mubr.f32.mxu0 0.0
        %4199 = vmatmul.mubr.f32.gmra.mrb[0].mxu0 %v4050
        %v4200 = vpop.f32.mrb[0].mxu0
        %v4201 = vadd.f32 0.0, %v4200
        %v4202 = vpop.f32.mrb[0].mxu0
        %4203 = vmatprep.mubr.f32.mxu0 0.0
        %4204 = vmatmul.mubr.f32.gmra.mrb[0].mxu0 %v4051
        %v4205 = vpop.f32.mrb[0].mxu0
        %v4206 = vadd.f32 0.0, %v4205
        %v4207 = vpop.f32.mrb[0].mxu0
        %4208 = vmatprep.mubr.f32.mxu0 0.0
        %4209 = vmatmul.mubr.f32.gmra.mrb[0].mxu0 %v4052
        %v4210 = vpop.f32.mrb[0].mxu0
        %v4211 = vadd.f32 0.0, %v4210
        %v4212 = vpop.f32.mrb[0].mxu0
        %4213 = vmatprep.mubr.f32.mxu0 0.0
        %4214 = vmatmul.mubr.f32.gmra.mrb[0].mxu0 %v4053
        %v4215 = vpop.f32.mrb[0].mxu0
        %v4216 = vadd.f32 0.0, %v4215
        %v4217 = vpop.f32.mrb[0].mxu0
        %4218 = vmatprep.mubr.f32.mxu0 0.0
        %4219 = vmatmul.mubr.f32.gmra.mrb[0].mxu0 %v4054
        %v4220 = vpop.f32.mrb[0].mxu0
        %v4221 = vadd.f32 0.0, %v4220
        %v4222 = vpop.f32.mrb[0].mxu0
        %4223 = vmatprep.mubr.f32.mxu0 0.0
        %4224 = vmatmul.mubr.f32.gmra.mrb[0].mxu0 %v4055
        %v4225 = vpop.f32.mrb[0].mxu0
        %v4226 = vadd.f32 0.0, %v4225
        %v4227 = vpop.f32.mrb[0].mxu0
        %4228 = vmatprep.mubr.f32.mxu0 0.0
        %4229 = vmatmul.mubr.f32.gmra.mrb[0].mxu0 %v4056
        %v4230 = vpop.f32.mrb[0].mxu0
        %v4231 = vadd.f32 0.0, %v4230
        %v4232 = vpop.f32.mrb[0].mxu0
        %4233 = vmatprep.mubr.f32.mxu0 0.0
        %4234 = vmatmul.mubr.f32.gmra.mrb[0].mxu0 %v4057
        %v4235 = vpop.f32.mrb[0].mxu0
        %v4236 = vadd.f32 0.0, %v4235
        %v4237 = vpop.f32.mrb[0].mxu0
        %4238 = vmatprep.mubr.f32.mxu0 0.0
        %4239 = vmatmul.mubr.f32.gmra.mrb[0].mxu0 %v4058
        %v4240 = vpop.f32.mrb[0].mxu0
        %v4241 = vadd.f32 0.0, %v4240
        %v4242 = vpop.f32.mrb[0].mxu0
        %4243 = vmatprep.mubr.f32.mxu0 0.0
        %4244 = vmatmul.mubr.f32.gmra.mrb[0].mxu0 %v4059
        %v4245 = vpop.f32.mrb[0].mxu0
        %v4246 = vadd.f32 0.0, %v4245
        %v4247 = vpop.f32.mrb[0].mxu0
        %4248 = vmatprep.mubr.f32.mxu0 0.0
        %4249 = vmatmul.mubr.f32.gmra.mrb[0].mxu0 %v4060
        %v4250 = vpop.f32.mrb[0].mxu0
        %v4251 = vadd.f32 0.0, %v4250
        %v4252 = vpop.f32.mrb[0].mxu0
        %4253 = vmatprep.mubr.f32.mxu0 0.0
        %4254 = vmatmul.mubr.f32.gmra.mrb[0].mxu0 %v4061
        %v4255 = vpop.f32.mrb[0].mxu0
        %v4256 = vadd.f32 0.0, %v4255
        %v4257 = vpop.f32.mrb[0].mxu0
        %4258 = vmatprep.mubr.f32.mxu0 0.0
        %4259 = vmatmul.mubr.f32.gmra.mrb[0].mxu0 %v4062
        %v4260 = vpop.f32.mrb[0].mxu0
        %v4261 = vadd.f32 0.0, %v4260
        %v4262 = vpop.f32.mrb[0].mxu0
        %4263 = vmatprep.mubr.f32.mxu0 0.0
        %4264 = vmatmul.mubr.f32.gmra.mrb[0].mxu0 %v4063
        %v4265 = vpop.f32.mrb[0].mxu0
        %v4266 = vadd.f32 0.0, %v4265
        %v4267 = vpop.f32.mrb[0].mxu0
        %4268 = vmatprep.mubr.f32.mxu0 0.0
        %4269 = vmatmul.mubr.f32.gmra.mrb[0].mxu0 %v4064
        %v4270 = vpop.f32.mrb[0].mxu0
        %v4271 = vadd.f32 0.0, %v4270
        %v4272 = vpop.f32.mrb[0].mxu0
        %4273 = vmatprep.mubr.f32.mxu0 0.0
        %4274 = vmatmul.mubr.f32.gmra.mrb[0].mxu0 %v4065
        %v4275 = vpop.f32.mrb[0].mxu0
        %v4276 = vadd.f32 0.0, %v4275
        %v4277 = vpop.f32.mrb[0].mxu0
        %4278 = vmatprep.mubr.f32.mxu0 0.0
        %4279 = vmatmul.mubr.f32.gmra.mrb[0].mxu0 %v4066
        %v4280 = vpop.f32.mrb[0].mxu0
        %v4281 = vadd.f32 0.0, %v4280
        %v4282 = vpop.f32.mrb[0].mxu0
        %4283 = vmatprep.mubr.f32.mxu0 0.0
        %4284 = vmatmul.mubr.f32.gmra.mrb[0].mxu0 %v4067
        %v4285 = vpop.f32.mrb[0].mxu0
        %v4286 = vadd.f32 0.0, %v4285
        %v4287 = vpop.f32.mrb[0].mxu0
        %4288 = vmatprep.mubr.f32.mxu0 0.0
        %4289 = vmatmul.mubr.f32.gmra.mrb[0].mxu0 %v4068
        %v4290 = vpop.f32.mrb[0].mxu0
        %v4291 = vadd.f32 0.0, %v4290
        %v4292 = vpop.f32.mrb[0].mxu0
        %4293 = vmatprep.mubr.f32.mxu0 0.0
        %4294 = vmatmul.mubr.f32.gmra.mrb[0].mxu0 %v4069
        %v4295 = vpop.f32.mrb[0].mxu0
        %v4296 = vadd.f32 0.0, %v4295
        %v4297 = vpop.f32.mrb[0].mxu0
        %4298 = vmatprep.mubr.f32.mxu0 0.0
        %4299 = vmatmul.mubr.f32.gmra.mrb[0].mxu0 %v4070
        %v4300 = vpop.f32.mrb[0].mxu0
        %v4301 = vadd.f32 0.0, %v4300
        %v4302 = vpop.f32.mrb[0].mxu0
        %4303 = vmatprep.mubr.f32.mxu0 0.0
        %4304 = vmatmul.mubr.f32.gmra.mrb[0].mxu0 %v4071
        %v4305 = vpop.f32.mrb[0].mxu0
        %v4306 = vadd.f32 0.0, %v4305
        %v4307 = vpop.f32.mrb[0].mxu0
        %4308 = vmatprep.mubr.f32.mxu0 0.0
        %4309 = vmatmul.mubr.f32.gmra.mrb[0].mxu0 %v4072
        %v4310 = vpop.f32.mrb[0].mxu0
        %v4311 = vadd.f32 0.0, %v4310
        %v4312 = vpop.f32.mrb[0].mxu0
        %4313 = vdwg.mxu0
        %4314 = vst [vmem:[#allocation3] sm:$0xff] %v4156
        %4315 = vst [vmem:[#allocation3 + $0x8] sm:$0xff] %v4161
        %4316 = vst [vmem:[#allocation3 + $0x10] sm:$0xff] %v4166
        %4317 = vst [vmem:[#allocation3 + $0x18] sm:$0xff] %v4171
        %4318 = vst [vmem:[#allocation3 + $0x20] sm:$0xff] %v4176
        %4319 = vst [vmem:[#allocation3 + $0x28] sm:$0xff] %v4181
        %4320 = vst [vmem:[#allocation3 + $0x30] sm:$0xff] %v4186
        %4321 = vst [vmem:[#allocation3 + $0x38] sm:$0xff] %v4191
        %4322 = vst [vmem:[#allocation3 + $0x40] sm:$0xff] %v4196
        %4323 = vst [vmem:[#allocation3 + $0x48] sm:$0xff] %v4201
        %4324 = vst [vmem:[#allocation3 + $0x50] sm:$0xff] %v4206
        %4325 = vst [vmem:[#allocation3 + $0x58] sm:$0xff] %v4211
        %4326 = vst [vmem:[#allocation3 + $0x60] sm:$0xff] %v4216
        %4327 = vst [vmem:[#allocation3 + $0x68] sm:$0xff] %v4221
        %4328 = vst [vmem:[#allocation3 + $0x70] sm:$0xff] %v4226
        %4329 = vst [vmem:[#allocation3 + $0x78] sm:$0xff] %v4231
        %4330 = vst [vmem:[#allocation3 + $0x80] sm:$0xff] %v4236
        %4331 = vst [vmem:[#allocation3 + $0x88] sm:$0xff] %v4241
        %4332 = vst [vmem:[#allocation3 + $0x90] sm:$0xff] %v4246
        %4333 = vst [vmem:[#allocation3 + $0x98] sm:$0xff] %v4251
        %4334 = vst [vmem:[#allocation3 + $0xa0] sm:$0xff] %v4256
        %4335 = vst [vmem:[#allocation3 + $0xa8] sm:$0xff] %v4261
        %4336 = vst [vmem:[#allocation3 + $0xb0] sm:$0xff] %v4266
        %4337 = vst [vmem:[#allocation3 + $0xb8] sm:$0xff] %v4271
        %4338 = vst [vmem:[#allocation3 + $0xc0] sm:$0xff] %v4276
        %4339 = vst [vmem:[#allocation3 + $0xc8] sm:$0xff] %v4281
        %4340 = vst [vmem:[#allocation3 + $0xd0] sm:$0xff] %v4286
        %4341 = vst [vmem:[#allocation3 + $0xd8] sm:$0xff] %v4291
        %4342 = vst [vmem:[#allocation3 + $0xe0] sm:$0xff] %v4296
        %4343 = vst [vmem:[#allocation3 + $0xe8] sm:$0xff] %v4301
        %4344 = vst [vmem:[#allocation3 + $0xf0] sm:$0xff] %v4306
        %4345 = vst [vmem:[#allocation3 + $0xf8] sm:$0xff] %v4311
        %v4346 = vld [vmem:[#allocation2 + $0x1] sm:$0xff]
        %v4347 = vld [vmem:[#allocation2 + $0x9] sm:$0xff]
        %v4348 = vld [vmem:[#allocation2 + $0x19] sm:$0xff]
        %v4349 = vld [vmem:[#allocation2 + $0x21] sm:$0xff]
        %v4350 = vld [vmem:[#allocation2 + $0x31] sm:$0xff]
        %v4351 = vld [vmem:[#allocation2 + $0x39] sm:$0xff]
        %v4352 = vld [vmem:[#allocation2 + $0x49] sm:$0xff]
        %v4353 = vld [vmem:[#allocation2 + $0x51] sm:$0xff]
        %v4354 = vld [vmem:[#allocation2 + $0x61] sm:$0xff]
        %v4355 = vld [vmem:[#allocation2 + $0x69] sm:$0xff]
        %v4356 = vld [vmem:[#allocation2 + $0x79] sm:$0xff]
        %v4357 = vld [vmem:[#allocation2 + $0x81] sm:$0xff]
        %v4358 = vld [vmem:[#allocation2 + $0x91] sm:$0xff]
        %v4359 = vld [vmem:[#allocation2 + $0x99] sm:$0xff]
        %v4360 = vld [vmem:[#allocation2 + $0xa9] sm:$0xff]
        %v4361 = vld [vmem:[#allocation2 + $0xb1] sm:$0xff]
        %v4362 = vld [vmem:[#allocation2 + $0xc1] sm:$0xff]
        %v4363 = vld [vmem:[#allocation2 + $0xc9] sm:$0xff]
        %v4364 = vld [vmem:[#allocation2 + $0xd9] sm:$0xff]
        %v4365 = vld [vmem:[#allocation2 + $0xe1] sm:$0xff]
        %v4366 = vld [vmem:[#allocation2 + $0xf1] sm:$0xff]
        %v4367 = vld [vmem:[#allocation2 + $0xf9] sm:$0xff]
        %v4368 = vld [vmem:[#allocation2 + $0x109] sm:$0xff]
        %v4369 = vld [vmem:[#allocation2 + $0x111] sm:$0xff]
        %v4370 = vld [vmem:[#allocation2 + $0x121] sm:$0xff]
        %v4371 = vld [vmem:[#allocation2 + $0x129] sm:$0xff]
        %v4372 = vld [vmem:[#allocation2 + $0x139] sm:$0xff]
        %v4373 = vld [vmem:[#allocation2 + $0x141] sm:$0xff]
        %v4374 = vld [vmem:[#allocation2 + $0x151] sm:$0xff]
        %v4375 = vld [vmem:[#allocation2 + $0x159] sm:$0xff]
        %v4376 = vld [vmem:[#allocation2 + $0x169] sm:$0xff]
        %v4377 = vld [vmem:[#allocation2 + $0x171] sm:$0xff]
        %s4378 = scalar_lea.vmem [#allocation4], 128
        %v4379 = vld [vmem:[%s4378] sm:$0xff]
        %v4380 = vld [vmem:[%s4378 + $0x8] sm:$0xff]
        %v4381 = vld [vmem:[%s4378 + $0x10] sm:$0xff]
        %v4382 = vld [vmem:[%s4378 + $0x18] sm:$0xff]
        %v4383 = vld [vmem:[%s4378 + $0x20] sm:$0xff]
        %v4384 = vld [vmem:[%s4378 + $0x28] sm:$0xff]
        %v4385 = vld [vmem:[%s4378 + $0x30] sm:$0xff]
        %v4386 = vld [vmem:[%s4378 + $0x38] sm:$0xff]
        %v4387 = vld [vmem:[%s4378 + $0x40] sm:$0xff]
        %v4388 = vld [vmem:[%s4378 + $0x48] sm:$0xff]
        %v4389 = vld [vmem:[%s4378 + $0x50] sm:$0xff]
        %v4390 = vld [vmem:[%s4378 + $0x58] sm:$0xff]
        %v4391 = vld [vmem:[%s4378 + $0x60] sm:$0xff]
        %v4392 = vld [vmem:[%s4378 + $0x68] sm:$0xff]
        %v4393 = vld [vmem:[%s4378 + $0x70] sm:$0xff]
        %v4394 = vld [vmem:[%s4378 + $0x78] sm:$0xff]
        %4395 = vmatprep.subr.mxu0 0.0
        %4396 = vmatpush1.msra.mxu0 %v4379
        %4397 = vmatprep.subr.mxu0 0.0
        %4398 = vmatpush1.msra.mxu0 %v4380
        %4399 = vmatprep.subr.mxu0 0.0
        %4400 = vmatpush1.msra.mxu0 %v4381
        %4401 = vmatprep.subr.mxu0 0.0
        %4402 = vmatpush1.msra.mxu0 %v4382
        %4403 = vmatprep.subr.mxu0 0.0
        %4404 = vmatpush1.msra.mxu0 %v4383
        %4405 = vmatprep.subr.mxu0 0.0
        %4406 = vmatpush1.msra.mxu0 %v4384
        %4407 = vmatprep.subr.mxu0 0.0
        %4408 = vmatpush1.msra.mxu0 %v4385
        %4409 = vmatprep.subr.mxu0 0.0
        %4410 = vmatpush1.msra.mxu0 %v4386
        %4411 = vmatprep.subr.mxu0 0.0
        %4412 = vmatpush1.msra.mxu0 %v4387
        %4413 = vmatprep.subr.mxu0 0.0
        %4414 = vmatpush1.msra.mxu0 %v4388
        %4415 = vmatprep.subr.mxu0 0.0
        %4416 = vmatpush1.msra.mxu0 %v4389
        %4417 = vmatprep.subr.mxu0 0.0
        %4418 = vmatpush1.msra.mxu0 %v4390
        %4419 = vmatprep.subr.mxu0 0.0
        %4420 = vmatpush1.msra.mxu0 %v4391
        %4421 = vmatprep.subr.mxu0 0.0
        %4422 = vmatpush1.msra.mxu0 %v4392
        %4423 = vmatprep.subr.mxu0 0.0
        %4424 = vmatpush1.msra.mxu0 %v4393
        %4425 = vmatprep.subr.mxu0 0.0
        %4426 = vmatpush1.msra.mxu0 %v4394
        %4427 = vmatprep.subr.mxu0 0.0
        %4428 = vmatpush1.msra.mxu0 0.0
        %4429 = vmatprep.subr.mxu0 0.0
        %4430 = vmatpush1.msra.mxu0 0.0
        %4431 = vmatprep.subr.mxu0 0.0
        %4432 = vmatpush1.msra.mxu0 0.0
        %4433 = vmatprep.subr.mxu0 0.0
        %4434 = vmatpush1.msra.mxu0 0.0
        %4435 = vmatprep.subr.mxu0 0.0
        %4436 = vmatpush1.msra.mxu0 0.0
        %4437 = vmatprep.subr.mxu0 0.0
        %4438 = vmatpush1.msra.mxu0 0.0
        %4439 = vmatprep.subr.mxu0 0.0
        %4440 = vmatpush1.msra.mxu0 0.0
        %4441 = vmatprep.subr.mxu0 0.0
        %4442 = vmatpush1.msra.mxu0 0.0
        %4443 = vmatprep.subr.mxu0 0.0
        %4444 = vmatpush1.msra.mxu0 0.0
        %4445 = vmatprep.subr.mxu0 0.0
        %4446 = vmatpush1.msra.mxu0 0.0
        %4447 = vmatprep.subr.mxu0 0.0
        %4448 = vmatpush1.msra.mxu0 0.0
        %4449 = vmatprep.subr.mxu0 0.0
        %4450 = vmatpush1.msra.mxu0 0.0
        %4451 = vmatprep.subr.mxu0 0.0
        %4452 = vmatpush1.msra.mxu0 0.0
        %4453 = vmatprep.subr.mxu0 0.0
        %4454 = vmatpush1.msra.mxu0 0.0
        %4455 = vmatprep.subr.mxu0 0.0
        %4456 = vmatpush1.msra.mxu0 0.0
        %4457 = vmatprep.subr.mxu0 0.0
        %4458 = vmatpush1.msra.mxu0 0.0
        %4459 = vmatprep.mubr.f32.mxu0 0.0
        %4460 = vmatmul.mubr.f32.gmra.mrb[0].mxu0 %v4346
        %v4461 = vpop.f32.mrb[0].mxu0
        %v4462 = vadd.f32 0.0, %v4461
        %v4463 = vpop.f32.mrb[0].mxu0
        %4464 = vmatprep.mubr.f32.mxu0 0.0
        %4465 = vmatmul.mubr.f32.gmra.mrb[0].mxu0 %v4347
        %v4466 = vpop.f32.mrb[0].mxu0
        %v4467 = vadd.f32 0.0, %v4466
        %v4468 = vpop.f32.mrb[0].mxu0
        %4469 = vmatprep.mubr.f32.mxu0 0.0
        %4470 = vmatmul.mubr.f32.gmra.mrb[0].mxu0 %v4348
        %v4471 = vpop.f32.mrb[0].mxu0
        %v4472 = vadd.f32 0.0, %v4471
        %v4473 = vpop.f32.mrb[0].mxu0
        %4474 = vmatprep.mubr.f32.mxu0 0.0
        %4475 = vmatmul.mubr.f32.gmra.mrb[0].mxu0 %v4349
        %v4476 = vpop.f32.mrb[0].mxu0
        %v4477 = vadd.f32 0.0, %v4476
        %v4478 = vpop.f32.mrb[0].mxu0
        %4479 = vmatprep.mubr.f32.mxu0 0.0
        %4480 = vmatmul.mubr.f32.gmra.mrb[0].mxu0 %v4350
        %v4481 = vpop.f32.mrb[0].mxu0
        %v4482 = vadd.f32 0.0, %v4481
        %v4483 = vpop.f32.mrb[0].mxu0
        %4484 = vmatprep.mubr.f32.mxu0 0.0
        %4485 = vmatmul.mubr.f32.gmra.mrb[0].mxu0 %v4351
        %v4486 = vpop.f32.mrb[0].mxu0
        %v4487 = vadd.f32 0.0, %v4486
        %v4488 = vpop.f32.mrb[0].mxu0
        %4489 = vmatprep.mubr.f32.mxu0 0.0
        %4490 = vmatmul.mubr.f32.gmra.mrb[0].mxu0 %v4352
        %v4491 = vpop.f32.mrb[0].mxu0
        %v4492 = vadd.f32 0.0, %v4491
        %v4493 = vpop.f32.mrb[0].mxu0
        %4494 = vmatprep.mubr.f32.mxu0 0.0
        %4495 = vmatmul.mubr.f32.gmra.mrb[0].mxu0 %v4353
        %v4496 = vpop.f32.mrb[0].mxu0
        %v4497 = vadd.f32 0.0, %v4496
        %v4498 = vpop.f32.mrb[0].mxu0
        %4499 = vmatprep.mubr.f32.mxu0 0.0
        %4500 = vmatmul.mubr.f32.gmra.mrb[0].mxu0 %v4354
        %v4501 = vpop.f32.mrb[0].mxu0
        %v4502 = vadd.f32 0.0, %v4501
        %v4503 = vpop.f32.mrb[0].mxu0
        %4504 = vmatprep.mubr.f32.mxu0 0.0
        %4505 = vmatmul.mubr.f32.gmra.mrb[0].mxu0 %v4355
        %v4506 = vpop.f32.mrb[0].mxu0
        %v4507 = vadd.f32 0.0, %v4506
        %v4508 = vpop.f32.mrb[0].mxu0
        %4509 = vmatprep.mubr.f32.mxu0 0.0
        %4510 = vmatmul.mubr.f32.gmra.mrb[0].mxu0 %v4356
        %v4511 = vpop.f32.mrb[0].mxu0
        %v4512 = vadd.f32 0.0, %v4511
        %v4513 = vpop.f32.mrb[0].mxu0
        %4514 = vmatprep.mubr.f32.mxu0 0.0
        %4515 = vmatmul.mubr.f32.gmra.mrb[0].mxu0 %v4357
        %v4516 = vpop.f32.mrb[0].mxu0
        %v4517 = vadd.f32 0.0, %v4516
        %v4518 = vpop.f32.mrb[0].mxu0
        %4519 = vmatprep.mubr.f32.mxu0 0.0
        %4520 = vmatmul.mubr.f32.gmra.mrb[0].mxu0 %v4358
        %v4521 = vpop.f32.mrb[0].mxu0
        %v4522 = vadd.f32 0.0, %v4521
        %v4523 = vpop.f32.mrb[0].mxu0
        %4524 = vmatprep.mubr.f32.mxu0 0.0
        %4525 = vmatmul.mubr.f32.gmra.mrb[0].mxu0 %v4359
        %v4526 = vpop.f32.mrb[0].mxu0
        %v4527 = vadd.f32 0.0, %v4526
        %v4528 = vpop.f32.mrb[0].mxu0
        %4529 = vmatprep.mubr.f32.mxu0 0.0
        %4530 = vmatmul.mubr.f32.gmra.mrb[0].mxu0 %v4360
        %v4531 = vpop.f32.mrb[0].mxu0
        %v4532 = vadd.f32 0.0, %v4531
        %v4533 = vpop.f32.mrb[0].mxu0
        %4534 = vmatprep.mubr.f32.mxu0 0.0
        %4535 = vmatmul.mubr.f32.gmra.mrb[0].mxu0 %v4361
        %v4536 = vpop.f32.mrb[0].mxu0
        %v4537 = vadd.f32 0.0, %v4536
        %v4538 = vpop.f32.mrb[0].mxu0
        %4539 = vmatprep.mubr.f32.mxu0 0.0
        %4540 = vmatmul.mubr.f32.gmra.mrb[0].mxu0 %v4362
        %v4541 = vpop.f32.mrb[0].mxu0
        %v4542 = vadd.f32 0.0, %v4541
        %v4543 = vpop.f32.mrb[0].mxu0
        %4544 = vmatprep.mubr.f32.mxu0 0.0
        %4545 = vmatmul.mubr.f32.gmra.mrb[0].mxu0 %v4363
        %v4546 = vpop.f32.mrb[0].mxu0
        %v4547 = vadd.f32 0.0, %v4546
        %v4548 = vpop.f32.mrb[0].mxu0
        %4549 = vmatprep.mubr.f32.mxu0 0.0
        %4550 = vmatmul.mubr.f32.gmra.mrb[0].mxu0 %v4364
        %v4551 = vpop.f32.mrb[0].mxu0
        %v4552 = vadd.f32 0.0, %v4551
        %v4553 = vpop.f32.mrb[0].mxu0
        %4554 = vmatprep.mubr.f32.mxu0 0.0
        %4555 = vmatmul.mubr.f32.gmra.mrb[0].mxu0 %v4365
        %v4556 = vpop.f32.mrb[0].mxu0
        %v4557 = vadd.f32 0.0, %v4556
        %v4558 = vpop.f32.mrb[0].mxu0
        %4559 = vmatprep.mubr.f32.mxu0 0.0
        %4560 = vmatmul.mubr.f32.gmra.mrb[0].mxu0 %v4366
        %v4561 = vpop.f32.mrb[0].mxu0
        %v4562 = vadd.f32 0.0, %v4561
        %v4563 = vpop.f32.mrb[0].mxu0
        %4564 = vmatprep.mubr.f32.mxu0 0.0
        %4565 = vmatmul.mubr.f32.gmra.mrb[0].mxu0 %v4367
        %v4566 = vpop.f32.mrb[0].mxu0
        %v4567 = vadd.f32 0.0, %v4566
        %v4568 = vpop.f32.mrb[0].mxu0
        %4569 = vmatprep.mubr.f32.mxu0 0.0
        %4570 = vmatmul.mubr.f32.gmra.mrb[0].mxu0 %v4368
        %v4571 = vpop.f32.mrb[0].mxu0
        %v4572 = vadd.f32 0.0, %v4571
        %v4573 = vpop.f32.mrb[0].mxu0
        %4574 = vmatprep.mubr.f32.mxu0 0.0
        %4575 = vmatmul.mubr.f32.gmra.mrb[0].mxu0 %v4369
        %v4576 = vpop.f32.mrb[0].mxu0
        %v4577 = vadd.f32 0.0, %v4576
        %v4578 = vpop.f32.mrb[0].mxu0
        %4579 = vmatprep.mubr.f32.mxu0 0.0
        %4580 = vmatmul.mubr.f32.gmra.mrb[0].mxu0 %v4370
        %v4581 = vpop.f32.mrb[0].mxu0
        %v4582 = vadd.f32 0.0, %v4581
        %v4583 = vpop.f32.mrb[0].mxu0
        %4584 = vmatprep.mubr.f32.mxu0 0.0
        %4585 = vmatmul.mubr.f32.gmra.mrb[0].mxu0 %v4371
        %v4586 = vpop.f32.mrb[0].mxu0
        %v4587 = vadd.f32 0.0, %v4586
        %v4588 = vpop.f32.mrb[0].mxu0
        %4589 = vmatprep.mubr.f32.mxu0 0.0
        %4590 = vmatmul.mubr.f32.gmra.mrb[0].mxu0 %v4372
        %v4591 = vpop.f32.mrb[0].mxu0
        %v4592 = vadd.f32 0.0, %v4591
        %v4593 = vpop.f32.mrb[0].mxu0
        %4594 = vmatprep.mubr.f32.mxu0 0.0
        %4595 = vmatmul.mubr.f32.gmra.mrb[0].mxu0 %v4373
        %v4596 = vpop.f32.mrb[0].mxu0
        %v4597 = vadd.f32 0.0, %v4596
        %v4598 = vpop.f32.mrb[0].mxu0
        %4599 = vmatprep.mubr.f32.mxu0 0.0
        %4600 = vmatmul.mubr.f32.gmra.mrb[0].mxu0 %v4374
        %v4601 = vpop.f32.mrb[0].mxu0
        %v4602 = vadd.f32 0.0, %v4601
        %v4603 = vpop.f32.mrb[0].mxu0
        %4604 = vmatprep.mubr.f32.mxu0 0.0
        %4605 = vmatmul.mubr.f32.gmra.mrb[0].mxu0 %v4375
        %v4606 = vpop.f32.mrb[0].mxu0
        %v4607 = vadd.f32 0.0, %v4606
        %v4608 = vpop.f32.mrb[0].mxu0
        %4609 = vmatprep.mubr.f32.mxu0 0.0
        %4610 = vmatmul.mubr.f32.gmra.mrb[0].mxu0 %v4376
        %v4611 = vpop.f32.mrb[0].mxu0
        %v4612 = vadd.f32 0.0, %v4611
        %v4613 = vpop.f32.mrb[0].mxu0
        %4614 = vmatprep.mubr.f32.mxu0 0.0
        %4615 = vmatmul.mubr.f32.gmra.mrb[0].mxu0 %v4377
        %v4616 = vpop.f32.mrb[0].mxu0
        %v4617 = vadd.f32 0.0, %v4616
        %v4618 = vpop.f32.mrb[0].mxu0
        %4619 = vdwg.mxu0
        %v4620 = vld [vmem:[#allocation3] sm:$0xff]
        %v4621 = vld [vmem:[#allocation3 + $0x8] sm:$0xff]
        %v4622 = vld [vmem:[#allocation3 + $0x10] sm:$0xff]
        %v4623 = vld [vmem:[#allocation3 + $0x18] sm:$0xff]
        %v4624 = vld [vmem:[#allocation3 + $0x20] sm:$0xff]
        %v4625 = vld [vmem:[#allocation3 + $0x28] sm:$0xff]
        %v4626 = vld [vmem:[#allocation3 + $0x30] sm:$0xff]
        %v4627 = vld [vmem:[#allocation3 + $0x38] sm:$0xff]
        %v4628 = vld [vmem:[#allocation3 + $0x40] sm:$0xff]
        %v4629 = vld [vmem:[#allocation3 + $0x48] sm:$0xff]
        %v4630 = vld [vmem:[#allocation3 + $0x50] sm:$0xff]
        %v4631 = vld [vmem:[#allocation3 + $0x58] sm:$0xff]
        %v4632 = vld [vmem:[#allocation3 + $0x60] sm:$0xff]
        %v4633 = vld [vmem:[#allocation3 + $0x68] sm:$0xff]
        %v4634 = vld [vmem:[#allocation3 + $0x70] sm:$0xff]
        %v4635 = vld [vmem:[#allocation3 + $0x78] sm:$0xff]
        %v4636 = vld [vmem:[#allocation3 + $0x80] sm:$0xff]
        %v4637 = vld [vmem:[#allocation3 + $0x88] sm:$0xff]
        %v4638 = vld [vmem:[#allocation3 + $0x90] sm:$0xff]
        %v4639 = vld [vmem:[#allocation3 + $0x98] sm:$0xff]
        %v4640 = vld [vmem:[#allocation3 + $0xa0] sm:$0xff]
        %v4641 = vld [vmem:[#allocation3 + $0xa8] sm:$0xff]
        %v4642 = vld [vmem:[#allocation3 + $0xb0] sm:$0xff]
        %v4643 = vld [vmem:[#allocation3 + $0xb8] sm:$0xff]
        %v4644 = vld [vmem:[#allocation3 + $0xc0] sm:$0xff]
        %v4645 = vld [vmem:[#allocation3 + $0xc8] sm:$0xff]
        %v4646 = vld [vmem:[#allocation3 + $0xd0] sm:$0xff]
        %v4647 = vld [vmem:[#allocation3 + $0xd8] sm:$0xff]
        %v4648 = vld [vmem:[#allocation3 + $0xe0] sm:$0xff]
        %v4649 = vld [vmem:[#allocation3 + $0xe8] sm:$0xff]
        %v4650 = vld [vmem:[#allocation3 + $0xf0] sm:$0xff]
        %v4651 = vld [vmem:[#allocation3 + $0xf8] sm:$0xff]
        %v4652 = vadd.f32 %v4620, %v4462
        %v4653 = vadd.f32 %v4621, %v4467
        %v4654 = vadd.f32 %v4622, %v4472
        %v4655 = vadd.f32 %v4623, %v4477
        %v4656 = vadd.f32 %v4624, %v4482
        %v4657 = vadd.f32 %v4625, %v4487
        %v4658 = vadd.f32 %v4626, %v4492
        %v4659 = vadd.f32 %v4627, %v4497
        %v4660 = vadd.f32 %v4628, %v4502
        %v4661 = vadd.f32 %v4629, %v4507
        %v4662 = vadd.f32 %v4630, %v4512
        %v4663 = vadd.f32 %v4631, %v4517
        %v4664 = vadd.f32 %v4632, %v4522
        %v4665 = vadd.f32 %v4633, %v4527
        %v4666 = vadd.f32 %v4634, %v4532
        %v4667 = vadd.f32 %v4635, %v4537
        %v4668 = vadd.f32 %v4636, %v4542
        %v4669 = vadd.f32 %v4637, %v4547
        %v4670 = vadd.f32 %v4638, %v4552
        %v4671 = vadd.f32 %v4639, %v4557
        %v4672 = vadd.f32 %v4640, %v4562
        %v4673 = vadd.f32 %v4641, %v4567
        %v4674 = vadd.f32 %v4642, %v4572
        %v4675 = vadd.f32 %v4643, %v4577
        %v4676 = vadd.f32 %v4644, %v4582
        %v4677 = vadd.f32 %v4645, %v4587
        %v4678 = vadd.f32 %v4646, %v4592
        %v4679 = vadd.f32 %v4647, %v4597
        %v4680 = vadd.f32 %v4648, %v4602
        %v4681 = vadd.f32 %v4649, %v4607
        %v4682 = vadd.f32 %v4650, %v4612
        %v4683 = vadd.f32 %v4651, %v4617
        %4684 = vst [vmem:[#allocation3] sm:$0xff] %v4652
        %4685 = vst [vmem:[#allocation3 + $0x8] sm:$0xff] %v4653
        %4686 = vst [vmem:[#allocation3 + $0x10] sm:$0xff] %v4654
        %4687 = vst [vmem:[#allocation3 + $0x18] sm:$0xff] %v4655
        %4688 = vst [vmem:[#allocation3 + $0x20] sm:$0xff] %v4656
        %4689 = vst [vmem:[#allocation3 + $0x28] sm:$0xff] %v4657
        %4690 = vst [vmem:[#allocation3 + $0x30] sm:$0xff] %v4658
        %4691 = vst [vmem:[#allocation3 + $0x38] sm:$0xff] %v4659
        %4692 = vst [vmem:[#allocation3 + $0x40] sm:$0xff] %v4660
        %4693 = vst [vmem:[#allocation3 + $0x48] sm:$0xff] %v4661
        %4694 = vst [vmem:[#allocation3 + $0x50] sm:$0xff] %v4662
        %4695 = vst [vmem:[#allocation3 + $0x58] sm:$0xff] %v4663
        %4696 = vst [vmem:[#allocation3 + $0x60] sm:$0xff] %v4664
        %4697 = vst [vmem:[#allocation3 + $0x68] sm:$0xff] %v4665
        %4698 = vst [vmem:[#allocation3 + $0x70] sm:$0xff] %v4666
        %4699 = vst [vmem:[#allocation3 + $0x78] sm:$0xff] %v4667
        %4700 = vst [vmem:[#allocation3 + $0x80] sm:$0xff] %v4668
        %4701 = vst [vmem:[#allocation3 + $0x88] sm:$0xff] %v4669
        %4702 = vst [vmem:[#allocation3 + $0x90] sm:$0xff] %v4670
        %4703 = vst [vmem:[#allocation3 + $0x98] sm:$0xff] %v4671
        %4704 = vst [vmem:[#allocation3 + $0xa0] sm:$0xff] %v4672
        %4705 = vst [vmem:[#allocation3 + $0xa8] sm:$0xff] %v4673
        %4706 = vst [vmem:[#allocation3 + $0xb0] sm:$0xff] %v4674
        %4707 = vst [vmem:[#allocation3 + $0xb8] sm:$0xff] %v4675
        %4708 = vst [vmem:[#allocation3 + $0xc0] sm:$0xff] %v4676
        %4709 = vst [vmem:[#allocation3 + $0xc8] sm:$0xff] %v4677
        %4710 = vst [vmem:[#allocation3 + $0xd0] sm:$0xff] %v4678
        %4711 = vst [vmem:[#allocation3 + $0xd8] sm:$0xff] %v4679
        %4712 = vst [vmem:[#allocation3 + $0xe0] sm:$0xff] %v4680
        %4713 = vst [vmem:[#allocation3 + $0xe8] sm:$0xff] %v4681
        %4714 = vst [vmem:[#allocation3 + $0xf0] sm:$0xff] %v4682
        %4715 = vst [vmem:[#allocation3 + $0xf8] sm:$0xff] %v4683
        %v4716 = vld [vmem:[#allocation2 + $0x2] sm:$0xff]
        %v4717 = vld [vmem:[#allocation2 + $0xa] sm:$0xff]
        %v4718 = vld [vmem:[#allocation2 + $0x1a] sm:$0xff]
        %v4719 = vld [vmem:[#allocation2 + $0x22] sm:$0xff]
        %v4720 = vld [vmem:[#allocation2 + $0x32] sm:$0xff]
        %v4721 = vld [vmem:[#allocation2 + $0x3a] sm:$0xff]
        %v4722 = vld [vmem:[#allocation2 + $0x4a] sm:$0xff]
        %v4723 = vld [vmem:[#allocation2 + $0x52] sm:$0xff]
        %v4724 = vld [vmem:[#allocation2 + $0x62] sm:$0xff]
        %v4725 = vld [vmem:[#allocation2 + $0x6a] sm:$0xff]
        %v4726 = vld [vmem:[#allocation2 + $0x7a] sm:$0xff]
        %v4727 = vld [vmem:[#allocation2 + $0x82] sm:$0xff]
        %v4728 = vld [vmem:[#allocation2 + $0x92] sm:$0xff]
        %v4729 = vld [vmem:[#allocation2 + $0x9a] sm:$0xff]
        %v4730 = vld [vmem:[#allocation2 + $0xaa] sm:$0xff]
        %v4731 = vld [vmem:[#allocation2 + $0xb2] sm:$0xff]
        %v4732 = vld [vmem:[#allocation2 + $0xc2] sm:$0xff]
        %v4733 = vld [vmem:[#allocation2 + $0xca] sm:$0xff]
        %v4734 = vld [vmem:[#allocation2 + $0xda] sm:$0xff]
        %v4735 = vld [vmem:[#allocation2 + $0xe2] sm:$0xff]
        %v4736 = vld [vmem:[#allocation2 + $0xf2] sm:$0xff]
        %v4737 = vld [vmem:[#allocation2 + $0xfa] sm:$0xff]
        %v4738 = vld [vmem:[#allocation2 + $0x10a] sm:$0xff]
        %v4739 = vld [vmem:[#allocation2 + $0x112] sm:$0xff]
        %v4740 = vld [vmem:[#allocation2 + $0x122] sm:$0xff]
        %v4741 = vld [vmem:[#allocation2 + $0x12a] sm:$0xff]
        %v4742 = vld [vmem:[#allocation2 + $0x13a] sm:$0xff]
        %v4743 = vld [vmem:[#allocation2 + $0x142] sm:$0xff]
        %v4744 = vld [vmem:[#allocation2 + $0x152] sm:$0xff]
        %v4745 = vld [vmem:[#allocation2 + $0x15a] sm:$0xff]
        %v4746 = vld [vmem:[#allocation2 + $0x16a] sm:$0xff]
        %v4747 = vld [vmem:[#allocation2 + $0x172] sm:$0xff]
        %s4748 = scalar_lea.vmem [#allocation4], 256
        %v4749 = vld [vmem:[%s4748] sm:$0xff]
        %v4750 = vld [vmem:[%s4748 + $0x8] sm:$0xff]
        %v4751 = vld [vmem:[%s4748 + $0x10] sm:$0xff]
        %v4752 = vld [vmem:[%s4748 + $0x18] sm:$0xff]
        %v4753 = vld [vmem:[%s4748 + $0x20] sm:$0xff]
        %v4754 = vld [vmem:[%s4748 + $0x28] sm:$0xff]
        %v4755 = vld [vmem:[%s4748 + $0x30] sm:$0xff]
        %v4756 = vld [vmem:[%s4748 + $0x38] sm:$0xff]
        %v4757 = vld [vmem:[%s4748 + $0x40] sm:$0xff]
        %v4758 = vld [vmem:[%s4748 + $0x48] sm:$0xff]
        %v4759 = vld [vmem:[%s4748 + $0x50] sm:$0xff]
        %v4760 = vld [vmem:[%s4748 + $0x58] sm:$0xff]
        %v4761 = vld [vmem:[%s4748 + $0x60] sm:$0xff]
        %v4762 = vld [vmem:[%s4748 + $0x68] sm:$0xff]
        %v4763 = vld [vmem:[%s4748 + $0x70] sm:$0xff]
        %v4764 = vld [vmem:[%s4748 + $0x78] sm:$0xff]
        %4765 = vmatprep.subr.mxu0 0.0
        %4766 = vmatpush1.msra.mxu0 %v4749
        %4767 = vmatprep.subr.mxu0 0.0
        %4768 = vmatpush1.msra.mxu0 %v4750
        %4769 = vmatprep.subr.mxu0 0.0
        %4770 = vmatpush1.msra.mxu0 %v4751
        %4771 = vmatprep.subr.mxu0 0.0
        %4772 = vmatpush1.msra.mxu0 %v4752
        %4773 = vmatprep.subr.mxu0 0.0
        %4774 = vmatpush1.msra.mxu0 %v4753
        %4775 = vmatprep.subr.mxu0 0.0
        %4776 = vmatpush1.msra.mxu0 %v4754
        %4777 = vmatprep.subr.mxu0 0.0
        %4778 = vmatpush1.msra.mxu0 %v4755
        %4779 = vmatprep.subr.mxu0 0.0
        %4780 = vmatpush1.msra.mxu0 %v4756
        %4781 = vmatprep.subr.mxu0 0.0
        %4782 = vmatpush1.msra.mxu0 %v4757
        %4783 = vmatprep.subr.mxu0 0.0
        %4784 = vmatpush1.msra.mxu0 %v4758
        %4785 = vmatprep.subr.mxu0 0.0
        %4786 = vmatpush1.msra.mxu0 %v4759
        %4787 = vmatprep.subr.mxu0 0.0
        %4788 = vmatpush1.msra.mxu0 %v4760
        %4789 = vmatprep.subr.mxu0 0.0
        %4790 = vmatpush1.msra.mxu0 %v4761
        %4791 = vmatprep.subr.mxu0 0.0
        %4792 = vmatpush1.msra.mxu0 %v4762
        %4793 = vmatprep.subr.mxu0 0.0
        %4794 = vmatpush1.msra.mxu0 %v4763
        %4795 = vmatprep.subr.mxu0 0.0
        %4796 = vmatpush1.msra.mxu0 %v4764
        %4797 = vmatprep.subr.mxu0 0.0
        %4798 = vmatpush1.msra.mxu0 0.0
        %4799 = vmatprep.subr.mxu0 0.0
        %4800 = vmatpush1.msra.mxu0 0.0
        %4801 = vmatprep.subr.mxu0 0.0
        %4802 = vmatpush1.msra.mxu0 0.0
        %4803 = vmatprep.subr.mxu0 0.0
        %4804 = vmatpush1.msra.mxu0 0.0
        %4805 = vmatprep.subr.mxu0 0.0
        %4806 = vmatpush1.msra.mxu0 0.0
        %4807 = vmatprep.subr.mxu0 0.0
        %4808 = vmatpush1.msra.mxu0 0.0
        %4809 = vmatprep.subr.mxu0 0.0
        %4810 = vmatpush1.msra.mxu0 0.0
        %4811 = vmatprep.subr.mxu0 0.0
        %4812 = vmatpush1.msra.mxu0 0.0
        %4813 = vmatprep.subr.mxu0 0.0
        %4814 = vmatpush1.msra.mxu0 0.0
        %4815 = vmatprep.subr.mxu0 0.0
        %4816 = vmatpush1.msra.mxu0 0.0
        %4817 = vmatprep.subr.mxu0 0.0
        %4818 = vmatpush1.msra.mxu0 0.0
        %4819 = vmatprep.subr.mxu0 0.0
        %4820 = vmatpush1.msra.mxu0 0.0
        %4821 = vmatprep.subr.mxu0 0.0
        %4822 = vmatpush1.msra.mxu0 0.0
        %4823 = vmatprep.subr.mxu0 0.0
        %4824 = vmatpush1.msra.mxu0 0.0
        %4825 = vmatprep.subr.mxu0 0.0
        %4826 = vmatpush1.msra.mxu0 0.0
        %4827 = vmatprep.subr.mxu0 0.0
        %4828 = vmatpush1.msra.mxu0 0.0
        %4829 = vmatprep.mubr.f32.mxu0 0.0
        %4830 = vmatmul.mubr.f32.gmra.mrb[0].mxu0 %v4716
        %v4831 = vpop.f32.mrb[0].mxu0
        %v4832 = vadd.f32 0.0, %v4831
        %v4833 = vpop.f32.mrb[0].mxu0
        %4834 = vmatprep.mubr.f32.mxu0 0.0
        %4835 = vmatmul.mubr.f32.gmra.mrb[0].mxu0 %v4717
        %v4836 = vpop.f32.mrb[0].mxu0
        %v4837 = vadd.f32 0.0, %v4836
        %v4838 = vpop.f32.mrb[0].mxu0
        %4839 = vmatprep.mubr.f32.mxu0 0.0
        %4840 = vmatmul.mubr.f32.gmra.mrb[0].mxu0 %v4718
        %v4841 = vpop.f32.mrb[0].mxu0
        %v4842 = vadd.f32 0.0, %v4841
        %v4843 = vpop.f32.mrb[0].mxu0
        %4844 = vmatprep.mubr.f32.mxu0 0.0
        %4845 = vmatmul.mubr.f32.gmra.mrb[0].mxu0 %v4719
        %v4846 = vpop.f32.mrb[0].mxu0
        %v4847 = vadd.f32 0.0, %v4846
        %v4848 = vpop.f32.mrb[0].mxu0
        %4849 = vmatprep.mubr.f32.mxu0 0.0
        %4850 = vmatmul.mubr.f32.gmra.mrb[0].mxu0 %v4720
        %v4851 = vpop.f32.mrb[0].mxu0
        %v4852 = vadd.f32 0.0, %v4851
        %v4853 = vpop.f32.mrb[0].mxu0
        %4854 = vmatprep.mubr.f32.mxu0 0.0
        %4855 = vmatmul.mubr.f32.gmra.mrb[0].mxu0 %v4721
        %v4856 = vpop.f32.mrb[0].mxu0
        %v4857 = vadd.f32 0.0, %v4856
        %v4858 = vpop.f32.mrb[0].mxu0
        %4859 = vmatprep.mubr.f32.mxu0 0.0
        %4860 = vmatmul.mubr.f32.gmra.mrb[0].mxu0 %v4722
        %v4861 = vpop.f32.mrb[0].mxu0
        %v4862 = vadd.f32 0.0, %v4861
        %v4863 = vpop.f32.mrb[0].mxu0
        %4864 = vmatprep.mubr.f32.mxu0 0.0
        %4865 = vmatmul.mubr.f32.gmra.mrb[0].mxu0 %v4723
        %v4866 = vpop.f32.mrb[0].mxu0
        %v4867 = vadd.f32 0.0, %v4866
        %v4868 = vpop.f32.mrb[0].mxu0
        %4869 = vmatprep.mubr.f32.mxu0 0.0
        %4870 = vmatmul.mubr.f32.gmra.mrb[0].mxu0 %v4724
        %v4871 = vpop.f32.mrb[0].mxu0
        %v4872 = vadd.f32 0.0, %v4871
        %v4873 = vpop.f32.mrb[0].mxu0
        %4874 = vmatprep.mubr.f32.mxu0 0.0
        %4875 = vmatmul.mubr.f32.gmra.mrb[0].mxu0 %v4725
        %v4876 = vpop.f32.mrb[0].mxu0
        %v4877 = vadd.f32 0.0, %v4876
        %v4878 = vpop.f32.mrb[0].mxu0
        %4879 = vmatprep.mubr.f32.mxu0 0.0
        %4880 = vmatmul.mubr.f32.gmra.mrb[0].mxu0 %v4726
        %v4881 = vpop.f32.mrb[0].mxu0
        %v4882 = vadd.f32 0.0, %v4881
        %v4883 = vpop.f32.mrb[0].mxu0
        %4884 = vmatprep.mubr.f32.mxu0 0.0
        %4885 = vmatmul.mubr.f32.gmra.mrb[0].mxu0 %v4727
        %v4886 = vpop.f32.mrb[0].mxu0
        %v4887 = vadd.f32 0.0, %v4886
        %v4888 = vpop.f32.mrb[0].mxu0
        %4889 = vmatprep.mubr.f32.mxu0 0.0
        %4890 = vmatmul.mubr.f32.gmra.mrb[0].mxu0 %v4728
        %v4891 = vpop.f32.mrb[0].mxu0
        %v4892 = vadd.f32 0.0, %v4891
        %v4893 = vpop.f32.mrb[0].mxu0
        %4894 = vmatprep.mubr.f32.mxu0 0.0
        %4895 = vmatmul.mubr.f32.gmra.mrb[0].mxu0 %v4729
        %v4896 = vpop.f32.mrb[0].mxu0
        %v4897 = vadd.f32 0.0, %v4896
        %v4898 = vpop.f32.mrb[0].mxu0
        %4899 = vmatprep.mubr.f32.mxu0 0.0
        %4900 = vmatmul.mubr.f32.gmra.mrb[0].mxu0 %v4730
        %v4901 = vpop.f32.mrb[0].mxu0
        %v4902 = vadd.f32 0.0, %v4901
        %v4903 = vpop.f32.mrb[0].mxu0
        %4904 = vmatprep.mubr.f32.mxu0 0.0
        %4905 = vmatmul.mubr.f32.gmra.mrb[0].mxu0 %v4731
        %v4906 = vpop.f32.mrb[0].mxu0
        %v4907 = vadd.f32 0.0, %v4906
        %v4908 = vpop.f32.mrb[0].mxu0
        %4909 = vmatprep.mubr.f32.mxu0 0.0
        %4910 = vmatmul.mubr.f32.gmra.mrb[0].mxu0 %v4732
        %v4911 = vpop.f32.mrb[0].mxu0
        %v4912 = vadd.f32 0.0, %v4911
        %v4913 = vpop.f32.mrb[0].mxu0
        %4914 = vmatprep.mubr.f32.mxu0 0.0
        %4915 = vmatmul.mubr.f32.gmra.mrb[0].mxu0 %v4733
        %v4916 = vpop.f32.mrb[0].mxu0
        %v4917 = vadd.f32 0.0, %v4916
        %v4918 = vpop.f32.mrb[0].mxu0
        %4919 = vmatprep.mubr.f32.mxu0 0.0
        %4920 = vmatmul.mubr.f32.gmra.mrb[0].mxu0 %v4734
        %v4921 = vpop.f32.mrb[0].mxu0
        %v4922 = vadd.f32 0.0, %v4921
        %v4923 = vpop.f32.mrb[0].mxu0
        %4924 = vmatprep.mubr.f32.mxu0 0.0
        %4925 = vmatmul.mubr.f32.gmra.mrb[0].mxu0 %v4735
        %v4926 = vpop.f32.mrb[0].mxu0
        %v4927 = vadd.f32 0.0, %v4926
        %v4928 = vpop.f32.mrb[0].mxu0
        %4929 = vmatprep.mubr.f32.mxu0 0.0
        %4930 = vmatmul.mubr.f32.gmra.mrb[0].mxu0 %v4736
        %v4931 = vpop.f32.mrb[0].mxu0
        %v4932 = vadd.f32 0.0, %v4931
        %v4933 = vpop.f32.mrb[0].mxu0
        %4934 = vmatprep.mubr.f32.mxu0 0.0
        %4935 = vmatmul.mubr.f32.gmra.mrb[0].mxu0 %v4737
        %v4936 = vpop.f32.mrb[0].mxu0
        %v4937 = vadd.f32 0.0, %v4936
        %v4938 = vpop.f32.mrb[0].mxu0
        %4939 = vmatprep.mubr.f32.mxu0 0.0
        %4940 = vmatmul.mubr.f32.gmra.mrb[0].mxu0 %v4738
        %v4941 = vpop.f32.mrb[0].mxu0
        %v4942 = vadd.f32 0.0, %v4941
        %v4943 = vpop.f32.mrb[0].mxu0
        %4944 = vmatprep.mubr.f32.mxu0 0.0
        %4945 = vmatmul.mubr.f32.gmra.mrb[0].mxu0 %v4739
        %v4946 = vpop.f32.mrb[0].mxu0
        %v4947 = vadd.f32 0.0, %v4946
        %v4948 = vpop.f32.mrb[0].mxu0
        %4949 = vmatprep.mubr.f32.mxu0 0.0
        %4950 = vmatmul.mubr.f32.gmra.mrb[0].mxu0 %v4740
        %v4951 = vpop.f32.mrb[0].mxu0
        %v4952 = vadd.f32 0.0, %v4951
        %v4953 = vpop.f32.mrb[0].mxu0
        %4954 = vmatprep.mubr.f32.mxu0 0.0
        %4955 = vmatmul.mubr.f32.gmra.mrb[0].mxu0 %v4741
        %v4956 = vpop.f32.mrb[0].mxu0
        %v4957 = vadd.f32 0.0, %v4956
        %v4958 = vpop.f32.mrb[0].mxu0
        %4959 = vmatprep.mubr.f32.mxu0 0.0
        %4960 = vmatmul.mubr.f32.gmra.mrb[0].mxu0 %v4742
        %v4961 = vpop.f32.mrb[0].mxu0
        %v4962 = vadd.f32 0.0, %v4961
        %v4963 = vpop.f32.mrb[0].mxu0
        %4964 = vmatprep.mubr.f32.mxu0 0.0
        %4965 = vmatmul.mubr.f32.gmra.mrb[0].mxu0 %v4743
        %v4966 = vpop.f32.mrb[0].mxu0
        %v4967 = vadd.f32 0.0, %v4966
        %v4968 = vpop.f32.mrb[0].mxu0
        %4969 = vmatprep.mubr.f32.mxu0 0.0
        %4970 = vmatmul.mubr.f32.gmra.mrb[0].mxu0 %v4744
        %v4971 = vpop.f32.mrb[0].mxu0
        %v4972 = vadd.f32 0.0, %v4971
        %v4973 = vpop.f32.mrb[0].mxu0
        %4974 = vmatprep.mubr.f32.mxu0 0.0
        %4975 = vmatmul.mubr.f32.gmra.mrb[0].mxu0 %v4745
        %v4976 = vpop.f32.mrb[0].mxu0
        %v4977 = vadd.f32 0.0, %v4976
        %v4978 = vpop.f32.mrb[0].mxu0
        %4979 = vmatprep.mubr.f32.mxu0 0.0
        %4980 = vmatmul.mubr.f32.gmra.mrb[0].mxu0 %v4746
        %v4981 = vpop.f32.mrb[0].mxu0
        %v4982 = vadd.f32 0.0, %v4981
        %v4983 = vpop.f32.mrb[0].mxu0
        %4984 = vmatprep.mubr.f32.mxu0 0.0
        %4985 = vmatmul.mubr.f32.gmra.mrb[0].mxu0 %v4747
        %v4986 = vpop.f32.mrb[0].mxu0
        %v4987 = vadd.f32 0.0, %v4986
        %v4988 = vpop.f32.mrb[0].mxu0
        %4989 = vdwg.mxu0
        %v4990 = vld [vmem:[#allocation3] sm:$0xff]
        %v4991 = vld [vmem:[#allocation3 + $0x8] sm:$0xff]
        %v4992 = vld [vmem:[#allocation3 + $0x10] sm:$0xff]
        %v4993 = vld [vmem:[#allocation3 + $0x18] sm:$0xff]
        %v4994 = vld [vmem:[#allocation3 + $0x20] sm:$0xff]
        %v4995 = vld [vmem:[#allocation3 + $0x28] sm:$0xff]
        %v4996 = vld [vmem:[#allocation3 + $0x30] sm:$0xff]
        %v4997 = vld [vmem:[#allocation3 + $0x38] sm:$0xff]
        %v4998 = vld [vmem:[#allocation3 + $0x40] sm:$0xff]
        %v4999 = vld [vmem:[#allocation3 + $0x48] sm:$0xff]
        %v5000 = vld [vmem:[#allocation3 + $0x50] sm:$0xff]
        %v5001 = vld [vmem:[#allocation3 + $0x58] sm:$0xff]
        %v5002 = vld [vmem:[#allocation3 + $0x60] sm:$0xff]
        %v5003 = vld [vmem:[#allocation3 + $0x68] sm:$0xff]
        %v5004 = vld [vmem:[#allocation3 + $0x70] sm:$0xff]
        %v5005 = vld [vmem:[#allocation3 + $0x78] sm:$0xff]
        %v5006 = vld [vmem:[#allocation3 + $0x80] sm:$0xff]
        %v5007 = vld [vmem:[#allocation3 + $0x88] sm:$0xff]
        %v5008 = vld [vmem:[#allocation3 + $0x90] sm:$0xff]
        %v5009 = vld [vmem:[#allocation3 + $0x98] sm:$0xff]
        %v5010 = vld [vmem:[#allocation3 + $0xa0] sm:$0xff]
        %v5011 = vld [vmem:[#allocation3 + $0xa8] sm:$0xff]
        %v5012 = vld [vmem:[#allocation3 + $0xb0] sm:$0xff]
        %v5013 = vld [vmem:[#allocation3 + $0xb8] sm:$0xff]
        %v5014 = vld [vmem:[#allocation3 + $0xc0] sm:$0xff]
        %v5015 = vld [vmem:[#allocation3 + $0xc8] sm:$0xff]
        %v5016 = vld [vmem:[#allocation3 + $0xd0] sm:$0xff]
        %v5017 = vld [vmem:[#allocation3 + $0xd8] sm:$0xff]
        %v5018 = vld [vmem:[#allocation3 + $0xe0] sm:$0xff]
        %v5019 = vld [vmem:[#allocation3 + $0xe8] sm:$0xff]
        %v5020 = vld [vmem:[#allocation3 + $0xf0] sm:$0xff]
        %v5021 = vld [vmem:[#allocation3 + $0xf8] sm:$0xff]
        %v5022 = vadd.f32 %v4990, %v4832
        %v5023 = vadd.f32 %v4991, %v4837
        %v5024 = vadd.f32 %v4992, %v4842
        %v5025 = vadd.f32 %v4993, %v4847
        %v5026 = vadd.f32 %v4994, %v4852
        %v5027 = vadd.f32 %v4995, %v4857
        %v5028 = vadd.f32 %v4996, %v4862
        %v5029 = vadd.f32 %v4997, %v4867
        %v5030 = vadd.f32 %v4998, %v4872
        %v5031 = vadd.f32 %v4999, %v4877
        %v5032 = vadd.f32 %v5000, %v4882
        %v5033 = vadd.f32 %v5001, %v4887
        %v5034 = vadd.f32 %v5002, %v4892
        %v5035 = vadd.f32 %v5003, %v4897
        %v5036 = vadd.f32 %v5004, %v4902
        %v5037 = vadd.f32 %v5005, %v4907
        %v5038 = vadd.f32 %v5006, %v4912
        %v5039 = vadd.f32 %v5007, %v4917
        %v5040 = vadd.f32 %v5008, %v4922
        %v5041 = vadd.f32 %v5009, %v4927
        %v5042 = vadd.f32 %v5010, %v4932
        %v5043 = vadd.f32 %v5011, %v4937
        %v5044 = vadd.f32 %v5012, %v4942
        %v5045 = vadd.f32 %v5013, %v4947
        %v5046 = vadd.f32 %v5014, %v4952
        %v5047 = vadd.f32 %v5015, %v4957
        %v5048 = vadd.f32 %v5016, %v4962
        %v5049 = vadd.f32 %v5017, %v4967
        %v5050 = vadd.f32 %v5018, %v4972
        %v5051 = vadd.f32 %v5019, %v4977
        %v5052 = vadd.f32 %v5020, %v4982
        %v5053 = vadd.f32 %v5021, %v4987
        %5054 = vst [vmem:[#allocation3] sm:$0xff] %v5022
        %5055 = vst [vmem:[#allocation3 + $0x8] sm:$0xff] %v5023
        %5056 = vst [vmem:[#allocation3 + $0x10] sm:$0xff] %v5024
        %5057 = vst [vmem:[#allocation3 + $0x18] sm:$0xff] %v5025
        %5058 = vst [vmem:[#allocation3 + $0x20] sm:$0xff] %v5026
        %5059 = vst [vmem:[#allocation3 + $0x28] sm:$0xff] %v5027
        %5060 = vst [vmem:[#allocation3 + $0x30] sm:$0xff] %v5028
        %5061 = vst [vmem:[#allocation3 + $0x38] sm:$0xff] %v5029
        %5062 = vst [vmem:[#allocation3 + $0x40] sm:$0xff] %v5030
        %5063 = vst [vmem:[#allocation3 + $0x48] sm:$0xff] %v5031
        %5064 = vst [vmem:[#allocation3 + $0x50] sm:$0xff] %v5032
        %5065 = vst [vmem:[#allocation3 + $0x58] sm:$0xff] %v5033
        %5066 = vst [vmem:[#allocation3 + $0x60] sm:$0xff] %v5034
        %5067 = vst [vmem:[#allocation3 + $0x68] sm:$0xff] %v5035
        %5068 = vst [vmem:[#allocation3 + $0x70] sm:$0xff] %v5036
        %5069 = vst [vmem:[#allocation3 + $0x78] sm:$0xff] %v5037
        %5070 = vst [vmem:[#allocation3 + $0x80] sm:$0xff] %v5038
        %5071 = vst [vmem:[#allocation3 + $0x88] sm:$0xff] %v5039
        %5072 = vst [vmem:[#allocation3 + $0x90] sm:$0xff] %v5040
        %5073 = vst [vmem:[#allocation3 + $0x98] sm:$0xff] %v5041
        %5074 = vst [vmem:[#allocation3 + $0xa0] sm:$0xff] %v5042
        %5075 = vst [vmem:[#allocation3 + $0xa8] sm:$0xff] %v5043
        %5076 = vst [vmem:[#allocation3 + $0xb0] sm:$0xff] %v5044
        %5077 = vst [vmem:[#allocation3 + $0xb8] sm:$0xff] %v5045
        %5078 = vst [vmem:[#allocation3 + $0xc0] sm:$0xff] %v5046
        %5079 = vst [vmem:[#allocation3 + $0xc8] sm:$0xff] %v5047
        %5080 = vst [vmem:[#allocation3 + $0xd0] sm:$0xff] %v5048
        %5081 = vst [vmem:[#allocation3 + $0xd8] sm:$0xff] %v5049
        %5082 = vst [vmem:[#allocation3 + $0xe0] sm:$0xff] %v5050
        %5083 = vst [vmem:[#allocation3 + $0xe8] sm:$0xff] %v5051
        %5084 = vst [vmem:[#allocation3 + $0xf0] sm:$0xff] %v5052
        %5085 = vst [vmem:[#allocation3 + $0xf8] sm:$0xff] %v5053
        %s5086 = scalar_lea.vmem [#allocation2], 24
        %v5087 = vld [vmem:[%s5086] sm:$0xff]
        %v5088 = vld [vmem:[%s5086 + $0x8] sm:$0xff]
        %v5089 = vld [vmem:[%s5086 + $0x18] sm:$0xff]
        %v5090 = vld [vmem:[%s5086 + $0x20] sm:$0xff]
        %v5091 = vld [vmem:[%s5086 + $0x30] sm:$0xff]
        %v5092 = vld [vmem:[%s5086 + $0x38] sm:$0xff]
        %v5093 = vld [vmem:[%s5086 + $0x48] sm:$0xff]
        %v5094 = vld [vmem:[%s5086 + $0x50] sm:$0xff]
        %v5095 = vld [vmem:[%s5086 + $0x60] sm:$0xff]
        %v5096 = vld [vmem:[%s5086 + $0x68] sm:$0xff]
        %v5097 = vld [vmem:[%s5086 + $0x78] sm:$0xff]
        %v5098 = vld [vmem:[%s5086 + $0x80] sm:$0xff]
        %v5099 = vld [vmem:[%s5086 + $0x90] sm:$0xff]
        %v5100 = vld [vmem:[%s5086 + $0x98] sm:$0xff]
        %v5101 = vld [vmem:[%s5086 + $0xa8] sm:$0xff]
        %v5102 = vld [vmem:[%s5086 + $0xb0] sm:$0xff]
        %v5103 = vld [vmem:[%s5086 + $0xc0] sm:$0xff]
        %v5104 = vld [vmem:[%s5086 + $0xc8] sm:$0xff]
        %v5105 = vld [vmem:[%s5086 + $0xd8] sm:$0xff]
        %v5106 = vld [vmem:[%s5086 + $0xe0] sm:$0xff]
        %v5107 = vld [vmem:[%s5086 + $0xf0] sm:$0xff]
        %v5108 = vld [vmem:[%s5086 + $0xf8] sm:$0xff]
        %v5109 = vld [vmem:[%s5086 + $0x108] sm:$0xff]
        %v5110 = vld [vmem:[%s5086 + $0x110] sm:$0xff]
        %v5111 = vld [vmem:[%s5086 + $0x120] sm:$0xff]
        %v5112 = vld [vmem:[%s5086 + $0x128] sm:$0xff]
        %v5113 = vld [vmem:[%s5086 + $0x138] sm:$0xff]
        %v5114 = vld [vmem:[%s5086 + $0x140] sm:$0xff]
        %v5115 = vld [vmem:[%s5086 + $0x150] sm:$0xff]
        %v5116 = vld [vmem:[%s5086 + $0x158] sm:$0xff]
        %v5117 = vld [vmem:[%s5086 + $0x168] sm:$0xff]
        %v5118 = vld [vmem:[%s5086 + $0x170] sm:$0xff]
        %s5119 = scalar_lea.vmem [#allocation4], 384
        %v5120 = vld [vmem:[%s5119] sm:$0xff]
        %v5121 = vld [vmem:[%s5119 + $0x8] sm:$0xff]
        %v5122 = vld [vmem:[%s5119 + $0x10] sm:$0xff]
        %v5123 = vld [vmem:[%s5119 + $0x18] sm:$0xff]
        %v5124 = vld [vmem:[%s5119 + $0x20] sm:$0xff]
        %v5125 = vld [vmem:[%s5119 + $0x28] sm:$0xff]
        %v5126 = vld [vmem:[%s5119 + $0x30] sm:$0xff]
        %v5127 = vld [vmem:[%s5119 + $0x38] sm:$0xff]
        %v5128 = vld [vmem:[%s5119 + $0x40] sm:$0xff]
        %v5129 = vld [vmem:[%s5119 + $0x48] sm:$0xff]
        %v5130 = vld [vmem:[%s5119 + $0x50] sm:$0xff]
        %v5131 = vld [vmem:[%s5119 + $0x58] sm:$0xff]
        %v5132 = vld [vmem:[%s5119 + $0x60] sm:$0xff]
        %v5133 = vld [vmem:[%s5119 + $0x68] sm:$0xff]
        %v5134 = vld [vmem:[%s5119 + $0x70] sm:$0xff]
        %v5135 = vld [vmem:[%s5119 + $0x78] sm:$0xff]
        %5136 = vmatprep.subr.mxu0 0.0
        %5137 = vmatpush1.msra.mxu0 %v5120
        %5138 = vmatprep.subr.mxu0 0.0
        %5139 = vmatpush1.msra.mxu0 %v5121
        %5140 = vmatprep.subr.mxu0 0.0
        %5141 = vmatpush1.msra.mxu0 %v5122
        %5142 = vmatprep.subr.mxu0 0.0
        %5143 = vmatpush1.msra.mxu0 %v5123
        %5144 = vmatprep.subr.mxu0 0.0
        %5145 = vmatpush1.msra.mxu0 %v5124
        %5146 = vmatprep.subr.mxu0 0.0
        %5147 = vmatpush1.msra.mxu0 %v5125
        %5148 = vmatprep.subr.mxu0 0.0
        %5149 = vmatpush1.msra.mxu0 %v5126
        %5150 = vmatprep.subr.mxu0 0.0
        %5151 = vmatpush1.msra.mxu0 %v5127
        %5152 = vmatprep.subr.mxu0 0.0
        %5153 = vmatpush1.msra.mxu0 %v5128
        %5154 = vmatprep.subr.mxu0 0.0
        %5155 = vmatpush1.msra.mxu0 %v5129
        %5156 = vmatprep.subr.mxu0 0.0
        %5157 = vmatpush1.msra.mxu0 %v5130
        %5158 = vmatprep.subr.mxu0 0.0
        %5159 = vmatpush1.msra.mxu0 %v5131
        %5160 = vmatprep.subr.mxu0 0.0
        %5161 = vmatpush1.msra.mxu0 %v5132
        %5162 = vmatprep.subr.mxu0 0.0
        %5163 = vmatpush1.msra.mxu0 %v5133
        %5164 = vmatprep.subr.mxu0 0.0
        %5165 = vmatpush1.msra.mxu0 %v5134
        %5166 = vmatprep.subr.mxu0 0.0
        %5167 = vmatpush1.msra.mxu0 %v5135
        %5168 = vmatprep.subr.mxu0 0.0
        %5169 = vmatpush1.msra.mxu0 0.0
        %5170 = vmatprep.subr.mxu0 0.0
        %5171 = vmatpush1.msra.mxu0 0.0
        %5172 = vmatprep.subr.mxu0 0.0
        %5173 = vmatpush1.msra.mxu0 0.0
        %5174 = vmatprep.subr.mxu0 0.0
        %5175 = vmatpush1.msra.mxu0 0.0
        %5176 = vmatprep.subr.mxu0 0.0
        %5177 = vmatpush1.msra.mxu0 0.0
        %5178 = vmatprep.subr.mxu0 0.0
        %5179 = vmatpush1.msra.mxu0 0.0
        %5180 = vmatprep.subr.mxu0 0.0
        %5181 = vmatpush1.msra.mxu0 0.0
        %5182 = vmatprep.subr.mxu0 0.0
        %5183 = vmatpush1.msra.mxu0 0.0
        %5184 = vmatprep.subr.mxu0 0.0
        %5185 = vmatpush1.msra.mxu0 0.0
        %5186 = vmatprep.subr.mxu0 0.0
        %5187 = vmatpush1.msra.mxu0 0.0
        %5188 = vmatprep.subr.mxu0 0.0
        %5189 = vmatpush1.msra.mxu0 0.0
        %5190 = vmatprep.subr.mxu0 0.0
        %5191 = vmatpush1.msra.mxu0 0.0
        %5192 = vmatprep.subr.mxu0 0.0
        %5193 = vmatpush1.msra.mxu0 0.0
        %5194 = vmatprep.subr.mxu0 0.0
        %5195 = vmatpush1.msra.mxu0 0.0
        %5196 = vmatprep.subr.mxu0 0.0
        %5197 = vmatpush1.msra.mxu0 0.0
        %5198 = vmatprep.subr.mxu0 0.0
        %5199 = vmatpush1.msra.mxu0 0.0
        %5200 = vmatprep.mubr.f32.mxu0 0.0
        %5201 = vmatmul.mubr.f32.gmra.mrb[0].mxu0 %v5087
        %v5202 = vpop.f32.mrb[0].mxu0
        %v5203 = vadd.f32 0.0, %v5202
        %v5204 = vpop.f32.mrb[0].mxu0
        %5205 = vmatprep.mubr.f32.mxu0 0.0
        %5206 = vmatmul.mubr.f32.gmra.mrb[0].mxu0 %v5088
        %v5207 = vpop.f32.mrb[0].mxu0
        %v5208 = vadd.f32 0.0, %v5207
        %v5209 = vpop.f32.mrb[0].mxu0
        %5210 = vmatprep.mubr.f32.mxu0 0.0
        %5211 = vmatmul.mubr.f32.gmra.mrb[0].mxu0 %v5089
        %v5212 = vpop.f32.mrb[0].mxu0
        %v5213 = vadd.f32 0.0, %v5212
        %v5214 = vpop.f32.mrb[0].mxu0
        %5215 = vmatprep.mubr.f32.mxu0 0.0
        %5216 = vmatmul.mubr.f32.gmra.mrb[0].mxu0 %v5090
        %v5217 = vpop.f32.mrb[0].mxu0
        %v5218 = vadd.f32 0.0, %v5217
        %v5219 = vpop.f32.mrb[0].mxu0
        %5220 = vmatprep.mubr.f32.mxu0 0.0
        %5221 = vmatmul.mubr.f32.gmra.mrb[0].mxu0 %v5091
        %v5222 = vpop.f32.mrb[0].mxu0
        %v5223 = vadd.f32 0.0, %v5222
        %v5224 = vpop.f32.mrb[0].mxu0
        %5225 = vmatprep.mubr.f32.mxu0 0.0
        %5226 = vmatmul.mubr.f32.gmra.mrb[0].mxu0 %v5092
        %v5227 = vpop.f32.mrb[0].mxu0
        %v5228 = vadd.f32 0.0, %v5227
        %v5229 = vpop.f32.mrb[0].mxu0
        %5230 = vmatprep.mubr.f32.mxu0 0.0
        %5231 = vmatmul.mubr.f32.gmra.mrb[0].mxu0 %v5093
        %v5232 = vpop.f32.mrb[0].mxu0
        %v5233 = vadd.f32 0.0, %v5232
        %v5234 = vpop.f32.mrb[0].mxu0
        %5235 = vmatprep.mubr.f32.mxu0 0.0
        %5236 = vmatmul.mubr.f32.gmra.mrb[0].mxu0 %v5094
        %v5237 = vpop.f32.mrb[0].mxu0
        %v5238 = vadd.f32 0.0, %v5237
        %v5239 = vpop.f32.mrb[0].mxu0
        %5240 = vmatprep.mubr.f32.mxu0 0.0
        %5241 = vmatmul.mubr.f32.gmra.mrb[0].mxu0 %v5095
        %v5242 = vpop.f32.mrb[0].mxu0
        %v5243 = vadd.f32 0.0, %v5242
        %v5244 = vpop.f32.mrb[0].mxu0
        %5245 = vmatprep.mubr.f32.mxu0 0.0
        %5246 = vmatmul.mubr.f32.gmra.mrb[0].mxu0 %v5096
        %v5247 = vpop.f32.mrb[0].mxu0
        %v5248 = vadd.f32 0.0, %v5247
        %v5249 = vpop.f32.mrb[0].mxu0
        %5250 = vmatprep.mubr.f32.mxu0 0.0
        %5251 = vmatmul.mubr.f32.gmra.mrb[0].mxu0 %v5097
        %v5252 = vpop.f32.mrb[0].mxu0
        %v5253 = vadd.f32 0.0, %v5252
        %v5254 = vpop.f32.mrb[0].mxu0
        %5255 = vmatprep.mubr.f32.mxu0 0.0
        %5256 = vmatmul.mubr.f32.gmra.mrb[0].mxu0 %v5098
        %v5257 = vpop.f32.mrb[0].mxu0
        %v5258 = vadd.f32 0.0, %v5257
        %v5259 = vpop.f32.mrb[0].mxu0
        %5260 = vmatprep.mubr.f32.mxu0 0.0
        %5261 = vmatmul.mubr.f32.gmra.mrb[0].mxu0 %v5099
        %v5262 = vpop.f32.mrb[0].mxu0
        %v5263 = vadd.f32 0.0, %v5262
        %v5264 = vpop.f32.mrb[0].mxu0
        %5265 = vmatprep.mubr.f32.mxu0 0.0
        %5266 = vmatmul.mubr.f32.gmra.mrb[0].mxu0 %v5100
        %v5267 = vpop.f32.mrb[0].mxu0
        %v5268 = vadd.f32 0.0, %v5267
        %v5269 = vpop.f32.mrb[0].mxu0
        %5270 = vmatprep.mubr.f32.mxu0 0.0
        %5271 = vmatmul.mubr.f32.gmra.mrb[0].mxu0 %v5101
        %v5272 = vpop.f32.mrb[0].mxu0
        %v5273 = vadd.f32 0.0, %v5272
        %v5274 = vpop.f32.mrb[0].mxu0
        %5275 = vmatprep.mubr.f32.mxu0 0.0
        %5276 = vmatmul.mubr.f32.gmra.mrb[0].mxu0 %v5102
        %v5277 = vpop.f32.mrb[0].mxu0
        %v5278 = vadd.f32 0.0, %v5277
        %v5279 = vpop.f32.mrb[0].mxu0
        %5280 = vmatprep.mubr.f32.mxu0 0.0
        %5281 = vmatmul.mubr.f32.gmra.mrb[0].mxu0 %v5103
        %v5282 = vpop.f32.mrb[0].mxu0
        %v5283 = vadd.f32 0.0, %v5282
        %v5284 = vpop.f32.mrb[0].mxu0
        %5285 = vmatprep.mubr.f32.mxu0 0.0
        %5286 = vmatmul.mubr.f32.gmra.mrb[0].mxu0 %v5104
        %v5287 = vpop.f32.mrb[0].mxu0
        %v5288 = vadd.f32 0.0, %v5287
        %v5289 = vpop.f32.mrb[0].mxu0
        %5290 = vmatprep.mubr.f32.mxu0 0.0
        %5291 = vmatmul.mubr.f32.gmra.mrb[0].mxu0 %v5105
        %v5292 = vpop.f32.mrb[0].mxu0
        %v5293 = vadd.f32 0.0, %v5292
        %v5294 = vpop.f32.mrb[0].mxu0
        %5295 = vmatprep.mubr.f32.mxu0 0.0
        %5296 = vmatmul.mubr.f32.gmra.mrb[0].mxu0 %v5106
        %v5297 = vpop.f32.mrb[0].mxu0
        %v5298 = vadd.f32 0.0, %v5297
        %v5299 = vpop.f32.mrb[0].mxu0
        %5300 = vmatprep.mubr.f32.mxu0 0.0
        %5301 = vmatmul.mubr.f32.gmra.mrb[0].mxu0 %v5107
        %v5302 = vpop.f32.mrb[0].mxu0
        %v5303 = vadd.f32 0.0, %v5302
        %v5304 = vpop.f32.mrb[0].mxu0
        %5305 = vmatprep.mubr.f32.mxu0 0.0
        %5306 = vmatmul.mubr.f32.gmra.mrb[0].mxu0 %v5108
        %v5307 = vpop.f32.mrb[0].mxu0
        %v5308 = vadd.f32 0.0, %v5307
        %v5309 = vpop.f32.mrb[0].mxu0
        %5310 = vmatprep.mubr.f32.mxu0 0.0
        %5311 = vmatmul.mubr.f32.gmra.mrb[0].mxu0 %v5109
        %v5312 = vpop.f32.mrb[0].mxu0
        %v5313 = vadd.f32 0.0, %v5312
        %v5314 = vpop.f32.mrb[0].mxu0
        %5315 = vmatprep.mubr.f32.mxu0 0.0
        %5316 = vmatmul.mubr.f32.gmra.mrb[0].mxu0 %v5110
        %v5317 = vpop.f32.mrb[0].mxu0
        %v5318 = vadd.f32 0.0, %v5317
        %v5319 = vpop.f32.mrb[0].mxu0
        %5320 = vmatprep.mubr.f32.mxu0 0.0
        %5321 = vmatmul.mubr.f32.gmra.mrb[0].mxu0 %v5111
        %v5322 = vpop.f32.mrb[0].mxu0
        %v5323 = vadd.f32 0.0, %v5322
        %v5324 = vpop.f32.mrb[0].mxu0
        %5325 = vmatprep.mubr.f32.mxu0 0.0
        %5326 = vmatmul.mubr.f32.gmra.mrb[0].mxu0 %v5112
        %v5327 = vpop.f32.mrb[0].mxu0
        %v5328 = vadd.f32 0.0, %v5327
        %v5329 = vpop.f32.mrb[0].mxu0
        %5330 = vmatprep.mubr.f32.mxu0 0.0
        %5331 = vmatmul.mubr.f32.gmra.mrb[0].mxu0 %v5113
        %v5332 = vpop.f32.mrb[0].mxu0
        %v5333 = vadd.f32 0.0, %v5332
        %v5334 = vpop.f32.mrb[0].mxu0
        %5335 = vmatprep.mubr.f32.mxu0 0.0
        %5336 = vmatmul.mubr.f32.gmra.mrb[0].mxu0 %v5114
        %v5337 = vpop.f32.mrb[0].mxu0
        %v5338 = vadd.f32 0.0, %v5337
        %v5339 = vpop.f32.mrb[0].mxu0
        %5340 = vmatprep.mubr.f32.mxu0 0.0
        %5341 = vmatmul.mubr.f32.gmra.mrb[0].mxu0 %v5115
        %v5342 = vpop.f32.mrb[0].mxu0
        %v5343 = vadd.f32 0.0, %v5342
        %v5344 = vpop.f32.mrb[0].mxu0
        %5345 = vmatprep.mubr.f32.mxu0 0.0
        %5346 = vmatmul.mubr.f32.gmra.mrb[0].mxu0 %v5116
        %v5347 = vpop.f32.mrb[0].mxu0
        %v5348 = vadd.f32 0.0, %v5347
        %v5349 = vpop.f32.mrb[0].mxu0
        %5350 = vmatprep.mubr.f32.mxu0 0.0
        %5351 = vmatmul.mubr.f32.gmra.mrb[0].mxu0 %v5117
        %v5352 = vpop.f32.mrb[0].mxu0
        %v5353 = vadd.f32 0.0, %v5352
        %v5354 = vpop.f32.mrb[0].mxu0
        %5355 = vmatprep.mubr.f32.mxu0 0.0
        %5356 = vmatmul.mubr.f32.gmra.mrb[0].mxu0 %v5118
        %v5357 = vpop.f32.mrb[0].mxu0
        %v5358 = vadd.f32 0.0, %v5357
        %v5359 = vpop.f32.mrb[0].mxu0
        %5360 = vdwg.mxu0
        %v5361 = vld [vmem:[#allocation3] sm:$0xff]
        %v5362 = vld [vmem:[#allocation3 + $0x8] sm:$0xff]
        %v5363 = vld [vmem:[#allocation3 + $0x10] sm:$0xff]
        %v5364 = vld [vmem:[#allocation3 + $0x18] sm:$0xff]
        %v5365 = vld [vmem:[#allocation3 + $0x20] sm:$0xff]
        %v5366 = vld [vmem:[#allocation3 + $0x28] sm:$0xff]
        %v5367 = vld [vmem:[#allocation3 + $0x30] sm:$0xff]
        %v5368 = vld [vmem:[#allocation3 + $0x38] sm:$0xff]
        %v5369 = vld [vmem:[#allocation3 + $0x40] sm:$0xff]
        %v5370 = vld [vmem:[#allocation3 + $0x48] sm:$0xff]
        %v5371 = vld [vmem:[#allocation3 + $0x50] sm:$0xff]
        %v5372 = vld [vmem:[#allocation3 + $0x58] sm:$0xff]
        %v5373 = vld [vmem:[#allocation3 + $0x60] sm:$0xff]
        %v5374 = vld [vmem:[#allocation3 + $0x68] sm:$0xff]
        %v5375 = vld [vmem:[#allocation3 + $0x70] sm:$0xff]
        %v5376 = vld [vmem:[#allocation3 + $0x78] sm:$0xff]
        %v5377 = vld [vmem:[#allocation3 + $0x80] sm:$0xff]
        %v5378 = vld [vmem:[#allocation3 + $0x88] sm:$0xff]
        %v5379 = vld [vmem:[#allocation3 + $0x90] sm:$0xff]
        %v5380 = vld [vmem:[#allocation3 + $0x98] sm:$0xff]
        %v5381 = vld [vmem:[#allocation3 + $0xa0] sm:$0xff]
        %v5382 = vld [vmem:[#allocation3 + $0xa8] sm:$0xff]
        %v5383 = vld [vmem:[#allocation3 + $0xb0] sm:$0xff]
        %v5384 = vld [vmem:[#allocation3 + $0xb8] sm:$0xff]
        %v5385 = vld [vmem:[#allocation3 + $0xc0] sm:$0xff]
        %v5386 = vld [vmem:[#allocation3 + $0xc8] sm:$0xff]
        %v5387 = vld [vmem:[#allocation3 + $0xd0] sm:$0xff]
        %v5388 = vld [vmem:[#allocation3 + $0xd8] sm:$0xff]
        %v5389 = vld [vmem:[#allocation3 + $0xe0] sm:$0xff]
        %v5390 = vld [vmem:[#allocation3 + $0xe8] sm:$0xff]
        %v5391 = vld [vmem:[#allocation3 + $0xf0] sm:$0xff]
        %v5392 = vld [vmem:[#allocation3 + $0xf8] sm:$0xff]
        %v5393 = vadd.f32 %v5361, %v5203
        %v5394 = vadd.f32 %v5362, %v5208
        %v5395 = vadd.f32 %v5363, %v5213
        %v5396 = vadd.f32 %v5364, %v5218
        %v5397 = vadd.f32 %v5365, %v5223
        %v5398 = vadd.f32 %v5366, %v5228
        %v5399 = vadd.f32 %v5367, %v5233
        %v5400 = vadd.f32 %v5368, %v5238
        %v5401 = vadd.f32 %v5369, %v5243
        %v5402 = vadd.f32 %v5370, %v5248
        %v5403 = vadd.f32 %v5371, %v5253
        %v5404 = vadd.f32 %v5372, %v5258
        %v5405 = vadd.f32 %v5373, %v5263
        %v5406 = vadd.f32 %v5374, %v5268
        %v5407 = vadd.f32 %v5375, %v5273
        %v5408 = vadd.f32 %v5376, %v5278
        %v5409 = vadd.f32 %v5377, %v5283
        %v5410 = vadd.f32 %v5378, %v5288
        %v5411 = vadd.f32 %v5379, %v5293
        %v5412 = vadd.f32 %v5380, %v5298
        %v5413 = vadd.f32 %v5381, %v5303
        %v5414 = vadd.f32 %v5382, %v5308
        %v5415 = vadd.f32 %v5383, %v5313
        %v5416 = vadd.f32 %v5384, %v5318
        %v5417 = vadd.f32 %v5385, %v5323
        %v5418 = vadd.f32 %v5386, %v5328
        %v5419 = vadd.f32 %v5387, %v5333
        %v5420 = vadd.f32 %v5388, %v5338
        %v5421 = vadd.f32 %v5389, %v5343
        %v5422 = vadd.f32 %v5390, %v5348
        %v5423 = vadd.f32 %v5391, %v5353
        %v5424 = vadd.f32 %v5392, %v5358
        %5425 = vst [vmem:[#allocation3] sm:$0xff] %v5393
        %5426 = vst [vmem:[#allocation3 + $0x8] sm:$0xff] %v5394
        %5427 = vst [vmem:[#allocation3 + $0x10] sm:$0xff] %v5395
        %5428 = vst [vmem:[#allocation3 + $0x18] sm:$0xff] %v5396
        %5429 = vst [vmem:[#allocation3 + $0x20] sm:$0xff] %v5397
        %5430 = vst [vmem:[#allocation3 + $0x28] sm:$0xff] %v5398
        %5431 = vst [vmem:[#allocation3 + $0x30] sm:$0xff] %v5399
        %5432 = vst [vmem:[#allocation3 + $0x38] sm:$0xff] %v5400
        %5433 = vst [vmem:[#allocation3 + $0x40] sm:$0xff] %v5401
        %5434 = vst [vmem:[#allocation3 + $0x48] sm:$0xff] %v5402
        %5435 = vst [vmem:[#allocation3 + $0x50] sm:$0xff] %v5403
        %5436 = vst [vmem:[#allocation3 + $0x58] sm:$0xff] %v5404
        %5437 = vst [vmem:[#allocation3 + $0x60] sm:$0xff] %v5405
        %5438 = vst [vmem:[#allocation3 + $0x68] sm:$0xff] %v5406
        %5439 = vst [vmem:[#allocation3 + $0x70] sm:$0xff] %v5407
        %5440 = vst [vmem:[#allocation3 + $0x78] sm:$0xff] %v5408
        %5441 = vst [vmem:[#allocation3 + $0x80] sm:$0xff] %v5409
        %5442 = vst [vmem:[#allocation3 + $0x88] sm:$0xff] %v5410
        %5443 = vst [vmem:[#allocation3 + $0x90] sm:$0xff] %v5411
        %5444 = vst [vmem:[#allocation3 + $0x98] sm:$0xff] %v5412
        %5445 = vst [vmem:[#allocation3 + $0xa0] sm:$0xff] %v5413
        %5446 = vst [vmem:[#allocation3 + $0xa8] sm:$0xff] %v5414
        %5447 = vst [vmem:[#allocation3 + $0xb0] sm:$0xff] %v5415
        %5448 = vst [vmem:[#allocation3 + $0xb8] sm:$0xff] %v5416
        %5449 = vst [vmem:[#allocation3 + $0xc0] sm:$0xff] %v5417
        %5450 = vst [vmem:[#allocation3 + $0xc8] sm:$0xff] %v5418
        %5451 = vst [vmem:[#allocation3 + $0xd0] sm:$0xff] %v5419
        %5452 = vst [vmem:[#allocation3 + $0xd8] sm:$0xff] %v5420
        %5453 = vst [vmem:[#allocation3 + $0xe0] sm:$0xff] %v5421
        %5454 = vst [vmem:[#allocation3 + $0xe8] sm:$0xff] %v5422
        %5455 = vst [vmem:[#allocation3 + $0xf0] sm:$0xff] %v5423
        %5456 = vst [vmem:[#allocation3 + $0xf8] sm:$0xff] %v5424
        %v5457 = vld [vmem:[%s5086 + $0x1] sm:$0xff]
        %v5458 = vld [vmem:[%s5086 + $0x9] sm:$0xff]
        %v5459 = vld [vmem:[%s5086 + $0x19] sm:$0xff]
        %v5460 = vld [vmem:[%s5086 + $0x21] sm:$0xff]
        %v5461 = vld [vmem:[%s5086 + $0x31] sm:$0xff]
        %v5462 = vld [vmem:[%s5086 + $0x39] sm:$0xff]
        %v5463 = vld [vmem:[%s5086 + $0x49] sm:$0xff]
        %v5464 = vld [vmem:[%s5086 + $0x51] sm:$0xff]
        %v5465 = vld [vmem:[%s5086 + $0x61] sm:$0xff]
        %v5466 = vld [vmem:[%s5086 + $0x69] sm:$0xff]
        %v5467 = vld [vmem:[%s5086 + $0x79] sm:$0xff]
        %v5468 = vld [vmem:[%s5086 + $0x81] sm:$0xff]
        %v5469 = vld [vmem:[%s5086 + $0x91] sm:$0xff]
        %v5470 = vld [vmem:[%s5086 + $0x99] sm:$0xff]
        %v5471 = vld [vmem:[%s5086 + $0xa9] sm:$0xff]
        %v5472 = vld [vmem:[%s5086 + $0xb1] sm:$0xff]
        %v5473 = vld [vmem:[%s5086 + $0xc1] sm:$0xff]
        %v5474 = vld [vmem:[%s5086 + $0xc9] sm:$0xff]
        %v5475 = vld [vmem:[%s5086 + $0xd9] sm:$0xff]
        %v5476 = vld [vmem:[%s5086 + $0xe1] sm:$0xff]
        %v5477 = vld [vmem:[%s5086 + $0xf1] sm:$0xff]
        %v5478 = vld [vmem:[%s5086 + $0xf9] sm:$0xff]
        %v5479 = vld [vmem:[%s5086 + $0x109] sm:$0xff]
        %v5480 = vld [vmem:[%s5086 + $0x111] sm:$0xff]
        %v5481 = vld [vmem:[%s5086 + $0x121] sm:$0xff]
        %v5482 = vld [vmem:[%s5086 + $0x129] sm:$0xff]
        %v5483 = vld [vmem:[%s5086 + $0x139] sm:$0xff]
        %v5484 = vld [vmem:[%s5086 + $0x141] sm:$0xff]
        %v5485 = vld [vmem:[%s5086 + $0x151] sm:$0xff]
        %v5486 = vld [vmem:[%s5086 + $0x159] sm:$0xff]
        %v5487 = vld [vmem:[%s5086 + $0x169] sm:$0xff]
        %v5488 = vld [vmem:[%s5086 + $0x171] sm:$0xff]
        %s5489 = scalar_lea.vmem [#allocation4], 512
        %v5490 = vld [vmem:[%s5489] sm:$0xff]
        %v5491 = vld [vmem:[%s5489 + $0x8] sm:$0xff]
        %v5492 = vld [vmem:[%s5489 + $0x10] sm:$0xff]
        %v5493 = vld [vmem:[%s5489 + $0x18] sm:$0xff]
        %v5494 = vld [vmem:[%s5489 + $0x20] sm:$0xff]
        %v5495 = vld [vmem:[%s5489 + $0x28] sm:$0xff]
        %v5496 = vld [vmem:[%s5489 + $0x30] sm:$0xff]
        %v5497 = vld [vmem:[%s5489 + $0x38] sm:$0xff]
        %v5498 = vld [vmem:[%s5489 + $0x40] sm:$0xff]
        %v5499 = vld [vmem:[%s5489 + $0x48] sm:$0xff]
        %v5500 = vld [vmem:[%s5489 + $0x50] sm:$0xff]
        %v5501 = vld [vmem:[%s5489 + $0x58] sm:$0xff]
        %v5502 = vld [vmem:[%s5489 + $0x60] sm:$0xff]
        %v5503 = vld [vmem:[%s5489 + $0x68] sm:$0xff]
        %v5504 = vld [vmem:[%s5489 + $0x70] sm:$0xff]
        %v5505 = vld [vmem:[%s5489 + $0x78] sm:$0xff]
        %5506 = vmatprep.subr.mxu0 0.0
        %5507 = vmatpush1.msra.mxu0 %v5490
        %5508 = vmatprep.subr.mxu0 0.0
        %5509 = vmatpush1.msra.mxu0 %v5491
        %5510 = vmatprep.subr.mxu0 0.0
        %5511 = vmatpush1.msra.mxu0 %v5492
        %5512 = vmatprep.subr.mxu0 0.0
        %5513 = vmatpush1.msra.mxu0 %v5493
        %5514 = vmatprep.subr.mxu0 0.0
        %5515 = vmatpush1.msra.mxu0 %v5494
        %5516 = vmatprep.subr.mxu0 0.0
        %5517 = vmatpush1.msra.mxu0 %v5495
        %5518 = vmatprep.subr.mxu0 0.0
        %5519 = vmatpush1.msra.mxu0 %v5496
        %5520 = vmatprep.subr.mxu0 0.0
        %5521 = vmatpush1.msra.mxu0 %v5497
        %5522 = vmatprep.subr.mxu0 0.0
        %5523 = vmatpush1.msra.mxu0 %v5498
        %5524 = vmatprep.subr.mxu0 0.0
        %5525 = vmatpush1.msra.mxu0 %v5499
        %5526 = vmatprep.subr.mxu0 0.0
        %5527 = vmatpush1.msra.mxu0 %v5500
        %5528 = vmatprep.subr.mxu0 0.0
        %5529 = vmatpush1.msra.mxu0 %v5501
        %5530 = vmatprep.subr.mxu0 0.0
        %5531 = vmatpush1.msra.mxu0 %v5502
        %5532 = vmatprep.subr.mxu0 0.0
        %5533 = vmatpush1.msra.mxu0 %v5503
        %5534 = vmatprep.subr.mxu0 0.0
        %5535 = vmatpush1.msra.mxu0 %v5504
        %5536 = vmatprep.subr.mxu0 0.0
        %5537 = vmatpush1.msra.mxu0 %v5505
        %5538 = vmatprep.subr.mxu0 0.0
        %5539 = vmatpush1.msra.mxu0 0.0
        %5540 = vmatprep.subr.mxu0 0.0
        %5541 = vmatpush1.msra.mxu0 0.0
        %5542 = vmatprep.subr.mxu0 0.0
        %5543 = vmatpush1.msra.mxu0 0.0
        %5544 = vmatprep.subr.mxu0 0.0
        %5545 = vmatpush1.msra.mxu0 0.0
        %5546 = vmatprep.subr.mxu0 0.0
        %5547 = vmatpush1.msra.mxu0 0.0
        %5548 = vmatprep.subr.mxu0 0.0
        %5549 = vmatpush1.msra.mxu0 0.0
        %5550 = vmatprep.subr.mxu0 0.0
        %5551 = vmatpush1.msra.mxu0 0.0
        %5552 = vmatprep.subr.mxu0 0.0
        %5553 = vmatpush1.msra.mxu0 0.0
        %5554 = vmatprep.subr.mxu0 0.0
        %5555 = vmatpush1.msra.mxu0 0.0
        %5556 = vmatprep.subr.mxu0 0.0
        %5557 = vmatpush1.msra.mxu0 0.0
        %5558 = vmatprep.subr.mxu0 0.0
        %5559 = vmatpush1.msra.mxu0 0.0
        %5560 = vmatprep.subr.mxu0 0.0
        %5561 = vmatpush1.msra.mxu0 0.0
        %5562 = vmatprep.subr.mxu0 0.0
        %5563 = vmatpush1.msra.mxu0 0.0
        %5564 = vmatprep.subr.mxu0 0.0
        %5565 = vmatpush1.msra.mxu0 0.0
        %5566 = vmatprep.subr.mxu0 0.0
        %5567 = vmatpush1.msra.mxu0 0.0
        %5568 = vmatprep.subr.mxu0 0.0
        %5569 = vmatpush1.msra.mxu0 0.0
        %5570 = vmatprep.mubr.f32.mxu0 0.0
        %5571 = vmatmul.mubr.f32.gmra.mrb[0].mxu0 %v5457
        %v5572 = vpop.f32.mrb[0].mxu0
        %v5573 = vadd.f32 0.0, %v5572
        %v5574 = vpop.f32.mrb[0].mxu0
        %5575 = vmatprep.mubr.f32.mxu0 0.0
        %5576 = vmatmul.mubr.f32.gmra.mrb[0].mxu0 %v5458
        %v5577 = vpop.f32.mrb[0].mxu0
        %v5578 = vadd.f32 0.0, %v5577
        %v5579 = vpop.f32.mrb[0].mxu0
        %5580 = vmatprep.mubr.f32.mxu0 0.0
        %5581 = vmatmul.mubr.f32.gmra.mrb[0].mxu0 %v5459
        %v5582 = vpop.f32.mrb[0].mxu0
        %v5583 = vadd.f32 0.0, %v5582
        %v5584 = vpop.f32.mrb[0].mxu0
        %5585 = vmatprep.mubr.f32.mxu0 0.0
        %5586 = vmatmul.mubr.f32.gmra.mrb[0].mxu0 %v5460
        %v5587 = vpop.f32.mrb[0].mxu0
        %v5588 = vadd.f32 0.0, %v5587
        %v5589 = vpop.f32.mrb[0].mxu0
        %5590 = vmatprep.mubr.f32.mxu0 0.0
        %5591 = vmatmul.mubr.f32.gmra.mrb[0].mxu0 %v5461
        %v5592 = vpop.f32.mrb[0].mxu0
        %v5593 = vadd.f32 0.0, %v5592
        %v5594 = vpop.f32.mrb[0].mxu0
        %5595 = vmatprep.mubr.f32.mxu0 0.0
        %5596 = vmatmul.mubr.f32.gmra.mrb[0].mxu0 %v5462
        %v5597 = vpop.f32.mrb[0].mxu0
        %v5598 = vadd.f32 0.0, %v5597
        %v5599 = vpop.f32.mrb[0].mxu0
        %5600 = vmatprep.mubr.f32.mxu0 0.0
        %5601 = vmatmul.mubr.f32.gmra.mrb[0].mxu0 %v5463
        %v5602 = vpop.f32.mrb[0].mxu0
        %v5603 = vadd.f32 0.0, %v5602
        %v5604 = vpop.f32.mrb[0].mxu0
        %5605 = vmatprep.mubr.f32.mxu0 0.0
        %5606 = vmatmul.mubr.f32.gmra.mrb[0].mxu0 %v5464
        %v5607 = vpop.f32.mrb[0].mxu0
        %v5608 = vadd.f32 0.0, %v5607
        %v5609 = vpop.f32.mrb[0].mxu0
        %5610 = vmatprep.mubr.f32.mxu0 0.0
        %5611 = vmatmul.mubr.f32.gmra.mrb[0].mxu0 %v5465
        %v5612 = vpop.f32.mrb[0].mxu0
        %v5613 = vadd.f32 0.0, %v5612
        %v5614 = vpop.f32.mrb[0].mxu0
        %5615 = vmatprep.mubr.f32.mxu0 0.0
        %5616 = vmatmul.mubr.f32.gmra.mrb[0].mxu0 %v5466
        %v5617 = vpop.f32.mrb[0].mxu0
        %v5618 = vadd.f32 0.0, %v5617
        %v5619 = vpop.f32.mrb[0].mxu0
        %5620 = vmatprep.mubr.f32.mxu0 0.0
        %5621 = vmatmul.mubr.f32.gmra.mrb[0].mxu0 %v5467
        %v5622 = vpop.f32.mrb[0].mxu0
        %v5623 = vadd.f32 0.0, %v5622
        %v5624 = vpop.f32.mrb[0].mxu0
        %5625 = vmatprep.mubr.f32.mxu0 0.0
        %5626 = vmatmul.mubr.f32.gmra.mrb[0].mxu0 %v5468
        %v5627 = vpop.f32.mrb[0].mxu0
        %v5628 = vadd.f32 0.0, %v5627
        %v5629 = vpop.f32.mrb[0].mxu0
        %5630 = vmatprep.mubr.f32.mxu0 0.0
        %5631 = vmatmul.mubr.f32.gmra.mrb[0].mxu0 %v5469
        %v5632 = vpop.f32.mrb[0].mxu0
        %v5633 = vadd.f32 0.0, %v5632
        %v5634 = vpop.f32.mrb[0].mxu0
        %5635 = vmatprep.mubr.f32.mxu0 0.0
        %5636 = vmatmul.mubr.f32.gmra.mrb[0].mxu0 %v5470
        %v5637 = vpop.f32.mrb[0].mxu0
        %v5638 = vadd.f32 0.0, %v5637
        %v5639 = vpop.f32.mrb[0].mxu0
        %5640 = vmatprep.mubr.f32.mxu0 0.0
        %5641 = vmatmul.mubr.f32.gmra.mrb[0].mxu0 %v5471
        %v5642 = vpop.f32.mrb[0].mxu0
        %v5643 = vadd.f32 0.0, %v5642
        %v5644 = vpop.f32.mrb[0].mxu0
        %5645 = vmatprep.mubr.f32.mxu0 0.0
        %5646 = vmatmul.mubr.f32.gmra.mrb[0].mxu0 %v5472
        %v5647 = vpop.f32.mrb[0].mxu0
        %v5648 = vadd.f32 0.0, %v5647
        %v5649 = vpop.f32.mrb[0].mxu0
        %5650 = vmatprep.mubr.f32.mxu0 0.0
        %5651 = vmatmul.mubr.f32.gmra.mrb[0].mxu0 %v5473
        %v5652 = vpop.f32.mrb[0].mxu0
        %v5653 = vadd.f32 0.0, %v5652
        %v5654 = vpop.f32.mrb[0].mxu0
        %5655 = vmatprep.mubr.f32.mxu0 0.0
        %5656 = vmatmul.mubr.f32.gmra.mrb[0].mxu0 %v5474
        %v5657 = vpop.f32.mrb[0].mxu0
        %v5658 = vadd.f32 0.0, %v5657
        %v5659 = vpop.f32.mrb[0].mxu0
        %5660 = vmatprep.mubr.f32.mxu0 0.0
        %5661 = vmatmul.mubr.f32.gmra.mrb[0].mxu0 %v5475
        %v5662 = vpop.f32.mrb[0].mxu0
        %v5663 = vadd.f32 0.0, %v5662
        %v5664 = vpop.f32.mrb[0].mxu0
        %5665 = vmatprep.mubr.f32.mxu0 0.0
        %5666 = vmatmul.mubr.f32.gmra.mrb[0].mxu0 %v5476
        %v5667 = vpop.f32.mrb[0].mxu0
        %v5668 = vadd.f32 0.0, %v5667
        %v5669 = vpop.f32.mrb[0].mxu0
        %5670 = vmatprep.mubr.f32.mxu0 0.0
        %5671 = vmatmul.mubr.f32.gmra.mrb[0].mxu0 %v5477
        %v5672 = vpop.f32.mrb[0].mxu0
        %v5673 = vadd.f32 0.0, %v5672
        %v5674 = vpop.f32.mrb[0].mxu0
        %5675 = vmatprep.mubr.f32.mxu0 0.0
        %5676 = vmatmul.mubr.f32.gmra.mrb[0].mxu0 %v5478
        %v5677 = vpop.f32.mrb[0].mxu0
        %v5678 = vadd.f32 0.0, %v5677
        %v5679 = vpop.f32.mrb[0].mxu0
        %5680 = vmatprep.mubr.f32.mxu0 0.0
        %5681 = vmatmul.mubr.f32.gmra.mrb[0].mxu0 %v5479
        %v5682 = vpop.f32.mrb[0].mxu0
        %v5683 = vadd.f32 0.0, %v5682
        %v5684 = vpop.f32.mrb[0].mxu0
        %5685 = vmatprep.mubr.f32.mxu0 0.0
        %5686 = vmatmul.mubr.f32.gmra.mrb[0].mxu0 %v5480
        %v5687 = vpop.f32.mrb[0].mxu0
        %v5688 = vadd.f32 0.0, %v5687
        %v5689 = vpop.f32.mrb[0].mxu0
        %5690 = vmatprep.mubr.f32.mxu0 0.0
        %5691 = vmatmul.mubr.f32.gmra.mrb[0].mxu0 %v5481
        %v5692 = vpop.f32.mrb[0].mxu0
        %v5693 = vadd.f32 0.0, %v5692
        %v5694 = vpop.f32.mrb[0].mxu0
        %5695 = vmatprep.mubr.f32.mxu0 0.0
        %5696 = vmatmul.mubr.f32.gmra.mrb[0].mxu0 %v5482
        %v5697 = vpop.f32.mrb[0].mxu0
        %v5698 = vadd.f32 0.0, %v5697
        %v5699 = vpop.f32.mrb[0].mxu0
        %5700 = vmatprep.mubr.f32.mxu0 0.0
        %5701 = vmatmul.mubr.f32.gmra.mrb[0].mxu0 %v5483
        %v5702 = vpop.f32.mrb[0].mxu0
        %v5703 = vadd.f32 0.0, %v5702
        %v5704 = vpop.f32.mrb[0].mxu0
        %5705 = vmatprep.mubr.f32.mxu0 0.0
        %5706 = vmatmul.mubr.f32.gmra.mrb[0].mxu0 %v5484
        %v5707 = vpop.f32.mrb[0].mxu0
        %v5708 = vadd.f32 0.0, %v5707
        %v5709 = vpop.f32.mrb[0].mxu0
        %5710 = vmatprep.mubr.f32.mxu0 0.0
        %5711 = vmatmul.mubr.f32.gmra.mrb[0].mxu0 %v5485
        %v5712 = vpop.f32.mrb[0].mxu0
        %v5713 = vadd.f32 0.0, %v5712
        %v5714 = vpop.f32.mrb[0].mxu0
        %5715 = vmatprep.mubr.f32.mxu0 0.0
        %5716 = vmatmul.mubr.f32.gmra.mrb[0].mxu0 %v5486
        %v5717 = vpop.f32.mrb[0].mxu0
        %v5718 = vadd.f32 0.0, %v5717
        %v5719 = vpop.f32.mrb[0].mxu0
        %5720 = vmatprep.mubr.f32.mxu0 0.0
        %5721 = vmatmul.mubr.f32.gmra.mrb[0].mxu0 %v5487
        %v5722 = vpop.f32.mrb[0].mxu0
        %v5723 = vadd.f32 0.0, %v5722
        %v5724 = vpop.f32.mrb[0].mxu0
        %5725 = vmatprep.mubr.f32.mxu0 0.0
        %5726 = vmatmul.mubr.f32.gmra.mrb[0].mxu0 %v5488
        %v5727 = vpop.f32.mrb[0].mxu0
        %v5728 = vadd.f32 0.0, %v5727
        %v5729 = vpop.f32.mrb[0].mxu0
        %5730 = vdwg.mxu0
        %v5731 = vld [vmem:[#allocation3] sm:$0xff]
        %v5732 = vld [vmem:[#allocation3 + $0x8] sm:$0xff]
        %v5733 = vld [vmem:[#allocation3 + $0x10] sm:$0xff]
        %v5734 = vld [vmem:[#allocation3 + $0x18] sm:$0xff]
        %v5735 = vld [vmem:[#allocation3 + $0x20] sm:$0xff]
        %v5736 = vld [vmem:[#allocation3 + $0x28] sm:$0xff]
        %v5737 = vld [vmem:[#allocation3 + $0x30] sm:$0xff]
        %v5738 = vld [vmem:[#allocation3 + $0x38] sm:$0xff]
        %v5739 = vld [vmem:[#allocation3 + $0x40] sm:$0xff]
        %v5740 = vld [vmem:[#allocation3 + $0x48] sm:$0xff]
        %v5741 = vld [vmem:[#allocation3 + $0x50] sm:$0xff]
        %v5742 = vld [vmem:[#allocation3 + $0x58] sm:$0xff]
        %v5743 = vld [vmem:[#allocation3 + $0x60] sm:$0xff]
        %v5744 = vld [vmem:[#allocation3 + $0x68] sm:$0xff]
        %v5745 = vld [vmem:[#allocation3 + $0x70] sm:$0xff]
        %v5746 = vld [vmem:[#allocation3 + $0x78] sm:$0xff]
        %v5747 = vld [vmem:[#allocation3 + $0x80] sm:$0xff]
        %v5748 = vld [vmem:[#allocation3 + $0x88] sm:$0xff]
        %v5749 = vld [vmem:[#allocation3 + $0x90] sm:$0xff]
        %v5750 = vld [vmem:[#allocation3 + $0x98] sm:$0xff]
        %v5751 = vld [vmem:[#allocation3 + $0xa0] sm:$0xff]
        %v5752 = vld [vmem:[#allocation3 + $0xa8] sm:$0xff]
        %v5753 = vld [vmem:[#allocation3 + $0xb0] sm:$0xff]
        %v5754 = vld [vmem:[#allocation3 + $0xb8] sm:$0xff]
        %v5755 = vld [vmem:[#allocation3 + $0xc0] sm:$0xff]
        %v5756 = vld [vmem:[#allocation3 + $0xc8] sm:$0xff]
        %v5757 = vld [vmem:[#allocation3 + $0xd0] sm:$0xff]
        %v5758 = vld [vmem:[#allocation3 + $0xd8] sm:$0xff]
        %v5759 = vld [vmem:[#allocation3 + $0xe0] sm:$0xff]
        %v5760 = vld [vmem:[#allocation3 + $0xe8] sm:$0xff]
        %v5761 = vld [vmem:[#allocation3 + $0xf0] sm:$0xff]
        %v5762 = vld [vmem:[#allocation3 + $0xf8] sm:$0xff]
        %v5763 = vadd.f32 %v5731, %v5573
        %v5764 = vadd.f32 %v5732, %v5578
        %v5765 = vadd.f32 %v5733, %v5583
        %v5766 = vadd.f32 %v5734, %v5588
        %v5767 = vadd.f32 %v5735, %v5593
        %v5768 = vadd.f32 %v5736, %v5598
        %v5769 = vadd.f32 %v5737, %v5603
        %v5770 = vadd.f32 %v5738, %v5608
        %v5771 = vadd.f32 %v5739, %v5613
        %v5772 = vadd.f32 %v5740, %v5618
        %v5773 = vadd.f32 %v5741, %v5623
        %v5774 = vadd.f32 %v5742, %v5628
        %v5775 = vadd.f32 %v5743, %v5633
        %v5776 = vadd.f32 %v5744, %v5638
        %v5777 = vadd.f32 %v5745, %v5643
        %v5778 = vadd.f32 %v5746, %v5648
        %v5779 = vadd.f32 %v5747, %v5653
        %v5780 = vadd.f32 %v5748, %v5658
        %v5781 = vadd.f32 %v5749, %v5663
        %v5782 = vadd.f32 %v5750, %v5668
        %v5783 = vadd.f32 %v5751, %v5673
        %v5784 = vadd.f32 %v5752, %v5678
        %v5785 = vadd.f32 %v5753, %v5683
        %v5786 = vadd.f32 %v5754, %v5688
        %v5787 = vadd.f32 %v5755, %v5693
        %v5788 = vadd.f32 %v5756, %v5698
        %v5789 = vadd.f32 %v5757, %v5703
        %v5790 = vadd.f32 %v5758, %v5708
        %v5791 = vadd.f32 %v5759, %v5713
        %v5792 = vadd.f32 %v5760, %v5718
        %v5793 = vadd.f32 %v5761, %v5723
        %v5794 = vadd.f32 %v5762, %v5728
        %5795 = vst [vmem:[#allocation3] sm:$0xff] %v5763
        %5796 = vst [vmem:[#allocation3 + $0x8] sm:$0xff] %v5764
        %5797 = vst [vmem:[#allocation3 + $0x10] sm:$0xff] %v5765
        %5798 = vst [vmem:[#allocation3 + $0x18] sm:$0xff] %v5766
        %5799 = vst [vmem:[#allocation3 + $0x20] sm:$0xff] %v5767
        %5800 = vst [vmem:[#allocation3 + $0x28] sm:$0xff] %v5768
        %5801 = vst [vmem:[#allocation3 + $0x30] sm:$0xff] %v5769
        %5802 = vst [vmem:[#allocation3 + $0x38] sm:$0xff] %v5770
        %5803 = vst [vmem:[#allocation3 + $0x40] sm:$0xff] %v5771
        %5804 = vst [vmem:[#allocation3 + $0x48] sm:$0xff] %v5772
        %5805 = vst [vmem:[#allocation3 + $0x50] sm:$0xff] %v5773
        %5806 = vst [vmem:[#allocation3 + $0x58] sm:$0xff] %v5774
        %5807 = vst [vmem:[#allocation3 + $0x60] sm:$0xff] %v5775
        %5808 = vst [vmem:[#allocation3 + $0x68] sm:$0xff] %v5776
        %5809 = vst [vmem:[#allocation3 + $0x70] sm:$0xff] %v5777
        %5810 = vst [vmem:[#allocation3 + $0x78] sm:$0xff] %v5778
        %5811 = vst [vmem:[#allocation3 + $0x80] sm:$0xff] %v5779
        %5812 = vst [vmem:[#allocation3 + $0x88] sm:$0xff] %v5780
        %5813 = vst [vmem:[#allocation3 + $0x90] sm:$0xff] %v5781
        %5814 = vst [vmem:[#allocation3 + $0x98] sm:$0xff] %v5782
        %5815 = vst [vmem:[#allocation3 + $0xa0] sm:$0xff] %v5783
        %5816 = vst [vmem:[#allocation3 + $0xa8] sm:$0xff] %v5784
        %5817 = vst [vmem:[#allocation3 + $0xb0] sm:$0xff] %v5785
        %5818 = vst [vmem:[#allocation3 + $0xb8] sm:$0xff] %v5786
        %5819 = vst [vmem:[#allocation3 + $0xc0] sm:$0xff] %v5787
        %5820 = vst [vmem:[#allocation3 + $0xc8] sm:$0xff] %v5788
        %5821 = vst [vmem:[#allocation3 + $0xd0] sm:$0xff] %v5789
        %5822 = vst [vmem:[#allocation3 + $0xd8] sm:$0xff] %v5790
        %5823 = vst [vmem:[#allocation3 + $0xe0] sm:$0xff] %v5791
        %5824 = vst [vmem:[#allocation3 + $0xe8] sm:$0xff] %v5792
        %5825 = vst [vmem:[#allocation3 + $0xf0] sm:$0xff] %v5793
        %5826 = vst [vmem:[#allocation3 + $0xf8] sm:$0xff] %v5794
        %v5827 = vld [vmem:[%s5086 + $0x2] sm:$0xff]
        %v5828 = vld [vmem:[%s5086 + $0xa] sm:$0xff]
        %v5829 = vld [vmem:[%s5086 + $0x1a] sm:$0xff]
        %v5830 = vld [vmem:[%s5086 + $0x22] sm:$0xff]
        %v5831 = vld [vmem:[%s5086 + $0x32] sm:$0xff]
        %v5832 = vld [vmem:[%s5086 + $0x3a] sm:$0xff]
        %v5833 = vld [vmem:[%s5086 + $0x4a] sm:$0xff]
        %v5834 = vld [vmem:[%s5086 + $0x52] sm:$0xff]
        %v5835 = vld [vmem:[%s5086 + $0x62] sm:$0xff]
        %v5836 = vld [vmem:[%s5086 + $0x6a] sm:$0xff]
        %v5837 = vld [vmem:[%s5086 + $0x7a] sm:$0xff]
        %v5838 = vld [vmem:[%s5086 + $0x82] sm:$0xff]
        %v5839 = vld [vmem:[%s5086 + $0x92] sm:$0xff]
        %v5840 = vld [vmem:[%s5086 + $0x9a] sm:$0xff]
        %v5841 = vld [vmem:[%s5086 + $0xaa] sm:$0xff]
        %v5842 = vld [vmem:[%s5086 + $0xb2] sm:$0xff]
        %v5843 = vld [vmem:[%s5086 + $0xc2] sm:$0xff]
        %v5844 = vld [vmem:[%s5086 + $0xca] sm:$0xff]
        %v5845 = vld [vmem:[%s5086 + $0xda] sm:$0xff]
        %v5846 = vld [vmem:[%s5086 + $0xe2] sm:$0xff]
        %v5847 = vld [vmem:[%s5086 + $0xf2] sm:$0xff]
        %v5848 = vld [vmem:[%s5086 + $0xfa] sm:$0xff]
        %v5849 = vld [vmem:[%s5086 + $0x10a] sm:$0xff]
        %v5850 = vld [vmem:[%s5086 + $0x112] sm:$0xff]
        %v5851 = vld [vmem:[%s5086 + $0x122] sm:$0xff]
        %v5852 = vld [vmem:[%s5086 + $0x12a] sm:$0xff]
        %v5853 = vld [vmem:[%s5086 + $0x13a] sm:$0xff]
        %v5854 = vld [vmem:[%s5086 + $0x142] sm:$0xff]
        %v5855 = vld [vmem:[%s5086 + $0x152] sm:$0xff]
        %v5856 = vld [vmem:[%s5086 + $0x15a] sm:$0xff]
        %v5857 = vld [vmem:[%s5086 + $0x16a] sm:$0xff]
        %v5858 = vld [vmem:[%s5086 + $0x172] sm:$0xff]
        %s5859 = scalar_lea.vmem [#allocation4], 640
        %v5860 = vld [vmem:[%s5859] sm:$0xff]
        %v5861 = vld [vmem:[%s5859 + $0x8] sm:$0xff]
        %v5862 = vld [vmem:[%s5859 + $0x10] sm:$0xff]
        %v5863 = vld [vmem:[%s5859 + $0x18] sm:$0xff]
        %v5864 = vld [vmem:[%s5859 + $0x20] sm:$0xff]
        %v5865 = vld [vmem:[%s5859 + $0x28] sm:$0xff]
        %v5866 = vld [vmem:[%s5859 + $0x30] sm:$0xff]
        %v5867 = vld [vmem:[%s5859 + $0x38] sm:$0xff]
        %v5868 = vld [vmem:[%s5859 + $0x40] sm:$0xff]
        %v5869 = vld [vmem:[%s5859 + $0x48] sm:$0xff]
        %v5870 = vld [vmem:[%s5859 + $0x50] sm:$0xff]
        %v5871 = vld [vmem:[%s5859 + $0x58] sm:$0xff]
        %v5872 = vld [vmem:[%s5859 + $0x60] sm:$0xff]
        %v5873 = vld [vmem:[%s5859 + $0x68] sm:$0xff]
        %v5874 = vld [vmem:[%s5859 + $0x70] sm:$0xff]
        %v5875 = vld [vmem:[%s5859 + $0x78] sm:$0xff]
        %5876 = vmatprep.subr.mxu0 0.0
        %5877 = vmatpush1.msra.mxu0 %v5860
        %5878 = vmatprep.subr.mxu0 0.0
        %5879 = vmatpush1.msra.mxu0 %v5861
        %5880 = vmatprep.subr.mxu0 0.0
        %5881 = vmatpush1.msra.mxu0 %v5862
        %5882 = vmatprep.subr.mxu0 0.0
        %5883 = vmatpush1.msra.mxu0 %v5863
        %5884 = vmatprep.subr.mxu0 0.0
        %5885 = vmatpush1.msra.mxu0 %v5864
        %5886 = vmatprep.subr.mxu0 0.0
        %5887 = vmatpush1.msra.mxu0 %v5865
        %5888 = vmatprep.subr.mxu0 0.0
        %5889 = vmatpush1.msra.mxu0 %v5866
        %5890 = vmatprep.subr.mxu0 0.0
        %5891 = vmatpush1.msra.mxu0 %v5867
        %5892 = vmatprep.subr.mxu0 0.0
        %5893 = vmatpush1.msra.mxu0 %v5868
        %5894 = vmatprep.subr.mxu0 0.0
        %5895 = vmatpush1.msra.mxu0 %v5869
        %5896 = vmatprep.subr.mxu0 0.0
        %5897 = vmatpush1.msra.mxu0 %v5870
        %5898 = vmatprep.subr.mxu0 0.0
        %5899 = vmatpush1.msra.mxu0 %v5871
        %5900 = vmatprep.subr.mxu0 0.0
        %5901 = vmatpush1.msra.mxu0 %v5872
        %5902 = vmatprep.subr.mxu0 0.0
        %5903 = vmatpush1.msra.mxu0 %v5873
        %5904 = vmatprep.subr.mxu0 0.0
        %5905 = vmatpush1.msra.mxu0 %v5874
        %5906 = vmatprep.subr.mxu0 0.0
        %5907 = vmatpush1.msra.mxu0 %v5875
        %5908 = vmatprep.subr.mxu0 0.0
        %5909 = vmatpush1.msra.mxu0 0.0
        %5910 = vmatprep.subr.mxu0 0.0
        %5911 = vmatpush1.msra.mxu0 0.0
        %5912 = vmatprep.subr.mxu0 0.0
        %5913 = vmatpush1.msra.mxu0 0.0
        %5914 = vmatprep.subr.mxu0 0.0
        %5915 = vmatpush1.msra.mxu0 0.0
        %5916 = vmatprep.subr.mxu0 0.0
        %5917 = vmatpush1.msra.mxu0 0.0
        %5918 = vmatprep.subr.mxu0 0.0
        %5919 = vmatpush1.msra.mxu0 0.0
        %5920 = vmatprep.subr.mxu0 0.0
        %5921 = vmatpush1.msra.mxu0 0.0
        %5922 = vmatprep.subr.mxu0 0.0
        %5923 = vmatpush1.msra.mxu0 0.0
        %5924 = vmatprep.subr.mxu0 0.0
        %5925 = vmatpush1.msra.mxu0 0.0
        %5926 = vmatprep.subr.mxu0 0.0
        %5927 = vmatpush1.msra.mxu0 0.0
        %5928 = vmatprep.subr.mxu0 0.0
        %5929 = vmatpush1.msra.mxu0 0.0
        %5930 = vmatprep.subr.mxu0 0.0
        %5931 = vmatpush1.msra.mxu0 0.0
        %5932 = vmatprep.subr.mxu0 0.0
        %5933 = vmatpush1.msra.mxu0 0.0
        %5934 = vmatprep.subr.mxu0 0.0
        %5935 = vmatpush1.msra.mxu0 0.0
        %5936 = vmatprep.subr.mxu0 0.0
        %5937 = vmatpush1.msra.mxu0 0.0
        %5938 = vmatprep.subr.mxu0 0.0
        %5939 = vmatpush1.msra.mxu0 0.0
        %5940 = vmatprep.mubr.f32.mxu0 0.0
        %5941 = vmatmul.mubr.f32.gmra.mrb[0].mxu0 %v5827
        %v5942 = vpop.f32.mrb[0].mxu0
        %v5943 = vadd.f32 0.0, %v5942
        %v5944 = vpop.f32.mrb[0].mxu0
        %5945 = vmatprep.mubr.f32.mxu0 0.0
        %5946 = vmatmul.mubr.f32.gmra.mrb[0].mxu0 %v5828
        %v5947 = vpop.f32.mrb[0].mxu0
        %v5948 = vadd.f32 0.0, %v5947
        %v5949 = vpop.f32.mrb[0].mxu0
        %5950 = vmatprep.mubr.f32.mxu0 0.0
        %5951 = vmatmul.mubr.f32.gmra.mrb[0].mxu0 %v5829
        %v5952 = vpop.f32.mrb[0].mxu0
        %v5953 = vadd.f32 0.0, %v5952
        %v5954 = vpop.f32.mrb[0].mxu0
        %5955 = vmatprep.mubr.f32.mxu0 0.0
        %5956 = vmatmul.mubr.f32.gmra.mrb[0].mxu0 %v5830
        %v5957 = vpop.f32.mrb[0].mxu0
        %v5958 = vadd.f32 0.0, %v5957
        %v5959 = vpop.f32.mrb[0].mxu0
        %5960 = vmatprep.mubr.f32.mxu0 0.0
        %5961 = vmatmul.mubr.f32.gmra.mrb[0].mxu0 %v5831
        %v5962 = vpop.f32.mrb[0].mxu0
        %v5963 = vadd.f32 0.0, %v5962
        %v5964 = vpop.f32.mrb[0].mxu0
        %5965 = vmatprep.mubr.f32.mxu0 0.0
        %5966 = vmatmul.mubr.f32.gmra.mrb[0].mxu0 %v5832
        %v5967 = vpop.f32.mrb[0].mxu0
        %v5968 = vadd.f32 0.0, %v5967
        %v5969 = vpop.f32.mrb[0].mxu0
        %5970 = vmatprep.mubr.f32.mxu0 0.0
        %5971 = vmatmul.mubr.f32.gmra.mrb[0].mxu0 %v5833
        %v5972 = vpop.f32.mrb[0].mxu0
        %v5973 = vadd.f32 0.0, %v5972
        %v5974 = vpop.f32.mrb[0].mxu0
        %5975 = vmatprep.mubr.f32.mxu0 0.0
        %5976 = vmatmul.mubr.f32.gmra.mrb[0].mxu0 %v5834
        %v5977 = vpop.f32.mrb[0].mxu0
        %v5978 = vadd.f32 0.0, %v5977
        %v5979 = vpop.f32.mrb[0].mxu0
        %5980 = vmatprep.mubr.f32.mxu0 0.0
        %5981 = vmatmul.mubr.f32.gmra.mrb[0].mxu0 %v5835
        %v5982 = vpop.f32.mrb[0].mxu0
        %v5983 = vadd.f32 0.0, %v5982
        %v5984 = vpop.f32.mrb[0].mxu0
        %5985 = vmatprep.mubr.f32.mxu0 0.0
        %5986 = vmatmul.mubr.f32.gmra.mrb[0].mxu0 %v5836
        %v5987 = vpop.f32.mrb[0].mxu0
        %v5988 = vadd.f32 0.0, %v5987
        %v5989 = vpop.f32.mrb[0].mxu0
        %5990 = vmatprep.mubr.f32.mxu0 0.0
        %5991 = vmatmul.mubr.f32.gmra.mrb[0].mxu0 %v5837
        %v5992 = vpop.f32.mrb[0].mxu0
        %v5993 = vadd.f32 0.0, %v5992
        %v5994 = vpop.f32.mrb[0].mxu0
        %5995 = vmatprep.mubr.f32.mxu0 0.0
        %5996 = vmatmul.mubr.f32.gmra.mrb[0].mxu0 %v5838
        %v5997 = vpop.f32.mrb[0].mxu0
        %v5998 = vadd.f32 0.0, %v5997
        %v5999 = vpop.f32.mrb[0].mxu0
        %6000 = vmatprep.mubr.f32.mxu0 0.0
        %6001 = vmatmul.mubr.f32.gmra.mrb[0].mxu0 %v5839
        %v6002 = vpop.f32.mrb[0].mxu0
        %v6003 = vadd.f32 0.0, %v6002
        %v6004 = vpop.f32.mrb[0].mxu0
        %6005 = vmatprep.mubr.f32.mxu0 0.0
        %6006 = vmatmul.mubr.f32.gmra.mrb[0].mxu0 %v5840
        %v6007 = vpop.f32.mrb[0].mxu0
        %v6008 = vadd.f32 0.0, %v6007
        %v6009 = vpop.f32.mrb[0].mxu0
        %6010 = vmatprep.mubr.f32.mxu0 0.0
        %6011 = vmatmul.mubr.f32.gmra.mrb[0].mxu0 %v5841
        %v6012 = vpop.f32.mrb[0].mxu0
        %v6013 = vadd.f32 0.0, %v6012
        %v6014 = vpop.f32.mrb[0].mxu0
        %6015 = vmatprep.mubr.f32.mxu0 0.0
        %6016 = vmatmul.mubr.f32.gmra.mrb[0].mxu0 %v5842
        %v6017 = vpop.f32.mrb[0].mxu0
        %v6018 = vadd.f32 0.0, %v6017
        %v6019 = vpop.f32.mrb[0].mxu0
        %6020 = vmatprep.mubr.f32.mxu0 0.0
        %6021 = vmatmul.mubr.f32.gmra.mrb[0].mxu0 %v5843
        %v6022 = vpop.f32.mrb[0].mxu0
        %v6023 = vadd.f32 0.0, %v6022
        %v6024 = vpop.f32.mrb[0].mxu0
        %6025 = vmatprep.mubr.f32.mxu0 0.0
        %6026 = vmatmul.mubr.f32.gmra.mrb[0].mxu0 %v5844
        %v6027 = vpop.f32.mrb[0].mxu0
        %v6028 = vadd.f32 0.0, %v6027
        %v6029 = vpop.f32.mrb[0].mxu0
        %6030 = vmatprep.mubr.f32.mxu0 0.0
        %6031 = vmatmul.mubr.f32.gmra.mrb[0].mxu0 %v5845
        %v6032 = vpop.f32.mrb[0].mxu0
        %v6033 = vadd.f32 0.0, %v6032
        %v6034 = vpop.f32.mrb[0].mxu0
        %6035 = vmatprep.mubr.f32.mxu0 0.0
        %6036 = vmatmul.mubr.f32.gmra.mrb[0].mxu0 %v5846
        %v6037 = vpop.f32.mrb[0].mxu0
        %v6038 = vadd.f32 0.0, %v6037
        %v6039 = vpop.f32.mrb[0].mxu0
        %6040 = vmatprep.mubr.f32.mxu0 0.0
        %6041 = vmatmul.mubr.f32.gmra.mrb[0].mxu0 %v5847
        %v6042 = vpop.f32.mrb[0].mxu0
        %v6043 = vadd.f32 0.0, %v6042
        %v6044 = vpop.f32.mrb[0].mxu0
        %6045 = vmatprep.mubr.f32.mxu0 0.0
        %6046 = vmatmul.mubr.f32.gmra.mrb[0].mxu0 %v5848
        %v6047 = vpop.f32.mrb[0].mxu0
        %v6048 = vadd.f32 0.0, %v6047
        %v6049 = vpop.f32.mrb[0].mxu0
        %6050 = vmatprep.mubr.f32.mxu0 0.0
        %6051 = vmatmul.mubr.f32.gmra.mrb[0].mxu0 %v5849
        %v6052 = vpop.f32.mrb[0].mxu0
        %v6053 = vadd.f32 0.0, %v6052
        %v6054 = vpop.f32.mrb[0].mxu0
        %6055 = vmatprep.mubr.f32.mxu0 0.0
        %6056 = vmatmul.mubr.f32.gmra.mrb[0].mxu0 %v5850
        %v6057 = vpop.f32.mrb[0].mxu0
        %v6058 = vadd.f32 0.0, %v6057
        %v6059 = vpop.f32.mrb[0].mxu0
        %6060 = vmatprep.mubr.f32.mxu0 0.0
        %6061 = vmatmul.mubr.f32.gmra.mrb[0].mxu0 %v5851
        %v6062 = vpop.f32.mrb[0].mxu0
        %v6063 = vadd.f32 0.0, %v6062
        %v6064 = vpop.f32.mrb[0].mxu0
        %6065 = vmatprep.mubr.f32.mxu0 0.0
        %6066 = vmatmul.mubr.f32.gmra.mrb[0].mxu0 %v5852
        %v6067 = vpop.f32.mrb[0].mxu0
        %v6068 = vadd.f32 0.0, %v6067
        %v6069 = vpop.f32.mrb[0].mxu0
        %6070 = vmatprep.mubr.f32.mxu0 0.0
        %6071 = vmatmul.mubr.f32.gmra.mrb[0].mxu0 %v5853
        %v6072 = vpop.f32.mrb[0].mxu0
        %v6073 = vadd.f32 0.0, %v6072
        %v6074 = vpop.f32.mrb[0].mxu0
        %6075 = vmatprep.mubr.f32.mxu0 0.0
        %6076 = vmatmul.mubr.f32.gmra.mrb[0].mxu0 %v5854
        %v6077 = vpop.f32.mrb[0].mxu0
        %v6078 = vadd.f32 0.0, %v6077
        %v6079 = vpop.f32.mrb[0].mxu0
        %6080 = vmatprep.mubr.f32.mxu0 0.0
        %6081 = vmatmul.mubr.f32.gmra.mrb[0].mxu0 %v5855
        %v6082 = vpop.f32.mrb[0].mxu0
        %v6083 = vadd.f32 0.0, %v6082
        %v6084 = vpop.f32.mrb[0].mxu0
        %6085 = vmatprep.mubr.f32.mxu0 0.0
        %6086 = vmatmul.mubr.f32.gmra.mrb[0].mxu0 %v5856
        %v6087 = vpop.f32.mrb[0].mxu0
        %v6088 = vadd.f32 0.0, %v6087
        %v6089 = vpop.f32.mrb[0].mxu0
        %6090 = vmatprep.mubr.f32.mxu0 0.0
        %6091 = vmatmul.mubr.f32.gmra.mrb[0].mxu0 %v5857
        %v6092 = vpop.f32.mrb[0].mxu0
        %v6093 = vadd.f32 0.0, %v6092
        %v6094 = vpop.f32.mrb[0].mxu0
        %6095 = vmatprep.mubr.f32.mxu0 0.0
        %6096 = vmatmul.mubr.f32.gmra.mrb[0].mxu0 %v5858
        %v6097 = vpop.f32.mrb[0].mxu0
        %v6098 = vadd.f32 0.0, %v6097
        %v6099 = vpop.f32.mrb[0].mxu0
        %6100 = vdwg.mxu0
        %v6101 = vld [vmem:[#allocation3] sm:$0xff]
        %v6102 = vld [vmem:[#allocation3 + $0x8] sm:$0xff]
        %v6103 = vld [vmem:[#allocation3 + $0x10] sm:$0xff]
        %v6104 = vld [vmem:[#allocation3 + $0x18] sm:$0xff]
        %v6105 = vld [vmem:[#allocation3 + $0x20] sm:$0xff]
        %v6106 = vld [vmem:[#allocation3 + $0x28] sm:$0xff]
        %v6107 = vld [vmem:[#allocation3 + $0x30] sm:$0xff]
        %v6108 = vld [vmem:[#allocation3 + $0x38] sm:$0xff]
        %v6109 = vld [vmem:[#allocation3 + $0x40] sm:$0xff]
        %v6110 = vld [vmem:[#allocation3 + $0x48] sm:$0xff]
        %v6111 = vld [vmem:[#allocation3 + $0x50] sm:$0xff]
        %v6112 = vld [vmem:[#allocation3 + $0x58] sm:$0xff]
        %v6113 = vld [vmem:[#allocation3 + $0x60] sm:$0xff]
        %v6114 = vld [vmem:[#allocation3 + $0x68] sm:$0xff]
        %v6115 = vld [vmem:[#allocation3 + $0x70] sm:$0xff]
        %v6116 = vld [vmem:[#allocation3 + $0x78] sm:$0xff]
        %v6117 = vld [vmem:[#allocation3 + $0x80] sm:$0xff]
        %v6118 = vld [vmem:[#allocation3 + $0x88] sm:$0xff]
        %v6119 = vld [vmem:[#allocation3 + $0x90] sm:$0xff]
        %v6120 = vld [vmem:[#allocation3 + $0x98] sm:$0xff]
        %v6121 = vld [vmem:[#allocation3 + $0xa0] sm:$0xff]
        %v6122 = vld [vmem:[#allocation3 + $0xa8] sm:$0xff]
        %v6123 = vld [vmem:[#allocation3 + $0xb0] sm:$0xff]
        %v6124 = vld [vmem:[#allocation3 + $0xb8] sm:$0xff]
        %v6125 = vld [vmem:[#allocation3 + $0xc0] sm:$0xff]
        %v6126 = vld [vmem:[#allocation3 + $0xc8] sm:$0xff]
        %v6127 = vld [vmem:[#allocation3 + $0xd0] sm:$0xff]
        %v6128 = vld [vmem:[#allocation3 + $0xd8] sm:$0xff]
        %v6129 = vld [vmem:[#allocation3 + $0xe0] sm:$0xff]
        %v6130 = vld [vmem:[#allocation3 + $0xe8] sm:$0xff]
        %v6131 = vld [vmem:[#allocation3 + $0xf0] sm:$0xff]
        %v6132 = vld [vmem:[#allocation3 + $0xf8] sm:$0xff]
        %v6133 = vadd.f32 %v6101, %v5943
        %v6134 = vadd.f32 %v6102, %v5948
        %v6135 = vadd.f32 %v6103, %v5953
        %v6136 = vadd.f32 %v6104, %v5958
        %v6137 = vadd.f32 %v6105, %v5963
        %v6138 = vadd.f32 %v6106, %v5968
        %v6139 = vadd.f32 %v6107, %v5973
        %v6140 = vadd.f32 %v6108, %v5978
        %v6141 = vadd.f32 %v6109, %v5983
        %v6142 = vadd.f32 %v6110, %v5988
        %v6143 = vadd.f32 %v6111, %v5993
        %v6144 = vadd.f32 %v6112, %v5998
        %v6145 = vadd.f32 %v6113, %v6003
        %v6146 = vadd.f32 %v6114, %v6008
        %v6147 = vadd.f32 %v6115, %v6013
        %v6148 = vadd.f32 %v6116, %v6018
        %v6149 = vadd.f32 %v6117, %v6023
        %v6150 = vadd.f32 %v6118, %v6028
        %v6151 = vadd.f32 %v6119, %v6033
        %v6152 = vadd.f32 %v6120, %v6038
        %v6153 = vadd.f32 %v6121, %v6043
        %v6154 = vadd.f32 %v6122, %v6048
        %v6155 = vadd.f32 %v6123, %v6053
        %v6156 = vadd.f32 %v6124, %v6058
        %v6157 = vadd.f32 %v6125, %v6063
        %v6158 = vadd.f32 %v6126, %v6068
        %v6159 = vadd.f32 %v6127, %v6073
        %v6160 = vadd.f32 %v6128, %v6078
        %v6161 = vadd.f32 %v6129, %v6083
        %v6162 = vadd.f32 %v6130, %v6088
        %v6163 = vadd.f32 %v6131, %v6093
        %v6164 = vadd.f32 %v6132, %v6098
        %6165 = vst [vmem:[#allocation3] sm:$0xff] %v6133
        %6166 = vst [vmem:[#allocation3 + $0x8] sm:$0xff] %v6134
        %6167 = vst [vmem:[#allocation3 + $0x10] sm:$0xff] %v6135
        %6168 = vst [vmem:[#allocation3 + $0x18] sm:$0xff] %v6136
        %6169 = vst [vmem:[#allocation3 + $0x20] sm:$0xff] %v6137
        %6170 = vst [vmem:[#allocation3 + $0x28] sm:$0xff] %v6138
        %6171 = vst [vmem:[#allocation3 + $0x30] sm:$0xff] %v6139
        %6172 = vst [vmem:[#allocation3 + $0x38] sm:$0xff] %v6140
        %6173 = vst [vmem:[#allocation3 + $0x40] sm:$0xff] %v6141
        %6174 = vst [vmem:[#allocation3 + $0x48] sm:$0xff] %v6142
        %6175 = vst [vmem:[#allocation3 + $0x50] sm:$0xff] %v6143
        %6176 = vst [vmem:[#allocation3 + $0x58] sm:$0xff] %v6144
        %6177 = vst [vmem:[#allocation3 + $0x60] sm:$0xff] %v6145
        %6178 = vst [vmem:[#allocation3 + $0x68] sm:$0xff] %v6146
        %6179 = vst [vmem:[#allocation3 + $0x70] sm:$0xff] %v6147
        %6180 = vst [vmem:[#allocation3 + $0x78] sm:$0xff] %v6148
        %6181 = vst [vmem:[#allocation3 + $0x80] sm:$0xff] %v6149
        %6182 = vst [vmem:[#allocation3 + $0x88] sm:$0xff] %v6150
        %6183 = vst [vmem:[#allocation3 + $0x90] sm:$0xff] %v6151
        %6184 = vst [vmem:[#allocation3 + $0x98] sm:$0xff] %v6152
        %6185 = vst [vmem:[#allocation3 + $0xa0] sm:$0xff] %v6153
        %6186 = vst [vmem:[#allocation3 + $0xa8] sm:$0xff] %v6154
        %6187 = vst [vmem:[#allocation3 + $0xb0] sm:$0xff] %v6155
        %6188 = vst [vmem:[#allocation3 + $0xb8] sm:$0xff] %v6156
        %6189 = vst [vmem:[#allocation3 + $0xc0] sm:$0xff] %v6157
        %6190 = vst [vmem:[#allocation3 + $0xc8] sm:$0xff] %v6158
        %6191 = vst [vmem:[#allocation3 + $0xd0] sm:$0xff] %v6159
        %6192 = vst [vmem:[#allocation3 + $0xd8] sm:$0xff] %v6160
        %6193 = vst [vmem:[#allocation3 + $0xe0] sm:$0xff] %v6161
        %6194 = vst [vmem:[#allocation3 + $0xe8] sm:$0xff] %v6162
        %6195 = vst [vmem:[#allocation3 + $0xf0] sm:$0xff] %v6163
        %6196 = vst [vmem:[#allocation3 + $0xf8] sm:$0xff] %v6164
        %s6197 = scalar_lea.vmem [#allocation2], 48
        %v6198 = vld [vmem:[%s6197] sm:$0xff]
        %v6199 = vld [vmem:[%s6197 + $0x8] sm:$0xff]
        %v6200 = vld [vmem:[%s6197 + $0x18] sm:$0xff]
        %v6201 = vld [vmem:[%s6197 + $0x20] sm:$0xff]
        %v6202 = vld [vmem:[%s6197 + $0x30] sm:$0xff]
        %v6203 = vld [vmem:[%s6197 + $0x38] sm:$0xff]
        %v6204 = vld [vmem:[%s6197 + $0x48] sm:$0xff]
        %v6205 = vld [vmem:[%s6197 + $0x50] sm:$0xff]
        %v6206 = vld [vmem:[%s6197 + $0x60] sm:$0xff]
        %v6207 = vld [vmem:[%s6197 + $0x68] sm:$0xff]
        %v6208 = vld [vmem:[%s6197 + $0x78] sm:$0xff]
        %v6209 = vld [vmem:[%s6197 + $0x80] sm:$0xff]
        %v6210 = vld [vmem:[%s6197 + $0x90] sm:$0xff]
        %v6211 = vld [vmem:[%s6197 + $0x98] sm:$0xff]
        %v6212 = vld [vmem:[%s6197 + $0xa8] sm:$0xff]
        %v6213 = vld [vmem:[%s6197 + $0xb0] sm:$0xff]
        %v6214 = vld [vmem:[%s6197 + $0xc0] sm:$0xff]
        %v6215 = vld [vmem:[%s6197 + $0xc8] sm:$0xff]
        %v6216 = vld [vmem:[%s6197 + $0xd8] sm:$0xff]
        %v6217 = vld [vmem:[%s6197 + $0xe0] sm:$0xff]
        %v6218 = vld [vmem:[%s6197 + $0xf0] sm:$0xff]
        %v6219 = vld [vmem:[%s6197 + $0xf8] sm:$0xff]
        %v6220 = vld [vmem:[%s6197 + $0x108] sm:$0xff]
        %v6221 = vld [vmem:[%s6197 + $0x110] sm:$0xff]
        %v6222 = vld [vmem:[%s6197 + $0x120] sm:$0xff]
        %v6223 = vld [vmem:[%s6197 + $0x128] sm:$0xff]
        %v6224 = vld [vmem:[%s6197 + $0x138] sm:$0xff]
        %v6225 = vld [vmem:[%s6197 + $0x140] sm:$0xff]
        %v6226 = vld [vmem:[%s6197 + $0x150] sm:$0xff]
        %v6227 = vld [vmem:[%s6197 + $0x158] sm:$0xff]
        %v6228 = vld [vmem:[%s6197 + $0x168] sm:$0xff]
        %v6229 = vld [vmem:[%s6197 + $0x170] sm:$0xff]
        %s6230 = scalar_lea.vmem [#allocation4], 768
        %v6231 = vld [vmem:[%s6230] sm:$0xff]
        %v6232 = vld [vmem:[%s6230 + $0x8] sm:$0xff]
        %v6233 = vld [vmem:[%s6230 + $0x10] sm:$0xff]
        %v6234 = vld [vmem:[%s6230 + $0x18] sm:$0xff]
        %v6235 = vld [vmem:[%s6230 + $0x20] sm:$0xff]
        %v6236 = vld [vmem:[%s6230 + $0x28] sm:$0xff]
        %v6237 = vld [vmem:[%s6230 + $0x30] sm:$0xff]
        %v6238 = vld [vmem:[%s6230 + $0x38] sm:$0xff]
        %v6239 = vld [vmem:[%s6230 + $0x40] sm:$0xff]
        %v6240 = vld [vmem:[%s6230 + $0x48] sm:$0xff]
        %v6241 = vld [vmem:[%s6230 + $0x50] sm:$0xff]
        %v6242 = vld [vmem:[%s6230 + $0x58] sm:$0xff]
        %v6243 = vld [vmem:[%s6230 + $0x60] sm:$0xff]
        %v6244 = vld [vmem:[%s6230 + $0x68] sm:$0xff]
        %v6245 = vld [vmem:[%s6230 + $0x70] sm:$0xff]
        %v6246 = vld [vmem:[%s6230 + $0x78] sm:$0xff]
        %6247 = vmatprep.subr.mxu0 0.0
        %6248 = vmatpush1.msra.mxu0 %v6231
        %6249 = vmatprep.subr.mxu0 0.0
        %6250 = vmatpush1.msra.mxu0 %v6232
        %6251 = vmatprep.subr.mxu0 0.0
        %6252 = vmatpush1.msra.mxu0 %v6233
        %6253 = vmatprep.subr.mxu0 0.0
        %6254 = vmatpush1.msra.mxu0 %v6234
        %6255 = vmatprep.subr.mxu0 0.0
        %6256 = vmatpush1.msra.mxu0 %v6235
        %6257 = vmatprep.subr.mxu0 0.0
        %6258 = vmatpush1.msra.mxu0 %v6236
        %6259 = vmatprep.subr.mxu0 0.0
        %6260 = vmatpush1.msra.mxu0 %v6237
        %6261 = vmatprep.subr.mxu0 0.0
        %6262 = vmatpush1.msra.mxu0 %v6238
        %6263 = vmatprep.subr.mxu0 0.0
        %6264 = vmatpush1.msra.mxu0 %v6239
        %6265 = vmatprep.subr.mxu0 0.0
        %6266 = vmatpush1.msra.mxu0 %v6240
        %6267 = vmatprep.subr.mxu0 0.0
        %6268 = vmatpush1.msra.mxu0 %v6241
        %6269 = vmatprep.subr.mxu0 0.0
        %6270 = vmatpush1.msra.mxu0 %v6242
        %6271 = vmatprep.subr.mxu0 0.0
        %6272 = vmatpush1.msra.mxu0 %v6243
        %6273 = vmatprep.subr.mxu0 0.0
        %6274 = vmatpush1.msra.mxu0 %v6244
        %6275 = vmatprep.subr.mxu0 0.0
        %6276 = vmatpush1.msra.mxu0 %v6245
        %6277 = vmatprep.subr.mxu0 0.0
        %6278 = vmatpush1.msra.mxu0 %v6246
        %6279 = vmatprep.subr.mxu0 0.0
        %6280 = vmatpush1.msra.mxu0 0.0
        %6281 = vmatprep.subr.mxu0 0.0
        %6282 = vmatpush1.msra.mxu0 0.0
        %6283 = vmatprep.subr.mxu0 0.0
        %6284 = vmatpush1.msra.mxu0 0.0
        %6285 = vmatprep.subr.mxu0 0.0
        %6286 = vmatpush1.msra.mxu0 0.0
        %6287 = vmatprep.subr.mxu0 0.0
        %6288 = vmatpush1.msra.mxu0 0.0
        %6289 = vmatprep.subr.mxu0 0.0
        %6290 = vmatpush1.msra.mxu0 0.0
        %6291 = vmatprep.subr.mxu0 0.0
        %6292 = vmatpush1.msra.mxu0 0.0
        %6293 = vmatprep.subr.mxu0 0.0
        %6294 = vmatpush1.msra.mxu0 0.0
        %6295 = vmatprep.subr.mxu0 0.0
        %6296 = vmatpush1.msra.mxu0 0.0
        %6297 = vmatprep.subr.mxu0 0.0
        %6298 = vmatpush1.msra.mxu0 0.0
        %6299 = vmatprep.subr.mxu0 0.0
        %6300 = vmatpush1.msra.mxu0 0.0
        %6301 = vmatprep.subr.mxu0 0.0
        %6302 = vmatpush1.msra.mxu0 0.0
        %6303 = vmatprep.subr.mxu0 0.0
        %6304 = vmatpush1.msra.mxu0 0.0
        %6305 = vmatprep.subr.mxu0 0.0
        %6306 = vmatpush1.msra.mxu0 0.0
        %6307 = vmatprep.subr.mxu0 0.0
        %6308 = vmatpush1.msra.mxu0 0.0
        %6309 = vmatprep.subr.mxu0 0.0
        %6310 = vmatpush1.msra.mxu0 0.0
        %6311 = vmatprep.mubr.f32.mxu0 0.0
        %6312 = vmatmul.mubr.f32.gmra.mrb[0].mxu0 %v6198
        %v6313 = vpop.f32.mrb[0].mxu0
        %v6314 = vadd.f32 0.0, %v6313
        %v6315 = vpop.f32.mrb[0].mxu0
        %6316 = vmatprep.mubr.f32.mxu0 0.0
        %6317 = vmatmul.mubr.f32.gmra.mrb[0].mxu0 %v6199
        %v6318 = vpop.f32.mrb[0].mxu0
        %v6319 = vadd.f32 0.0, %v6318
        %v6320 = vpop.f32.mrb[0].mxu0
        %6321 = vmatprep.mubr.f32.mxu0 0.0
        %6322 = vmatmul.mubr.f32.gmra.mrb[0].mxu0 %v6200
        %v6323 = vpop.f32.mrb[0].mxu0
        %v6324 = vadd.f32 0.0, %v6323
        %v6325 = vpop.f32.mrb[0].mxu0
        %6326 = vmatprep.mubr.f32.mxu0 0.0
        %6327 = vmatmul.mubr.f32.gmra.mrb[0].mxu0 %v6201
        %v6328 = vpop.f32.mrb[0].mxu0
        %v6329 = vadd.f32 0.0, %v6328
        %v6330 = vpop.f32.mrb[0].mxu0
        %6331 = vmatprep.mubr.f32.mxu0 0.0
        %6332 = vmatmul.mubr.f32.gmra.mrb[0].mxu0 %v6202
        %v6333 = vpop.f32.mrb[0].mxu0
        %v6334 = vadd.f32 0.0, %v6333
        %v6335 = vpop.f32.mrb[0].mxu0
        %6336 = vmatprep.mubr.f32.mxu0 0.0
        %6337 = vmatmul.mubr.f32.gmra.mrb[0].mxu0 %v6203
        %v6338 = vpop.f32.mrb[0].mxu0
        %v6339 = vadd.f32 0.0, %v6338
        %v6340 = vpop.f32.mrb[0].mxu0
        %6341 = vmatprep.mubr.f32.mxu0 0.0
        %6342 = vmatmul.mubr.f32.gmra.mrb[0].mxu0 %v6204
        %v6343 = vpop.f32.mrb[0].mxu0
        %v6344 = vadd.f32 0.0, %v6343
        %v6345 = vpop.f32.mrb[0].mxu0
        %6346 = vmatprep.mubr.f32.mxu0 0.0
        %6347 = vmatmul.mubr.f32.gmra.mrb[0].mxu0 %v6205
        %v6348 = vpop.f32.mrb[0].mxu0
        %v6349 = vadd.f32 0.0, %v6348
        %v6350 = vpop.f32.mrb[0].mxu0
        %6351 = vmatprep.mubr.f32.mxu0 0.0
        %6352 = vmatmul.mubr.f32.gmra.mrb[0].mxu0 %v6206
        %v6353 = vpop.f32.mrb[0].mxu0
        %v6354 = vadd.f32 0.0, %v6353
        %v6355 = vpop.f32.mrb[0].mxu0
        %6356 = vmatprep.mubr.f32.mxu0 0.0
        %6357 = vmatmul.mubr.f32.gmra.mrb[0].mxu0 %v6207
        %v6358 = vpop.f32.mrb[0].mxu0
        %v6359 = vadd.f32 0.0, %v6358
        %v6360 = vpop.f32.mrb[0].mxu0
        %6361 = vmatprep.mubr.f32.mxu0 0.0
        %6362 = vmatmul.mubr.f32.gmra.mrb[0].mxu0 %v6208
        %v6363 = vpop.f32.mrb[0].mxu0
        %v6364 = vadd.f32 0.0, %v6363
        %v6365 = vpop.f32.mrb[0].mxu0
        %6366 = vmatprep.mubr.f32.mxu0 0.0
        %6367 = vmatmul.mubr.f32.gmra.mrb[0].mxu0 %v6209
        %v6368 = vpop.f32.mrb[0].mxu0
        %v6369 = vadd.f32 0.0, %v6368
        %v6370 = vpop.f32.mrb[0].mxu0
        %6371 = vmatprep.mubr.f32.mxu0 0.0
        %6372 = vmatmul.mubr.f32.gmra.mrb[0].mxu0 %v6210
        %v6373 = vpop.f32.mrb[0].mxu0
        %v6374 = vadd.f32 0.0, %v6373
        %v6375 = vpop.f32.mrb[0].mxu0
        %6376 = vmatprep.mubr.f32.mxu0 0.0
        %6377 = vmatmul.mubr.f32.gmra.mrb[0].mxu0 %v6211
        %v6378 = vpop.f32.mrb[0].mxu0
        %v6379 = vadd.f32 0.0, %v6378
        %v6380 = vpop.f32.mrb[0].mxu0
        %6381 = vmatprep.mubr.f32.mxu0 0.0
        %6382 = vmatmul.mubr.f32.gmra.mrb[0].mxu0 %v6212
        %v6383 = vpop.f32.mrb[0].mxu0
        %v6384 = vadd.f32 0.0, %v6383
        %v6385 = vpop.f32.mrb[0].mxu0
        %6386 = vmatprep.mubr.f32.mxu0 0.0
        %6387 = vmatmul.mubr.f32.gmra.mrb[0].mxu0 %v6213
        %v6388 = vpop.f32.mrb[0].mxu0
        %v6389 = vadd.f32 0.0, %v6388
        %v6390 = vpop.f32.mrb[0].mxu0
        %6391 = vmatprep.mubr.f32.mxu0 0.0
        %6392 = vmatmul.mubr.f32.gmra.mrb[0].mxu0 %v6214
        %v6393 = vpop.f32.mrb[0].mxu0
        %v6394 = vadd.f32 0.0, %v6393
        %v6395 = vpop.f32.mrb[0].mxu0
        %6396 = vmatprep.mubr.f32.mxu0 0.0
        %6397 = vmatmul.mubr.f32.gmra.mrb[0].mxu0 %v6215
        %v6398 = vpop.f32.mrb[0].mxu0
        %v6399 = vadd.f32 0.0, %v6398
        %v6400 = vpop.f32.mrb[0].mxu0
        %6401 = vmatprep.mubr.f32.mxu0 0.0
        %6402 = vmatmul.mubr.f32.gmra.mrb[0].mxu0 %v6216
        %v6403 = vpop.f32.mrb[0].mxu0
        %v6404 = vadd.f32 0.0, %v6403
        %v6405 = vpop.f32.mrb[0].mxu0
        %6406 = vmatprep.mubr.f32.mxu0 0.0
        %6407 = vmatmul.mubr.f32.gmra.mrb[0].mxu0 %v6217
        %v6408 = vpop.f32.mrb[0].mxu0
        %v6409 = vadd.f32 0.0, %v6408
        %v6410 = vpop.f32.mrb[0].mxu0
        %6411 = vmatprep.mubr.f32.mxu0 0.0
        %6412 = vmatmul.mubr.f32.gmra.mrb[0].mxu0 %v6218
        %v6413 = vpop.f32.mrb[0].mxu0
        %v6414 = vadd.f32 0.0, %v6413
        %v6415 = vpop.f32.mrb[0].mxu0
        %6416 = vmatprep.mubr.f32.mxu0 0.0
        %6417 = vmatmul.mubr.f32.gmra.mrb[0].mxu0 %v6219
        %v6418 = vpop.f32.mrb[0].mxu0
        %v6419 = vadd.f32 0.0, %v6418
        %v6420 = vpop.f32.mrb[0].mxu0
        %6421 = vmatprep.mubr.f32.mxu0 0.0
        %6422 = vmatmul.mubr.f32.gmra.mrb[0].mxu0 %v6220
        %v6423 = vpop.f32.mrb[0].mxu0
        %v6424 = vadd.f32 0.0, %v6423
        %v6425 = vpop.f32.mrb[0].mxu0
        %6426 = vmatprep.mubr.f32.mxu0 0.0
        %6427 = vmatmul.mubr.f32.gmra.mrb[0].mxu0 %v6221
        %v6428 = vpop.f32.mrb[0].mxu0
        %v6429 = vadd.f32 0.0, %v6428
        %v6430 = vpop.f32.mrb[0].mxu0
        %6431 = vmatprep.mubr.f32.mxu0 0.0
        %6432 = vmatmul.mubr.f32.gmra.mrb[0].mxu0 %v6222
        %v6433 = vpop.f32.mrb[0].mxu0
        %v6434 = vadd.f32 0.0, %v6433
        %v6435 = vpop.f32.mrb[0].mxu0
        %6436 = vmatprep.mubr.f32.mxu0 0.0
        %6437 = vmatmul.mubr.f32.gmra.mrb[0].mxu0 %v6223
        %v6438 = vpop.f32.mrb[0].mxu0
        %v6439 = vadd.f32 0.0, %v6438
        %v6440 = vpop.f32.mrb[0].mxu0
        %6441 = vmatprep.mubr.f32.mxu0 0.0
        %6442 = vmatmul.mubr.f32.gmra.mrb[0].mxu0 %v6224
        %v6443 = vpop.f32.mrb[0].mxu0
        %v6444 = vadd.f32 0.0, %v6443
        %v6445 = vpop.f32.mrb[0].mxu0
        %6446 = vmatprep.mubr.f32.mxu0 0.0
        %6447 = vmatmul.mubr.f32.gmra.mrb[0].mxu0 %v6225
        %v6448 = vpop.f32.mrb[0].mxu0
        %v6449 = vadd.f32 0.0, %v6448
        %v6450 = vpop.f32.mrb[0].mxu0
        %6451 = vmatprep.mubr.f32.mxu0 0.0
        %6452 = vmatmul.mubr.f32.gmra.mrb[0].mxu0 %v6226
        %v6453 = vpop.f32.mrb[0].mxu0
        %v6454 = vadd.f32 0.0, %v6453
        %v6455 = vpop.f32.mrb[0].mxu0
        %6456 = vmatprep.mubr.f32.mxu0 0.0
        %6457 = vmatmul.mubr.f32.gmra.mrb[0].mxu0 %v6227
        %v6458 = vpop.f32.mrb[0].mxu0
        %v6459 = vadd.f32 0.0, %v6458
        %v6460 = vpop.f32.mrb[0].mxu0
        %6461 = vmatprep.mubr.f32.mxu0 0.0
        %6462 = vmatmul.mubr.f32.gmra.mrb[0].mxu0 %v6228
        %v6463 = vpop.f32.mrb[0].mxu0
        %v6464 = vadd.f32 0.0, %v6463
        %v6465 = vpop.f32.mrb[0].mxu0
        %6466 = vmatprep.mubr.f32.mxu0 0.0
        %6467 = vmatmul.mubr.f32.gmra.mrb[0].mxu0 %v6229
        %v6468 = vpop.f32.mrb[0].mxu0
        %v6469 = vadd.f32 0.0, %v6468
        %v6470 = vpop.f32.mrb[0].mxu0
        %6471 = vdwg.mxu0
        %v6472 = vld [vmem:[#allocation3] sm:$0xff]
        %v6473 = vld [vmem:[#allocation3 + $0x8] sm:$0xff]
        %v6474 = vld [vmem:[#allocation3 + $0x10] sm:$0xff]
        %v6475 = vld [vmem:[#allocation3 + $0x18] sm:$0xff]
        %v6476 = vld [vmem:[#allocation3 + $0x20] sm:$0xff]
        %v6477 = vld [vmem:[#allocation3 + $0x28] sm:$0xff]
        %v6478 = vld [vmem:[#allocation3 + $0x30] sm:$0xff]
        %v6479 = vld [vmem:[#allocation3 + $0x38] sm:$0xff]
        %v6480 = vld [vmem:[#allocation3 + $0x40] sm:$0xff]
        %v6481 = vld [vmem:[#allocation3 + $0x48] sm:$0xff]
        %v6482 = vld [vmem:[#allocation3 + $0x50] sm:$0xff]
        %v6483 = vld [vmem:[#allocation3 + $0x58] sm:$0xff]
        %v6484 = vld [vmem:[#allocation3 + $0x60] sm:$0xff]
        %v6485 = vld [vmem:[#allocation3 + $0x68] sm:$0xff]
        %v6486 = vld [vmem:[#allocation3 + $0x70] sm:$0xff]
        %v6487 = vld [vmem:[#allocation3 + $0x78] sm:$0xff]
        %v6488 = vld [vmem:[#allocation3 + $0x80] sm:$0xff]
        %v6489 = vld [vmem:[#allocation3 + $0x88] sm:$0xff]
        %v6490 = vld [vmem:[#allocation3 + $0x90] sm:$0xff]
        %v6491 = vld [vmem:[#allocation3 + $0x98] sm:$0xff]
        %v6492 = vld [vmem:[#allocation3 + $0xa0] sm:$0xff]
        %v6493 = vld [vmem:[#allocation3 + $0xa8] sm:$0xff]
        %v6494 = vld [vmem:[#allocation3 + $0xb0] sm:$0xff]
        %v6495 = vld [vmem:[#allocation3 + $0xb8] sm:$0xff]
        %v6496 = vld [vmem:[#allocation3 + $0xc0] sm:$0xff]
        %v6497 = vld [vmem:[#allocation3 + $0xc8] sm:$0xff]
        %v6498 = vld [vmem:[#allocation3 + $0xd0] sm:$0xff]
        %v6499 = vld [vmem:[#allocation3 + $0xd8] sm:$0xff]
        %v6500 = vld [vmem:[#allocation3 + $0xe0] sm:$0xff]
        %v6501 = vld [vmem:[#allocation3 + $0xe8] sm:$0xff]
        %v6502 = vld [vmem:[#allocation3 + $0xf0] sm:$0xff]
        %v6503 = vld [vmem:[#allocation3 + $0xf8] sm:$0xff]
        %v6504 = vadd.f32 %v6472, %v6314
        %v6505 = vadd.f32 %v6473, %v6319
        %v6506 = vadd.f32 %v6474, %v6324
        %v6507 = vadd.f32 %v6475, %v6329
        %v6508 = vadd.f32 %v6476, %v6334
        %v6509 = vadd.f32 %v6477, %v6339
        %v6510 = vadd.f32 %v6478, %v6344
        %v6511 = vadd.f32 %v6479, %v6349
        %v6512 = vadd.f32 %v6480, %v6354
        %v6513 = vadd.f32 %v6481, %v6359
        %v6514 = vadd.f32 %v6482, %v6364
        %v6515 = vadd.f32 %v6483, %v6369
        %v6516 = vadd.f32 %v6484, %v6374
        %v6517 = vadd.f32 %v6485, %v6379
        %v6518 = vadd.f32 %v6486, %v6384
        %v6519 = vadd.f32 %v6487, %v6389
        %v6520 = vadd.f32 %v6488, %v6394
        %v6521 = vadd.f32 %v6489, %v6399
        %v6522 = vadd.f32 %v6490, %v6404
        %v6523 = vadd.f32 %v6491, %v6409
        %v6524 = vadd.f32 %v6492, %v6414
        %v6525 = vadd.f32 %v6493, %v6419
        %v6526 = vadd.f32 %v6494, %v6424
        %v6527 = vadd.f32 %v6495, %v6429
        %v6528 = vadd.f32 %v6496, %v6434
        %v6529 = vadd.f32 %v6497, %v6439
        %v6530 = vadd.f32 %v6498, %v6444
        %v6531 = vadd.f32 %v6499, %v6449
        %v6532 = vadd.f32 %v6500, %v6454
        %v6533 = vadd.f32 %v6501, %v6459
        %v6534 = vadd.f32 %v6502, %v6464
        %v6535 = vadd.f32 %v6503, %v6469
        %6536 = vst [vmem:[#allocation3] sm:$0xff] %v6504
        %6537 = vst [vmem:[#allocation3 + $0x8] sm:$0xff] %v6505
        %6538 = vst [vmem:[#allocation3 + $0x10] sm:$0xff] %v6506
        %6539 = vst [vmem:[#allocation3 + $0x18] sm:$0xff] %v6507
        %6540 = vst [vmem:[#allocation3 + $0x20] sm:$0xff] %v6508
        %6541 = vst [vmem:[#allocation3 + $0x28] sm:$0xff] %v6509
        %6542 = vst [vmem:[#allocation3 + $0x30] sm:$0xff] %v6510
        %6543 = vst [vmem:[#allocation3 + $0x38] sm:$0xff] %v6511
        %6544 = vst [vmem:[#allocation3 + $0x40] sm:$0xff] %v6512
        %6545 = vst [vmem:[#allocation3 + $0x48] sm:$0xff] %v6513
        %6546 = vst [vmem:[#allocation3 + $0x50] sm:$0xff] %v6514
        %6547 = vst [vmem:[#allocation3 + $0x58] sm:$0xff] %v6515
        %6548 = vst [vmem:[#allocation3 + $0x60] sm:$0xff] %v6516
        %6549 = vst [vmem:[#allocation3 + $0x68] sm:$0xff] %v6517
        %6550 = vst [vmem:[#allocation3 + $0x70] sm:$0xff] %v6518
        %6551 = vst [vmem:[#allocation3 + $0x78] sm:$0xff] %v6519
        %6552 = vst [vmem:[#allocation3 + $0x80] sm:$0xff] %v6520
        %6553 = vst [vmem:[#allocation3 + $0x88] sm:$0xff] %v6521
        %6554 = vst [vmem:[#allocation3 + $0x90] sm:$0xff] %v6522
        %6555 = vst [vmem:[#allocation3 + $0x98] sm:$0xff] %v6523
        %6556 = vst [vmem:[#allocation3 + $0xa0] sm:$0xff] %v6524
        %6557 = vst [vmem:[#allocation3 + $0xa8] sm:$0xff] %v6525
        %6558 = vst [vmem:[#allocation3 + $0xb0] sm:$0xff] %v6526
        %6559 = vst [vmem:[#allocation3 + $0xb8] sm:$0xff] %v6527
        %6560 = vst [vmem:[#allocation3 + $0xc0] sm:$0xff] %v6528
        %6561 = vst [vmem:[#allocation3 + $0xc8] sm:$0xff] %v6529
        %6562 = vst [vmem:[#allocation3 + $0xd0] sm:$0xff] %v6530
        %6563 = vst [vmem:[#allocation3 + $0xd8] sm:$0xff] %v6531
        %6564 = vst [vmem:[#allocation3 + $0xe0] sm:$0xff] %v6532
        %6565 = vst [vmem:[#allocation3 + $0xe8] sm:$0xff] %v6533
        %6566 = vst [vmem:[#allocation3 + $0xf0] sm:$0xff] %v6534
        %6567 = vst [vmem:[#allocation3 + $0xf8] sm:$0xff] %v6535
        %v6568 = vld [vmem:[%s6197 + $0x1] sm:$0xff]
        %v6569 = vld [vmem:[%s6197 + $0x9] sm:$0xff]
        %v6570 = vld [vmem:[%s6197 + $0x19] sm:$0xff]
        %v6571 = vld [vmem:[%s6197 + $0x21] sm:$0xff]
        %v6572 = vld [vmem:[%s6197 + $0x31] sm:$0xff]
        %v6573 = vld [vmem:[%s6197 + $0x39] sm:$0xff]
        %v6574 = vld [vmem:[%s6197 + $0x49] sm:$0xff]
        %v6575 = vld [vmem:[%s6197 + $0x51] sm:$0xff]
        %v6576 = vld [vmem:[%s6197 + $0x61] sm:$0xff]
        %v6577 = vld [vmem:[%s6197 + $0x69] sm:$0xff]
        %v6578 = vld [vmem:[%s6197 + $0x79] sm:$0xff]
        %v6579 = vld [vmem:[%s6197 + $0x81] sm:$0xff]
        %v6580 = vld [vmem:[%s6197 + $0x91] sm:$0xff]
        %v6581 = vld [vmem:[%s6197 + $0x99] sm:$0xff]
        %v6582 = vld [vmem:[%s6197 + $0xa9] sm:$0xff]
        %v6583 = vld [vmem:[%s6197 + $0xb1] sm:$0xff]
        %v6584 = vld [vmem:[%s6197 + $0xc1] sm:$0xff]
        %v6585 = vld [vmem:[%s6197 + $0xc9] sm:$0xff]
        %v6586 = vld [vmem:[%s6197 + $0xd9] sm:$0xff]
        %v6587 = vld [vmem:[%s6197 + $0xe1] sm:$0xff]
        %v6588 = vld [vmem:[%s6197 + $0xf1] sm:$0xff]
        %v6589 = vld [vmem:[%s6197 + $0xf9] sm:$0xff]
        %v6590 = vld [vmem:[%s6197 + $0x109] sm:$0xff]
        %v6591 = vld [vmem:[%s6197 + $0x111] sm:$0xff]
        %v6592 = vld [vmem:[%s6197 + $0x121] sm:$0xff]
        %v6593 = vld [vmem:[%s6197 + $0x129] sm:$0xff]
        %v6594 = vld [vmem:[%s6197 + $0x139] sm:$0xff]
        %v6595 = vld [vmem:[%s6197 + $0x141] sm:$0xff]
        %v6596 = vld [vmem:[%s6197 + $0x151] sm:$0xff]
        %v6597 = vld [vmem:[%s6197 + $0x159] sm:$0xff]
        %v6598 = vld [vmem:[%s6197 + $0x169] sm:$0xff]
        %v6599 = vld [vmem:[%s6197 + $0x171] sm:$0xff]
        %s6600 = scalar_lea.vmem [#allocation4], 896
        %v6601 = vld [vmem:[%s6600] sm:$0xff]
        %v6602 = vld [vmem:[%s6600 + $0x8] sm:$0xff]
        %v6603 = vld [vmem:[%s6600 + $0x10] sm:$0xff]
        %v6604 = vld [vmem:[%s6600 + $0x18] sm:$0xff]
        %v6605 = vld [vmem:[%s6600 + $0x20] sm:$0xff]
        %v6606 = vld [vmem:[%s6600 + $0x28] sm:$0xff]
        %v6607 = vld [vmem:[%s6600 + $0x30] sm:$0xff]
        %v6608 = vld [vmem:[%s6600 + $0x38] sm:$0xff]
        %v6609 = vld [vmem:[%s6600 + $0x40] sm:$0xff]
        %v6610 = vld [vmem:[%s6600 + $0x48] sm:$0xff]
        %v6611 = vld [vmem:[%s6600 + $0x50] sm:$0xff]
        %v6612 = vld [vmem:[%s6600 + $0x58] sm:$0xff]
        %v6613 = vld [vmem:[%s6600 + $0x60] sm:$0xff]
        %v6614 = vld [vmem:[%s6600 + $0x68] sm:$0xff]
        %v6615 = vld [vmem:[%s6600 + $0x70] sm:$0xff]
        %v6616 = vld [vmem:[%s6600 + $0x78] sm:$0xff]
        %6617 = vmatprep.subr.mxu0 0.0
        %6618 = vmatpush1.msra.mxu0 %v6601
        %6619 = vmatprep.subr.mxu0 0.0
        %6620 = vmatpush1.msra.mxu0 %v6602
        %6621 = vmatprep.subr.mxu0 0.0
        %6622 = vmatpush1.msra.mxu0 %v6603
        %6623 = vmatprep.subr.mxu0 0.0
        %6624 = vmatpush1.msra.mxu0 %v6604
        %6625 = vmatprep.subr.mxu0 0.0
        %6626 = vmatpush1.msra.mxu0 %v6605
        %6627 = vmatprep.subr.mxu0 0.0
        %6628 = vmatpush1.msra.mxu0 %v6606
        %6629 = vmatprep.subr.mxu0 0.0
        %6630 = vmatpush1.msra.mxu0 %v6607
        %6631 = vmatprep.subr.mxu0 0.0
        %6632 = vmatpush1.msra.mxu0 %v6608
        %6633 = vmatprep.subr.mxu0 0.0
        %6634 = vmatpush1.msra.mxu0 %v6609
        %6635 = vmatprep.subr.mxu0 0.0
        %6636 = vmatpush1.msra.mxu0 %v6610
        %6637 = vmatprep.subr.mxu0 0.0
        %6638 = vmatpush1.msra.mxu0 %v6611
        %6639 = vmatprep.subr.mxu0 0.0
        %6640 = vmatpush1.msra.mxu0 %v6612
        %6641 = vmatprep.subr.mxu0 0.0
        %6642 = vmatpush1.msra.mxu0 %v6613
        %6643 = vmatprep.subr.mxu0 0.0
        %6644 = vmatpush1.msra.mxu0 %v6614
        %6645 = vmatprep.subr.mxu0 0.0
        %6646 = vmatpush1.msra.mxu0 %v6615
        %6647 = vmatprep.subr.mxu0 0.0
        %6648 = vmatpush1.msra.mxu0 %v6616
        %6649 = vmatprep.subr.mxu0 0.0
        %6650 = vmatpush1.msra.mxu0 0.0
        %6651 = vmatprep.subr.mxu0 0.0
        %6652 = vmatpush1.msra.mxu0 0.0
        %6653 = vmatprep.subr.mxu0 0.0
        %6654 = vmatpush1.msra.mxu0 0.0
        %6655 = vmatprep.subr.mxu0 0.0
        %6656 = vmatpush1.msra.mxu0 0.0
        %6657 = vmatprep.subr.mxu0 0.0
        %6658 = vmatpush1.msra.mxu0 0.0
        %6659 = vmatprep.subr.mxu0 0.0
        %6660 = vmatpush1.msra.mxu0 0.0
        %6661 = vmatprep.subr.mxu0 0.0
        %6662 = vmatpush1.msra.mxu0 0.0
        %6663 = vmatprep.subr.mxu0 0.0
        %6664 = vmatpush1.msra.mxu0 0.0
        %6665 = vmatprep.subr.mxu0 0.0
        %6666 = vmatpush1.msra.mxu0 0.0
        %6667 = vmatprep.subr.mxu0 0.0
        %6668 = vmatpush1.msra.mxu0 0.0
        %6669 = vmatprep.subr.mxu0 0.0
        %6670 = vmatpush1.msra.mxu0 0.0
        %6671 = vmatprep.subr.mxu0 0.0
        %6672 = vmatpush1.msra.mxu0 0.0
        %6673 = vmatprep.subr.mxu0 0.0
        %6674 = vmatpush1.msra.mxu0 0.0
        %6675 = vmatprep.subr.mxu0 0.0
        %6676 = vmatpush1.msra.mxu0 0.0
        %6677 = vmatprep.subr.mxu0 0.0
        %6678 = vmatpush1.msra.mxu0 0.0
        %6679 = vmatprep.subr.mxu0 0.0
        %6680 = vmatpush1.msra.mxu0 0.0
        %6681 = vmatprep.mubr.f32.mxu0 0.0
        %6682 = vmatmul.mubr.f32.gmra.mrb[0].mxu0 %v6568
        %v6683 = vpop.f32.mrb[0].mxu0
        %v6684 = vadd.f32 0.0, %v6683
        %v6685 = vpop.f32.mrb[0].mxu0
        %6686 = vmatprep.mubr.f32.mxu0 0.0
        %6687 = vmatmul.mubr.f32.gmra.mrb[0].mxu0 %v6569
        %v6688 = vpop.f32.mrb[0].mxu0
        %v6689 = vadd.f32 0.0, %v6688
        %v6690 = vpop.f32.mrb[0].mxu0
        %6691 = vmatprep.mubr.f32.mxu0 0.0
        %6692 = vmatmul.mubr.f32.gmra.mrb[0].mxu0 %v6570
        %v6693 = vpop.f32.mrb[0].mxu0
        %v6694 = vadd.f32 0.0, %v6693
        %v6695 = vpop.f32.mrb[0].mxu0
        %6696 = vmatprep.mubr.f32.mxu0 0.0
        %6697 = vmatmul.mubr.f32.gmra.mrb[0].mxu0 %v6571
        %v6698 = vpop.f32.mrb[0].mxu0
        %v6699 = vadd.f32 0.0, %v6698
        %v6700 = vpop.f32.mrb[0].mxu0
        %6701 = vmatprep.mubr.f32.mxu0 0.0
        %6702 = vmatmul.mubr.f32.gmra.mrb[0].mxu0 %v6572
        %v6703 = vpop.f32.mrb[0].mxu0
        %v6704 = vadd.f32 0.0, %v6703
        %v6705 = vpop.f32.mrb[0].mxu0
        %6706 = vmatprep.mubr.f32.mxu0 0.0
        %6707 = vmatmul.mubr.f32.gmra.mrb[0].mxu0 %v6573
        %v6708 = vpop.f32.mrb[0].mxu0
        %v6709 = vadd.f32 0.0, %v6708
        %v6710 = vpop.f32.mrb[0].mxu0
        %6711 = vmatprep.mubr.f32.mxu0 0.0
        %6712 = vmatmul.mubr.f32.gmra.mrb[0].mxu0 %v6574
        %v6713 = vpop.f32.mrb[0].mxu0
        %v6714 = vadd.f32 0.0, %v6713
        %v6715 = vpop.f32.mrb[0].mxu0
        %6716 = vmatprep.mubr.f32.mxu0 0.0
        %6717 = vmatmul.mubr.f32.gmra.mrb[0].mxu0 %v6575
        %v6718 = vpop.f32.mrb[0].mxu0
        %v6719 = vadd.f32 0.0, %v6718
        %v6720 = vpop.f32.mrb[0].mxu0
        %6721 = vmatprep.mubr.f32.mxu0 0.0
        %6722 = vmatmul.mubr.f32.gmra.mrb[0].mxu0 %v6576
        %v6723 = vpop.f32.mrb[0].mxu0
        %v6724 = vadd.f32 0.0, %v6723
        %v6725 = vpop.f32.mrb[0].mxu0
        %6726 = vmatprep.mubr.f32.mxu0 0.0
        %6727 = vmatmul.mubr.f32.gmra.mrb[0].mxu0 %v6577
        %v6728 = vpop.f32.mrb[0].mxu0
        %v6729 = vadd.f32 0.0, %v6728
        %v6730 = vpop.f32.mrb[0].mxu0
        %6731 = vmatprep.mubr.f32.mxu0 0.0
        %6732 = vmatmul.mubr.f32.gmra.mrb[0].mxu0 %v6578
        %v6733 = vpop.f32.mrb[0].mxu0
        %v6734 = vadd.f32 0.0, %v6733
        %v6735 = vpop.f32.mrb[0].mxu0
        %6736 = vmatprep.mubr.f32.mxu0 0.0
        %6737 = vmatmul.mubr.f32.gmra.mrb[0].mxu0 %v6579
        %v6738 = vpop.f32.mrb[0].mxu0
        %v6739 = vadd.f32 0.0, %v6738
        %v6740 = vpop.f32.mrb[0].mxu0
        %6741 = vmatprep.mubr.f32.mxu0 0.0
        %6742 = vmatmul.mubr.f32.gmra.mrb[0].mxu0 %v6580
        %v6743 = vpop.f32.mrb[0].mxu0
        %v6744 = vadd.f32 0.0, %v6743
        %v6745 = vpop.f32.mrb[0].mxu0
        %6746 = vmatprep.mubr.f32.mxu0 0.0
        %6747 = vmatmul.mubr.f32.gmra.mrb[0].mxu0 %v6581
        %v6748 = vpop.f32.mrb[0].mxu0
        %v6749 = vadd.f32 0.0, %v6748
        %v6750 = vpop.f32.mrb[0].mxu0
        %6751 = vmatprep.mubr.f32.mxu0 0.0
        %6752 = vmatmul.mubr.f32.gmra.mrb[0].mxu0 %v6582
        %v6753 = vpop.f32.mrb[0].mxu0
        %v6754 = vadd.f32 0.0, %v6753
        %v6755 = vpop.f32.mrb[0].mxu0
        %6756 = vmatprep.mubr.f32.mxu0 0.0
        %6757 = vmatmul.mubr.f32.gmra.mrb[0].mxu0 %v6583
        %v6758 = vpop.f32.mrb[0].mxu0
        %v6759 = vadd.f32 0.0, %v6758
        %v6760 = vpop.f32.mrb[0].mxu0
        %6761 = vmatprep.mubr.f32.mxu0 0.0
        %6762 = vmatmul.mubr.f32.gmra.mrb[0].mxu0 %v6584
        %v6763 = vpop.f32.mrb[0].mxu0
        %v6764 = vadd.f32 0.0, %v6763
        %v6765 = vpop.f32.mrb[0].mxu0
        %6766 = vmatprep.mubr.f32.mxu0 0.0
        %6767 = vmatmul.mubr.f32.gmra.mrb[0].mxu0 %v6585
        %v6768 = vpop.f32.mrb[0].mxu0
        %v6769 = vadd.f32 0.0, %v6768
        %v6770 = vpop.f32.mrb[0].mxu0
        %6771 = vmatprep.mubr.f32.mxu0 0.0
        %6772 = vmatmul.mubr.f32.gmra.mrb[0].mxu0 %v6586
        %v6773 = vpop.f32.mrb[0].mxu0
        %v6774 = vadd.f32 0.0, %v6773
        %v6775 = vpop.f32.mrb[0].mxu0
        %6776 = vmatprep.mubr.f32.mxu0 0.0
        %6777 = vmatmul.mubr.f32.gmra.mrb[0].mxu0 %v6587
        %v6778 = vpop.f32.mrb[0].mxu0
        %v6779 = vadd.f32 0.0, %v6778
        %v6780 = vpop.f32.mrb[0].mxu0
        %6781 = vmatprep.mubr.f32.mxu0 0.0
        %6782 = vmatmul.mubr.f32.gmra.mrb[0].mxu0 %v6588
        %v6783 = vpop.f32.mrb[0].mxu0
        %v6784 = vadd.f32 0.0, %v6783
        %v6785 = vpop.f32.mrb[0].mxu0
        %6786 = vmatprep.mubr.f32.mxu0 0.0
        %6787 = vmatmul.mubr.f32.gmra.mrb[0].mxu0 %v6589
        %v6788 = vpop.f32.mrb[0].mxu0
        %v6789 = vadd.f32 0.0, %v6788
        %v6790 = vpop.f32.mrb[0].mxu0
        %6791 = vmatprep.mubr.f32.mxu0 0.0
        %6792 = vmatmul.mubr.f32.gmra.mrb[0].mxu0 %v6590
        %v6793 = vpop.f32.mrb[0].mxu0
        %v6794 = vadd.f32 0.0, %v6793
        %v6795 = vpop.f32.mrb[0].mxu0
        %6796 = vmatprep.mubr.f32.mxu0 0.0
        %6797 = vmatmul.mubr.f32.gmra.mrb[0].mxu0 %v6591
        %v6798 = vpop.f32.mrb[0].mxu0
        %v6799 = vadd.f32 0.0, %v6798
        %v6800 = vpop.f32.mrb[0].mxu0
        %6801 = vmatprep.mubr.f32.mxu0 0.0
        %6802 = vmatmul.mubr.f32.gmra.mrb[0].mxu0 %v6592
        %v6803 = vpop.f32.mrb[0].mxu0
        %v6804 = vadd.f32 0.0, %v6803
        %v6805 = vpop.f32.mrb[0].mxu0
        %6806 = vmatprep.mubr.f32.mxu0 0.0
        %6807 = vmatmul.mubr.f32.gmra.mrb[0].mxu0 %v6593
        %v6808 = vpop.f32.mrb[0].mxu0
        %v6809 = vadd.f32 0.0, %v6808
        %v6810 = vpop.f32.mrb[0].mxu0
        %6811 = vmatprep.mubr.f32.mxu0 0.0
        %6812 = vmatmul.mubr.f32.gmra.mrb[0].mxu0 %v6594
        %v6813 = vpop.f32.mrb[0].mxu0
        %v6814 = vadd.f32 0.0, %v6813
        %v6815 = vpop.f32.mrb[0].mxu0
        %6816 = vmatprep.mubr.f32.mxu0 0.0
        %6817 = vmatmul.mubr.f32.gmra.mrb[0].mxu0 %v6595
        %v6818 = vpop.f32.mrb[0].mxu0
        %v6819 = vadd.f32 0.0, %v6818
        %v6820 = vpop.f32.mrb[0].mxu0
        %6821 = vmatprep.mubr.f32.mxu0 0.0
        %6822 = vmatmul.mubr.f32.gmra.mrb[0].mxu0 %v6596
        %v6823 = vpop.f32.mrb[0].mxu0
        %v6824 = vadd.f32 0.0, %v6823
        %v6825 = vpop.f32.mrb[0].mxu0
        %6826 = vmatprep.mubr.f32.mxu0 0.0
        %6827 = vmatmul.mubr.f32.gmra.mrb[0].mxu0 %v6597
        %v6828 = vpop.f32.mrb[0].mxu0
        %v6829 = vadd.f32 0.0, %v6828
        %v6830 = vpop.f32.mrb[0].mxu0
        %6831 = vmatprep.mubr.f32.mxu0 0.0
        %6832 = vmatmul.mubr.f32.gmra.mrb[0].mxu0 %v6598
        %v6833 = vpop.f32.mrb[0].mxu0
        %v6834 = vadd.f32 0.0, %v6833
        %v6835 = vpop.f32.mrb[0].mxu0
        %6836 = vmatprep.mubr.f32.mxu0 0.0
        %6837 = vmatmul.mubr.f32.gmra.mrb[0].mxu0 %v6599
        %v6838 = vpop.f32.mrb[0].mxu0
        %v6839 = vadd.f32 0.0, %v6838
        %v6840 = vpop.f32.mrb[0].mxu0
        %6841 = vdwg.mxu0
        %v6842 = vld [vmem:[#allocation3] sm:$0xff]
        %v6843 = vld [vmem:[#allocation3 + $0x8] sm:$0xff]
        %v6844 = vld [vmem:[#allocation3 + $0x10] sm:$0xff]
        %v6845 = vld [vmem:[#allocation3 + $0x18] sm:$0xff]
        %v6846 = vld [vmem:[#allocation3 + $0x20] sm:$0xff]
        %v6847 = vld [vmem:[#allocation3 + $0x28] sm:$0xff]
        %v6848 = vld [vmem:[#allocation3 + $0x30] sm:$0xff]
        %v6849 = vld [vmem:[#allocation3 + $0x38] sm:$0xff]
        %v6850 = vld [vmem:[#allocation3 + $0x40] sm:$0xff]
        %v6851 = vld [vmem:[#allocation3 + $0x48] sm:$0xff]
        %v6852 = vld [vmem:[#allocation3 + $0x50] sm:$0xff]
        %v6853 = vld [vmem:[#allocation3 + $0x58] sm:$0xff]
        %v6854 = vld [vmem:[#allocation3 + $0x60] sm:$0xff]
        %v6855 = vld [vmem:[#allocation3 + $0x68] sm:$0xff]
        %v6856 = vld [vmem:[#allocation3 + $0x70] sm:$0xff]
        %v6857 = vld [vmem:[#allocation3 + $0x78] sm:$0xff]
        %v6858 = vld [vmem:[#allocation3 + $0x80] sm:$0xff]
        %v6859 = vld [vmem:[#allocation3 + $0x88] sm:$0xff]
        %v6860 = vld [vmem:[#allocation3 + $0x90] sm:$0xff]
        %v6861 = vld [vmem:[#allocation3 + $0x98] sm:$0xff]
        %v6862 = vld [vmem:[#allocation3 + $0xa0] sm:$0xff]
        %v6863 = vld [vmem:[#allocation3 + $0xa8] sm:$0xff]
        %v6864 = vld [vmem:[#allocation3 + $0xb0] sm:$0xff]
        %v6865 = vld [vmem:[#allocation3 + $0xb8] sm:$0xff]
        %v6866 = vld [vmem:[#allocation3 + $0xc0] sm:$0xff]
        %v6867 = vld [vmem:[#allocation3 + $0xc8] sm:$0xff]
        %v6868 = vld [vmem:[#allocation3 + $0xd0] sm:$0xff]
        %v6869 = vld [vmem:[#allocation3 + $0xd8] sm:$0xff]
        %v6870 = vld [vmem:[#allocation3 + $0xe0] sm:$0xff]
        %v6871 = vld [vmem:[#allocation3 + $0xe8] sm:$0xff]
        %v6872 = vld [vmem:[#allocation3 + $0xf0] sm:$0xff]
        %v6873 = vld [vmem:[#allocation3 + $0xf8] sm:$0xff]
        %v6874 = vadd.f32 %v6842, %v6684
        %v6875 = vadd.f32 %v6843, %v6689
        %v6876 = vadd.f32 %v6844, %v6694
        %v6877 = vadd.f32 %v6845, %v6699
        %v6878 = vadd.f32 %v6846, %v6704
        %v6879 = vadd.f32 %v6847, %v6709
        %v6880 = vadd.f32 %v6848, %v6714
        %v6881 = vadd.f32 %v6849, %v6719
        %v6882 = vadd.f32 %v6850, %v6724
        %v6883 = vadd.f32 %v6851, %v6729
        %v6884 = vadd.f32 %v6852, %v6734
        %v6885 = vadd.f32 %v6853, %v6739
        %v6886 = vadd.f32 %v6854, %v6744
        %v6887 = vadd.f32 %v6855, %v6749
        %v6888 = vadd.f32 %v6856, %v6754
        %v6889 = vadd.f32 %v6857, %v6759
        %v6890 = vadd.f32 %v6858, %v6764
        %v6891 = vadd.f32 %v6859, %v6769
        %v6892 = vadd.f32 %v6860, %v6774
        %v6893 = vadd.f32 %v6861, %v6779
        %v6894 = vadd.f32 %v6862, %v6784
        %v6895 = vadd.f32 %v6863, %v6789
        %v6896 = vadd.f32 %v6864, %v6794
        %v6897 = vadd.f32 %v6865, %v6799
        %v6898 = vadd.f32 %v6866, %v6804
        %v6899 = vadd.f32 %v6867, %v6809
        %v6900 = vadd.f32 %v6868, %v6814
        %v6901 = vadd.f32 %v6869, %v6819
        %v6902 = vadd.f32 %v6870, %v6824
        %v6903 = vadd.f32 %v6871, %v6829
        %v6904 = vadd.f32 %v6872, %v6834
        %v6905 = vadd.f32 %v6873, %v6839
        %6906 = vst [vmem:[#allocation3] sm:$0xff] %v6874
        %6907 = vst [vmem:[#allocation3 + $0x8] sm:$0xff] %v6875
        %6908 = vst [vmem:[#allocation3 + $0x10] sm:$0xff] %v6876
        %6909 = vst [vmem:[#allocation3 + $0x18] sm:$0xff] %v6877
        %6910 = vst [vmem:[#allocation3 + $0x20] sm:$0xff] %v6878
        %6911 = vst [vmem:[#allocation3 + $0x28] sm:$0xff] %v6879
        %6912 = vst [vmem:[#allocation3 + $0x30] sm:$0xff] %v6880
        %6913 = vst [vmem:[#allocation3 + $0x38] sm:$0xff] %v6881
        %6914 = vst [vmem:[#allocation3 + $0x40] sm:$0xff] %v6882
        %6915 = vst [vmem:[#allocation3 + $0x48] sm:$0xff] %v6883
        %6916 = vst [vmem:[#allocation3 + $0x50] sm:$0xff] %v6884
        %6917 = vst [vmem:[#allocation3 + $0x58] sm:$0xff] %v6885
        %6918 = vst [vmem:[#allocation3 + $0x60] sm:$0xff] %v6886
        %6919 = vst [vmem:[#allocation3 + $0x68] sm:$0xff] %v6887
        %6920 = vst [vmem:[#allocation3 + $0x70] sm:$0xff] %v6888
        %6921 = vst [vmem:[#allocation3 + $0x78] sm:$0xff] %v6889
        %6922 = vst [vmem:[#allocation3 + $0x80] sm:$0xff] %v6890
        %6923 = vst [vmem:[#allocation3 + $0x88] sm:$0xff] %v6891
        %6924 = vst [vmem:[#allocation3 + $0x90] sm:$0xff] %v6892
        %6925 = vst [vmem:[#allocation3 + $0x98] sm:$0xff] %v6893
        %6926 = vst [vmem:[#allocation3 + $0xa0] sm:$0xff] %v6894
        %6927 = vst [vmem:[#allocation3 + $0xa8] sm:$0xff] %v6895
        %6928 = vst [vmem:[#allocation3 + $0xb0] sm:$0xff] %v6896
        %6929 = vst [vmem:[#allocation3 + $0xb8] sm:$0xff] %v6897
        %6930 = vst [vmem:[#allocation3 + $0xc0] sm:$0xff] %v6898
        %6931 = vst [vmem:[#allocation3 + $0xc8] sm:$0xff] %v6899
        %6932 = vst [vmem:[#allocation3 + $0xd0] sm:$0xff] %v6900
        %6933 = vst [vmem:[#allocation3 + $0xd8] sm:$0xff] %v6901
        %6934 = vst [vmem:[#allocation3 + $0xe0] sm:$0xff] %v6902
        %6935 = vst [vmem:[#allocation3 + $0xe8] sm:$0xff] %v6903
        %6936 = vst [vmem:[#allocation3 + $0xf0] sm:$0xff] %v6904
        %6937 = vst [vmem:[#allocation3 + $0xf8] sm:$0xff] %v6905
        %v6938 = vld [vmem:[%s6197 + $0x2] sm:$0xff]
        %v6939 = vld [vmem:[%s6197 + $0xa] sm:$0xff]
        %v6940 = vld [vmem:[%s6197 + $0x1a] sm:$0xff]
        %v6941 = vld [vmem:[%s6197 + $0x22] sm:$0xff]
        %v6942 = vld [vmem:[%s6197 + $0x32] sm:$0xff]
        %v6943 = vld [vmem:[%s6197 + $0x3a] sm:$0xff]
        %v6944 = vld [vmem:[%s6197 + $0x4a] sm:$0xff]
        %v6945 = vld [vmem:[%s6197 + $0x52] sm:$0xff]
        %v6946 = vld [vmem:[%s6197 + $0x62] sm:$0xff]
        %v6947 = vld [vmem:[%s6197 + $0x6a] sm:$0xff]
        %v6948 = vld [vmem:[%s6197 + $0x7a] sm:$0xff]
        %v6949 = vld [vmem:[%s6197 + $0x82] sm:$0xff]
        %v6950 = vld [vmem:[%s6197 + $0x92] sm:$0xff]
        %v6951 = vld [vmem:[%s6197 + $0x9a] sm:$0xff]
        %v6952 = vld [vmem:[%s6197 + $0xaa] sm:$0xff]
        %v6953 = vld [vmem:[%s6197 + $0xb2] sm:$0xff]
        %v6954 = vld [vmem:[%s6197 + $0xc2] sm:$0xff]
        %v6955 = vld [vmem:[%s6197 + $0xca] sm:$0xff]
        %v6956 = vld [vmem:[%s6197 + $0xda] sm:$0xff]
        %v6957 = vld [vmem:[%s6197 + $0xe2] sm:$0xff]
        %v6958 = vld [vmem:[%s6197 + $0xf2] sm:$0xff]
        %v6959 = vld [vmem:[%s6197 + $0xfa] sm:$0xff]
        %v6960 = vld [vmem:[%s6197 + $0x10a] sm:$0xff]
        %v6961 = vld [vmem:[%s6197 + $0x112] sm:$0xff]
        %v6962 = vld [vmem:[%s6197 + $0x122] sm:$0xff]
        %v6963 = vld [vmem:[%s6197 + $0x12a] sm:$0xff]
        %v6964 = vld [vmem:[%s6197 + $0x13a] sm:$0xff]
        %v6965 = vld [vmem:[%s6197 + $0x142] sm:$0xff]
        %v6966 = vld [vmem:[%s6197 + $0x152] sm:$0xff]
        %v6967 = vld [vmem:[%s6197 + $0x15a] sm:$0xff]
        %v6968 = vld [vmem:[%s6197 + $0x16a] sm:$0xff]
        %v6969 = vld [vmem:[%s6197 + $0x172] sm:$0xff]
        %s6970 = scalar_lea.vmem [#allocation4], 1024
        %v6971 = vld [vmem:[%s6970] sm:$0xff]
        %v6972 = vld [vmem:[%s6970 + $0x8] sm:$0xff]
        %v6973 = vld [vmem:[%s6970 + $0x10] sm:$0xff]
        %v6974 = vld [vmem:[%s6970 + $0x18] sm:$0xff]
        %v6975 = vld [vmem:[%s6970 + $0x20] sm:$0xff]
        %v6976 = vld [vmem:[%s6970 + $0x28] sm:$0xff]
        %v6977 = vld [vmem:[%s6970 + $0x30] sm:$0xff]
        %v6978 = vld [vmem:[%s6970 + $0x38] sm:$0xff]
        %v6979 = vld [vmem:[%s6970 + $0x40] sm:$0xff]
        %v6980 = vld [vmem:[%s6970 + $0x48] sm:$0xff]
        %v6981 = vld [vmem:[%s6970 + $0x50] sm:$0xff]
        %v6982 = vld [vmem:[%s6970 + $0x58] sm:$0xff]
        %v6983 = vld [vmem:[%s6970 + $0x60] sm:$0xff]
        %v6984 = vld [vmem:[%s6970 + $0x68] sm:$0xff]
        %v6985 = vld [vmem:[%s6970 + $0x70] sm:$0xff]
        %v6986 = vld [vmem:[%s6970 + $0x78] sm:$0xff]
        %6987 = vmatprep.subr.mxu0 0.0
        %6988 = vmatpush1.msra.mxu0 %v6971
        %6989 = vmatprep.subr.mxu0 0.0
        %6990 = vmatpush1.msra.mxu0 %v6972
        %6991 = vmatprep.subr.mxu0 0.0
        %6992 = vmatpush1.msra.mxu0 %v6973
        %6993 = vmatprep.subr.mxu0 0.0
        %6994 = vmatpush1.msra.mxu0 %v6974
        %6995 = vmatprep.subr.mxu0 0.0
        %6996 = vmatpush1.msra.mxu0 %v6975
        %6997 = vmatprep.subr.mxu0 0.0
        %6998 = vmatpush1.msra.mxu0 %v6976
        %6999 = vmatprep.subr.mxu0 0.0
        %7000 = vmatpush1.msra.mxu0 %v6977
        %7001 = vmatprep.subr.mxu0 0.0
        %7002 = vmatpush1.msra.mxu0 %v6978
        %7003 = vmatprep.subr.mxu0 0.0
        %7004 = vmatpush1.msra.mxu0 %v6979
        %7005 = vmatprep.subr.mxu0 0.0
        %7006 = vmatpush1.msra.mxu0 %v6980
        %7007 = vmatprep.subr.mxu0 0.0
        %7008 = vmatpush1.msra.mxu0 %v6981
        %7009 = vmatprep.subr.mxu0 0.0
        %7010 = vmatpush1.msra.mxu0 %v6982
        %7011 = vmatprep.subr.mxu0 0.0
        %7012 = vmatpush1.msra.mxu0 %v6983
        %7013 = vmatprep.subr.mxu0 0.0
        %7014 = vmatpush1.msra.mxu0 %v6984
        %7015 = vmatprep.subr.mxu0 0.0
        %7016 = vmatpush1.msra.mxu0 %v6985
        %7017 = vmatprep.subr.mxu0 0.0
        %7018 = vmatpush1.msra.mxu0 %v6986
        %7019 = vmatprep.subr.mxu0 0.0
        %7020 = vmatpush1.msra.mxu0 0.0
        %7021 = vmatprep.subr.mxu0 0.0
        %7022 = vmatpush1.msra.mxu0 0.0
        %7023 = vmatprep.subr.mxu0 0.0
        %7024 = vmatpush1.msra.mxu0 0.0
        %7025 = vmatprep.subr.mxu0 0.0
        %7026 = vmatpush1.msra.mxu0 0.0
        %7027 = vmatprep.subr.mxu0 0.0
        %7028 = vmatpush1.msra.mxu0 0.0
        %7029 = vmatprep.subr.mxu0 0.0
        %7030 = vmatpush1.msra.mxu0 0.0
        %7031 = vmatprep.subr.mxu0 0.0
        %7032 = vmatpush1.msra.mxu0 0.0
        %7033 = vmatprep.subr.mxu0 0.0
        %7034 = vmatpush1.msra.mxu0 0.0
        %7035 = vmatprep.subr.mxu0 0.0
        %7036 = vmatpush1.msra.mxu0 0.0
        %7037 = vmatprep.subr.mxu0 0.0
        %7038 = vmatpush1.msra.mxu0 0.0
        %7039 = vmatprep.subr.mxu0 0.0
        %7040 = vmatpush1.msra.mxu0 0.0
        %7041 = vmatprep.subr.mxu0 0.0
        %7042 = vmatpush1.msra.mxu0 0.0
        %7043 = vmatprep.subr.mxu0 0.0
        %7044 = vmatpush1.msra.mxu0 0.0
        %7045 = vmatprep.subr.mxu0 0.0
        %7046 = vmatpush1.msra.mxu0 0.0
        %7047 = vmatprep.subr.mxu0 0.0
        %7048 = vmatpush1.msra.mxu0 0.0
        %7049 = vmatprep.subr.mxu0 0.0
        %7050 = vmatpush1.msra.mxu0 0.0
        %7051 = vmatprep.mubr.f32.mxu0 0.0
        %7052 = vmatmul.mubr.f32.gmra.mrb[0].mxu0 %v6938
        %v7053 = vpop.f32.mrb[0].mxu0
        %v7054 = vadd.f32 0.0, %v7053
        %v7055 = vpop.f32.mrb[0].mxu0
        %7056 = vmatprep.mubr.f32.mxu0 0.0
        %7057 = vmatmul.mubr.f32.gmra.mrb[0].mxu0 %v6939
        %v7058 = vpop.f32.mrb[0].mxu0
        %v7059 = vadd.f32 0.0, %v7058
        %v7060 = vpop.f32.mrb[0].mxu0
        %7061 = vmatprep.mubr.f32.mxu0 0.0
        %7062 = vmatmul.mubr.f32.gmra.mrb[0].mxu0 %v6940
        %v7063 = vpop.f32.mrb[0].mxu0
        %v7064 = vadd.f32 0.0, %v7063
        %v7065 = vpop.f32.mrb[0].mxu0
        %7066 = vmatprep.mubr.f32.mxu0 0.0
        %7067 = vmatmul.mubr.f32.gmra.mrb[0].mxu0 %v6941
        %v7068 = vpop.f32.mrb[0].mxu0
        %v7069 = vadd.f32 0.0, %v7068
        %v7070 = vpop.f32.mrb[0].mxu0
        %7071 = vmatprep.mubr.f32.mxu0 0.0
        %7072 = vmatmul.mubr.f32.gmra.mrb[0].mxu0 %v6942
        %v7073 = vpop.f32.mrb[0].mxu0
        %v7074 = vadd.f32 0.0, %v7073
        %v7075 = vpop.f32.mrb[0].mxu0
        %7076 = vmatprep.mubr.f32.mxu0 0.0
        %7077 = vmatmul.mubr.f32.gmra.mrb[0].mxu0 %v6943
        %v7078 = vpop.f32.mrb[0].mxu0
        %v7079 = vadd.f32 0.0, %v7078
        %v7080 = vpop.f32.mrb[0].mxu0
        %7081 = vmatprep.mubr.f32.mxu0 0.0
        %7082 = vmatmul.mubr.f32.gmra.mrb[0].mxu0 %v6944
        %v7083 = vpop.f32.mrb[0].mxu0
        %v7084 = vadd.f32 0.0, %v7083
        %v7085 = vpop.f32.mrb[0].mxu0
        %7086 = vmatprep.mubr.f32.mxu0 0.0
        %7087 = vmatmul.mubr.f32.gmra.mrb[0].mxu0 %v6945
        %v7088 = vpop.f32.mrb[0].mxu0
        %v7089 = vadd.f32 0.0, %v7088
        %v7090 = vpop.f32.mrb[0].mxu0
        %7091 = vmatprep.mubr.f32.mxu0 0.0
        %7092 = vmatmul.mubr.f32.gmra.mrb[0].mxu0 %v6946
        %v7093 = vpop.f32.mrb[0].mxu0
        %v7094 = vadd.f32 0.0, %v7093
        %v7095 = vpop.f32.mrb[0].mxu0
        %7096 = vmatprep.mubr.f32.mxu0 0.0
        %7097 = vmatmul.mubr.f32.gmra.mrb[0].mxu0 %v6947
        %v7098 = vpop.f32.mrb[0].mxu0
        %v7099 = vadd.f32 0.0, %v7098
        %v7100 = vpop.f32.mrb[0].mxu0
        %7101 = vmatprep.mubr.f32.mxu0 0.0
        %7102 = vmatmul.mubr.f32.gmra.mrb[0].mxu0 %v6948
        %v7103 = vpop.f32.mrb[0].mxu0
        %v7104 = vadd.f32 0.0, %v7103
        %v7105 = vpop.f32.mrb[0].mxu0
        %7106 = vmatprep.mubr.f32.mxu0 0.0
        %7107 = vmatmul.mubr.f32.gmra.mrb[0].mxu0 %v6949
        %v7108 = vpop.f32.mrb[0].mxu0
        %v7109 = vadd.f32 0.0, %v7108
        %v7110 = vpop.f32.mrb[0].mxu0
        %7111 = vmatprep.mubr.f32.mxu0 0.0
        %7112 = vmatmul.mubr.f32.gmra.mrb[0].mxu0 %v6950
        %v7113 = vpop.f32.mrb[0].mxu0
        %v7114 = vadd.f32 0.0, %v7113
        %v7115 = vpop.f32.mrb[0].mxu0
        %7116 = vmatprep.mubr.f32.mxu0 0.0
        %7117 = vmatmul.mubr.f32.gmra.mrb[0].mxu0 %v6951
        %v7118 = vpop.f32.mrb[0].mxu0
        %v7119 = vadd.f32 0.0, %v7118
        %v7120 = vpop.f32.mrb[0].mxu0
        %7121 = vmatprep.mubr.f32.mxu0 0.0
        %7122 = vmatmul.mubr.f32.gmra.mrb[0].mxu0 %v6952
        %v7123 = vpop.f32.mrb[0].mxu0
        %v7124 = vadd.f32 0.0, %v7123
        %v7125 = vpop.f32.mrb[0].mxu0
        %7126 = vmatprep.mubr.f32.mxu0 0.0
        %7127 = vmatmul.mubr.f32.gmra.mrb[0].mxu0 %v6953
        %v7128 = vpop.f32.mrb[0].mxu0
        %v7129 = vadd.f32 0.0, %v7128
        %v7130 = vpop.f32.mrb[0].mxu0
        %7131 = vmatprep.mubr.f32.mxu0 0.0
        %7132 = vmatmul.mubr.f32.gmra.mrb[0].mxu0 %v6954
        %v7133 = vpop.f32.mrb[0].mxu0
        %v7134 = vadd.f32 0.0, %v7133
        %v7135 = vpop.f32.mrb[0].mxu0
        %7136 = vmatprep.mubr.f32.mxu0 0.0
        %7137 = vmatmul.mubr.f32.gmra.mrb[0].mxu0 %v6955
        %v7138 = vpop.f32.mrb[0].mxu0
        %v7139 = vadd.f32 0.0, %v7138
        %v7140 = vpop.f32.mrb[0].mxu0
        %7141 = vmatprep.mubr.f32.mxu0 0.0
        %7142 = vmatmul.mubr.f32.gmra.mrb[0].mxu0 %v6956
        %v7143 = vpop.f32.mrb[0].mxu0
        %v7144 = vadd.f32 0.0, %v7143
        %v7145 = vpop.f32.mrb[0].mxu0
        %7146 = vmatprep.mubr.f32.mxu0 0.0
        %7147 = vmatmul.mubr.f32.gmra.mrb[0].mxu0 %v6957
        %v7148 = vpop.f32.mrb[0].mxu0
        %v7149 = vadd.f32 0.0, %v7148
        %v7150 = vpop.f32.mrb[0].mxu0
        %7151 = vmatprep.mubr.f32.mxu0 0.0
        %7152 = vmatmul.mubr.f32.gmra.mrb[0].mxu0 %v6958
        %v7153 = vpop.f32.mrb[0].mxu0
        %v7154 = vadd.f32 0.0, %v7153
        %v7155 = vpop.f32.mrb[0].mxu0
        %7156 = vmatprep.mubr.f32.mxu0 0.0
        %7157 = vmatmul.mubr.f32.gmra.mrb[0].mxu0 %v6959
        %v7158 = vpop.f32.mrb[0].mxu0
        %v7159 = vadd.f32 0.0, %v7158
        %v7160 = vpop.f32.mrb[0].mxu0
        %7161 = vmatprep.mubr.f32.mxu0 0.0
        %7162 = vmatmul.mubr.f32.gmra.mrb[0].mxu0 %v6960
        %v7163 = vpop.f32.mrb[0].mxu0
        %v7164 = vadd.f32 0.0, %v7163
        %v7165 = vpop.f32.mrb[0].mxu0
        %7166 = vmatprep.mubr.f32.mxu0 0.0
        %7167 = vmatmul.mubr.f32.gmra.mrb[0].mxu0 %v6961
        %v7168 = vpop.f32.mrb[0].mxu0
        %v7169 = vadd.f32 0.0, %v7168
        %v7170 = vpop.f32.mrb[0].mxu0
        %7171 = vmatprep.mubr.f32.mxu0 0.0
        %7172 = vmatmul.mubr.f32.gmra.mrb[0].mxu0 %v6962
        %v7173 = vpop.f32.mrb[0].mxu0
        %v7174 = vadd.f32 0.0, %v7173
        %v7175 = vpop.f32.mrb[0].mxu0
        %7176 = vmatprep.mubr.f32.mxu0 0.0
        %7177 = vmatmul.mubr.f32.gmra.mrb[0].mxu0 %v6963
        %v7178 = vpop.f32.mrb[0].mxu0
        %v7179 = vadd.f32 0.0, %v7178
        %v7180 = vpop.f32.mrb[0].mxu0
        %7181 = vmatprep.mubr.f32.mxu0 0.0
        %7182 = vmatmul.mubr.f32.gmra.mrb[0].mxu0 %v6964
        %v7183 = vpop.f32.mrb[0].mxu0
        %v7184 = vadd.f32 0.0, %v7183
        %v7185 = vpop.f32.mrb[0].mxu0
        %7186 = vmatprep.mubr.f32.mxu0 0.0
        %7187 = vmatmul.mubr.f32.gmra.mrb[0].mxu0 %v6965
        %v7188 = vpop.f32.mrb[0].mxu0
        %v7189 = vadd.f32 0.0, %v7188
        %v7190 = vpop.f32.mrb[0].mxu0
        %7191 = vmatprep.mubr.f32.mxu0 0.0
        %7192 = vmatmul.mubr.f32.gmra.mrb[0].mxu0 %v6966
        %v7193 = vpop.f32.mrb[0].mxu0
        %v7194 = vadd.f32 0.0, %v7193
        %v7195 = vpop.f32.mrb[0].mxu0
        %7196 = vmatprep.mubr.f32.mxu0 0.0
        %7197 = vmatmul.mubr.f32.gmra.mrb[0].mxu0 %v6967
        %v7198 = vpop.f32.mrb[0].mxu0
        %v7199 = vadd.f32 0.0, %v7198
        %v7200 = vpop.f32.mrb[0].mxu0
        %7201 = vmatprep.mubr.f32.mxu0 0.0
        %7202 = vmatmul.mubr.f32.gmra.mrb[0].mxu0 %v6968
        %v7203 = vpop.f32.mrb[0].mxu0
        %v7204 = vadd.f32 0.0, %v7203
        %v7205 = vpop.f32.mrb[0].mxu0
        %7206 = vmatprep.mubr.f32.mxu0 0.0
        %7207 = vmatmul.mubr.f32.gmra.mrb[0].mxu0 %v6969
        %v7208 = vpop.f32.mrb[0].mxu0
        %v7209 = vadd.f32 0.0, %v7208
        %v7210 = vpop.f32.mrb[0].mxu0
        %7211 = vdwg.mxu0
        %v7212 = vld [vmem:[#allocation3] sm:$0xff]
        %v7213 = vld [vmem:[#allocation3 + $0x8] sm:$0xff]
        %v7214 = vld [vmem:[#allocation3 + $0x10] sm:$0xff]
        %v7215 = vld [vmem:[#allocation3 + $0x18] sm:$0xff]
        %v7216 = vld [vmem:[#allocation3 + $0x20] sm:$0xff]
        %v7217 = vld [vmem:[#allocation3 + $0x28] sm:$0xff]
        %v7218 = vld [vmem:[#allocation3 + $0x30] sm:$0xff]
        %v7219 = vld [vmem:[#allocation3 + $0x38] sm:$0xff]
        %v7220 = vld [vmem:[#allocation3 + $0x40] sm:$0xff]
        %v7221 = vld [vmem:[#allocation3 + $0x48] sm:$0xff]
        %v7222 = vld [vmem:[#allocation3 + $0x50] sm:$0xff]
        %v7223 = vld [vmem:[#allocation3 + $0x58] sm:$0xff]
        %v7224 = vld [vmem:[#allocation3 + $0x60] sm:$0xff]
        %v7225 = vld [vmem:[#allocation3 + $0x68] sm:$0xff]
        %v7226 = vld [vmem:[#allocation3 + $0x70] sm:$0xff]
        %v7227 = vld [vmem:[#allocation3 + $0x78] sm:$0xff]
        %v7228 = vld [vmem:[#allocation3 + $0x80] sm:$0xff]
        %v7229 = vld [vmem:[#allocation3 + $0x88] sm:$0xff]
        %v7230 = vld [vmem:[#allocation3 + $0x90] sm:$0xff]
        %v7231 = vld [vmem:[#allocation3 + $0x98] sm:$0xff]
        %v7232 = vld [vmem:[#allocation3 + $0xa0] sm:$0xff]
        %v7233 = vld [vmem:[#allocation3 + $0xa8] sm:$0xff]
        %v7234 = vld [vmem:[#allocation3 + $0xb0] sm:$0xff]
        %v7235 = vld [vmem:[#allocation3 + $0xb8] sm:$0xff]
        %v7236 = vld [vmem:[#allocation3 + $0xc0] sm:$0xff]
        %v7237 = vld [vmem:[#allocation3 + $0xc8] sm:$0xff]
        %v7238 = vld [vmem:[#allocation3 + $0xd0] sm:$0xff]
        %v7239 = vld [vmem:[#allocation3 + $0xd8] sm:$0xff]
        %v7240 = vld [vmem:[#allocation3 + $0xe0] sm:$0xff]
        %v7241 = vld [vmem:[#allocation3 + $0xe8] sm:$0xff]
        %v7242 = vld [vmem:[#allocation3 + $0xf0] sm:$0xff]
        %v7243 = vld [vmem:[#allocation3 + $0xf8] sm:$0xff]
        %v7244 = vadd.f32 %v7212, %v7054
        %v7245 = vadd.f32 %v7213, %v7059
        %v7246 = vadd.f32 %v7214, %v7064
        %v7247 = vadd.f32 %v7215, %v7069
        %v7248 = vadd.f32 %v7216, %v7074
        %v7249 = vadd.f32 %v7217, %v7079
        %v7250 = vadd.f32 %v7218, %v7084
        %v7251 = vadd.f32 %v7219, %v7089
        %v7252 = vadd.f32 %v7220, %v7094
        %v7253 = vadd.f32 %v7221, %v7099
        %v7254 = vadd.f32 %v7222, %v7104
        %v7255 = vadd.f32 %v7223, %v7109
        %v7256 = vadd.f32 %v7224, %v7114
        %v7257 = vadd.f32 %v7225, %v7119
        %v7258 = vadd.f32 %v7226, %v7124
        %v7259 = vadd.f32 %v7227, %v7129
        %v7260 = vadd.f32 %v7228, %v7134
        %v7261 = vadd.f32 %v7229, %v7139
        %v7262 = vadd.f32 %v7230, %v7144
        %v7263 = vadd.f32 %v7231, %v7149
        %v7264 = vadd.f32 %v7232, %v7154
        %v7265 = vadd.f32 %v7233, %v7159
        %v7266 = vadd.f32 %v7234, %v7164
        %v7267 = vadd.f32 %v7235, %v7169
        %v7268 = vadd.f32 %v7236, %v7174
        %v7269 = vadd.f32 %v7237, %v7179
        %v7270 = vadd.f32 %v7238, %v7184
        %v7271 = vadd.f32 %v7239, %v7189
        %v7272 = vadd.f32 %v7240, %v7194
        %v7273 = vadd.f32 %v7241, %v7199
        %v7274 = vadd.f32 %v7242, %v7204
        %v7275 = vadd.f32 %v7243, %v7209
        %7276 = vst [vmem:[#allocation3] sm:$0xff] %v7244
        %7277 = vst [vmem:[#allocation3 + $0x8] sm:$0xff] %v7245
        %7278 = vst [vmem:[#allocation3 + $0x10] sm:$0xff] %v7246
        %7279 = vst [vmem:[#allocation3 + $0x18] sm:$0xff] %v7247
        %7280 = vst [vmem:[#allocation3 + $0x20] sm:$0xff] %v7248
        %7281 = vst [vmem:[#allocation3 + $0x28] sm:$0xff] %v7249
        %7282 = vst [vmem:[#allocation3 + $0x30] sm:$0xff] %v7250
        %7283 = vst [vmem:[#allocation3 + $0x38] sm:$0xff] %v7251
        %7284 = vst [vmem:[#allocation3 + $0x40] sm:$0xff] %v7252
        %7285 = vst [vmem:[#allocation3 + $0x48] sm:$0xff] %v7253
        %7286 = vst [vmem:[#allocation3 + $0x50] sm:$0xff] %v7254
        %7287 = vst [vmem:[#allocation3 + $0x58] sm:$0xff] %v7255
        %7288 = vst [vmem:[#allocation3 + $0x60] sm:$0xff] %v7256
        %7289 = vst [vmem:[#allocation3 + $0x68] sm:$0xff] %v7257
        %7290 = vst [vmem:[#allocation3 + $0x70] sm:$0xff] %v7258
        %7291 = vst [vmem:[#allocation3 + $0x78] sm:$0xff] %v7259
        %7292 = vst [vmem:[#allocation3 + $0x80] sm:$0xff] %v7260
        %7293 = vst [vmem:[#allocation3 + $0x88] sm:$0xff] %v7261
        %7294 = vst [vmem:[#allocation3 + $0x90] sm:$0xff] %v7262
        %7295 = vst [vmem:[#allocation3 + $0x98] sm:$0xff] %v7263
        %7296 = vst [vmem:[#allocation3 + $0xa0] sm:$0xff] %v7264
        %7297 = vst [vmem:[#allocation3 + $0xa8] sm:$0xff] %v7265
        %7298 = vst [vmem:[#allocation3 + $0xb0] sm:$0xff] %v7266
        %7299 = vst [vmem:[#allocation3 + $0xb8] sm:$0xff] %v7267
        %7300 = vst [vmem:[#allocation3 + $0xc0] sm:$0xff] %v7268
        %7301 = vst [vmem:[#allocation3 + $0xc8] sm:$0xff] %v7269
        %7302 = vst [vmem:[#allocation3 + $0xd0] sm:$0xff] %v7270
        %7303 = vst [vmem:[#allocation3 + $0xd8] sm:$0xff] %v7271
        %7304 = vst [vmem:[#allocation3 + $0xe0] sm:$0xff] %v7272
        %7305 = vst [vmem:[#allocation3 + $0xe8] sm:$0xff] %v7273
        %7306 = vst [vmem:[#allocation3 + $0xf0] sm:$0xff] %v7274
        %7307 = vst [vmem:[#allocation3 + $0xf8] sm:$0xff] %v7275
        %v7308 = vld [vmem:[#allocation3] sm:$0xff]
        %v7309 = vld [vmem:[#allocation3 + $0x8] sm:$0xff]
        %v7310 = vld [vmem:[#allocation3 + $0x10] sm:$0xff]
        %v7311 = vld [vmem:[#allocation3 + $0x18] sm:$0xff]
        %v7312 = vld [vmem:[#allocation3 + $0x20] sm:$0xff]
        %v7313 = vld [vmem:[#allocation3 + $0x28] sm:$0xff]
        %v7314 = vld [vmem:[#allocation3 + $0x30] sm:$0xff]
        %v7315 = vld [vmem:[#allocation3 + $0x38] sm:$0xff]
        %v7316 = vld [vmem:[#allocation3 + $0x40] sm:$0xff]
        %v7317 = vld [vmem:[#allocation3 + $0x48] sm:$0xff]
        %v7318 = vld [vmem:[#allocation3 + $0x50] sm:$0xff]
        %v7319 = vld [vmem:[#allocation3 + $0x58] sm:$0xff]
        %v7320 = vld [vmem:[#allocation3 + $0x60] sm:$0xff]
        %v7321 = vld [vmem:[#allocation3 + $0x68] sm:$0xff]
        %v7322 = vld [vmem:[#allocation3 + $0x70] sm:$0xff]
        %v7323 = vld [vmem:[#allocation3 + $0x78] sm:$0xff]
        %v7324 = vld [vmem:[#allocation3 + $0x80] sm:$0xff]
        %v7325 = vld [vmem:[#allocation3 + $0x88] sm:$0xff]
        %v7326 = vld [vmem:[#allocation3 + $0x90] sm:$0xff]
        %v7327 = vld [vmem:[#allocation3 + $0x98] sm:$0xff]
        %v7328 = vld [vmem:[#allocation3 + $0xa0] sm:$0xff]
        %v7329 = vld [vmem:[#allocation3 + $0xa8] sm:$0xff]
        %v7330 = vld [vmem:[#allocation3 + $0xb0] sm:$0xff]
        %v7331 = vld [vmem:[#allocation3 + $0xb8] sm:$0xff]
        %v7332 = vld [vmem:[#allocation3 + $0xc0] sm:$0xff]
        %v7333 = vld [vmem:[#allocation3 + $0xc8] sm:$0xff]
        %v7334 = vld [vmem:[#allocation3 + $0xd0] sm:$0xff]
        %v7335 = vld [vmem:[#allocation3 + $0xd8] sm:$0xff]
        %v7336 = vld [vmem:[#allocation3 + $0xe0] sm:$0xff]
        %v7337 = vld [vmem:[#allocation3 + $0xe8] sm:$0xff]
        %v7338 = vld [vmem:[#allocation3 + $0xf0] sm:$0xff]
        %v7339 = vld [vmem:[#allocation3 + $0xf8] sm:$0xff]
        %v7340 = vld [vmem:[%s4] sm:$0x1]
        %v7342 = vlaneseq
        %v7343 = vshrl.u32 %v7342, 7
        %v7344 = vsub.s32 0, %v7343
        %v7345 = vrot.slane %v7340, %v7344
        %v7347 = vadd.f32 %v7308, %v7345
        %v7348 = vadd.f32 %v7309, %v7345
        %v7349 = vadd.f32 %v7310, %v7345
        %v7350 = vadd.f32 %v7311, %v7345
        %v7351 = vadd.f32 %v7312, %v7345
        %v7352 = vadd.f32 %v7313, %v7345
        %v7353 = vadd.f32 %v7314, %v7345
        %v7354 = vadd.f32 %v7315, %v7345
        %v7355 = vadd.f32 %v7316, %v7345
        %v7356 = vadd.f32 %v7317, %v7345
        %v7357 = vadd.f32 %v7318, %v7345
        %v7358 = vadd.f32 %v7319, %v7345
        %v7359 = vadd.f32 %v7320, %v7345
        %v7360 = vadd.f32 %v7321, %v7345
        %v7361 = vadd.f32 %v7322, %v7345
        %v7362 = vadd.f32 %v7323, %v7345
        %v7363 = vadd.f32 %v7324, %v7345
        %v7364 = vadd.f32 %v7325, %v7345
        %v7365 = vadd.f32 %v7326, %v7345
        %v7366 = vadd.f32 %v7327, %v7345
        %v7367 = vadd.f32 %v7328, %v7345
        %v7368 = vadd.f32 %v7329, %v7345
        %v7369 = vadd.f32 %v7330, %v7345
        %v7370 = vadd.f32 %v7331, %v7345
        %v7371 = vadd.f32 %v7332, %v7345
        %v7372 = vadd.f32 %v7333, %v7345
        %v7373 = vadd.f32 %v7334, %v7345
        %v7374 = vadd.f32 %v7335, %v7345
        %v7375 = vadd.f32 %v7336, %v7345
        %v7376 = vadd.f32 %v7337, %v7345
        %v7377 = vadd.f32 %v7338, %v7345
        %v7378 = vadd.f32 %v7339, %v7345
        %7379 = vst [vmem:[%s246] sm:$0xff] %v7347
        %7380 = vst [vmem:[%s246 + $0x8] sm:$0xff] %v7348
        %7381 = vst [vmem:[%s246 + $0x10] sm:$0xff] %v7349
        %7382 = vst [vmem:[%s246 + $0x18] sm:$0xff] %v7350
        %7383 = vst [vmem:[%s246 + $0x20] sm:$0xff] %v7351
        %7384 = vst [vmem:[%s246 + $0x28] sm:$0xff] %v7352
        %7385 = vst [vmem:[%s246 + $0x30] sm:$0xff] %v7353
        %7386 = vst [vmem:[%s246 + $0x38] sm:$0xff] %v7354
        %7387 = vst [vmem:[%s246 + $0x40] sm:$0xff] %v7355
        %7388 = vst [vmem:[%s246 + $0x48] sm:$0xff] %v7356
        %7389 = vst [vmem:[%s246 + $0x50] sm:$0xff] %v7357
        %7390 = vst [vmem:[%s246 + $0x58] sm:$0xff] %v7358
        %7391 = vst [vmem:[%s246 + $0x60] sm:$0xff] %v7359
        %7392 = vst [vmem:[%s246 + $0x68] sm:$0xff] %v7360
        %7393 = vst [vmem:[%s246 + $0x70] sm:$0xff] %v7361
        %7394 = vst [vmem:[%s246 + $0x78] sm:$0xff] %v7362
        %7395 = vst [vmem:[%s246 + $0x80] sm:$0xff] %v7363
        %7396 = vst [vmem:[%s246 + $0x88] sm:$0xff] %v7364
        %7397 = vst [vmem:[%s246 + $0x90] sm:$0xff] %v7365
        %7398 = vst [vmem:[%s246 + $0x98] sm:$0xff] %v7366
        %7399 = vst [vmem:[%s246 + $0xa0] sm:$0xff] %v7367
        %7400 = vst [vmem:[%s246 + $0xa8] sm:$0xff] %v7368
        %7401 = vst [vmem:[%s246 + $0xb0] sm:$0xff] %v7369
        %7402 = vst [vmem:[%s246 + $0xb8] sm:$0xff] %v7370
        %7403 = vst [vmem:[%s246 + $0xc0] sm:$0xff] %v7371
        %7404 = vst [vmem:[%s246 + $0xc8] sm:$0xff] %v7372
        %7405 = vst [vmem:[%s246 + $0xd0] sm:$0xff] %v7373
        %7406 = vst [vmem:[%s246 + $0xd8] sm:$0xff] %v7374
        %7407 = vst [vmem:[%s246 + $0xe0] sm:$0xff] %v7375
        %7408 = vst [vmem:[%s246 + $0xe8] sm:$0xff] %v7376
        %7409 = vst [vmem:[%s246 + $0xf0] sm:$0xff] %v7377
        %7410 = vst [vmem:[%s246 + $0xf8] sm:$0xff] %v7378
        %s7411 = sand.u32 %s152, 1
        %s7412 = scalar_lea.sflag [#allocation6], %s7411
        %s7413 = sand.u32 %s152, 1
        %s7414 = smul.addr %s7413, 256
        %s7415 = scalar_lea.vmem [#allocation7], %s7414
        // Predicated region
        $region49: #{tpu_custom_call.1} parent=39 // pred_check
          %p7416 = pneg %p162
        $region50: #{tpu_custom_call.1} parent=39 // pred_check_branch
          %7418 = sbr.rel (%p7416) target = $region52
        $region51: #{tpu_custom_call.1} parent=39 // pred_region
          %s7419 = smul.u32 16, %s25
          %s7421 = ssub.s32 4096, 4096
          %7422 = vsyncadd %s7412, %s7421
          %s7423 = smul.addr %s7419, 2
          %s7424 = smul.addr %s24, 32
          %s7425 = sadd.s32 %s7423, %s7424
          %s7426 = smul.addr %s7425, 128
          %s7427 = scalar_lea.hbm %s5, %s7426
          %s7428 = sshll.u32 %s7415, 4
          %s7429 = int_to_ptr.vmem [resolvable:$true] %s7428
          %7434 = dma.vmem_to_hbm [thread:$0]  %s7429, 4096, %s7427, %s7412, 128, 128, 8
        $region52: #{tpu_custom_call.1} parent=39 // pred_fallthru
          _
      $region40: #{tpu_custom_call.1} parent=5 // pred_fallthru
        _
      %p7435 = scmp.le.s32.totalorder 2, %s15
      // Predicated region
      $region53: #{tpu_custom_call.1} parent=5 // pred_check
        %p7436 = pneg %p7435
      $region54: #{tpu_custom_call.1} parent=5 // pred_check_branch
        %7438 = sbr.rel (%p7436) target = $region56
      $region55: #{tpu_custom_call.1} parent=5 // pred_region
        %s7439 = ssub.s32 %s15, 2
        // Predicated region
        $region57: #{tpu_custom_call.1} parent=55 // pred_check
          %p7440 = pneg %p168
        $region58: #{tpu_custom_call.1} parent=55 // pred_check_branch
          %7442 = sbr.rel (%p7440) target = $region60
        $region59: #{tpu_custom_call.1} parent=55 // pred_region
          %s7443 = sand.u32 %s153, 1
          %s7444 = scalar_lea.sflag [#allocation6], %s7443
          %s7445 = sand.u32 %s153, 1
          %s7446 = smul.addr %s7445, 256
          %s7447 = scalar_lea.vmem [#allocation7], %s7446
          %7448 = dma.done %s7444, 4096
        $region60: #{tpu_custom_call.1} parent=55 // pred_fallthru
          _
      $region56: #{tpu_custom_call.1} parent=5 // pred_fallthru
        _
    $region6: #{tpu_custom_call.1} parent=1 // loop_footer
      %s19 = sadd.s32 1, %s15
    $region7: #{tpu_custom_call.1} parent=1 // loop_footer_branch
      %14 = sbr.rel target = $region3
    $region8: #{tpu_custom_call.1} parent=1 // loop_exit
      _
    %7449 = vsyncpa [#allocation5], 1
    %s7450 = scalar_lea.sflag [#allocation5], 1
    %7451 = vsyncpa %s7450, 1
    %7452 = vsyncpa [#allocation6], 1
    %s7453 = scalar_lea.sflag [#allocation6], 1
    %7454 = vsyncpa %s7453, 1

</llo_original>
